<compile_context>
chip_gen: v6e
topology: v6e:2x2x1
jax: 0.10.0
libtpu: 0.0.40
codegen_flags: <defaults>
</compile_context>

<pallas_src>
import numpy as np
import jax
import jax.numpy as jnp
from jax import lax
from jax.experimental import pallas as pl
from jax.experimental.pallas import tpu as pltpu


def _round_up(x, m):
    return -(-x // m) * m


# ----------------------------------------------------------------------------
# Fused Pallas kernel: embedding gather + RNN1 (all layers, row 0) +
# RNN2 (layer 0 only, all rows)
# ----------------------------------------------------------------------------
def build_disc_kernel(n_layers, vocab, embed_dim, H, S1, S2, B2, B2p):
    P = 10  # params per GRU layer (per-gate, lane-offset-0 layout)

    def gru_cell(gr, gz, gn, h, w_hh_r, w_hh_z, w_hh_n, b_hn_b):
        # gr/gz/gn already include the x-side projection and folded biases.
        gh_r = jnp.dot(h, w_hh_r, preferred_element_type=jnp.float32)
        gh_z = jnp.dot(h, w_hh_z, preferred_element_type=jnp.float32)
        gh_n = jnp.dot(h, w_hh_n, preferred_element_type=jnp.float32)
        r = jax.nn.sigmoid(gr + gh_r)
        z = jax.nn.sigmoid(gz + gh_z)
        n = jnp.tanh(gn + r * (gh_n + b_hn_b))
        return (1.0 - z) * n + z * h

    def kernel(*refs):
        emb_ref, ids1_ref, ids2_ref = refs[0], refs[1], refs[2]
        p = refs[3:3 + P * (n_layers + 1)]
        abstract_ref = refs[3 + P * (n_layers + 1)]   # [S1, H]
        kph_ref = refs[4 + P * (n_layers + 1)]        # [B2, H]

        emb = emb_ref[...]                            # [V, E]

        def layer_params(idx):
            base = P * idx
            return [p[base + i][...] for i in range(P)]

        # ------------------- RNN1 (only batch row 0 contributes) -----------
        ids1 = ids1_ref[...]                          # [S1, 1] int32
        iota1 = lax.broadcasted_iota(jnp.int32, (S1, vocab), 1)
        oh1 = jnp.where(ids1 == iota1, 1.0, 0.0).astype(jnp.float32)
        x1 = jnp.dot(oh1, emb, preferred_element_type=jnp.float32)   # [S1, E]

        lp1 = [layer_params(l) for l in range(n_layers)]
        (w_ih_r0, w_ih_z0, w_ih_n0, _, _, _, b_r0, b_z0, b_in0, _) = lp1[0]
        # Hoisted layer-0 input projections (biases folded once, outside loop).
        gx_r0 = jnp.dot(x1, w_ih_r0, preferred_element_type=jnp.float32) + b_r0
        gx_z0 = jnp.dot(x1, w_ih_z0, preferred_element_type=jnp.float32) + b_z0
        gx_n0 = jnp.dot(x1, w_ih_n0, preferred_element_type=jnp.float32) + b_in0

        h = [jnp.zeros((1, H), jnp.float32) for _ in range(n_layers)]
        outs = []
        for t in range(S1):                   # fully unrolled, static indices
            for l in range(n_layers):         # wavefront: no inter-layer barrier
                (w_ih_r, w_ih_z, w_ih_n, w_hh_r, w_hh_z, w_hh_n,
                 b_r, b_z, b_in, b_hn) = lp1[l]
                if l == 0:
                    gr = gx_r0[t:t + 1, :]
                    gz = gx_z0[t:t + 1, :]
                    gn = gx_n0[t:t + 1, :]
                else:
                    xin = h[l - 1]            # layer l-1's output at step t
                    gr = jnp.dot(xin, w_ih_r,
                                 preferred_element_type=jnp.float32) + b_r
                    gz = jnp.dot(xin, w_ih_z,
                                 preferred_element_type=jnp.float32) + b_z
                    gn = jnp.dot(xin, w_ih_n,
                                 preferred_element_type=jnp.float32) + b_in
                h[l] = gru_cell(gr, gz, gn, h[l],
                                w_hh_r, w_hh_z, w_hh_n, b_hn)
            outs.append(h[n_layers - 1])
        # Single contiguous store of the last-layer per-step outputs.
        abstract_ref[...] = jnp.concatenate(outs, axis=0)

        # ------------------- RNN2: layer 0 only (layers >= 1 are dead) -----
        ids2 = ids2_ref[...]                          # [S2*B2p, 1] int32
        iota2 = lax.broadcasted_iota(jnp.int32, (S2 * B2p, vocab), 1)
        oh2 = jnp.where(ids2 == iota2, 1.0, 0.0).astype(jnp.float32)
        x2 = jnp.dot(oh2, emb, preferred_element_type=jnp.float32)   # [S2*B2p, E]

        (w_ih_r, w_ih_z, w_ih_n, w_hh_r, w_hh_z, w_hh_n,
         b_r, b_z, b_in, b_hn) = layer_params(n_layers)
        gx_r = jnp.dot(x2, w_ih_r, preferred_element_type=jnp.float32) + b_r
        gx_z = jnp.dot(x2, w_ih_z, preferred_element_type=jnp.float32) + b_z
        gx_n = jnp.dot(x2, w_ih_n, preferred_element_type=jnp.float32) + b_in
        b_hn_b = jnp.broadcast_to(b_hn, (B2p, H))     # hoisted out of time loop

        h2 = jnp.zeros((B2p, H), jnp.float32)
        for t in range(S2):                   # fully unrolled
            gr = gx_r[t * B2p:(t + 1) * B2p, :]       # sublane-aligned slices
            gz = gx_z[t * B2p:(t + 1) * B2p, :]
            gn = gx_n[t * B2p:(t + 1) * B2p, :]
            h2 = gru_cell(gr, gz, gn, h2, w_hh_r, w_hh_z, w_hh_n, b_hn_b)
        kph_ref[...] = h2[:B2, :]             # output slicing done in-kernel

    return kernel


# ----------------------------------------------------------------------------
# Parameter construction (deterministic, PyTorch-style U(-1/sqrt(H), 1/sqrt(H)))
# ----------------------------------------------------------------------------
def init_gru_params(key, embed_dim, hidden_dim, n_layers):
    """Per-gate, pre-transposed params (gate order r, z, n) — reference layout."""
    k = 1.0 / np.sqrt(hidden_dim)
    layers = []
    for layer in range(n_layers):
        in_dim = embed_dim if layer == 0 else hidden_dim
        key, k1, k2, k3, k4 = jax.random.split(key, 5)
        w_ih = jax.random.uniform(k1, (3, hidden_dim, in_dim), jnp.float32, -k, k)
        w_hh = jax.random.uniform(k2, (3, hidden_dim, hidden_dim), jnp.float32, -k, k)
        b_ih = jax.random.uniform(k3, (3, 1, hidden_dim), jnp.float32, -k, k)
        b_hh = jax.random.uniform(k4, (3, 1, hidden_dim), jnp.float32, -k, k)
        layers.append((jnp.transpose(w_ih, (0, 2, 1)),   # [3, in, H]
                       jnp.transpose(w_hh, (0, 2, 1)),   # [3, H, H]
                       b_ih, b_hh))                      # [3, 1, H]
    return key, layers


def kernel_layer_params(w_ih_t, w_hh_t, b_ih, b_hh):
    """Kernel layout: separate per-gate weights (lane offset 0) + folded biases."""
    return [w_ih_t[0], w_ih_t[1], w_ih_t[2],        # [Din, H] each
            w_hh_t[0], w_hh_t[1], w_hh_t[2],        # [H, H]  each
            b_ih[0] + b_hh[0],                      # b_r  [1, H]
            b_ih[1] + b_hh[1],                      # b_z  [1, H]
            b_ih[2],                                # b_in [1, H]
            b_hh[2]]                                # b_hn [1, H]


def init_discriminator_params(seed, vocab_size, embed_dim, hidden_dim, n_layers):
    key = jax.random.PRNGKey(seed)
    key, ke = jax.random.split(key)
    embedding = jax.random.normal(ke, (vocab_size, embed_dim), jnp.float32)
    key, rnn1 = init_gru_params(key, embed_dim, hidden_dim, n_layers)
    key, rnn2 = init_gru_params(key, embed_dim, hidden_dim, n_layers)
    flat = []
    for lp in rnn1:
        flat.extend(kernel_layer_params(*lp))
    flat.extend(kernel_layer_params(*rnn2[0]))  # RNN2 layers >= 1 never used
    return {"embedding": embedding,
            "rnn1": rnn1, "rnn2": rnn2,          # per-gate (reference)
            "kernel_params": flat}               # kernel layout


# ----------------------------------------------------------------------------
# Discriminator.forward (single fused pallas_call)
# ----------------------------------------------------------------------------
def discriminator_forward(params, src_ids, kph_ids):
    emb = params["embedding"]
    flat = params["kernel_params"]
    n_layers = len(params["rnn1"])
    V, E = emb.shape
    H = params["rnn1"][0][1].shape[-1]

    B1, S1 = src_ids.shape
    B2, S2 = kph_ids.shape
    B2p = _round_up(B2, 8)                # f32 sublane quantum

    # Tiny int32 index plumbing only — all float gather/pad/slice work is
    # inside the kernel.  `abstract` only depends on src batch row 0.
    ids1 = src_ids[0].reshape(S1, 1).astype(jnp.int32)
    ids2 = jnp.pad(kph_ids.T.astype(jnp.int32), ((0, 0), (0, B2p - B2)))
    ids2 = ids2.reshape(S2 * B2p, 1)      # time-major, batch padded to 8

    vmem = pl.BlockSpec(memory_space=pltpu.MemorySpace.VMEM)
    kernel = build_disc_kernel(n_layers, V, E, H, S1, S2, B2, B2p)
    abstract, keyphrase_d = pl.pallas_call(
        kernel,
        out_shape=(jax.ShapeDtypeStruct((S1, H), jnp.float32),
                   jax.ShapeDtypeStruct((B2, H), jnp.float32)),
        in_specs=[vmem] * (3 + len(flat)),
        out_specs=(vmem, vmem),
    )(emb, ids1, ids2, *flat)
    return abstract, keyphrase_d


# ----------------------------------------------------------------------------
# NumPy reference (per-gate math, unfused) for a correctness sanity check
# ----------------------------------------------------------------------------
def np_sigmoid(x):
    return 1.0 / (1.0 + np.exp(-x))


def ref_gru_layer(x, w_ih_t, w_hh_t, b_ih, b_hh):
    x = np.asarray(x); w_ih_t = np.asarray(w_ih_t); w_hh_t = np.asarray(w_hh_t)
    b_ih = np.asarray(b_ih); b_hh = np.asarray(b_hh)
    S, B, _ = x.shape
    H = w_hh_t.shape[1]
    h = np.zeros((B, H), np.float32)
    outs = np.zeros((S, B, H), np.float32)
    for t in range(S):
        xt = x[t]
        r = np_sigmoid(xt @ w_ih_t[0] + b_ih[0] + h @ w_hh_t[0] + b_hh[0])
        z = np_sigmoid(xt @ w_ih_t[1] + b_ih[1] + h @ w_hh_t[1] + b_hh[1])
        n = np.tanh(xt @ w_ih_t[2] + b_ih[2] + r * (h @ w_hh_t[2] + b_hh[2]))
        h = (1.0 - z) * n + z * h
        outs[t] = h
    return outs, h


def ref_forward(params, src_ids, kph_ids):
    emb = np.asarray(params["embedding"])
    src_e = emb[np.asarray(src_ids)]
    kph_e = emb[np.asarray(kph_ids)]

    def srnn(x_bse, layers):
        x = np.transpose(x_bse, (1, 0, 2))
        hs = []
        for lp in layers:
            x, hf = ref_gru_layer(x, *lp)
            hs.append(hf)
        return np.transpose(x, (1, 0, 2)), np.transpose(np.stack(hs, 0), (1, 0, 2))

    abstract_d, _ = srnn(src_e, params["rnn1"])
    _, kph_hidden = srnn(kph_e, params["rnn2"])
    return abstract_d[0, :, :], kph_hidden[:, 0, :]


# ----------------------------------------------------------------------------
if __name__ == "__main__":
    vocab_size = 64
    embed_dim = 32
    hidden_dim = 32
    n_layers = 2
    pad_idx = 0

    B_src, S_src = 4, 8   # src already tiled to total_kphs rows upstream
    B_kph, S_kph = 4, 6   # padded keyphrases

    params = init_discriminator_params(0, vocab_size, embed_dim,
                                       hidden_dim, n_layers)

    key = jax.random.PRNGKey(0)
    k1, k2 = jax.random.split(key)
    src = jax.random.randint(k1, (B_src, S_src), 0, vocab_size, dtype=jnp.int32)
    kph = jax.random.randint(k2, (B_kph, S_kph), 0, vocab_size, dtype=jnp.int32)

    fwd = jax.jit(discriminator_forward)
    abstract, keyphrase_d = fwd(params, src, kph)
    abstract = jax.block_until_ready(abstract)
    keyphrase_d = jax.block_until_ready(keyphrase_d)

    assert abstract.shape == (S_src, hidden_dim)
    assert keyphrase_d.shape == (B_kph, hidden_dim)

    ref_abstract, ref_keyphrase = ref_forward(params, src, kph)
    np.testing.assert_allclose(np.asarray(abstract), ref_abstract,
                               rtol=1e-3, atol=1e-3)
    np.testing.assert_allclose(np.asarray(keyphrase_d), ref_keyphrase,
                               rtol=1e-3, atol=1e-3)

    print("KERNEL_OK")
</pallas_src>

<mosaic_0001>
module attributes {stable_mosaic.version = 11 : i64} {
  func.func @kernel(%arg0: memref<64x32xf32, #tpu.memory_space<vmem>>, %arg1: memref<8x1xi32, #tpu.memory_space<vmem>>, %arg2: memref<48x1xi32, #tpu.memory_space<vmem>>, %arg3: memref<32x32xf32, #tpu.memory_space<vmem>>, %arg4: memref<32x32xf32, #tpu.memory_space<vmem>>, %arg5: memref<32x32xf32, #tpu.memory_space<vmem>>, %arg6: memref<32x32xf32, #tpu.memory_space<vmem>>, %arg7: memref<32x32xf32, #tpu.memory_space<vmem>>, %arg8: memref<32x32xf32, #tpu.memory_space<vmem>>, %arg9: memref<1x32xf32, #tpu.memory_space<vmem>>, %arg10: memref<1x32xf32, #tpu.memory_space<vmem>>, %arg11: memref<1x32xf32, #tpu.memory_space<vmem>>, %arg12: memref<1x32xf32, #tpu.memory_space<vmem>>, %arg13: memref<32x32xf32, #tpu.memory_space<vmem>>, %arg14: memref<32x32xf32, #tpu.memory_space<vmem>>, %arg15: memref<32x32xf32, #tpu.memory_space<vmem>>, %arg16: memref<32x32xf32, #tpu.memory_space<vmem>>, %arg17: memref<32x32xf32, #tpu.memory_space<vmem>>, %arg18: memref<32x32xf32, #tpu.memory_space<vmem>>, %arg19: memref<1x32xf32, #tpu.memory_space<vmem>>, %arg20: memref<1x32xf32, #tpu.memory_space<vmem>>, %arg21: memref<1x32xf32, #tpu.memory_space<vmem>>, %arg22: memref<1x32xf32, #tpu.memory_space<vmem>>, %arg23: memref<32x32xf32, #tpu.memory_space<vmem>>, %arg24: memref<32x32xf32, #tpu.memory_space<vmem>>, %arg25: memref<32x32xf32, #tpu.memory_space<vmem>>, %arg26: memref<32x32xf32, #tpu.memory_space<vmem>>, %arg27: memref<32x32xf32, #tpu.memory_space<vmem>>, %arg28: memref<32x32xf32, #tpu.memory_space<vmem>>, %arg29: memref<1x32xf32, #tpu.memory_space<vmem>>, %arg30: memref<1x32xf32, #tpu.memory_space<vmem>>, %arg31: memref<1x32xf32, #tpu.memory_space<vmem>>, %arg32: memref<1x32xf32, #tpu.memory_space<vmem>>, %arg33: memref<8x32xf32, #tpu.memory_space<vmem>>, %arg34: memref<4x32xf32, #tpu.memory_space<vmem>>) attributes {dimension_semantics = [], scalar_prefetch = 0 : i64, scratch_operands = 0 : i64, tpu.core_type = #tpu.core_type<tc>} {
    %c0 = arith.constant 0 : index
    %c0_0 = arith.constant 0 : index
    %0 = vector.load %arg0[%c0, %c0_0] : memref<64x32xf32, #tpu.memory_space<vmem>>, vector<64x32xf32>
    %c0_1 = arith.constant 0 : index
    %c0_2 = arith.constant 0 : index
    %1 = vector.load %arg1[%c0_1, %c0_2] : memref<8x1xi32, #tpu.memory_space<vmem>>, vector<8x1xi32>
    %2 = tpu.iota {dimensions = array<i32: 1>} : vector<8x64xi32>
    %3 = vector.broadcast %1 : vector<8x1xi32> to vector<8x64xi32>
    %4 = arith.cmpi eq, %3, %2 : vector<8x64xi32>
    %cst = arith.constant 1.000000e+00 : f32
    %cst_3 = arith.constant 0.000000e+00 : f32
    %5 = vector.broadcast %cst : f32 to vector<8x64xf32>
    %6 = vector.broadcast %cst_3 : f32 to vector<8x64xf32>
    %7 = arith.select %4, %5, %6 : vector<8x64xi1>, vector<8x64xf32>
    %cst_4 = arith.constant dense<0.000000e+00> : vector<8x32xf32>
    %8 = tpu.matmul %7, %0, %cst_4 {dimension_numbers = #tpu.dot_dimension_numbers<[1], [0], [0], [1], [0, 0, 1, 1], [], []>} : vector<8x64xf32>, vector<64x32xf32>, vector<8x32xf32> -> vector<8x32xf32>
    %c0_5 = arith.constant 0 : index
    %c0_6 = arith.constant 0 : index
    %9 = vector.load %arg3[%c0_5, %c0_6] : memref<32x32xf32, #tpu.memory_space<vmem>>, vector<32x32xf32>
    %c0_7 = arith.constant 0 : index
    %c0_8 = arith.constant 0 : index
    %10 = vector.load %arg4[%c0_7, %c0_8] : memref<32x32xf32, #tpu.memory_space<vmem>>, vector<32x32xf32>
    %c0_9 = arith.constant 0 : index
    %c0_10 = arith.constant 0 : index
    %11 = vector.load %arg5[%c0_9, %c0_10] : memref<32x32xf32, #tpu.memory_space<vmem>>, vector<32x32xf32>
    %c0_11 = arith.constant 0 : index
    %c0_12 = arith.constant 0 : index
    %12 = vector.load %arg6[%c0_11, %c0_12] : memref<32x32xf32, #tpu.memory_space<vmem>>, vector<32x32xf32>
    %c0_13 = arith.constant 0 : index
    %c0_14 = arith.constant 0 : index
    %13 = vector.load %arg7[%c0_13, %c0_14] : memref<32x32xf32, #tpu.memory_space<vmem>>, vector<32x32xf32>
    %c0_15 = arith.constant 0 : index
    %c0_16 = arith.constant 0 : index
    %14 = vector.load %arg8[%c0_15, %c0_16] : memref<32x32xf32, #tpu.memory_space<vmem>>, vector<32x32xf32>
    %c0_17 = arith.constant 0 : index
    %c0_18 = arith.constant 0 : index
    %15 = vector.load %arg9[%c0_17, %c0_18] : memref<1x32xf32, #tpu.memory_space<vmem>>, vector<1x32xf32>
    %c0_19 = arith.constant 0 : index
    %c0_20 = arith.constant 0 : index
    %16 = vector.load %arg10[%c0_19, %c0_20] : memref<1x32xf32, #tpu.memory_space<vmem>>, vector<1x32xf32>
    %c0_21 = arith.constant 0 : index
    %c0_22 = arith.constant 0 : index
    %17 = vector.load %arg11[%c0_21, %c0_22] : memref<1x32xf32, #tpu.memory_space<vmem>>, vector<1x32xf32>
    %c0_23 = arith.constant 0 : index
    %c0_24 = arith.constant 0 : index
    %18 = vector.load %arg12[%c0_23, %c0_24] : memref<1x32xf32, #tpu.memory_space<vmem>>, vector<1x32xf32>
    %c0_25 = arith.constant 0 : index
    %c0_26 = arith.constant 0 : index
    %19 = vector.load %arg13[%c0_25, %c0_26] : memref<32x32xf32, #tpu.memory_space<vmem>>, vector<32x32xf32>
    %c0_27 = arith.constant 0 : index
    %c0_28 = arith.constant 0 : index
    %20 = vector.load %arg14[%c0_27, %c0_28] : memref<32x32xf32, #tpu.memory_space<vmem>>, vector<32x32xf32>
    %c0_29 = arith.constant 0 : index
    %c0_30 = arith.constant 0 : index
    %21 = vector.load %arg15[%c0_29, %c0_30] : memref<32x32xf32, #tpu.memory_space<vmem>>, vector<32x32xf32>
    %c0_31 = arith.constant 0 : index
    %c0_32 = arith.constant 0 : index
    %22 = vector.load %arg16[%c0_31, %c0_32] : memref<32x32xf32, #tpu.memory_space<vmem>>, vector<32x32xf32>
    %c0_33 = arith.constant 0 : index
    %c0_34 = arith.constant 0 : index
    %23 = vector.load %arg17[%c0_33, %c0_34] : memref<32x32xf32, #tpu.memory_space<vmem>>, vector<32x32xf32>
    %c0_35 = arith.constant 0 : index
    %c0_36 = arith.constant 0 : index
    %24 = vector.load %arg18[%c0_35, %c0_36] : memref<32x32xf32, #tpu.memory_space<vmem>>, vector<32x32xf32>
    %c0_37 = arith.constant 0 : index
    %c0_38 = arith.constant 0 : index
    %25 = vector.load %arg19[%c0_37, %c0_38] : memref<1x32xf32, #tpu.memory_space<vmem>>, vector<1x32xf32>
    %c0_39 = arith.constant 0 : index
    %c0_40 = arith.constant 0 : index
    %26 = vector.load %arg20[%c0_39, %c0_40] : memref<1x32xf32, #tpu.memory_space<vmem>>, vector<1x32xf32>
    %c0_41 = arith.constant 0 : index
    %c0_42 = arith.constant 0 : index
    %27 = vector.load %arg21[%c0_41, %c0_42] : memref<1x32xf32, #tpu.memory_space<vmem>>, vector<1x32xf32>
    %c0_43 = arith.constant 0 : index
    %c0_44 = arith.constant 0 : index
    %28 = vector.load %arg22[%c0_43, %c0_44] : memref<1x32xf32, #tpu.memory_space<vmem>>, vector<1x32xf32>
    %cst_45 = arith.constant dense<0.000000e+00> : vector<8x32xf32>
    %29 = tpu.matmul %8, %9, %cst_45 {dimension_numbers = #tpu.dot_dimension_numbers<[1], [0], [0], [1], [0, 0, 1, 1], [], []>} : vector<8x32xf32>, vector<32x32xf32>, vector<8x32xf32> -> vector<8x32xf32>
    %30 = vector.broadcast %15 : vector<1x32xf32> to vector<8x32xf32>
    %31 = arith.addf %29, %30 : vector<8x32xf32>
    %cst_46 = arith.constant dense<0.000000e+00> : vector<8x32xf32>
    %32 = tpu.matmul %8, %10, %cst_46 {dimension_numbers = #tpu.dot_dimension_numbers<[1], [0], [0], [1], [0, 0, 1, 1], [], []>} : vector<8x32xf32>, vector<32x32xf32>, vector<8x32xf32> -> vector<8x32xf32>
    %33 = vector.broadcast %16 : vector<1x32xf32> to vector<8x32xf32>
    %34 = arith.addf %32, %33 : vector<8x32xf32>
    %cst_47 = arith.constant dense<0.000000e+00> : vector<8x32xf32>
    %35 = tpu.matmul %8, %11, %cst_47 {dimension_numbers = #tpu.dot_dimension_numbers<[1], [0], [0], [1], [0, 0, 1, 1], [], []>} : vector<8x32xf32>, vector<32x32xf32>, vector<8x32xf32> -> vector<8x32xf32>
    %36 = vector.broadcast %17 : vector<1x32xf32> to vector<8x32xf32>
    %37 = arith.addf %35, %36 : vector<8x32xf32>
    %cst_48 = arith.constant 0.000000e+00 : f32
    %38 = vector.broadcast %cst_48 : f32 to vector<1x32xf32>
    %cst_49 = arith.constant 0.000000e+00 : f32
    %39 = vector.broadcast %cst_49 : f32 to vector<1x32xf32>
    %40 = vector.extract_strided_slice %31 {offsets = [0, 0], sizes = [1, 32], strides = [1, 1]} : vector<8x32xf32> to vector<1x32xf32>
    %41 = vector.extract_strided_slice %34 {offsets = [0, 0], sizes = [1, 32], strides = [1, 1]} : vector<8x32xf32> to vector<1x32xf32>
    %42 = vector.extract_strided_slice %37 {offsets = [0, 0], sizes = [1, 32], strides = [1, 1]} : vector<8x32xf32> to vector<1x32xf32>
    %cst_50 = arith.constant dense<0.000000e+00> : vector<1x32xf32>
    %43 = tpu.matmul %38, %12, %cst_50 {dimension_numbers = #tpu.dot_dimension_numbers<[1], [0], [0], [1], [0, 0, 1, 1], [], []>} : vector<1x32xf32>, vector<32x32xf32>, vector<1x32xf32> -> vector<1x32xf32>
    %cst_51 = arith.constant dense<0.000000e+00> : vector<1x32xf32>
    %44 = tpu.matmul %38, %13, %cst_51 {dimension_numbers = #tpu.dot_dimension_numbers<[1], [0], [0], [1], [0, 0, 1, 1], [], []>} : vector<1x32xf32>, vector<32x32xf32>, vector<1x32xf32> -> vector<1x32xf32>
    %cst_52 = arith.constant dense<0.000000e+00> : vector<1x32xf32>
    %45 = tpu.matmul %38, %14, %cst_52 {dimension_numbers = #tpu.dot_dimension_numbers<[1], [0], [0], [1], [0, 0, 1, 1], [], []>} : vector<1x32xf32>, vector<32x32xf32>, vector<1x32xf32> -> vector<1x32xf32>
    %46 = arith.addf %40, %43 : vector<1x32xf32>
    %47 = arith.negf %46 : vector<1x32xf32>
    %48 = math.exp %47 : vector<1x32xf32>
    %cst_53 = arith.constant 1.000000e+00 : f32
    %49 = vector.broadcast %cst_53 : f32 to vector<1x32xf32>
    %50 = arith.addf %49, %48 : vector<1x32xf32>
    %51 = arith.divf %49, %50 : vector<1x32xf32>
    %52 = arith.addf %41, %44 : vector<1x32xf32>
    %53 = arith.negf %52 : vector<1x32xf32>
    %54 = math.exp %53 : vector<1x32xf32>
    %cst_54 = arith.constant 1.000000e+00 : f32
    %55 = vector.broadcast %cst_54 : f32 to vector<1x32xf32>
    %56 = arith.addf %55, %54 : vector<1x32xf32>
    %57 = arith.divf %55, %56 : vector<1x32xf32>
    %58 = arith.addf %45, %18 : vector<1x32xf32>
    %59 = arith.mulf %51, %58 : vector<1x32xf32>
    %60 = arith.addf %42, %59 : vector<1x32xf32>
    %61 = math.tanh %60 : vector<1x32xf32>
    %cst_55 = arith.constant 1.000000e+00 : f32
    %62 = vector.broadcast %cst_55 : f32 to vector<1x32xf32>
    %63 = arith.subf %62, %57 : vector<1x32xf32>
    %64 = arith.mulf %63, %61 : vector<1x32xf32>
    %65 = arith.mulf %57, %38 : vector<1x32xf32>
    %66 = arith.addf %64, %65 : vector<1x32xf32>
    %cst_56 = arith.constant dense<0.000000e+00> : vector<1x32xf32>
    %67 = tpu.matmul %66, %19, %cst_56 {dimension_numbers = #tpu.dot_dimension_numbers<[1], [0], [0], [1], [0, 0, 1, 1], [], []>} : vector<1x32xf32>, vector<32x32xf32>, vector<1x32xf32> -> vector<1x32xf32>
    %68 = arith.addf %67, %25 : vector<1x32xf32>
    %cst_57 = arith.constant dense<0.000000e+00> : vector<1x32xf32>
    %69 = tpu.matmul %66, %20, %cst_57 {dimension_numbers = #tpu.dot_dimension_numbers<[1], [0], [0], [1], [0, 0, 1, 1], [], []>} : vector<1x32xf32>, vector<32x32xf32>, vector<1x32xf32> -> vector<1x32xf32>
    %70 = arith.addf %69, %26 : vector<1x32xf32>
    %cst_58 = arith.constant dense<0.000000e+00> : vector<1x32xf32>
    %71 = tpu.matmul %66, %21, %cst_58 {dimension_numbers = #tpu.dot_dimension_numbers<[1], [0], [0], [1], [0, 0, 1, 1], [], []>} : vector<1x32xf32>, vector<32x32xf32>, vector<1x32xf32> -> vector<1x32xf32>
    %72 = arith.addf %71, %27 : vector<1x32xf32>
    %cst_59 = arith.constant dense<0.000000e+00> : vector<1x32xf32>
    %73 = tpu.matmul %39, %22, %cst_59 {dimension_numbers = #tpu.dot_dimension_numbers<[1], [0], [0], [1], [0, 0, 1, 1], [], []>} : vector<1x32xf32>, vector<32x32xf32>, vector<1x32xf32> -> vector<1x32xf32>
    %cst_60 = arith.constant dense<0.000000e+00> : vector<1x32xf32>
    %74 = tpu.matmul %39, %23, %cst_60 {dimension_numbers = #tpu.dot_dimension_numbers<[1], [0], [0], [1], [0, 0, 1, 1], [], []>} : vector<1x32xf32>, vector<32x32xf32>, vector<1x32xf32> -> vector<1x32xf32>
    %cst_61 = arith.constant dense<0.000000e+00> : vector<1x32xf32>
    %75 = tpu.matmul %39, %24, %cst_61 {dimension_numbers = #tpu.dot_dimension_numbers<[1], [0], [0], [1], [0, 0, 1, 1], [], []>} : vector<1x32xf32>, vector<32x32xf32>, vector<1x32xf32> -> vector<1x32xf32>
    %76 = arith.addf %68, %73 : vector<1x32xf32>
    %77 = arith.negf %76 : vector<1x32xf32>
    %78 = math.exp %77 : vector<1x32xf32>
    %cst_62 = arith.constant 1.000000e+00 : f32
    %79 = vector.broadcast %cst_62 : f32 to vector<1x32xf32>
    %80 = arith.addf %79, %78 : vector<1x32xf32>
    %81 = arith.divf %79, %80 : vector<1x32xf32>
    %82 = arith.addf %70, %74 : vector<1x32xf32>
    %83 = arith.negf %82 : vector<1x32xf32>
    %84 = math.exp %83 : vector<1x32xf32>
    %cst_63 = arith.constant 1.000000e+00 : f32
    %85 = vector.broadcast %cst_63 : f32 to vector<1x32xf32>
    %86 = arith.addf %85, %84 : vector<1x32xf32>
    %87 = arith.divf %85, %86 : vector<1x32xf32>
    %88 = arith.addf %75, %28 : vector<1x32xf32>
    %89 = arith.mulf %81, %88 : vector<1x32xf32>
    %90 = arith.addf %72, %89 : vector<1x32xf32>
    %91 = math.tanh %90 : vector<1x32xf32>
    %cst_64 = arith.constant 1.000000e+00 : f32
    %92 = vector.broadcast %cst_64 : f32 to vector<1x32xf32>
    %93 = arith.subf %92, %87 : vector<1x32xf32>
    %94 = arith.mulf %93, %91 : vector<1x32xf32>
    %95 = arith.mulf %87, %39 : vector<1x32xf32>
    %96 = arith.addf %94, %95 : vector<1x32xf32>
    %97 = vector.extract_strided_slice %31 {offsets = [1, 0], sizes = [1, 32], strides = [1, 1]} : vector<8x32xf32> to vector<1x32xf32>
    %98 = vector.extract_strided_slice %34 {offsets = [1, 0], sizes = [1, 32], strides = [1, 1]} : vector<8x32xf32> to vector<1x32xf32>
    %99 = vector.extract_strided_slice %37 {offsets = [1, 0], sizes = [1, 32], strides = [1, 1]} : vector<8x32xf32> to vector<1x32xf32>
    %cst_65 = arith.constant dense<0.000000e+00> : vector<1x32xf32>
    %100 = tpu.matmul %66, %12, %cst_65 {dimension_numbers = #tpu.dot_dimension_numbers<[1], [0], [0], [1], [0, 0, 1, 1], [], []>} : vector<1x32xf32>, vector<32x32xf32>, vector<1x32xf32> -> vector<1x32xf32>
    %cst_66 = arith.constant dense<0.000000e+00> : vector<1x32xf32>
    %101 = tpu.matmul %66, %13, %cst_66 {dimension_numbers = #tpu.dot_dimension_numbers<[1], [0], [0], [1], [0, 0, 1, 1], [], []>} : vector<1x32xf32>, vector<32x32xf32>, vector<1x32xf32> -> vector<1x32xf32>
    %cst_67 = arith.constant dense<0.000000e+00> : vector<1x32xf32>
    %102 = tpu.matmul %66, %14, %cst_67 {dimension_numbers = #tpu.dot_dimension_numbers<[1], [0], [0], [1], [0, 0, 1, 1], [], []>} : vector<1x32xf32>, vector<32x32xf32>, vector<1x32xf32> -> vector<1x32xf32>
    %103 = arith.addf %97, %100 : vector<1x32xf32>
    %104 = arith.negf %103 : vector<1x32xf32>
    %105 = math.exp %104 : vector<1x32xf32>
    %cst_68 = arith.constant 1.000000e+00 : f32
    %106 = vector.broadcast %cst_68 : f32 to vector<1x32xf32>
    %107 = arith.addf %106, %105 : vector<1x32xf32>
    %108 = arith.divf %106, %107 : vector<1x32xf32>
    %109 = arith.addf %98, %101 : vector<1x32xf32>
    %110 = arith.negf %109 : vector<1x32xf32>
    %111 = math.exp %110 : vector<1x32xf32>
    %cst_69 = arith.constant 1.000000e+00 : f32
    %112 = vector.broadcast %cst_69 : f32 to vector<1x32xf32>
    %113 = arith.addf %112, %111 : vector<1x32xf32>
    %114 = arith.divf %112, %113 : vector<1x32xf32>
    %115 = arith.addf %102, %18 : vector<1x32xf32>
    %116 = arith.mulf %108, %115 : vector<1x32xf32>
    %117 = arith.addf %99, %116 : vector<1x32xf32>
    %118 = math.tanh %117 : vector<1x32xf32>
    %cst_70 = arith.constant 1.000000e+00 : f32
    %119 = vector.broadcast %cst_70 : f32 to vector<1x32xf32>
    %120 = arith.subf %119, %114 : vector<1x32xf32>
    %121 = arith.mulf %120, %118 : vector<1x32xf32>
    %122 = arith.mulf %114, %66 : vector<1x32xf32>
    %123 = arith.addf %121, %122 : vector<1x32xf32>
    %cst_71 = arith.constant dense<0.000000e+00> : vector<1x32xf32>
    %124 = tpu.matmul %123, %19, %cst_71 {dimension_numbers = #tpu.dot_dimension_numbers<[1], [0], [0], [1], [0, 0, 1, 1], [], []>} : vector<1x32xf32>, vector<32x32xf32>, vector<1x32xf32> -> vector<1x32xf32>
    %125 = arith.addf %124, %25 : vector<1x32xf32>
    %cst_72 = arith.constant dense<0.000000e+00> : vector<1x32xf32>
    %126 = tpu.matmul %123, %20, %cst_72 {dimension_numbers = #tpu.dot_dimension_numbers<[1], [0], [0], [1], [0, 0, 1, 1], [], []>} : vector<1x32xf32>, vector<32x32xf32>, vector<1x32xf32> -> vector<1x32xf32>
    %127 = arith.addf %126, %26 : vector<1x32xf32>
    %cst_73 = arith.constant dense<0.000000e+00> : vector<1x32xf32>
    %128 = tpu.matmul %123, %21, %cst_73 {dimension_numbers = #tpu.dot_dimension_numbers<[1], [0], [0], [1], [0, 0, 1, 1], [], []>} : vector<1x32xf32>, vector<32x32xf32>, vector<1x32xf32> -> vector<1x32xf32>
    %129 = arith.addf %128, %27 : vector<1x32xf32>
    %cst_74 = arith.constant dense<0.000000e+00> : vector<1x32xf32>
    %130 = tpu.matmul %96, %22, %cst_74 {dimension_numbers = #tpu.dot_dimension_numbers<[1], [0], [0], [1], [0, 0, 1, 1], [], []>} : vector<1x32xf32>, vector<32x32xf32>, vector<1x32xf32> -> vector<1x32xf32>
    %cst_75 = arith.constant dense<0.000000e+00> : vector<1x32xf32>
    %131 = tpu.matmul %96, %23, %cst_75 {dimension_numbers = #tpu.dot_dimension_numbers<[1], [0], [0], [1], [0, 0, 1, 1], [], []>} : vector<1x32xf32>, vector<32x32xf32>, vector<1x32xf32> -> vector<1x32xf32>
    %cst_76 = arith.constant dense<0.000000e+00> : vector<1x32xf32>
    %132 = tpu.matmul %96, %24, %cst_76 {dimension_numbers = #tpu.dot_dimension_numbers<[1], [0], [0], [1], [0, 0, 1, 1], [], []>} : vector<1x32xf32>, vector<32x32xf32>, vector<1x32xf32> -> vector<1x32xf32>
    %133 = arith.addf %125, %130 : vector<1x32xf32>
    %134 = arith.negf %133 : vector<1x32xf32>
    %135 = math.exp %134 : vector<1x32xf32>
    %cst_77 = arith.constant 1.000000e+00 : f32
    %136 = vector.broadcast %cst_77 : f32 to vector<1x32xf32>
    %137 = arith.addf %136, %135 : vector<1x32xf32>
    %138 = arith.divf %136, %137 : vector<1x32xf32>
    %139 = arith.addf %127, %131 : vector<1x32xf32>
    %140 = arith.negf %139 : vector<1x32xf32>
    %141 = math.exp %140 : vector<1x32xf32>
    %cst_78 = arith.constant 1.000000e+00 : f32
    %142 = vector.broadcast %cst_78 : f32 to vector<1x32xf32>
    %143 = arith.addf %142, %141 : vector<1x32xf32>
    %144 = arith.divf %142, %143 : vector<1x32xf32>
    %145 = arith.addf %132, %28 : vector<1x32xf32>
    %146 = arith.mulf %138, %145 : vector<1x32xf32>
    %147 = arith.addf %129, %146 : vector<1x32xf32>
    %148 = math.tanh %147 : vector<1x32xf32>
    %cst_79 = arith.constant 1.000000e+00 : f32
    %149 = vector.broadcast %cst_79 : f32 to vector<1x32xf32>
    %150 = arith.subf %149, %144 : vector<1x32xf32>
    %151 = arith.mulf %150, %148 : vector<1x32xf32>
    %152 = arith.mulf %144, %96 : vector<1x32xf32>
    %153 = arith.addf %151, %152 : vector<1x32xf32>
    %154 = vector.extract_strided_slice %31 {offsets = [2, 0], sizes = [1, 32], strides = [1, 1]} : vector<8x32xf32> to vector<1x32xf32>
    %155 = vector.extract_strided_slice %34 {offsets = [2, 0], sizes = [1, 32], strides = [1, 1]} : vector<8x32xf32> to vector<1x32xf32>
    %156 = vector.extract_strided_slice %37 {offsets = [2, 0], sizes = [1, 32], strides = [1, 1]} : vector<8x32xf32> to vector<1x32xf32>
    %cst_80 = arith.constant dense<0.000000e+00> : vector<1x32xf32>
    %157 = tpu.matmul %123, %12, %cst_80 {dimension_numbers = #tpu.dot_dimension_numbers<[1], [0], [0], [1], [0, 0, 1, 1], [], []>} : vector<1x32xf32>, vector<32x32xf32>, vector<1x32xf32> -> vector<1x32xf32>
    %cst_81 = arith.constant dense<0.000000e+00> : vector<1x32xf32>
    %158 = tpu.matmul %123, %13, %cst_81 {dimension_numbers = #tpu.dot_dimension_numbers<[1], [0], [0], [1], [0, 0, 1, 1], [], []>} : vector<1x32xf32>, vector<32x32xf32>, vector<1x32xf32> -> vector<1x32xf32>
    %cst_82 = arith.constant dense<0.000000e+00> : vector<1x32xf32>
    %159 = tpu.matmul %123, %14, %cst_82 {dimension_numbers = #tpu.dot_dimension_numbers<[1], [0], [0], [1], [0, 0, 1, 1], [], []>} : vector<1x32xf32>, vector<32x32xf32>, vector<1x32xf32> -> vector<1x32xf32>
    %160 = arith.addf %154, %157 : vector<1x32xf32>
    %161 = arith.negf %160 : vector<1x32xf32>
    %162 = math.exp %161 : vector<1x32xf32>
    %cst_83 = arith.constant 1.000000e+00 : f32
    %163 = vector.broadcast %cst_83 : f32 to vector<1x32xf32>
    %164 = arith.addf %163, %162 : vector<1x32xf32>
    %165 = arith.divf %163, %164 : vector<1x32xf32>
    %166 = arith.addf %155, %158 : vector<1x32xf32>
    %167 = arith.negf %166 : vector<1x32xf32>
    %168 = math.exp %167 : vector<1x32xf32>
    %cst_84 = arith.constant 1.000000e+00 : f32
    %169 = vector.broadcast %cst_84 : f32 to vector<1x32xf32>
    %170 = arith.addf %169, %168 : vector<1x32xf32>
    %171 = arith.divf %169, %170 : vector<1x32xf32>
    %172 = arith.addf %159, %18 : vector<1x32xf32>
    %173 = arith.mulf %165, %172 : vector<1x32xf32>
    %174 = arith.addf %156, %173 : vector<1x32xf32>
    %175 = math.tanh %174 : vector<1x32xf32>
    %cst_85 = arith.constant 1.000000e+00 : f32
    %176 = vector.broadcast %cst_85 : f32 to vector<1x32xf32>
    %177 = arith.subf %176, %171 : vector<1x32xf32>
    %178 = arith.mulf %177, %175 : vector<1x32xf32>
    %179 = arith.mulf %171, %123 : vector<1x32xf32>
    %180 = arith.addf %178, %179 : vector<1x32xf32>
    %cst_86 = arith.constant dense<0.000000e+00> : vector<1x32xf32>
    %181 = tpu.matmul %180, %19, %cst_86 {dimension_numbers = #tpu.dot_dimension_numbers<[1], [0], [0], [1], [0, 0, 1, 1], [], []>} : vector<1x32xf32>, vector<32x32xf32>, vector<1x32xf32> -> vector<1x32xf32>
    %182 = arith.addf %181, %25 : vector<1x32xf32>
    %cst_87 = arith.constant dense<0.000000e+00> : vector<1x32xf32>
    %183 = tpu.matmul %180, %20, %cst_87 {dimension_numbers = #tpu.dot_dimension_numbers<[1], [0], [0], [1], [0, 0, 1, 1], [], []>} : vector<1x32xf32>, vector<32x32xf32>, vector<1x32xf32> -> vector<1x32xf32>
    %184 = arith.addf %183, %26 : vector<1x32xf32>
    %cst_88 = arith.constant dense<0.000000e+00> : vector<1x32xf32>
    %185 = tpu.matmul %180, %21, %cst_88 {dimension_numbers = #tpu.dot_dimension_numbers<[1], [0], [0], [1], [0, 0, 1, 1], [], []>} : vector<1x32xf32>, vector<32x32xf32>, vector<1x32xf32> -> vector<1x32xf32>
    %186 = arith.addf %185, %27 : vector<1x32xf32>
    %cst_89 = arith.constant dense<0.000000e+00> : vector<1x32xf32>
    %187 = tpu.matmul %153, %22, %cst_89 {dimension_numbers = #tpu.dot_dimension_numbers<[1], [0], [0], [1], [0, 0, 1, 1], [], []>} : vector<1x32xf32>, vector<32x32xf32>, vector<1x32xf32> -> vector<1x32xf32>
    %cst_90 = arith.constant dense<0.000000e+00> : vector<1x32xf32>
    %188 = tpu.matmul %153, %23, %cst_90 {dimension_numbers = #tpu.dot_dimension_numbers<[1], [0], [0], [1], [0, 0, 1, 1], [], []>} : vector<1x32xf32>, vector<32x32xf32>, vector<1x32xf32> -> vector<1x32xf32>
    %cst_91 = arith.constant dense<0.000000e+00> : vector<1x32xf32>
    %189 = tpu.matmul %153, %24, %cst_91 {dimension_numbers = #tpu.dot_dimension_numbers<[1], [0], [0], [1], [0, 0, 1, 1], [], []>} : vector<1x32xf32>, vector<32x32xf32>, vector<1x32xf32> -> vector<1x32xf32>
    %190 = arith.addf %182, %187 : vector<1x32xf32>
    %191 = arith.negf %190 : vector<1x32xf32>
    %192 = math.exp %191 : vector<1x32xf32>
    %cst_92 = arith.constant 1.000000e+00 : f32
    %193 = vector.broadcast %cst_92 : f32 to vector<1x32xf32>
    %194 = arith.addf %193, %192 : vector<1x32xf32>
    %195 = arith.divf %193, %194 : vector<1x32xf32>
    %196 = arith.addf %184, %188 : vector<1x32xf32>
    %197 = arith.negf %196 : vector<1x32xf32>
    %198 = math.exp %197 : vector<1x32xf32>
    %cst_93 = arith.constant 1.000000e+00 : f32
    %199 = vector.broadcast %cst_93 : f32 to vector<1x32xf32>
    %200 = arith.addf %199, %198 : vector<1x32xf32>
    %201 = arith.divf %199, %200 : vector<1x32xf32>
    %202 = arith.addf %189, %28 : vector<1x32xf32>
    %203 = arith.mulf %195, %202 : vector<1x32xf32>
    %204 = arith.addf %186, %203 : vector<1x32xf32>
    %205 = math.tanh %204 : vector<1x32xf32>
    %cst_94 = arith.constant 1.000000e+00 : f32
    %206 = vector.broadcast %cst_94 : f32 to vector<1x32xf32>
    %207 = arith.subf %206, %201 : vector<1x32xf32>
    %208 = arith.mulf %207, %205 : vector<1x32xf32>
    %209 = arith.mulf %201, %153 : vector<1x32xf32>
    %210 = arith.addf %208, %209 : vector<1x32xf32>
    %211 = vector.extract_strided_slice %31 {offsets = [3, 0], sizes = [1, 32], strides = [1, 1]} : vector<8x32xf32> to vector<1x32xf32>
    %212 = vector.extract_strided_slice %34 {offsets = [3, 0], sizes = [1, 32], strides = [1, 1]} : vector<8x32xf32> to vector<1x32xf32>
    %213 = vector.extract_strided_slice %37 {offsets = [3, 0], sizes = [1, 32], strides = [1, 1]} : vector<8x32xf32> to vector<1x32xf32>
    %cst_95 = arith.constant dense<0.000000e+00> : vector<1x32xf32>
    %214 = tpu.matmul %180, %12, %cst_95 {dimension_numbers = #tpu.dot_dimension_numbers<[1], [0], [0], [1], [0, 0, 1, 1], [], []>} : vector<1x32xf32>, vector<32x32xf32>, vector<1x32xf32> -> vector<1x32xf32>
    %cst_96 = arith.constant dense<0.000000e+00> : vector<1x32xf32>
    %215 = tpu.matmul %180, %13, %cst_96 {dimension_numbers = #tpu.dot_dimension_numbers<[1], [0], [0], [1], [0, 0, 1, 1], [], []>} : vector<1x32xf32>, vector<32x32xf32>, vector<1x32xf32> -> vector<1x32xf32>
    %cst_97 = arith.constant dense<0.000000e+00> : vector<1x32xf32>
    %216 = tpu.matmul %180, %14, %cst_97 {dimension_numbers = #tpu.dot_dimension_numbers<[1], [0], [0], [1], [0, 0, 1, 1], [], []>} : vector<1x32xf32>, vector<32x32xf32>, vector<1x32xf32> -> vector<1x32xf32>
    %217 = arith.addf %211, %214 : vector<1x32xf32>
    %218 = arith.negf %217 : vector<1x32xf32>
    %219 = math.exp %218 : vector<1x32xf32>
    %cst_98 = arith.constant 1.000000e+00 : f32
    %220 = vector.broadcast %cst_98 : f32 to vector<1x32xf32>
    %221 = arith.addf %220, %219 : vector<1x32xf32>
    %222 = arith.divf %220, %221 : vector<1x32xf32>
    %223 = arith.addf %212, %215 : vector<1x32xf32>
    %224 = arith.negf %223 : vector<1x32xf32>
    %225 = math.exp %224 : vector<1x32xf32>
    %cst_99 = arith.constant 1.000000e+00 : f32
    %226 = vector.broadcast %cst_99 : f32 to vector<1x32xf32>
    %227 = arith.addf %226, %225 : vector<1x32xf32>
    %228 = arith.divf %226, %227 : vector<1x32xf32>
    %229 = arith.addf %216, %18 : vector<1x32xf32>
    %230 = arith.mulf %222, %229 : vector<1x32xf32>
    %231 = arith.addf %213, %230 : vector<1x32xf32>
    %232 = math.tanh %231 : vector<1x32xf32>
    %cst_100 = arith.constant 1.000000e+00 : f32
    %233 = vector.broadcast %cst_100 : f32 to vector<1x32xf32>
    %234 = arith.subf %233, %228 : vector<1x32xf32>
    %235 = arith.mulf %234, %232 : vector<1x32xf32>
    %236 = arith.mulf %228, %180 : vector<1x32xf32>
    %237 = arith.addf %235, %236 : vector<1x32xf32>
    %cst_101 = arith.constant dense<0.000000e+00> : vector<1x32xf32>
    %238 = tpu.matmul %237, %19, %cst_101 {dimension_numbers = #tpu.dot_dimension_numbers<[1], [0], [0], [1], [0, 0, 1, 1], [], []>} : vector<1x32xf32>, vector<32x32xf32>, vector<1x32xf32> -> vector<1x32xf32>
    %239 = arith.addf %238, %25 : vector<1x32xf32>
    %cst_102 = arith.constant dense<0.000000e+00> : vector<1x32xf32>
    %240 = tpu.matmul %237, %20, %cst_102 {dimension_numbers = #tpu.dot_dimension_numbers<[1], [0], [0], [1], [0, 0, 1, 1], [], []>} : vector<1x32xf32>, vector<32x32xf32>, vector<1x32xf32> -> vector<1x32xf32>
    %241 = arith.addf %240, %26 : vector<1x32xf32>
    %cst_103 = arith.constant dense<0.000000e+00> : vector<1x32xf32>
    %242 = tpu.matmul %237, %21, %cst_103 {dimension_numbers = #tpu.dot_dimension_numbers<[1], [0], [0], [1], [0, 0, 1, 1], [], []>} : vector<1x32xf32>, vector<32x32xf32>, vector<1x32xf32> -> vector<1x32xf32>
    %243 = arith.addf %242, %27 : vector<1x32xf32>
    %cst_104 = arith.constant dense<0.000000e+00> : vector<1x32xf32>
    %244 = tpu.matmul %210, %22, %cst_104 {dimension_numbers = #tpu.dot_dimension_numbers<[1], [0], [0], [1], [0, 0, 1, 1], [], []>} : vector<1x32xf32>, vector<32x32xf32>, vector<1x32xf32> -> vector<1x32xf32>
    %cst_105 = arith.constant dense<0.000000e+00> : vector<1x32xf32>
    %245 = tpu.matmul %210, %23, %cst_105 {dimension_numbers = #tpu.dot_dimension_numbers<[1], [0], [0], [1], [0, 0, 1, 1], [], []>} : vector<1x32xf32>, vector<32x32xf32>, vector<1x32xf32> -> vector<1x32xf32>
    %cst_106 = arith.constant dense<0.000000e+00> : vector<1x32xf32>
    %246 = tpu.matmul %210, %24, %cst_106 {dimension_numbers = #tpu.dot_dimension_numbers<[1], [0], [0], [1], [0, 0, 1, 1], [], []>} : vector<1x32xf32>, vector<32x32xf32>, vector<1x32xf32> -> vector<1x32xf32>
    %247 = arith.addf %239, %244 : vector<1x32xf32>
    %248 = arith.negf %247 : vector<1x32xf32>
    %249 = math.exp %248 : vector<1x32xf32>
    %cst_107 = arith.constant 1.000000e+00 : f32
    %250 = vector.broadcast %cst_107 : f32 to vector<1x32xf32>
    %251 = arith.addf %250, %249 : vector<1x32xf32>
    %252 = arith.divf %250, %251 : vector<1x32xf32>
    %253 = arith.addf %241, %245 : vector<1x32xf32>
    %254 = arith.negf %253 : vector<1x32xf32>
    %255 = math.exp %254 : vector<1x32xf32>
    %cst_108 = arith.constant 1.000000e+00 : f32
    %256 = vector.broadcast %cst_108 : f32 to vector<1x32xf32>
    %257 = arith.addf %256, %255 : vector<1x32xf32>
    %258 = arith.divf %256, %257 : vector<1x32xf32>
    %259 = arith.addf %246, %28 : vector<1x32xf32>
    %260 = arith.mulf %252, %259 : vector<1x32xf32>
    %261 = arith.addf %243, %260 : vector<1x32xf32>
    %262 = math.tanh %261 : vector<1x32xf32>
    %cst_109 = arith.constant 1.000000e+00 : f32
    %263 = vector.broadcast %cst_109 : f32 to vector<1x32xf32>
    %264 = arith.subf %263, %258 : vector<1x32xf32>
    %265 = arith.mulf %264, %262 : vector<1x32xf32>
    %266 = arith.mulf %258, %210 : vector<1x32xf32>
    %267 = arith.addf %265, %266 : vector<1x32xf32>
    %268 = vector.extract_strided_slice %31 {offsets = [4, 0], sizes = [1, 32], strides = [1, 1]} : vector<8x32xf32> to vector<1x32xf32>
    %269 = vector.extract_strided_slice %34 {offsets = [4, 0], sizes = [1, 32], strides = [1, 1]} : vector<8x32xf32> to vector<1x32xf32>
    %270 = vector.extract_strided_slice %37 {offsets = [4, 0], sizes = [1, 32], strides = [1, 1]} : vector<8x32xf32> to vector<1x32xf32>
    %cst_110 = arith.constant dense<0.000000e+00> : vector<1x32xf32>
    %271 = tpu.matmul %237, %12, %cst_110 {dimension_numbers = #tpu.dot_dimension_numbers<[1], [0], [0], [1], [0, 0, 1, 1], [], []>} : vector<1x32xf32>, vector<32x32xf32>, vector<1x32xf32> -> vector<1x32xf32>
    %cst_111 = arith.constant dense<0.000000e+00> : vector<1x32xf32>
    %272 = tpu.matmul %237, %13, %cst_111 {dimension_numbers = #tpu.dot_dimension_numbers<[1], [0], [0], [1], [0, 0, 1, 1], [], []>} : vector<1x32xf32>, vector<32x32xf32>, vector<1x32xf32> -> vector<1x32xf32>
    %cst_112 = arith.constant dense<0.000000e+00> : vector<1x32xf32>
    %273 = tpu.matmul %237, %14, %cst_112 {dimension_numbers = #tpu.dot_dimension_numbers<[1], [0], [0], [1], [0, 0, 1, 1], [], []>} : vector<1x32xf32>, vector<32x32xf32>, vector<1x32xf32> -> vector<1x32xf32>
    %274 = arith.addf %268, %271 : vector<1x32xf32>
    %275 = arith.negf %274 : vector<1x32xf32>
    %276 = math.exp %275 : vector<1x32xf32>
    %cst_113 = arith.constant 1.000000e+00 : f32
    %277 = vector.broadcast %cst_113 : f32 to vector<1x32xf32>
    %278 = arith.addf %277, %276 : vector<1x32xf32>
    %279 = arith.divf %277, %278 : vector<1x32xf32>
    %280 = arith.addf %269, %272 : vector<1x32xf32>
    %281 = arith.negf %280 : vector<1x32xf32>
    %282 = math.exp %281 : vector<1x32xf32>
    %cst_114 = arith.constant 1.000000e+00 : f32
    %283 = vector.broadcast %cst_114 : f32 to vector<1x32xf32>
    %284 = arith.addf %283, %282 : vector<1x32xf32>
    %285 = arith.divf %283, %284 : vector<1x32xf32>
    %286 = arith.addf %273, %18 : vector<1x32xf32>
    %287 = arith.mulf %279, %286 : vector<1x32xf32>
    %288 = arith.addf %270, %287 : vector<1x32xf32>
    %289 = math.tanh %288 : vector<1x32xf32>
    %cst_115 = arith.constant 1.000000e+00 : f32
    %290 = vector.broadcast %cst_115 : f32 to vector<1x32xf32>
    %291 = arith.subf %290, %285 : vector<1x32xf32>
    %292 = arith.mulf %291, %289 : vector<1x32xf32>
    %293 = arith.mulf %285, %237 : vector<1x32xf32>
    %294 = arith.addf %292, %293 : vector<1x32xf32>
    %cst_116 = arith.constant dense<0.000000e+00> : vector<1x32xf32>
    %295 = tpu.matmul %294, %19, %cst_116 {dimension_numbers = #tpu.dot_dimension_numbers<[1], [0], [0], [1], [0, 0, 1, 1], [], []>} : vector<1x32xf32>, vector<32x32xf32>, vector<1x32xf32> -> vector<1x32xf32>
    %296 = arith.addf %295, %25 : vector<1x32xf32>
    %cst_117 = arith.constant dense<0.000000e+00> : vector<1x32xf32>
    %297 = tpu.matmul %294, %20, %cst_117 {dimension_numbers = #tpu.dot_dimension_numbers<[1], [0], [0], [1], [0, 0, 1, 1], [], []>} : vector<1x32xf32>, vector<32x32xf32>, vector<1x32xf32> -> vector<1x32xf32>
    %298 = arith.addf %297, %26 : vector<1x32xf32>
    %cst_118 = arith.constant dense<0.000000e+00> : vector<1x32xf32>
    %299 = tpu.matmul %294, %21, %cst_118 {dimension_numbers = #tpu.dot_dimension_numbers<[1], [0], [0], [1], [0, 0, 1, 1], [], []>} : vector<1x32xf32>, vector<32x32xf32>, vector<1x32xf32> -> vector<1x32xf32>
    %300 = arith.addf %299, %27 : vector<1x32xf32>
    %cst_119 = arith.constant dense<0.000000e+00> : vector<1x32xf32>
    %301 = tpu.matmul %267, %22, %cst_119 {dimension_numbers = #tpu.dot_dimension_numbers<[1], [0], [0], [1], [0, 0, 1, 1], [], []>} : vector<1x32xf32>, vector<32x32xf32>, vector<1x32xf32> -> vector<1x32xf32>
    %cst_120 = arith.constant dense<0.000000e+00> : vector<1x32xf32>
    %302 = tpu.matmul %267, %23, %cst_120 {dimension_numbers = #tpu.dot_dimension_numbers<[1], [0], [0], [1], [0, 0, 1, 1], [], []>} : vector<1x32xf32>, vector<32x32xf32>, vector<1x32xf32> -> vector<1x32xf32>
    %cst_121 = arith.constant dense<0.000000e+00> : vector<1x32xf32>
    %303 = tpu.matmul %267, %24, %cst_121 {dimension_numbers = #tpu.dot_dimension_numbers<[1], [0], [0], [1], [0, 0, 1, 1], [], []>} : vector<1x32xf32>, vector<32x32xf32>, vector<1x32xf32> -> vector<1x32xf32>
    %304 = arith.addf %296, %301 : vector<1x32xf32>
    %305 = arith.negf %304 : vector<1x32xf32>
    %306 = math.exp %305 : vector<1x32xf32>
    %cst_122 = arith.constant 1.000000e+00 : f32
    %307 = vector.broadcast %cst_122 : f32 to vector<1x32xf32>
    %308 = arith.addf %307, %306 : vector<1x32xf32>
    %309 = arith.divf %307, %308 : vector<1x32xf32>
    %310 = arith.addf %298, %302 : vector<1x32xf32>
    %311 = arith.negf %310 : vector<1x32xf32>
    %312 = math.exp %311 : vector<1x32xf32>
    %cst_123 = arith.constant 1.000000e+00 : f32
    %313 = vector.broadcast %cst_123 : f32 to vector<1x32xf32>
    %314 = arith.addf %313, %312 : vector<1x32xf32>
    %315 = arith.divf %313, %314 : vector<1x32xf32>
    %316 = arith.addf %303, %28 : vector<1x32xf32>
    %317 = arith.mulf %309, %316 : vector<1x32xf32>
    %318 = arith.addf %300, %317 : vector<1x32xf32>
    %319 = math.tanh %318 : vector<1x32xf32>
    %cst_124 = arith.constant 1.000000e+00 : f32
    %320 = vector.broadcast %cst_124 : f32 to vector<1x32xf32>
    %321 = arith.subf %320, %315 : vector<1x32xf32>
    %322 = arith.mulf %321, %319 : vector<1x32xf32>
    %323 = arith.mulf %315, %267 : vector<1x32xf32>
    %324 = arith.addf %322, %323 : vector<1x32xf32>
    %325 = vector.extract_strided_slice %31 {offsets = [5, 0], sizes = [1, 32], strides = [1, 1]} : vector<8x32xf32> to vector<1x32xf32>
    %326 = vector.extract_strided_slice %34 {offsets = [5, 0], sizes = [1, 32], strides = [1, 1]} : vector<8x32xf32> to vector<1x32xf32>
    %327 = vector.extract_strided_slice %37 {offsets = [5, 0], sizes = [1, 32], strides = [1, 1]} : vector<8x32xf32> to vector<1x32xf32>
    %cst_125 = arith.constant dense<0.000000e+00> : vector<1x32xf32>
    %328 = tpu.matmul %294, %12, %cst_125 {dimension_numbers = #tpu.dot_dimension_numbers<[1], [0], [0], [1], [0, 0, 1, 1], [], []>} : vector<1x32xf32>, vector<32x32xf32>, vector<1x32xf32> -> vector<1x32xf32>
    %cst_126 = arith.constant dense<0.000000e+00> : vector<1x32xf32>
    %329 = tpu.matmul %294, %13, %cst_126 {dimension_numbers = #tpu.dot_dimension_numbers<[1], [0], [0], [1], [0, 0, 1, 1], [], []>} : vector<1x32xf32>, vector<32x32xf32>, vector<1x32xf32> -> vector<1x32xf32>
    %cst_127 = arith.constant dense<0.000000e+00> : vector<1x32xf32>
    %330 = tpu.matmul %294, %14, %cst_127 {dimension_numbers = #tpu.dot_dimension_numbers<[1], [0], [0], [1], [0, 0, 1, 1], [], []>} : vector<1x32xf32>, vector<32x32xf32>, vector<1x32xf32> -> vector<1x32xf32>
    %331 = arith.addf %325, %328 : vector<1x32xf32>
    %332 = arith.negf %331 : vector<1x32xf32>
    %333 = math.exp %332 : vector<1x32xf32>
    %cst_128 = arith.constant 1.000000e+00 : f32
    %334 = vector.broadcast %cst_128 : f32 to vector<1x32xf32>
    %335 = arith.addf %334, %333 : vector<1x32xf32>
    %336 = arith.divf %334, %335 : vector<1x32xf32>
    %337 = arith.addf %326, %329 : vector<1x32xf32>
    %338 = arith.negf %337 : vector<1x32xf32>
    %339 = math.exp %338 : vector<1x32xf32>
    %cst_129 = arith.constant 1.000000e+00 : f32
    %340 = vector.broadcast %cst_129 : f32 to vector<1x32xf32>
    %341 = arith.addf %340, %339 : vector<1x32xf32>
    %342 = arith.divf %340, %341 : vector<1x32xf32>
    %343 = arith.addf %330, %18 : vector<1x32xf32>
    %344 = arith.mulf %336, %343 : vector<1x32xf32>
    %345 = arith.addf %327, %344 : vector<1x32xf32>
    %346 = math.tanh %345 : vector<1x32xf32>
    %cst_130 = arith.constant 1.000000e+00 : f32
    %347 = vector.broadcast %cst_130 : f32 to vector<1x32xf32>
    %348 = arith.subf %347, %342 : vector<1x32xf32>
    %349 = arith.mulf %348, %346 : vector<1x32xf32>
    %350 = arith.mulf %342, %294 : vector<1x32xf32>
    %351 = arith.addf %349, %350 : vector<1x32xf32>
    %cst_131 = arith.constant dense<0.000000e+00> : vector<1x32xf32>
    %352 = tpu.matmul %351, %19, %cst_131 {dimension_numbers = #tpu.dot_dimension_numbers<[1], [0], [0], [1], [0, 0, 1, 1], [], []>} : vector<1x32xf32>, vector<32x32xf32>, vector<1x32xf32> -> vector<1x32xf32>
    %353 = arith.addf %352, %25 : vector<1x32xf32>
    %cst_132 = arith.constant dense<0.000000e+00> : vector<1x32xf32>
    %354 = tpu.matmul %351, %20, %cst_132 {dimension_numbers = #tpu.dot_dimension_numbers<[1], [0], [0], [1], [0, 0, 1, 1], [], []>} : vector<1x32xf32>, vector<32x32xf32>, vector<1x32xf32> -> vector<1x32xf32>
    %355 = arith.addf %354, %26 : vector<1x32xf32>
    %cst_133 = arith.constant dense<0.000000e+00> : vector<1x32xf32>
    %356 = tpu.matmul %351, %21, %cst_133 {dimension_numbers = #tpu.dot_dimension_numbers<[1], [0], [0], [1], [0, 0, 1, 1], [], []>} : vector<1x32xf32>, vector<32x32xf32>, vector<1x32xf32> -> vector<1x32xf32>
    %357 = arith.addf %356, %27 : vector<1x32xf32>
    %cst_134 = arith.constant dense<0.000000e+00> : vector<1x32xf32>
    %358 = tpu.matmul %324, %22, %cst_134 {dimension_numbers = #tpu.dot_dimension_numbers<[1], [0], [0], [1], [0, 0, 1, 1], [], []>} : vector<1x32xf32>, vector<32x32xf32>, vector<1x32xf32> -> vector<1x32xf32>
    %cst_135 = arith.constant dense<0.000000e+00> : vector<1x32xf32>
    %359 = tpu.matmul %324, %23, %cst_135 {dimension_numbers = #tpu.dot_dimension_numbers<[1], [0], [0], [1], [0, 0, 1, 1], [], []>} : vector<1x32xf32>, vector<32x32xf32>, vector<1x32xf32> -> vector<1x32xf32>
    %cst_136 = arith.constant dense<0.000000e+00> : vector<1x32xf32>
    %360 = tpu.matmul %324, %24, %cst_136 {dimension_numbers = #tpu.dot_dimension_numbers<[1], [0], [0], [1], [0, 0, 1, 1], [], []>} : vector<1x32xf32>, vector<32x32xf32>, vector<1x32xf32> -> vector<1x32xf32>
    %361 = arith.addf %353, %358 : vector<1x32xf32>
    %362 = arith.negf %361 : vector<1x32xf32>
    %363 = math.exp %362 : vector<1x32xf32>
    %cst_137 = arith.constant 1.000000e+00 : f32
    %364 = vector.broadcast %cst_137 : f32 to vector<1x32xf32>
    %365 = arith.addf %364, %363 : vector<1x32xf32>
    %366 = arith.divf %364, %365 : vector<1x32xf32>
    %367 = arith.addf %355, %359 : vector<1x32xf32>
    %368 = arith.negf %367 : vector<1x32xf32>
    %369 = math.exp %368 : vector<1x32xf32>
    %cst_138 = arith.constant 1.000000e+00 : f32
    %370 = vector.broadcast %cst_138 : f32 to vector<1x32xf32>
    %371 = arith.addf %370, %369 : vector<1x32xf32>
    %372 = arith.divf %370, %371 : vector<1x32xf32>
    %373 = arith.addf %360, %28 : vector<1x32xf32>
    %374 = arith.mulf %366, %373 : vector<1x32xf32>
    %375 = arith.addf %357, %374 : vector<1x32xf32>
    %376 = math.tanh %375 : vector<1x32xf32>
    %cst_139 = arith.constant 1.000000e+00 : f32
    %377 = vector.broadcast %cst_139 : f32 to vector<1x32xf32>
    %378 = arith.subf %377, %372 : vector<1x32xf32>
    %379 = arith.mulf %378, %376 : vector<1x32xf32>
    %380 = arith.mulf %372, %324 : vector<1x32xf32>
    %381 = arith.addf %379, %380 : vector<1x32xf32>
    %382 = vector.extract_strided_slice %31 {offsets = [6, 0], sizes = [1, 32], strides = [1, 1]} : vector<8x32xf32> to vector<1x32xf32>
    %383 = vector.extract_strided_slice %34 {offsets = [6, 0], sizes = [1, 32], strides = [1, 1]} : vector<8x32xf32> to vector<1x32xf32>
    %384 = vector.extract_strided_slice %37 {offsets = [6, 0], sizes = [1, 32], strides = [1, 1]} : vector<8x32xf32> to vector<1x32xf32>
    %cst_140 = arith.constant dense<0.000000e+00> : vector<1x32xf32>
    %385 = tpu.matmul %351, %12, %cst_140 {dimension_numbers = #tpu.dot_dimension_numbers<[1], [0], [0], [1], [0, 0, 1, 1], [], []>} : vector<1x32xf32>, vector<32x32xf32>, vector<1x32xf32> -> vector<1x32xf32>
    %cst_141 = arith.constant dense<0.000000e+00> : vector<1x32xf32>
    %386 = tpu.matmul %351, %13, %cst_141 {dimension_numbers = #tpu.dot_dimension_numbers<[1], [0], [0], [1], [0, 0, 1, 1], [], []>} : vector<1x32xf32>, vector<32x32xf32>, vector<1x32xf32> -> vector<1x32xf32>
    %cst_142 = arith.constant dense<0.000000e+00> : vector<1x32xf32>
    %387 = tpu.matmul %351, %14, %cst_142 {dimension_numbers = #tpu.dot_dimension_numbers<[1], [0], [0], [1], [0, 0, 1, 1], [], []>} : vector<1x32xf32>, vector<32x32xf32>, vector<1x32xf32> -> vector<1x32xf32>
    %388 = arith.addf %382, %385 : vector<1x32xf32>
    %389 = arith.negf %388 : vector<1x32xf32>
    %390 = math.exp %389 : vector<1x32xf32>
    %cst_143 = arith.constant 1.000000e+00 : f32
    %391 = vector.broadcast %cst_143 : f32 to vector<1x32xf32>
    %392 = arith.addf %391, %390 : vector<1x32xf32>
    %393 = arith.divf %391, %392 : vector<1x32xf32>
    %394 = arith.addf %383, %386 : vector<1x32xf32>
    %395 = arith.negf %394 : vector<1x32xf32>
    %396 = math.exp %395 : vector<1x32xf32>
    %cst_144 = arith.constant 1.000000e+00 : f32
    %397 = vector.broadcast %cst_144 : f32 to vector<1x32xf32>
    %398 = arith.addf %397, %396 : vector<1x32xf32>
    %399 = arith.divf %397, %398 : vector<1x32xf32>
    %400 = arith.addf %387, %18 : vector<1x32xf32>
    %401 = arith.mulf %393, %400 : vector<1x32xf32>
    %402 = arith.addf %384, %401 : vector<1x32xf32>
    %403 = math.tanh %402 : vector<1x32xf32>
    %cst_145 = arith.constant 1.000000e+00 : f32
    %404 = vector.broadcast %cst_145 : f32 to vector<1x32xf32>
    %405 = arith.subf %404, %399 : vector<1x32xf32>
    %406 = arith.mulf %405, %403 : vector<1x32xf32>
    %407 = arith.mulf %399, %351 : vector<1x32xf32>
    %408 = arith.addf %406, %407 : vector<1x32xf32>
    %cst_146 = arith.constant dense<0.000000e+00> : vector<1x32xf32>
    %409 = tpu.matmul %408, %19, %cst_146 {dimension_numbers = #tpu.dot_dimension_numbers<[1], [0], [0], [1], [0, 0, 1, 1], [], []>} : vector<1x32xf32>, vector<32x32xf32>, vector<1x32xf32> -> vector<1x32xf32>
    %410 = arith.addf %409, %25 : vector<1x32xf32>
    %cst_147 = arith.constant dense<0.000000e+00> : vector<1x32xf32>
    %411 = tpu.matmul %408, %20, %cst_147 {dimension_numbers = #tpu.dot_dimension_numbers<[1], [0], [0], [1], [0, 0, 1, 1], [], []>} : vector<1x32xf32>, vector<32x32xf32>, vector<1x32xf32> -> vector<1x32xf32>
    %412 = arith.addf %411, %26 : vector<1x32xf32>
    %cst_148 = arith.constant dense<0.000000e+00> : vector<1x32xf32>
    %413 = tpu.matmul %408, %21, %cst_148 {dimension_numbers = #tpu.dot_dimension_numbers<[1], [0], [0], [1], [0, 0, 1, 1], [], []>} : vector<1x32xf32>, vector<32x32xf32>, vector<1x32xf32> -> vector<1x32xf32>
    %414 = arith.addf %413, %27 : vector<1x32xf32>
    %cst_149 = arith.constant dense<0.000000e+00> : vector<1x32xf32>
    %415 = tpu.matmul %381, %22, %cst_149 {dimension_numbers = #tpu.dot_dimension_numbers<[1], [0], [0], [1], [0, 0, 1, 1], [], []>} : vector<1x32xf32>, vector<32x32xf32>, vector<1x32xf32> -> vector<1x32xf32>
    %cst_150 = arith.constant dense<0.000000e+00> : vector<1x32xf32>
    %416 = tpu.matmul %381, %23, %cst_150 {dimension_numbers = #tpu.dot_dimension_numbers<[1], [0], [0], [1], [0, 0, 1, 1], [], []>} : vector<1x32xf32>, vector<32x32xf32>, vector<1x32xf32> -> vector<1x32xf32>
    %cst_151 = arith.constant dense<0.000000e+00> : vector<1x32xf32>
    %417 = tpu.matmul %381, %24, %cst_151 {dimension_numbers = #tpu.dot_dimension_numbers<[1], [0], [0], [1], [0, 0, 1, 1], [], []>} : vector<1x32xf32>, vector<32x32xf32>, vector<1x32xf32> -> vector<1x32xf32>
    %418 = arith.addf %410, %415 : vector<1x32xf32>
    %419 = arith.negf %418 : vector<1x32xf32>
    %420 = math.exp %419 : vector<1x32xf32>
    %cst_152 = arith.constant 1.000000e+00 : f32
    %421 = vector.broadcast %cst_152 : f32 to vector<1x32xf32>
    %422 = arith.addf %421, %420 : vector<1x32xf32>
    %423 = arith.divf %421, %422 : vector<1x32xf32>
    %424 = arith.addf %412, %416 : vector<1x32xf32>
    %425 = arith.negf %424 : vector<1x32xf32>
    %426 = math.exp %425 : vector<1x32xf32>
    %cst_153 = arith.constant 1.000000e+00 : f32
    %427 = vector.broadcast %cst_153 : f32 to vector<1x32xf32>
    %428 = arith.addf %427, %426 : vector<1x32xf32>
    %429 = arith.divf %427, %428 : vector<1x32xf32>
    %430 = arith.addf %417, %28 : vector<1x32xf32>
    %431 = arith.mulf %423, %430 : vector<1x32xf32>
    %432 = arith.addf %414, %431 : vector<1x32xf32>
    %433 = math.tanh %432 : vector<1x32xf32>
    %cst_154 = arith.constant 1.000000e+00 : f32
    %434 = vector.broadcast %cst_154 : f32 to vector<1x32xf32>
    %435 = arith.subf %434, %429 : vector<1x32xf32>
    %436 = arith.mulf %435, %433 : vector<1x32xf32>
    %437 = arith.mulf %429, %381 : vector<1x32xf32>
    %438 = arith.addf %436, %437 : vector<1x32xf32>
    %439 = vector.extract_strided_slice %31 {offsets = [7, 0], sizes = [1, 32], strides = [1, 1]} : vector<8x32xf32> to vector<1x32xf32>
    %440 = vector.extract_strided_slice %34 {offsets = [7, 0], sizes = [1, 32], strides = [1, 1]} : vector<8x32xf32> to vector<1x32xf32>
    %441 = vector.extract_strided_slice %37 {offsets = [7, 0], sizes = [1, 32], strides = [1, 1]} : vector<8x32xf32> to vector<1x32xf32>
    %cst_155 = arith.constant dense<0.000000e+00> : vector<1x32xf32>
    %442 = tpu.matmul %408, %12, %cst_155 {dimension_numbers = #tpu.dot_dimension_numbers<[1], [0], [0], [1], [0, 0, 1, 1], [], []>} : vector<1x32xf32>, vector<32x32xf32>, vector<1x32xf32> -> vector<1x32xf32>
    %cst_156 = arith.constant dense<0.000000e+00> : vector<1x32xf32>
    %443 = tpu.matmul %408, %13, %cst_156 {dimension_numbers = #tpu.dot_dimension_numbers<[1], [0], [0], [1], [0, 0, 1, 1], [], []>} : vector<1x32xf32>, vector<32x32xf32>, vector<1x32xf32> -> vector<1x32xf32>
    %cst_157 = arith.constant dense<0.000000e+00> : vector<1x32xf32>
    %444 = tpu.matmul %408, %14, %cst_157 {dimension_numbers = #tpu.dot_dimension_numbers<[1], [0], [0], [1], [0, 0, 1, 1], [], []>} : vector<1x32xf32>, vector<32x32xf32>, vector<1x32xf32> -> vector<1x32xf32>
    %445 = arith.addf %439, %442 : vector<1x32xf32>
    %446 = arith.negf %445 : vector<1x32xf32>
    %447 = math.exp %446 : vector<1x32xf32>
    %cst_158 = arith.constant 1.000000e+00 : f32
    %448 = vector.broadcast %cst_158 : f32 to vector<1x32xf32>
    %449 = arith.addf %448, %447 : vector<1x32xf32>
    %450 = arith.divf %448, %449 : vector<1x32xf32>
    %451 = arith.addf %440, %443 : vector<1x32xf32>
    %452 = arith.negf %451 : vector<1x32xf32>
    %453 = math.exp %452 : vector<1x32xf32>
    %cst_159 = arith.constant 1.000000e+00 : f32
    %454 = vector.broadcast %cst_159 : f32 to vector<1x32xf32>
    %455 = arith.addf %454, %453 : vector<1x32xf32>
    %456 = arith.divf %454, %455 : vector<1x32xf32>
    %457 = arith.addf %444, %18 : vector<1x32xf32>
    %458 = arith.mulf %450, %457 : vector<1x32xf32>
    %459 = arith.addf %441, %458 : vector<1x32xf32>
    %460 = math.tanh %459 : vector<1x32xf32>
    %cst_160 = arith.constant 1.000000e+00 : f32
    %461 = vector.broadcast %cst_160 : f32 to vector<1x32xf32>
    %462 = arith.subf %461, %456 : vector<1x32xf32>
    %463 = arith.mulf %462, %460 : vector<1x32xf32>
    %464 = arith.mulf %456, %408 : vector<1x32xf32>
    %465 = arith.addf %463, %464 : vector<1x32xf32>
    %cst_161 = arith.constant dense<0.000000e+00> : vector<1x32xf32>
    %466 = tpu.matmul %465, %19, %cst_161 {dimension_numbers = #tpu.dot_dimension_numbers<[1], [0], [0], [1], [0, 0, 1, 1], [], []>} : vector<1x32xf32>, vector<32x32xf32>, vector<1x32xf32> -> vector<1x32xf32>
    %467 = arith.addf %466, %25 : vector<1x32xf32>
    %cst_162 = arith.constant dense<0.000000e+00> : vector<1x32xf32>
    %468 = tpu.matmul %465, %20, %cst_162 {dimension_numbers = #tpu.dot_dimension_numbers<[1], [0], [0], [1], [0, 0, 1, 1], [], []>} : vector<1x32xf32>, vector<32x32xf32>, vector<1x32xf32> -> vector<1x32xf32>
    %469 = arith.addf %468, %26 : vector<1x32xf32>
    %cst_163 = arith.constant dense<0.000000e+00> : vector<1x32xf32>
    %470 = tpu.matmul %465, %21, %cst_163 {dimension_numbers = #tpu.dot_dimension_numbers<[1], [0], [0], [1], [0, 0, 1, 1], [], []>} : vector<1x32xf32>, vector<32x32xf32>, vector<1x32xf32> -> vector<1x32xf32>
    %471 = arith.addf %470, %27 : vector<1x32xf32>
    %cst_164 = arith.constant dense<0.000000e+00> : vector<1x32xf32>
    %472 = tpu.matmul %438, %22, %cst_164 {dimension_numbers = #tpu.dot_dimension_numbers<[1], [0], [0], [1], [0, 0, 1, 1], [], []>} : vector<1x32xf32>, vector<32x32xf32>, vector<1x32xf32> -> vector<1x32xf32>
    %cst_165 = arith.constant dense<0.000000e+00> : vector<1x32xf32>
    %473 = tpu.matmul %438, %23, %cst_165 {dimension_numbers = #tpu.dot_dimension_numbers<[1], [0], [0], [1], [0, 0, 1, 1], [], []>} : vector<1x32xf32>, vector<32x32xf32>, vector<1x32xf32> -> vector<1x32xf32>
    %cst_166 = arith.constant dense<0.000000e+00> : vector<1x32xf32>
    %474 = tpu.matmul %438, %24, %cst_166 {dimension_numbers = #tpu.dot_dimension_numbers<[1], [0], [0], [1], [0, 0, 1, 1], [], []>} : vector<1x32xf32>, vector<32x32xf32>, vector<1x32xf32> -> vector<1x32xf32>
    %475 = arith.addf %467, %472 : vector<1x32xf32>
    %476 = arith.negf %475 : vector<1x32xf32>
    %477 = math.exp %476 : vector<1x32xf32>
    %cst_167 = arith.constant 1.000000e+00 : f32
    %478 = vector.broadcast %cst_167 : f32 to vector<1x32xf32>
    %479 = arith.addf %478, %477 : vector<1x32xf32>
    %480 = arith.divf %478, %479 : vector<1x32xf32>
    %481 = arith.addf %469, %473 : vector<1x32xf32>
    %482 = arith.negf %481 : vector<1x32xf32>
    %483 = math.exp %482 : vector<1x32xf32>
    %cst_168 = arith.constant 1.000000e+00 : f32
    %484 = vector.broadcast %cst_168 : f32 to vector<1x32xf32>
    %485 = arith.addf %484, %483 : vector<1x32xf32>
    %486 = arith.divf %484, %485 : vector<1x32xf32>
    %487 = arith.addf %474, %28 : vector<1x32xf32>
    %488 = arith.mulf %480, %487 : vector<1x32xf32>
    %489 = arith.addf %471, %488 : vector<1x32xf32>
    %490 = math.tanh %489 : vector<1x32xf32>
    %cst_169 = arith.constant 1.000000e+00 : f32
    %491 = vector.broadcast %cst_169 : f32 to vector<1x32xf32>
    %492 = arith.subf %491, %486 : vector<1x32xf32>
    %493 = arith.mulf %492, %490 : vector<1x32xf32>
    %494 = arith.mulf %486, %438 : vector<1x32xf32>
    %495 = arith.addf %493, %494 : vector<1x32xf32>
    %496 = tpu.concatenate %96, %153, %210, %267, %324, %381, %438, %495 in 0 : vector<1x32xf32>, vector<1x32xf32>, vector<1x32xf32>, vector<1x32xf32>, vector<1x32xf32>, vector<1x32xf32>, vector<1x32xf32>, vector<1x32xf32> -> vector<8x32xf32>
    %c0_170 = arith.constant 0 : index
    %c0_171 = arith.constant 0 : index
    %497 = vector.load %arg33[%c0_170, %c0_171] : memref<8x32xf32, #tpu.memory_space<vmem>>, vector<8x32xf32>
    tpu.vector_store %arg33[%c0_170, %c0_171], %496 {strides = array<i32>} : memref<8x32xf32, #tpu.memory_space<vmem>>, vector<8x32xf32>,
    %c0_172 = arith.constant 0 : index
    %c0_173 = arith.constant 0 : index
    %498 = vector.load %arg2[%c0_172, %c0_173] : memref<48x1xi32, #tpu.memory_space<vmem>>, vector<48x1xi32>
    %499 = tpu.iota {dimensions = array<i32: 1>} : vector<48x64xi32>
    %500 = vector.broadcast %498 : vector<48x1xi32> to vector<48x64xi32>
    %501 = arith.cmpi eq, %500, %499 : vector<48x64xi32>
    %cst_174 = arith.constant 1.000000e+00 : f32
    %cst_175 = arith.constant 0.000000e+00 : f32
    %502 = vector.broadcast %cst_174 : f32 to vector<48x64xf32>
    %503 = vector.broadcast %cst_175 : f32 to vector<48x64xf32>
    %504 = arith.select %501, %502, %503 : vector<48x64xi1>, vector<48x64xf32>
    %cst_176 = arith.constant dense<0.000000e+00> : vector<48x32xf32>
    %505 = tpu.matmul %504, %0, %cst_176 {dimension_numbers = #tpu.dot_dimension_numbers<[1], [0], [0], [1], [0, 0, 1, 1], [], []>} : vector<48x64xf32>, vector<64x32xf32>, vector<48x32xf32> -> vector<48x32xf32>
    %c0_177 = arith.constant 0 : index
    %c0_178 = arith.constant 0 : index
    %506 = vector.load %arg23[%c0_177, %c0_178] : memref<32x32xf32, #tpu.memory_space<vmem>>, vector<32x32xf32>
    %c0_179 = arith.constant 0 : index
    %c0_180 = arith.constant 0 : index
    %507 = vector.load %arg24[%c0_179, %c0_180] : memref<32x32xf32, #tpu.memory_space<vmem>>, vector<32x32xf32>
    %c0_181 = arith.constant 0 : index
    %c0_182 = arith.constant 0 : index
    %508 = vector.load %arg25[%c0_181, %c0_182] : memref<32x32xf32, #tpu.memory_space<vmem>>, vector<32x32xf32>
    %c0_183 = arith.constant 0 : index
    %c0_184 = arith.constant 0 : index
    %509 = vector.load %arg26[%c0_183, %c0_184] : memref<32x32xf32, #tpu.memory_space<vmem>>, vector<32x32xf32>
    %c0_185 = arith.constant 0 : index
    %c0_186 = arith.constant 0 : index
    %510 = vector.load %arg27[%c0_185, %c0_186] : memref<32x32xf32, #tpu.memory_space<vmem>>, vector<32x32xf32>
    %c0_187 = arith.constant 0 : index
    %c0_188 = arith.constant 0 : index
    %511 = vector.load %arg28[%c0_187, %c0_188] : memref<32x32xf32, #tpu.memory_space<vmem>>, vector<32x32xf32>
    %c0_189 = arith.constant 0 : index
    %c0_190 = arith.constant 0 : index
    %512 = vector.load %arg29[%c0_189, %c0_190] : memref<1x32xf32, #tpu.memory_space<vmem>>, vector<1x32xf32>
    %c0_191 = arith.constant 0 : index
    %c0_192 = arith.constant 0 : index
    %513 = vector.load %arg30[%c0_191, %c0_192] : memref<1x32xf32, #tpu.memory_space<vmem>>, vector<1x32xf32>
    %c0_193 = arith.constant 0 : index
    %c0_194 = arith.constant 0 : index
    %514 = vector.load %arg31[%c0_193, %c0_194] : memref<1x32xf32, #tpu.memory_space<vmem>>, vector<1x32xf32>
    %c0_195 = arith.constant 0 : index
    %c0_196 = arith.constant 0 : index
    %515 = vector.load %arg32[%c0_195, %c0_196] : memref<1x32xf32, #tpu.memory_space<vmem>>, vector<1x32xf32>
    %cst_197 = arith.constant dense<0.000000e+00> : vector<48x32xf32>
    %516 = tpu.matmul %505, %506, %cst_197 {dimension_numbers = #tpu.dot_dimension_numbers<[1], [0], [0], [1], [0, 0, 1, 1], [], []>} : vector<48x32xf32>, vector<32x32xf32>, vector<48x32xf32> -> vector<48x32xf32>
    %517 = vector.broadcast %512 : vector<1x32xf32> to vector<48x32xf32>
    %518 = arith.addf %516, %517 : vector<48x32xf32>
    %cst_198 = arith.constant dense<0.000000e+00> : vector<48x32xf32>
    %519 = tpu.matmul %505, %507, %cst_198 {dimension_numbers = #tpu.dot_dimension_numbers<[1], [0], [0], [1], [0, 0, 1, 1], [], []>} : vector<48x32xf32>, vector<32x32xf32>, vector<48x32xf32> -> vector<48x32xf32>
    %520 = vector.broadcast %513 : vector<1x32xf32> to vector<48x32xf32>
    %521 = arith.addf %519, %520 : vector<48x32xf32>
    %cst_199 = arith.constant dense<0.000000e+00> : vector<48x32xf32>
    %522 = tpu.matmul %505, %508, %cst_199 {dimension_numbers = #tpu.dot_dimension_numbers<[1], [0], [0], [1], [0, 0, 1, 1], [], []>} : vector<48x32xf32>, vector<32x32xf32>, vector<48x32xf32> -> vector<48x32xf32>
    %523 = vector.broadcast %514 : vector<1x32xf32> to vector<48x32xf32>
    %524 = arith.addf %522, %523 : vector<48x32xf32>
    %525 = vector.shape_cast %515 : vector<1x32xf32> to vector<1x32xf32>
    %526 = vector.broadcast %525 : vector<1x32xf32> to vector<8x32xf32>
    %cst_200 = arith.constant 0.000000e+00 : f32
    %527 = vector.broadcast %cst_200 : f32 to vector<8x32xf32>
    %528 = vector.extract_strided_slice %518 {offsets = [0, 0], sizes = [8, 32], strides = [1, 1]} : vector<48x32xf32> to vector<8x32xf32>
    %529 = vector.extract_strided_slice %521 {offsets = [0, 0], sizes = [8, 32], strides = [1, 1]} : vector<48x32xf32> to vector<8x32xf32>
    %530 = vector.extract_strided_slice %524 {offsets = [0, 0], sizes = [8, 32], strides = [1, 1]} : vector<48x32xf32> to vector<8x32xf32>
    %cst_201 = arith.constant dense<0.000000e+00> : vector<8x32xf32>
    %531 = tpu.matmul %527, %509, %cst_201 {dimension_numbers = #tpu.dot_dimension_numbers<[1], [0], [0], [1], [0, 0, 1, 1], [], []>} : vector<8x32xf32>, vector<32x32xf32>, vector<8x32xf32> -> vector<8x32xf32>
    %cst_202 = arith.constant dense<0.000000e+00> : vector<8x32xf32>
    %532 = tpu.matmul %527, %510, %cst_202 {dimension_numbers = #tpu.dot_dimension_numbers<[1], [0], [0], [1], [0, 0, 1, 1], [], []>} : vector<8x32xf32>, vector<32x32xf32>, vector<8x32xf32> -> vector<8x32xf32>
    %cst_203 = arith.constant dense<0.000000e+00> : vector<8x32xf32>
    %533 = tpu.matmul %527, %511, %cst_203 {dimension_numbers = #tpu.dot_dimension_numbers<[1], [0], [0], [1], [0, 0, 1, 1], [], []>} : vector<8x32xf32>, vector<32x32xf32>, vector<8x32xf32> -> vector<8x32xf32>
    %534 = arith.addf %528, %531 : vector<8x32xf32>
    %535 = arith.negf %534 : vector<8x32xf32>
    %536 = math.exp %535 : vector<8x32xf32>
    %cst_204 = arith.constant 1.000000e+00 : f32
    %537 = vector.broadcast %cst_204 : f32 to vector<8x32xf32>
    %538 = arith.addf %537, %536 : vector<8x32xf32>
    %539 = arith.divf %537, %538 : vector<8x32xf32>
    %540 = arith.addf %529, %532 : vector<8x32xf32>
    %541 = arith.negf %540 : vector<8x32xf32>
    %542 = math.exp %541 : vector<8x32xf32>
    %cst_205 = arith.constant 1.000000e+00 : f32
    %543 = vector.broadcast %cst_205 : f32 to vector<8x32xf32>
    %544 = arith.addf %543, %542 : vector<8x32xf32>
    %545 = arith.divf %543, %544 : vector<8x32xf32>
    %546 = arith.addf %533, %526 : vector<8x32xf32>
    %547 = arith.mulf %539, %546 : vector<8x32xf32>
    %548 = arith.addf %530, %547 : vector<8x32xf32>
    %549 = math.tanh %548 : vector<8x32xf32>
    %cst_206 = arith.constant 1.000000e+00 : f32
    %550 = vector.broadcast %cst_206 : f32 to vector<8x32xf32>
    %551 = arith.subf %550, %545 : vector<8x32xf32>
    %552 = arith.mulf %551, %549 : vector<8x32xf32>
    %553 = arith.mulf %545, %527 : vector<8x32xf32>
    %554 = arith.addf %552, %553 : vector<8x32xf32>
    %555 = vector.extract_strided_slice %518 {offsets = [8, 0], sizes = [8, 32], strides = [1, 1]} : vector<48x32xf32> to vector<8x32xf32>
    %556 = vector.extract_strided_slice %521 {offsets = [8, 0], sizes = [8, 32], strides = [1, 1]} : vector<48x32xf32> to vector<8x32xf32>
    %557 = vector.extract_strided_slice %524 {offsets = [8, 0], sizes = [8, 32], strides = [1, 1]} : vector<48x32xf32> to vector<8x32xf32>
    %cst_207 = arith.constant dense<0.000000e+00> : vector<8x32xf32>
    %558 = tpu.matmul %554, %509, %cst_207 {dimension_numbers = #tpu.dot_dimension_numbers<[1], [0], [0], [1], [0, 0, 1, 1], [], []>} : vector<8x32xf32>, vector<32x32xf32>, vector<8x32xf32> -> vector<8x32xf32>
    %cst_208 = arith.constant dense<0.000000e+00> : vector<8x32xf32>
    %559 = tpu.matmul %554, %510, %cst_208 {dimension_numbers = #tpu.dot_dimension_numbers<[1], [0], [0], [1], [0, 0, 1, 1], [], []>} : vector<8x32xf32>, vector<32x32xf32>, vector<8x32xf32> -> vector<8x32xf32>
    %cst_209 = arith.constant dense<0.000000e+00> : vector<8x32xf32>
    %560 = tpu.matmul %554, %511, %cst_209 {dimension_numbers = #tpu.dot_dimension_numbers<[1], [0], [0], [1], [0, 0, 1, 1], [], []>} : vector<8x32xf32>, vector<32x32xf32>, vector<8x32xf32> -> vector<8x32xf32>
    %561 = arith.addf %555, %558 : vector<8x32xf32>
    %562 = arith.negf %561 : vector<8x32xf32>
    %563 = math.exp %562 : vector<8x32xf32>
    %cst_210 = arith.constant 1.000000e+00 : f32
    %564 = vector.broadcast %cst_210 : f32 to vector<8x32xf32>
    %565 = arith.addf %564, %563 : vector<8x32xf32>
    %566 = arith.divf %564, %565 : vector<8x32xf32>
    %567 = arith.addf %556, %559 : vector<8x32xf32>
    %568 = arith.negf %567 : vector<8x32xf32>
    %569 = math.exp %568 : vector<8x32xf32>
    %cst_211 = arith.constant 1.000000e+00 : f32
    %570 = vector.broadcast %cst_211 : f32 to vector<8x32xf32>
    %571 = arith.addf %570, %569 : vector<8x32xf32>
    %572 = arith.divf %570, %571 : vector<8x32xf32>
    %573 = arith.addf %560, %526 : vector<8x32xf32>
    %574 = arith.mulf %566, %573 : vector<8x32xf32>
    %575 = arith.addf %557, %574 : vector<8x32xf32>
    %576 = math.tanh %575 : vector<8x32xf32>
    %cst_212 = arith.constant 1.000000e+00 : f32
    %577 = vector.broadcast %cst_212 : f32 to vector<8x32xf32>
    %578 = arith.subf %577, %572 : vector<8x32xf32>
    %579 = arith.mulf %578, %576 : vector<8x32xf32>
    %580 = arith.mulf %572, %554 : vector<8x32xf32>
    %581 = arith.addf %579, %580 : vector<8x32xf32>
    %582 = vector.extract_strided_slice %518 {offsets = [16, 0], sizes = [8, 32], strides = [1, 1]} : vector<48x32xf32> to vector<8x32xf32>
    %583 = vector.extract_strided_slice %521 {offsets = [16, 0], sizes = [8, 32], strides = [1, 1]} : vector<48x32xf32> to vector<8x32xf32>
    %584 = vector.extract_strided_slice %524 {offsets = [16, 0], sizes = [8, 32], strides = [1, 1]} : vector<48x32xf32> to vector<8x32xf32>
    %cst_213 = arith.constant dense<0.000000e+00> : vector<8x32xf32>
    %585 = tpu.matmul %581, %509, %cst_213 {dimension_numbers = #tpu.dot_dimension_numbers<[1], [0], [0], [1], [0, 0, 1, 1], [], []>} : vector<8x32xf32>, vector<32x32xf32>, vector<8x32xf32> -> vector<8x32xf32>
    %cst_214 = arith.constant dense<0.000000e+00> : vector<8x32xf32>
    %586 = tpu.matmul %581, %510, %cst_214 {dimension_numbers = #tpu.dot_dimension_numbers<[1], [0], [0], [1], [0, 0, 1, 1], [], []>} : vector<8x32xf32>, vector<32x32xf32>, vector<8x32xf32> -> vector<8x32xf32>
    %cst_215 = arith.constant dense<0.000000e+00> : vector<8x32xf32>
    %587 = tpu.matmul %581, %511, %cst_215 {dimension_numbers = #tpu.dot_dimension_numbers<[1], [0], [0], [1], [0, 0, 1, 1], [], []>} : vector<8x32xf32>, vector<32x32xf32>, vector<8x32xf32> -> vector<8x32xf32>
    %588 = arith.addf %582, %585 : vector<8x32xf32>
    %589 = arith.negf %588 : vector<8x32xf32>
    %590 = math.exp %589 : vector<8x32xf32>
    %cst_216 = arith.constant 1.000000e+00 : f32
    %591 = vector.broadcast %cst_216 : f32 to vector<8x32xf32>
    %592 = arith.addf %591, %590 : vector<8x32xf32>
    %593 = arith.divf %591, %592 : vector<8x32xf32>
    %594 = arith.addf %583, %586 : vector<8x32xf32>
    %595 = arith.negf %594 : vector<8x32xf32>
    %596 = math.exp %595 : vector<8x32xf32>
    %cst_217 = arith.constant 1.000000e+00 : f32
    %597 = vector.broadcast %cst_217 : f32 to vector<8x32xf32>
    %598 = arith.addf %597, %596 : vector<8x32xf32>
    %599 = arith.divf %597, %598 : vector<8x32xf32>
    %600 = arith.addf %587, %526 : vector<8x32xf32>
    %601 = arith.mulf %593, %600 : vector<8x32xf32>
    %602 = arith.addf %584, %601 : vector<8x32xf32>
    %603 = math.tanh %602 : vector<8x32xf32>
    %cst_218 = arith.constant 1.000000e+00 : f32
    %604 = vector.broadcast %cst_218 : f32 to vector<8x32xf32>
    %605 = arith.subf %604, %599 : vector<8x32xf32>
    %606 = arith.mulf %605, %603 : vector<8x32xf32>
    %607 = arith.mulf %599, %581 : vector<8x32xf32>
    %608 = arith.addf %606, %607 : vector<8x32xf32>
    %609 = vector.extract_strided_slice %518 {offsets = [24, 0], sizes = [8, 32], strides = [1, 1]} : vector<48x32xf32> to vector<8x32xf32>
    %610 = vector.extract_strided_slice %521 {offsets = [24, 0], sizes = [8, 32], strides = [1, 1]} : vector<48x32xf32> to vector<8x32xf32>
    %611 = vector.extract_strided_slice %524 {offsets = [24, 0], sizes = [8, 32], strides = [1, 1]} : vector<48x32xf32> to vector<8x32xf32>
    %cst_219 = arith.constant dense<0.000000e+00> : vector<8x32xf32>
    %612 = tpu.matmul %608, %509, %cst_219 {dimension_numbers = #tpu.dot_dimension_numbers<[1], [0], [0], [1], [0, 0, 1, 1], [], []>} : vector<8x32xf32>, vector<32x32xf32>, vector<8x32xf32> -> vector<8x32xf32>
    %cst_220 = arith.constant dense<0.000000e+00> : vector<8x32xf32>
    %613 = tpu.matmul %608, %510, %cst_220 {dimension_numbers = #tpu.dot_dimension_numbers<[1], [0], [0], [1], [0, 0, 1, 1], [], []>} : vector<8x32xf32>, vector<32x32xf32>, vector<8x32xf32> -> vector<8x32xf32>
    %cst_221 = arith.constant dense<0.000000e+00> : vector<8x32xf32>
    %614 = tpu.matmul %608, %511, %cst_221 {dimension_numbers = #tpu.dot_dimension_numbers<[1], [0], [0], [1], [0, 0, 1, 1], [], []>} : vector<8x32xf32>, vector<32x32xf32>, vector<8x32xf32> -> vector<8x32xf32>
    %615 = arith.addf %609, %612 : vector<8x32xf32>
    %616 = arith.negf %615 : vector<8x32xf32>
    %617 = math.exp %616 : vector<8x32xf32>
    %cst_222 = arith.constant 1.000000e+00 : f32
    %618 = vector.broadcast %cst_222 : f32 to vector<8x32xf32>
    %619 = arith.addf %618, %617 : vector<8x32xf32>
    %620 = arith.divf %618, %619 : vector<8x32xf32>
    %621 = arith.addf %610, %613 : vector<8x32xf32>
    %622 = arith.negf %621 : vector<8x32xf32>
    %623 = math.exp %622 : vector<8x32xf32>
    %cst_223 = arith.constant 1.000000e+00 : f32
    %624 = vector.broadcast %cst_223 : f32 to vector<8x32xf32>
    %625 = arith.addf %624, %623 : vector<8x32xf32>
    %626 = arith.divf %624, %625 : vector<8x32xf32>
    %627 = arith.addf %614, %526 : vector<8x32xf32>
    %628 = arith.mulf %620, %627 : vector<8x32xf32>
    %629 = arith.addf %611, %628 : vector<8x32xf32>
    %630 = math.tanh %629 : vector<8x32xf32>
    %cst_224 = arith.constant 1.000000e+00 : f32
    %631 = vector.broadcast %cst_224 : f32 to vector<8x32xf32>
    %632 = arith.subf %631, %626 : vector<8x32xf32>
    %633 = arith.mulf %632, %630 : vector<8x32xf32>
    %634 = arith.mulf %626, %608 : vector<8x32xf32>
    %635 = arith.addf %633, %634 : vector<8x32xf32>
    %636 = vector.extract_strided_slice %518 {offsets = [32, 0], sizes = [8, 32], strides = [1, 1]} : vector<48x32xf32> to vector<8x32xf32>
    %637 = vector.extract_strided_slice %521 {offsets = [32, 0], sizes = [8, 32], strides = [1, 1]} : vector<48x32xf32> to vector<8x32xf32>
    %638 = vector.extract_strided_slice %524 {offsets = [32, 0], sizes = [8, 32], strides = [1, 1]} : vector<48x32xf32> to vector<8x32xf32>
    %cst_225 = arith.constant dense<0.000000e+00> : vector<8x32xf32>
    %639 = tpu.matmul %635, %509, %cst_225 {dimension_numbers = #tpu.dot_dimension_numbers<[1], [0], [0], [1], [0, 0, 1, 1], [], []>} : vector<8x32xf32>, vector<32x32xf32>, vector<8x32xf32> -> vector<8x32xf32>
    %cst_226 = arith.constant dense<0.000000e+00> : vector<8x32xf32>
    %640 = tpu.matmul %635, %510, %cst_226 {dimension_numbers = #tpu.dot_dimension_numbers<[1], [0], [0], [1], [0, 0, 1, 1], [], []>} : vector<8x32xf32>, vector<32x32xf32>, vector<8x32xf32> -> vector<8x32xf32>
    %cst_227 = arith.constant dense<0.000000e+00> : vector<8x32xf32>
    %641 = tpu.matmul %635, %511, %cst_227 {dimension_numbers = #tpu.dot_dimension_numbers<[1], [0], [0], [1], [0, 0, 1, 1], [], []>} : vector<8x32xf32>, vector<32x32xf32>, vector<8x32xf32> -> vector<8x32xf32>
    %642 = arith.addf %636, %639 : vector<8x32xf32>
    %643 = arith.negf %642 : vector<8x32xf32>
    %644 = math.exp %643 : vector<8x32xf32>
    %cst_228 = arith.constant 1.000000e+00 : f32
    %645 = vector.broadcast %cst_228 : f32 to vector<8x32xf32>
    %646 = arith.addf %645, %644 : vector<8x32xf32>
    %647 = arith.divf %645, %646 : vector<8x32xf32>
    %648 = arith.addf %637, %640 : vector<8x32xf32>
    %649 = arith.negf %648 : vector<8x32xf32>
    %650 = math.exp %649 : vector<8x32xf32>
    %cst_229 = arith.constant 1.000000e+00 : f32
    %651 = vector.broadcast %cst_229 : f32 to vector<8x32xf32>
    %652 = arith.addf %651, %650 : vector<8x32xf32>
    %653 = arith.divf %651, %652 : vector<8x32xf32>
    %654 = arith.addf %641, %526 : vector<8x32xf32>
    %655 = arith.mulf %647, %654 : vector<8x32xf32>
    %656 = arith.addf %638, %655 : vector<8x32xf32>
    %657 = math.tanh %656 : vector<8x32xf32>
    %cst_230 = arith.constant 1.000000e+00 : f32
    %658 = vector.broadcast %cst_230 : f32 to vector<8x32xf32>
    %659 = arith.subf %658, %653 : vector<8x32xf32>
    %660 = arith.mulf %659, %657 : vector<8x32xf32>
    %661 = arith.mulf %653, %635 : vector<8x32xf32>
    %662 = arith.addf %660, %661 : vector<8x32xf32>
    %663 = vector.extract_strided_slice %518 {offsets = [40, 0], sizes = [8, 32], strides = [1, 1]} : vector<48x32xf32> to vector<8x32xf32>
    %664 = vector.extract_strided_slice %521 {offsets = [40, 0], sizes = [8, 32], strides = [1, 1]} : vector<48x32xf32> to vector<8x32xf32>
    %665 = vector.extract_strided_slice %524 {offsets = [40, 0], sizes = [8, 32], strides = [1, 1]} : vector<48x32xf32> to vector<8x32xf32>
    %cst_231 = arith.constant dense<0.000000e+00> : vector<8x32xf32>
    %666 = tpu.matmul %662, %509, %cst_231 {dimension_numbers = #tpu.dot_dimension_numbers<[1], [0], [0], [1], [0, 0, 1, 1], [], []>} : vector<8x32xf32>, vector<32x32xf32>, vector<8x32xf32> -> vector<8x32xf32>
    %cst_232 = arith.constant dense<0.000000e+00> : vector<8x32xf32>
    %667 = tpu.matmul %662, %510, %cst_232 {dimension_numbers = #tpu.dot_dimension_numbers<[1], [0], [0], [1], [0, 0, 1, 1], [], []>} : vector<8x32xf32>, vector<32x32xf32>, vector<8x32xf32> -> vector<8x32xf32>
    %cst_233 = arith.constant dense<0.000000e+00> : vector<8x32xf32>
    %668 = tpu.matmul %662, %511, %cst_233 {dimension_numbers = #tpu.dot_dimension_numbers<[1], [0], [0], [1], [0, 0, 1, 1], [], []>} : vector<8x32xf32>, vector<32x32xf32>, vector<8x32xf32> -> vector<8x32xf32>
    %669 = arith.addf %663, %666 : vector<8x32xf32>
    %670 = arith.negf %669 : vector<8x32xf32>
    %671 = math.exp %670 : vector<8x32xf32>
    %cst_234 = arith.constant 1.000000e+00 : f32
    %672 = vector.broadcast %cst_234 : f32 to vector<8x32xf32>
    %673 = arith.addf %672, %671 : vector<8x32xf32>
    %674 = arith.divf %672, %673 : vector<8x32xf32>
    %675 = arith.addf %664, %667 : vector<8x32xf32>
    %676 = arith.negf %675 : vector<8x32xf32>
    %677 = math.exp %676 : vector<8x32xf32>
    %cst_235 = arith.constant 1.000000e+00 : f32
    %678 = vector.broadcast %cst_235 : f32 to vector<8x32xf32>
    %679 = arith.addf %678, %677 : vector<8x32xf32>
    %680 = arith.divf %678, %679 : vector<8x32xf32>
    %681 = arith.addf %668, %526 : vector<8x32xf32>
    %682 = arith.mulf %674, %681 : vector<8x32xf32>
    %683 = arith.addf %665, %682 : vector<8x32xf32>
    %684 = math.tanh %683 : vector<8x32xf32>
    %cst_236 = arith.constant 1.000000e+00 : f32
    %685 = vector.broadcast %cst_236 : f32 to vector<8x32xf32>
    %686 = arith.subf %685, %680 : vector<8x32xf32>
    %687 = arith.mulf %686, %684 : vector<8x32xf32>
    %688 = arith.mulf %680, %662 : vector<8x32xf32>
    %689 = arith.addf %687, %688 : vector<8x32xf32>
    %690 = vector.extract_strided_slice %689 {offsets = [0, 0], sizes = [4, 32], strides = [1, 1]} : vector<8x32xf32> to vector<4x32xf32>
    %c0_237 = arith.constant 0 : index
    %c0_238 = arith.constant 0 : index
    %691 = vector.load %arg34[%c0_237, %c0_238] : memref<4x32xf32, #tpu.memory_space<vmem>>, vector<4x32xf32>
    tpu.vector_store %arg34[%c0_237, %c0_238], %690 {strides = array<i32>} : memref<4x32xf32, #tpu.memory_space<vmem>>, vector<4x32xf32>,
    return
  }
}

</mosaic_0001>

<llo_original>
// kernel: discriminator_forward.1
$region0: #{discriminator_forward.1}
  #allocation0 [shape = 'u32[]', space=smem, size = 0x4, offset = 0x4, fixed_abs, tag = 'smem constant byte address 0x4 - core index']
  #allocation1 [shape = 'u32[144,128]{1,0:T(1,128)}', space=vmem, size = 0x12000, scoped, tag = 'internal scratch']
  %s0 = inlined_call_operand.smem [shape: u32[35], index: -1, kind: input, shape index: {}]
  %s1 = sld [smem:[%s0]]
  %s2 = scalar_lea.smem %s0, 1
  %s3 = sld [smem:[%s2]]
  %s4 = scalar_lea.smem %s0, 2
  %s5 = sld [smem:[%s4]]
  %s6 = scalar_lea.smem %s0, 3
  %s7 = sld [smem:[%s6]]
  %s8 = scalar_lea.smem %s0, 4
  %s9 = sld [smem:[%s8]]
  %s10 = scalar_lea.smem %s0, 5
  %s11 = sld [smem:[%s10]]
  %s12 = scalar_lea.smem %s0, 6
  %s13 = sld [smem:[%s12]]
  %s14 = scalar_lea.smem %s0, 7
  %s15 = sld [smem:[%s14]]
  %s16 = scalar_lea.smem %s0, 8
  %s17 = sld [smem:[%s16]]
  %s18 = scalar_lea.smem %s0, 9
  %s19 = sld [smem:[%s18]]
  %s20 = scalar_lea.smem %s0, 10
  %s21 = sld [smem:[%s20]]
  %s22 = scalar_lea.smem %s0, 11
  %s23 = sld [smem:[%s22]]
  %s24 = scalar_lea.smem %s0, 12
  %s25 = sld [smem:[%s24]]
  %s26 = scalar_lea.smem %s0, 13
  %s27 = sld [smem:[%s26]]
  %s28 = scalar_lea.smem %s0, 14
  %s29 = sld [smem:[%s28]]
  %s30 = scalar_lea.smem %s0, 15
  %s31 = sld [smem:[%s30]]
  %s32 = scalar_lea.smem %s0, 16
  %s33 = sld [smem:[%s32]]
  %s34 = scalar_lea.smem %s0, 17
  %s35 = sld [smem:[%s34]]
  %s36 = scalar_lea.smem %s0, 18
  %s37 = sld [smem:[%s36]]
  %s38 = scalar_lea.smem %s0, 19
  %s39 = sld [smem:[%s38]]
  %s40 = scalar_lea.smem %s0, 20
  %s41 = sld [smem:[%s40]]
  %s42 = scalar_lea.smem %s0, 21
  %s43 = sld [smem:[%s42]]
  %s44 = scalar_lea.smem %s0, 22
  %s45 = sld [smem:[%s44]]
  %s46 = scalar_lea.smem %s0, 23
  %s47 = sld [smem:[%s46]]
  %s48 = scalar_lea.smem %s0, 24
  %s49 = sld [smem:[%s48]]
  %s50 = scalar_lea.smem %s0, 25
  %s51 = sld [smem:[%s50]]
  %s52 = scalar_lea.smem %s0, 26
  %s53 = sld [smem:[%s52]]
  %s54 = scalar_lea.smem %s0, 27
  %s55 = sld [smem:[%s54]]
  %s56 = scalar_lea.smem %s0, 28
  %s57 = sld [smem:[%s56]]
  %s58 = scalar_lea.smem %s0, 29
  %s59 = sld [smem:[%s58]]
  %s60 = scalar_lea.smem %s0, 30
  %s61 = sld [smem:[%s60]]
  %s62 = scalar_lea.smem %s0, 31
  %s63 = sld [smem:[%s62]]
  %s64 = scalar_lea.smem %s0, 32
  %s65 = sld [smem:[%s64]]
  %s66 = scalar_lea.smem %s0, 33
  %s67 = sld [smem:[%s66]]
  %s68 = scalar_lea.smem %s0, 34
  %s69 = sld [smem:[%s68]]
  %70 = xla_tuple %s67, %s69
  %s71 = sld [smem:[#allocation0]]
  $region222: #{discriminator_forward.1} parent=0
    _
  %s73 = ssub.s32 1, %s71
  %s74 = scalar_select 0, %s73, %s71
  $region1: #{discriminator_forward.1} parent=0
    #allocation2 [shape = 'u8[512]{0}', space=vmem, size = 0x400, scoped, tag = 'input window, operand 9, single buffered']
    #allocation3 [shape = 's32[1]{0}', space=sflag, size = 0x4, scoped, tag = 'scoped memory for discriminator_forward.1']
    #allocation4 [shape = 's32[1]{0}', space=sflag, size = 0x4, scoped, tag = 'scoped memory for discriminator_forward.1']
    #allocation5 [shape = 'u8[512]{0}', space=vmem, size = 0x400, scoped, tag = 'input window, operand 10, single buffered']
    #allocation6 [shape = 's32[1]{0}', space=sflag, size = 0x4, scoped, tag = 'scoped memory for discriminator_forward.1']
    #allocation7 [shape = 'u8[512]{0}', space=vmem, size = 0x400, scoped, tag = 'input window, operand 11, single buffered']
    #allocation8 [shape = 'u8[512]{0}', space=vmem, size = 0x400, scoped, tag = 'input window, operand 12, single buffered']
    #allocation9 [shape = 's32[1]{0}', space=sflag, size = 0x4, scoped, tag = 'scoped memory for discriminator_forward.1']
    #allocation10 [shape = 'u8[16384]{0}', space=vmem, size = 0x4000, scoped, tag = 'input window, operand 13, single buffered']
    #allocation11 [shape = 'u8[16384]{0}', space=vmem, size = 0x4000, scoped, tag = 'input window, operand 14, single buffered']
    #allocation12 [shape = 's32[1]{0}', space=sflag, size = 0x4, scoped, tag = 'scoped memory for discriminator_forward.1']
    #allocation13 [shape = 'u8[16384]{0}', space=vmem, size = 0x4000, scoped, tag = 'input window, operand 15, single buffered']
    #allocation14 [shape = 'u8[16384]{0}', space=vmem, size = 0x4000, scoped, tag = 'input window, operand 16, single buffered']
    #allocation15 [shape = 's32[1]{0}', space=sflag, size = 0x4, scoped, tag = 'scoped memory for discriminator_forward.1']
    #allocation16 [shape = 'u8[16384]{0}', space=vmem, size = 0x4000, scoped, tag = 'input window, operand 17, single buffered']
    #allocation17 [shape = 'u8[16384]{0}', space=vmem, size = 0x4000, scoped, tag = 'input window, operand 18, single buffered']
    #allocation18 [shape = 's32[1]{0}', space=sflag, size = 0x4, scoped, tag = 'scoped memory for discriminator_forward.1']
    #allocation19 [shape = 'u8[512]{0}', space=vmem, size = 0x400, scoped, tag = 'input window, operand 19, single buffered']
    #allocation20 [shape = 'u8[512]{0}', space=vmem, size = 0x400, scoped, tag = 'input window, operand 20, single buffered']
    #allocation21 [shape = 's32[1]{0}', space=sflag, size = 0x4, scoped, tag = 'scoped memory for discriminator_forward.1']
    #allocation22 [shape = 'u8[512]{0}', space=vmem, size = 0x400, scoped, tag = 'input window, operand 21, single buffered']
    #allocation23 [shape = 'u8[16384]{0}', space=vmem, size = 0x4000, scoped, tag = 'input window, operand 24, single buffered']
    #allocation24 [shape = 's32[1]{0}', space=sflag, size = 0x4, scoped, tag = 'scoped memory for discriminator_forward.1']
    #allocation25 [shape = 'u8[16384]{0}', space=vmem, size = 0x4000, scoped, tag = 'input window, operand 25, single buffered']
    #allocation26 [shape = 'u8[16384]{0}', space=vmem, size = 0x4000, scoped, tag = 'input window, operand 26, single buffered']
    #allocation27 [shape = 's32[1]{0}', space=sflag, size = 0x4, scoped, tag = 'scoped memory for discriminator_forward.1']
    #allocation28 [shape = 'u8[16384]{0}', space=vmem, size = 0x4000, scoped, tag = 'input window, operand 27, single buffered']
    #allocation29 [shape = 'u8[16384]{0}', space=vmem, size = 0x4000, scoped, tag = 'input window, operand 28, single buffered']
    #allocation30 [shape = 's32[1]{0}', space=sflag, size = 0x4, scoped, tag = 'scoped memory for discriminator_forward.1']
    #allocation31 [shape = 'u8[4096]{0}', space=vmem, size = 0x1000, scoped, tag = 'output window, operand 0, single buffered']
    #allocation32 [shape = 'u8[2048]{0}', space=vmem, size = 0x800, scoped, tag = 'output window, operand 1, single buffered']
    #allocation33 [shape = 's32[1]{0}', space=sflag, size = 0x4, scoped, tag = 'scoped memory for discriminator_forward.1']
    %75 = vsyncpa [#allocation3], 0
    %76 = vsyncpa [#allocation6], 0
    %77 = vsyncpa [#allocation9], 0
    %78 = vsyncpa [#allocation12], 0
    %79 = vsyncpa [#allocation15], 0
    %80 = vsyncpa [#allocation18], 0
    %81 = vsyncpa [#allocation21], 0
    %82 = vsyncpa [#allocation24], 0
    %83 = vsyncpa [#allocation27], 0
    %84 = vsyncpa [#allocation30], 0
    %85 = vsyncpa [#allocation4], 0
    %86 = vsyncpa [#allocation33], 0
    // Predicated region
    $region2: #{discriminator_forward.1} parent=1 // pred_check
      _
    $region3: #{discriminator_forward.1} parent=1 // pred_check_branch
      %88 = sbr.rel (0) target = $region5
    $region4: #{discriminator_forward.1} parent=1 // pred_region
      _
    $region5: #{discriminator_forward.1} parent=1 // pred_fallthru
      _
    // Predicated region
    $region6: #{discriminator_forward.1} parent=1 // pred_check
      _
    $region7: #{discriminator_forward.1} parent=1 // pred_check_branch
      %90 = sbr.rel (0) target = $region9
    $region8: #{discriminator_forward.1} parent=1 // pred_region
      _
    $region9: #{discriminator_forward.1} parent=1 // pred_fallthru
      _
    // Predicated region
    $region10: #{discriminator_forward.1} parent=1 // pred_check
      _
    $region11: #{discriminator_forward.1} parent=1 // pred_check_branch
      %92 = sbr.rel (0) target = $region13
    $region12: #{discriminator_forward.1} parent=1 // pred_region
      _
    $region13: #{discriminator_forward.1} parent=1 // pred_fallthru
      _
    // Predicated region
    $region14: #{discriminator_forward.1} parent=1 // pred_check
      _
    $region15: #{discriminator_forward.1} parent=1 // pred_check_branch
      %94 = sbr.rel (0) target = $region17
    $region16: #{discriminator_forward.1} parent=1 // pred_region
      _
    $region17: #{discriminator_forward.1} parent=1 // pred_fallthru
      _
    // Predicated region
    $region18: #{discriminator_forward.1} parent=1 // pred_check
      _
    $region19: #{discriminator_forward.1} parent=1 // pred_check_branch
      %96 = sbr.rel (0) target = $region21
    $region20: #{discriminator_forward.1} parent=1 // pred_region
      _
    $region21: #{discriminator_forward.1} parent=1 // pred_fallthru
      _
    // Predicated region
    $region22: #{discriminator_forward.1} parent=1 // pred_check
      _
    $region23: #{discriminator_forward.1} parent=1 // pred_check_branch
      %98 = sbr.rel (0) target = $region25
    $region24: #{discriminator_forward.1} parent=1 // pred_region
      _
    $region25: #{discriminator_forward.1} parent=1 // pred_fallthru
      _
    // Predicated region
    $region26: #{discriminator_forward.1} parent=1 // pred_check
      _
    $region27: #{discriminator_forward.1} parent=1 // pred_check_branch
      %100 = sbr.rel (0) target = $region29
    $region28: #{discriminator_forward.1} parent=1 // pred_region
      _
    $region29: #{discriminator_forward.1} parent=1 // pred_fallthru
      _
    // Predicated region
    $region30: #{discriminator_forward.1} parent=1 // pred_check
      _
    $region31: #{discriminator_forward.1} parent=1 // pred_check_branch
      %102 = sbr.rel (0) target = $region33
    $region32: #{discriminator_forward.1} parent=1 // pred_region
      _
    $region33: #{discriminator_forward.1} parent=1 // pred_fallthru
      _
    // Predicated region
    $region34: #{discriminator_forward.1} parent=1 // pred_check
      _
    $region35: #{discriminator_forward.1} parent=1 // pred_check_branch
      %104 = sbr.rel (0) target = $region37
    $region36: #{discriminator_forward.1} parent=1 // pred_region
      _
    $region37: #{discriminator_forward.1} parent=1 // pred_fallthru
      _
    // Predicated region
    $region38: #{discriminator_forward.1} parent=1 // pred_check
      _
    $region39: #{discriminator_forward.1} parent=1 // pred_check_branch
      %106 = sbr.rel (0) target = $region41
    $region40: #{discriminator_forward.1} parent=1 // pred_region
      %s108 = ssub.s32 16, 16
      %109 = vsyncadd [#allocation3], %s108
      %s111 = sshll.u32 [#allocation2], 4
      %s112 = int_to_ptr.vmem [resolvable:$true] %s111
      %114 = dma.hbm_to_vmem [thread:$0]  %s19, 16, %s112, [#allocation3]
    $region41: #{discriminator_forward.1} parent=1 // pred_fallthru
      _
    // Predicated region
    $region42: #{discriminator_forward.1} parent=1 // pred_check
      _
    $region43: #{discriminator_forward.1} parent=1 // pred_check_branch
      %116 = sbr.rel (0) target = $region45
    $region44: #{discriminator_forward.1} parent=1 // pred_region
      %s118 = ssub.s32 16, 16
      %119 = vsyncadd [#allocation6], %s118
      %s121 = sshll.u32 [#allocation5], 4
      %s122 = int_to_ptr.vmem [resolvable:$true] %s121
      %124 = dma.hbm_to_vmem [thread:$0]  %s21, 16, %s122, [#allocation6]
    $region45: #{discriminator_forward.1} parent=1 // pred_fallthru
      _
    // Predicated region
    $region46: #{discriminator_forward.1} parent=1 // pred_check
      _
    $region47: #{discriminator_forward.1} parent=1 // pred_check_branch
      %126 = sbr.rel (0) target = $region49
    $region48: #{discriminator_forward.1} parent=1 // pred_region
      %s128 = ssub.s32 16, 16
      %129 = vsyncadd [#allocation6], %s128
      %s131 = sshll.u32 [#allocation7], 4
      %s132 = int_to_ptr.vmem [resolvable:$true] %s131
      %134 = dma.hbm_to_vmem [thread:$0]  %s23, 16, %s132, [#allocation6]
    $region49: #{discriminator_forward.1} parent=1 // pred_fallthru
      _
    // Predicated region
    $region50: #{discriminator_forward.1} parent=1 // pred_check
      _
    $region51: #{discriminator_forward.1} parent=1 // pred_check_branch
      %136 = sbr.rel (0) target = $region53
    $region52: #{discriminator_forward.1} parent=1 // pred_region
      %s138 = ssub.s32 16, 16
      %139 = vsyncadd [#allocation9], %s138
      %s141 = sshll.u32 [#allocation8], 4
      %s142 = int_to_ptr.vmem [resolvable:$true] %s141
      %144 = dma.hbm_to_vmem [thread:$0]  %s25, 16, %s142, [#allocation9]
    $region53: #{discriminator_forward.1} parent=1 // pred_fallthru
      _
    // Predicated region
    $region54: #{discriminator_forward.1} parent=1 // pred_check
      _
    $region55: #{discriminator_forward.1} parent=1 // pred_check_branch
      %146 = sbr.rel (0) target = $region57
    $region56: #{discriminator_forward.1} parent=1 // pred_region
      %s148 = ssub.s32 512, 512
      %149 = vsyncadd [#allocation9], %s148
      %s150 = sshll.u32 [#allocation10], 4
      %s151 = int_to_ptr.vmem [resolvable:$true] %s150
      %156 = dma.hbm_to_vmem [thread:$0]  %s27, 512, %s151, [#allocation9], 128, 128, 8
    $region57: #{discriminator_forward.1} parent=1 // pred_fallthru
      _
    // Predicated region
    $region58: #{discriminator_forward.1} parent=1 // pred_check
      _
    $region59: #{discriminator_forward.1} parent=1 // pred_check_branch
      %158 = sbr.rel (0) target = $region61
    $region60: #{discriminator_forward.1} parent=1 // pred_region
      %s160 = ssub.s32 512, 512
      %161 = vsyncadd [#allocation12], %s160
      %s162 = sshll.u32 [#allocation11], 4
      %s163 = int_to_ptr.vmem [resolvable:$true] %s162
      %168 = dma.hbm_to_vmem [thread:$0]  %s29, 512, %s163, [#allocation12], 128, 128, 8
    $region61: #{discriminator_forward.1} parent=1 // pred_fallthru
      _
    // Predicated region
    $region62: #{discriminator_forward.1} parent=1 // pred_check
      _
    $region63: #{discriminator_forward.1} parent=1 // pred_check_branch
      %170 = sbr.rel (0) target = $region65
    $region64: #{discriminator_forward.1} parent=1 // pred_region
      %s172 = ssub.s32 512, 512
      %173 = vsyncadd [#allocation12], %s172
      %s174 = sshll.u32 [#allocation13], 4
      %s175 = int_to_ptr.vmem [resolvable:$true] %s174
      %180 = dma.hbm_to_vmem [thread:$0]  %s31, 512, %s175, [#allocation12], 128, 128, 8
    $region65: #{discriminator_forward.1} parent=1 // pred_fallthru
      _
    // Predicated region
    $region66: #{discriminator_forward.1} parent=1 // pred_check
      _
    $region67: #{discriminator_forward.1} parent=1 // pred_check_branch
      %182 = sbr.rel (0) target = $region69
    $region68: #{discriminator_forward.1} parent=1 // pred_region
      %s184 = ssub.s32 512, 512
      %185 = vsyncadd [#allocation15], %s184
      %s186 = sshll.u32 [#allocation14], 4
      %s187 = int_to_ptr.vmem [resolvable:$true] %s186
      %192 = dma.hbm_to_vmem [thread:$0]  %s33, 512, %s187, [#allocation15], 128, 128, 8
    $region69: #{discriminator_forward.1} parent=1 // pred_fallthru
      _
    // Predicated region
    $region70: #{discriminator_forward.1} parent=1 // pred_check
      _
    $region71: #{discriminator_forward.1} parent=1 // pred_check_branch
      %194 = sbr.rel (0) target = $region73
    $region72: #{discriminator_forward.1} parent=1 // pred_region
      %s196 = ssub.s32 512, 512
      %197 = vsyncadd [#allocation15], %s196
      %s198 = sshll.u32 [#allocation16], 4
      %s199 = int_to_ptr.vmem [resolvable:$true] %s198
      %204 = dma.hbm_to_vmem [thread:$0]  %s35, 512, %s199, [#allocation15], 128, 128, 8
    $region73: #{discriminator_forward.1} parent=1 // pred_fallthru
      _
    // Predicated region
    $region74: #{discriminator_forward.1} parent=1 // pred_check
      _
    $region75: #{discriminator_forward.1} parent=1 // pred_check_branch
      %206 = sbr.rel (0) target = $region77
    $region76: #{discriminator_forward.1} parent=1 // pred_region
      %s208 = ssub.s32 512, 512
      %209 = vsyncadd [#allocation18], %s208
      %s210 = sshll.u32 [#allocation17], 4
      %s211 = int_to_ptr.vmem [resolvable:$true] %s210
      %216 = dma.hbm_to_vmem [thread:$0]  %s37, 512, %s211, [#allocation18], 128, 128, 8
    $region77: #{discriminator_forward.1} parent=1 // pred_fallthru
      _
    // Predicated region
    $region78: #{discriminator_forward.1} parent=1 // pred_check
      _
    $region79: #{discriminator_forward.1} parent=1 // pred_check_branch
      %218 = sbr.rel (0) target = $region81
    $region80: #{discriminator_forward.1} parent=1 // pred_region
      %s220 = ssub.s32 16, 16
      %221 = vsyncadd [#allocation18], %s220
      %s223 = sshll.u32 [#allocation19], 4
      %s224 = int_to_ptr.vmem [resolvable:$true] %s223
      %226 = dma.hbm_to_vmem [thread:$0]  %s39, 16, %s224, [#allocation18]
    $region81: #{discriminator_forward.1} parent=1 // pred_fallthru
      _
    // Predicated region
    $region82: #{discriminator_forward.1} parent=1 // pred_check
      _
    $region83: #{discriminator_forward.1} parent=1 // pred_check_branch
      %228 = sbr.rel (0) target = $region85
    $region84: #{discriminator_forward.1} parent=1 // pred_region
      %s230 = ssub.s32 16, 16
      %231 = vsyncadd [#allocation21], %s230
      %s233 = sshll.u32 [#allocation20], 4
      %s234 = int_to_ptr.vmem [resolvable:$true] %s233
      %236 = dma.hbm_to_vmem [thread:$0]  %s41, 16, %s234, [#allocation21]
    $region85: #{discriminator_forward.1} parent=1 // pred_fallthru
      _
    // Predicated region
    $region86: #{discriminator_forward.1} parent=1 // pred_check
      _
    $region87: #{discriminator_forward.1} parent=1 // pred_check_branch
      %238 = sbr.rel (0) target = $region89
    $region88: #{discriminator_forward.1} parent=1 // pred_region
      %s240 = ssub.s32 16, 16
      %241 = vsyncadd [#allocation21], %s240
      %s243 = sshll.u32 [#allocation22], 4
      %s244 = int_to_ptr.vmem [resolvable:$true] %s243
      %246 = dma.hbm_to_vmem [thread:$0]  %s43, 16, %s244, [#allocation21]
    $region89: #{discriminator_forward.1} parent=1 // pred_fallthru
      _
    // Predicated region
    $region90: #{discriminator_forward.1} parent=1 // pred_check
      _
    $region91: #{discriminator_forward.1} parent=1 // pred_check_branch
      %248 = sbr.rel (0) target = $region93
    $region92: #{discriminator_forward.1} parent=1 // pred_region
      _
    $region93: #{discriminator_forward.1} parent=1 // pred_fallthru
      _
    // Predicated region
    $region94: #{discriminator_forward.1} parent=1 // pred_check
      _
    $region95: #{discriminator_forward.1} parent=1 // pred_check_branch
      %250 = sbr.rel (0) target = $region97
    $region96: #{discriminator_forward.1} parent=1 // pred_region
      _
    $region97: #{discriminator_forward.1} parent=1 // pred_fallthru
      _
    // Predicated region
    $region98: #{discriminator_forward.1} parent=1 // pred_check
      _
    $region99: #{discriminator_forward.1} parent=1 // pred_check_branch
      %252 = sbr.rel (0) target = $region101
    $region100: #{discriminator_forward.1} parent=1 // pred_region
      %s254 = ssub.s32 512, 512
      %255 = vsyncadd [#allocation24], %s254
      %s256 = sshll.u32 [#allocation23], 4
      %s257 = int_to_ptr.vmem [resolvable:$true] %s256
      %262 = dma.hbm_to_vmem [thread:$0]  %s49, 512, %s257, [#allocation24], 128, 128, 8
    $region101: #{discriminator_forward.1} parent=1 // pred_fallthru
      _
    // Predicated region
    $region102: #{discriminator_forward.1} parent=1 // pred_check
      _
    $region103: #{discriminator_forward.1} parent=1 // pred_check_branch
      %264 = sbr.rel (0) target = $region105
    $region104: #{discriminator_forward.1} parent=1 // pred_region
      %s266 = ssub.s32 512, 512
      %267 = vsyncadd [#allocation24], %s266
      %s268 = sshll.u32 [#allocation25], 4
      %s269 = int_to_ptr.vmem [resolvable:$true] %s268
      %274 = dma.hbm_to_vmem [thread:$0]  %s51, 512, %s269, [#allocation24], 128, 128, 8
    $region105: #{discriminator_forward.1} parent=1 // pred_fallthru
      _
    // Predicated region
    $region106: #{discriminator_forward.1} parent=1 // pred_check
      _
    $region107: #{discriminator_forward.1} parent=1 // pred_check_branch
      %276 = sbr.rel (0) target = $region109
    $region108: #{discriminator_forward.1} parent=1 // pred_region
      %s278 = ssub.s32 512, 512
      %279 = vsyncadd [#allocation27], %s278
      %s280 = sshll.u32 [#allocation26], 4
      %s281 = int_to_ptr.vmem [resolvable:$true] %s280
      %286 = dma.hbm_to_vmem [thread:$0]  %s53, 512, %s281, [#allocation27], 128, 128, 8
    $region109: #{discriminator_forward.1} parent=1 // pred_fallthru
      _
    // Predicated region
    $region110: #{discriminator_forward.1} parent=1 // pred_check
      _
    $region111: #{discriminator_forward.1} parent=1 // pred_check_branch
      %288 = sbr.rel (0) target = $region113
    $region112: #{discriminator_forward.1} parent=1 // pred_region
      %s290 = ssub.s32 512, 512
      %291 = vsyncadd [#allocation27], %s290
      %s292 = sshll.u32 [#allocation28], 4
      %s293 = int_to_ptr.vmem [resolvable:$true] %s292
      %298 = dma.hbm_to_vmem [thread:$0]  %s55, 512, %s293, [#allocation27], 128, 128, 8
    $region113: #{discriminator_forward.1} parent=1 // pred_fallthru
      _
    // Predicated region
    $region114: #{discriminator_forward.1} parent=1 // pred_check
      _
    $region115: #{discriminator_forward.1} parent=1 // pred_check_branch
      %300 = sbr.rel (0) target = $region117
    $region116: #{discriminator_forward.1} parent=1 // pred_region
      %s302 = ssub.s32 512, 512
      %303 = vsyncadd [#allocation30], %s302
      %s304 = sshll.u32 [#allocation29], 4
      %s305 = int_to_ptr.vmem [resolvable:$true] %s304
      %310 = dma.hbm_to_vmem [thread:$0]  %s57, 512, %s305, [#allocation30], 128, 128, 8
    $region117: #{discriminator_forward.1} parent=1 // pred_fallthru
      _
    // Predicated region
    $region118: #{discriminator_forward.1} parent=1 // pred_check
      _
    $region119: #{discriminator_forward.1} parent=1 // pred_check_branch
      %312 = sbr.rel (0) target = $region121
    $region120: #{discriminator_forward.1} parent=1 // pred_region
      _
    $region121: #{discriminator_forward.1} parent=1 // pred_fallthru
      _
    // Predicated region
    $region122: #{discriminator_forward.1} parent=1 // pred_check
      _
    $region123: #{discriminator_forward.1} parent=1 // pred_check_branch
      %314 = sbr.rel (0) target = $region125
    $region124: #{discriminator_forward.1} parent=1 // pred_region
      _
    $region125: #{discriminator_forward.1} parent=1 // pred_fallthru
      _
    // Predicated region
    $region126: #{discriminator_forward.1} parent=1 // pred_check
      _
    $region127: #{discriminator_forward.1} parent=1 // pred_check_branch
      %316 = sbr.rel (0) target = $region129
    $region128: #{discriminator_forward.1} parent=1 // pred_region
      _
    $region129: #{discriminator_forward.1} parent=1 // pred_fallthru
      _
    // Predicated region
    $region130: #{discriminator_forward.1} parent=1 // pred_check
      _
    $region131: #{discriminator_forward.1} parent=1 // pred_check_branch
      %318 = sbr.rel (0) target = $region133
    $region132: #{discriminator_forward.1} parent=1 // pred_region
      _
    $region133: #{discriminator_forward.1} parent=1 // pred_fallthru
      _
    // Predicated region
    $region134: #{discriminator_forward.1} parent=1 // pred_check
      _
    $region135: #{discriminator_forward.1} parent=1 // pred_check_branch
      %320 = sbr.rel (0) target = $region137
    $region136: #{discriminator_forward.1} parent=1 // pred_region
      %321 = dma.done [#allocation3], 16
    $region137: #{discriminator_forward.1} parent=1 // pred_fallthru
      _
    // Predicated region
    $region138: #{discriminator_forward.1} parent=1 // pred_check
      _
    $region139: #{discriminator_forward.1} parent=1 // pred_check_branch
      %323 = sbr.rel (0) target = $region141
    $region140: #{discriminator_forward.1} parent=1 // pred_region
      %324 = dma.done [#allocation6], 16
    $region141: #{discriminator_forward.1} parent=1 // pred_fallthru
      _
    // Predicated region
    $region142: #{discriminator_forward.1} parent=1 // pred_check
      _
    $region143: #{discriminator_forward.1} parent=1 // pred_check_branch
      %326 = sbr.rel (0) target = $region145
    $region144: #{discriminator_forward.1} parent=1 // pred_region
      %327 = dma.done [#allocation6], 16
    $region145: #{discriminator_forward.1} parent=1 // pred_fallthru
      _
    // Predicated region
    $region146: #{discriminator_forward.1} parent=1 // pred_check
      _
    $region147: #{discriminator_forward.1} parent=1 // pred_check_branch
      %329 = sbr.rel (0) target = $region149
    $region148: #{discriminator_forward.1} parent=1 // pred_region
      %330 = dma.done [#allocation9], 16
    $region149: #{discriminator_forward.1} parent=1 // pred_fallthru
      _
    // Predicated region
    $region150: #{discriminator_forward.1} parent=1 // pred_check
      _
    $region151: #{discriminator_forward.1} parent=1 // pred_check_branch
      %332 = sbr.rel (0) target = $region153
    $region152: #{discriminator_forward.1} parent=1 // pred_region
      %333 = dma.done [#allocation9], 512
    $region153: #{discriminator_forward.1} parent=1 // pred_fallthru
      _
    // Predicated region
    $region154: #{discriminator_forward.1} parent=1 // pred_check
      _
    $region155: #{discriminator_forward.1} parent=1 // pred_check_branch
      %335 = sbr.rel (0) target = $region157
    $region156: #{discriminator_forward.1} parent=1 // pred_region
      %336 = dma.done [#allocation12], 512
    $region157: #{discriminator_forward.1} parent=1 // pred_fallthru
      _
    // Predicated region
    $region158: #{discriminator_forward.1} parent=1 // pred_check
      _
    $region159: #{discriminator_forward.1} parent=1 // pred_check_branch
      %338 = sbr.rel (0) target = $region161
    $region160: #{discriminator_forward.1} parent=1 // pred_region
      %339 = dma.done [#allocation12], 512
    $region161: #{discriminator_forward.1} parent=1 // pred_fallthru
      _
    // Predicated region
    $region162: #{discriminator_forward.1} parent=1 // pred_check
      _
    $region163: #{discriminator_forward.1} parent=1 // pred_check_branch
      %341 = sbr.rel (0) target = $region165
    $region164: #{discriminator_forward.1} parent=1 // pred_region
      %342 = dma.done [#allocation15], 512
    $region165: #{discriminator_forward.1} parent=1 // pred_fallthru
      _
    // Predicated region
    $region166: #{discriminator_forward.1} parent=1 // pred_check
      _
    $region167: #{discriminator_forward.1} parent=1 // pred_check_branch
      %344 = sbr.rel (0) target = $region169
    $region168: #{discriminator_forward.1} parent=1 // pred_region
      %345 = dma.done [#allocation15], 512
    $region169: #{discriminator_forward.1} parent=1 // pred_fallthru
      _
    // Predicated region
    $region170: #{discriminator_forward.1} parent=1 // pred_check
      _
    $region171: #{discriminator_forward.1} parent=1 // pred_check_branch
      %347 = sbr.rel (0) target = $region173
    $region172: #{discriminator_forward.1} parent=1 // pred_region
      %348 = dma.done [#allocation18], 512
    $region173: #{discriminator_forward.1} parent=1 // pred_fallthru
      _
    // Predicated region
    $region174: #{discriminator_forward.1} parent=1 // pred_check
      _
    $region175: #{discriminator_forward.1} parent=1 // pred_check_branch
      %350 = sbr.rel (0) target = $region177
    $region176: #{discriminator_forward.1} parent=1 // pred_region
      %351 = dma.done [#allocation18], 16
    $region177: #{discriminator_forward.1} parent=1 // pred_fallthru
      _
    // Predicated region
    $region178: #{discriminator_forward.1} parent=1 // pred_check
      _
    $region179: #{discriminator_forward.1} parent=1 // pred_check_branch
      %353 = sbr.rel (0) target = $region181
    $region180: #{discriminator_forward.1} parent=1 // pred_region
      %354 = dma.done [#allocation21], 16
    $region181: #{discriminator_forward.1} parent=1 // pred_fallthru
      _
    // Predicated region
    $region182: #{discriminator_forward.1} parent=1 // pred_check
      _
    $region183: #{discriminator_forward.1} parent=1 // pred_check_branch
      %356 = sbr.rel (0) target = $region185
    $region184: #{discriminator_forward.1} parent=1 // pred_region
      %357 = dma.done [#allocation21], 16
    $region185: #{discriminator_forward.1} parent=1 // pred_fallthru
      _
    // Predicated region
    $region186: #{discriminator_forward.1} parent=1 // pred_check
      _
    $region187: #{discriminator_forward.1} parent=1 // pred_check_branch
      %359 = sbr.rel (0) target = $region189
    $region188: #{discriminator_forward.1} parent=1 // pred_region
      %360 = dma.done [#allocation24], 512
    $region189: #{discriminator_forward.1} parent=1 // pred_fallthru
      _
    // Predicated region
    $region190: #{discriminator_forward.1} parent=1 // pred_check
      _
    $region191: #{discriminator_forward.1} parent=1 // pred_check_branch
      %362 = sbr.rel (0) target = $region193
    $region192: #{discriminator_forward.1} parent=1 // pred_region
      %363 = dma.done [#allocation24], 512
    $region193: #{discriminator_forward.1} parent=1 // pred_fallthru
      _
    // Predicated region
    $region194: #{discriminator_forward.1} parent=1 // pred_check
      _
    $region195: #{discriminator_forward.1} parent=1 // pred_check_branch
      %365 = sbr.rel (0) target = $region197
    $region196: #{discriminator_forward.1} parent=1 // pred_region
      %366 = dma.done [#allocation27], 512
    $region197: #{discriminator_forward.1} parent=1 // pred_fallthru
      _
    // Predicated region
    $region198: #{discriminator_forward.1} parent=1 // pred_check
      _
    $region199: #{discriminator_forward.1} parent=1 // pred_check_branch
      %368 = sbr.rel (0) target = $region201
    $region200: #{discriminator_forward.1} parent=1 // pred_region
      %369 = dma.done [#allocation27], 512
    $region201: #{discriminator_forward.1} parent=1 // pred_fallthru
      _
    // Predicated region
    $region202: #{discriminator_forward.1} parent=1 // pred_check
      _
    $region203: #{discriminator_forward.1} parent=1 // pred_check_branch
      %371 = sbr.rel (0) target = $region205
    $region204: #{discriminator_forward.1} parent=1 // pred_region
      %372 = dma.done [#allocation30], 512
    $region205: #{discriminator_forward.1} parent=1 // pred_fallthru
      _
    %v373 = vld [vmem:[%s1] sm:$0xff]
    %v374 = vld [vmem:[%s1 + $0x8] sm:$0xff]
    %v375 = vld [vmem:[%s1 + $0x10] sm:$0xff]
    %v376 = vld [vmem:[%s1 + $0x18] sm:$0xff]
    %v377 = vld [vmem:[%s1 + $0x20] sm:$0xff]
    %v378 = vld [vmem:[%s1 + $0x28] sm:$0xff]
    %v379 = vld [vmem:[%s1 + $0x30] sm:$0xff]
    %v380 = vld [vmem:[%s1 + $0x38] sm:$0xff]
    %v381 = vld [vmem:[%s3] sm:$0xff]
    %v382 = vlaneseq
    %v383 = vand.u32 %v382, 127
    %384 = vset.pattern.permute.xlu0 0
    %385 = vperm.xlu0 %384, %v381
    %v386 = vpop.permute.xlu0 %385
    %vm387 = vcmp.eq.s32.totalorder %v386, %v383
    %v388 = vsel %vm387, 1.0, 0.0
    %vm389 = vcmask 523264
    %v391 = vsel %vm389, %v388, 0
    %393 = vmatprep.subr.mxu0 0.0
    %394 = vmatpush1.msra.mxu0 0.0
    %395 = vmatprep.subr.mxu0 0.0
    %396 = vmatpush1.msra.mxu0 0.0
    %397 = vmatprep.subr.mxu0 0.0
    %398 = vmatpush1.msra.mxu0 0.0
    %399 = vmatprep.subr.mxu0 0.0
    %400 = vmatpush1.msra.mxu0 0.0
    %401 = vmatprep.subr.mxu0 0.0
    %402 = vmatpush1.msra.mxu0 0.0
    %403 = vmatprep.subr.mxu0 0.0
    %404 = vmatpush1.msra.mxu0 0.0
    %405 = vmatprep.subr.mxu0 0.0
    %406 = vmatpush1.msra.mxu0 0.0
    %407 = vmatprep.subr.mxu0 0.0
    %408 = vmatpush1.msra.mxu0 0.0
    %409 = vmatprep.subr.mxu0 0.0
    %410 = vmatpush1.msra.mxu0 %v380
    %411 = vmatprep.subr.mxu0 0.0
    %412 = vmatpush1.msra.mxu0 %v379
    %413 = vmatprep.subr.mxu0 0.0
    %414 = vmatpush1.msra.mxu0 %v378
    %415 = vmatprep.subr.mxu0 0.0
    %416 = vmatpush1.msra.mxu0 %v377
    %417 = vmatprep.subr.mxu0 0.0
    %418 = vmatpush1.msra.mxu0 %v376
    %419 = vmatprep.subr.mxu0 0.0
    %420 = vmatpush1.msra.mxu0 %v375
    %421 = vmatprep.subr.mxu0 0.0
    %422 = vmatpush1.msra.mxu0 %v374
    %423 = vmatprep.subr.mxu0 0.0
    %424 = vmatpush1.msra.mxu0 %v373
    %425 = vmatprep.subr.mxu0 0.0
    %426 = vmatpush2.msra.mxu0 0.0
    %427 = vmatprep.subr.mxu0 0.0
    %428 = vmatpush2.msra.mxu0 0.0
    %429 = vmatprep.subr.mxu0 0.0
    %430 = vmatpush2.msra.mxu0 0.0
    %431 = vmatprep.subr.mxu0 0.0
    %432 = vmatpush2.msra.mxu0 0.0
    %433 = vmatprep.subr.mxu0 0.0
    %434 = vmatpush2.msra.mxu0 0.0
    %435 = vmatprep.subr.mxu0 0.0
    %436 = vmatpush2.msra.mxu0 0.0
    %437 = vmatprep.subr.mxu0 0.0
    %438 = vmatpush2.msra.mxu0 0.0
    %439 = vmatprep.subr.mxu0 0.0
    %440 = vmatpush2.msra.mxu0 0.0
    %441 = vmatprep.subr.mxu0 0.0
    %442 = vmatpush2.msra.mxu0 0.0
    %443 = vmatprep.subr.mxu0 0.0
    %444 = vmatpush2.msra.mxu0 0.0
    %445 = vmatprep.subr.mxu0 0.0
    %446 = vmatpush2.msra.mxu0 0.0
    %447 = vmatprep.subr.mxu0 0.0
    %448 = vmatpush2.msra.mxu0 0.0
    %449 = vmatprep.subr.mxu0 0.0
    %450 = vmatpush2.msra.mxu0 0.0
    %451 = vmatprep.subr.mxu0 0.0
    %452 = vmatpush2.msra.mxu0 0.0
    %453 = vmatprep.subr.mxu0 0.0
    %454 = vmatpush2.msra.mxu0 0.0
    %455 = vmatprep.subr.mxu0 0.0
    %456 = vmatpush2.msra.mxu0 0.0
    %457 = vmatprep.mubr.f32.mxu0 0.0
    %458 = vmatmul.mubr.f32.gmra.mxu0 %v391
    %v459 = vpop.f32.mrf.mxu0
    %v460 = vadd.f32 0.0, %v459
    %v461 = vpop.f32.mrf.mxu0
    %462 = vdwg.mxu0
    %v463 = vld [vmem:[%s7] sm:$0xff]
    %v464 = vld [vmem:[%s7 + $0x8] sm:$0xff]
    %v465 = vld [vmem:[%s7 + $0x10] sm:$0xff]
    %v466 = vld [vmem:[%s7 + $0x18] sm:$0xff]
    %v467 = vld [vmem:[%s9] sm:$0xff]
    %v468 = vld [vmem:[%s9 + $0x8] sm:$0xff]
    %v469 = vld [vmem:[%s9 + $0x10] sm:$0xff]
    %v470 = vld [vmem:[%s9 + $0x18] sm:$0xff]
    %v471 = vld [vmem:[%s11] sm:$0xff]
    %v472 = vld [vmem:[%s11 + $0x8] sm:$0xff]
    %v473 = vld [vmem:[%s11 + $0x10] sm:$0xff]
    %v474 = vld [vmem:[%s11 + $0x18] sm:$0xff]
    %v475 = vld [vmem:[%s13] sm:$0xff]
    %v476 = vld [vmem:[%s13 + $0x8] sm:$0xff]
    %v477 = vld [vmem:[%s13 + $0x10] sm:$0xff]
    %v478 = vld [vmem:[%s13 + $0x18] sm:$0xff]
    %v479 = vld [vmem:[%s15] sm:$0xff]
    %v480 = vld [vmem:[%s15 + $0x8] sm:$0xff]
    %v481 = vld [vmem:[%s15 + $0x10] sm:$0xff]
    %v482 = vld [vmem:[%s15 + $0x18] sm:$0xff]
    %v483 = vld [vmem:[%s17] sm:$0xff]
    %v484 = vld [vmem:[%s17 + $0x8] sm:$0xff]
    %v485 = vld [vmem:[%s17 + $0x10] sm:$0xff]
    %v486 = vld [vmem:[%s17 + $0x18] sm:$0xff]
    %v487 = vld [vmem:[#allocation2] sm:$0x1]
    %v488 = vld [vmem:[#allocation5] sm:$0x1]
    %v489 = vld [vmem:[#allocation7] sm:$0x1]
    %v490 = vld [vmem:[#allocation8] sm:$0x1]
    %v491 = vld [vmem:[#allocation10] sm:$0xff]
    %v492 = vld [vmem:[#allocation10 + $0x8] sm:$0xff]
    %v493 = vld [vmem:[#allocation10 + $0x10] sm:$0xff]
    %v494 = vld [vmem:[#allocation10 + $0x18] sm:$0xff]
    %v495 = vld [vmem:[#allocation11] sm:$0xff]
    %v496 = vld [vmem:[#allocation11 + $0x8] sm:$0xff]
    %v497 = vld [vmem:[#allocation11 + $0x10] sm:$0xff]
    %v498 = vld [vmem:[#allocation11 + $0x18] sm:$0xff]
    %v499 = vld [vmem:[#allocation13] sm:$0xff]
    %v500 = vld [vmem:[#allocation13 + $0x8] sm:$0xff]
    %v501 = vld [vmem:[#allocation13 + $0x10] sm:$0xff]
    %v502 = vld [vmem:[#allocation13 + $0x18] sm:$0xff]
    %v503 = vld [vmem:[#allocation14] sm:$0xff]
    %v504 = vld [vmem:[#allocation14 + $0x8] sm:$0xff]
    %v505 = vld [vmem:[#allocation14 + $0x10] sm:$0xff]
    %v506 = vld [vmem:[#allocation14 + $0x18] sm:$0xff]
    %v507 = vld [vmem:[#allocation16] sm:$0xff]
    %v508 = vld [vmem:[#allocation16 + $0x8] sm:$0xff]
    %v509 = vld [vmem:[#allocation16 + $0x10] sm:$0xff]
    %v510 = vld [vmem:[#allocation16 + $0x18] sm:$0xff]
    %v511 = vld [vmem:[#allocation17] sm:$0xff]
    %v512 = vld [vmem:[#allocation17 + $0x8] sm:$0xff]
    %v513 = vld [vmem:[#allocation17 + $0x10] sm:$0xff]
    %v514 = vld [vmem:[#allocation17 + $0x18] sm:$0xff]
    %v515 = vld [vmem:[#allocation19] sm:$0x1]
    %v516 = vld [vmem:[#allocation20] sm:$0x1]
    %v517 = vld [vmem:[#allocation22] sm:$0x1]
    %v518 = vld [vmem:[%s45] sm:$0x1]
    %v520 = vlaneseq
    %v521 = vshrl.u32 %v520, 7
    %v522 = vsub.s32 0, %v521
    %v523 = vrot.slane %v487, %v522
    %vm525 = vcmask 261120
    %v527 = vsel %vm525, %v460, 0
    %529 = vmatprep.subr.mxu0 0.0
    %530 = vmatpush1.msra.mxu0 0.0
    %531 = vmatprep.subr.mxu0 0.0
    %532 = vmatpush1.msra.mxu0 0.0
    %533 = vmatprep.subr.mxu0 0.0
    %534 = vmatpush1.msra.mxu0 0.0
    %535 = vmatprep.subr.mxu0 0.0
    %536 = vmatpush1.msra.mxu0 0.0
    %537 = vmatprep.subr.mxu0 0.0
    %538 = vmatpush1.msra.mxu0 0.0
    %539 = vmatprep.subr.mxu0 0.0
    %540 = vmatpush1.msra.mxu0 0.0
    %541 = vmatprep.subr.mxu0 0.0
    %542 = vmatpush1.msra.mxu0 0.0
    %543 = vmatprep.subr.mxu0 0.0
    %544 = vmatpush1.msra.mxu0 0.0
    %545 = vmatprep.subr.mxu0 0.0
    %546 = vmatpush1.msra.mxu0 0.0
    %547 = vmatprep.subr.mxu0 0.0
    %548 = vmatpush1.msra.mxu0 0.0
    %549 = vmatprep.subr.mxu0 0.0
    %550 = vmatpush1.msra.mxu0 0.0
    %551 = vmatprep.subr.mxu0 0.0
    %552 = vmatpush1.msra.mxu0 0.0
    %553 = vmatprep.subr.mxu0 0.0
    %554 = vmatpush1.msra.mxu0 %v466
    %555 = vmatprep.subr.mxu0 0.0
    %556 = vmatpush1.msra.mxu0 %v465
    %557 = vmatprep.subr.mxu0 0.0
    %558 = vmatpush1.msra.mxu0 %v464
    %559 = vmatprep.subr.mxu0 0.0
    %560 = vmatpush1.msra.mxu0 %v463
    %561 = vmatprep.subr.mxu0 0.0
    %562 = vmatpush2.msra.mxu0 0.0
    %563 = vmatprep.subr.mxu0 0.0
    %564 = vmatpush2.msra.mxu0 0.0
    %565 = vmatprep.subr.mxu0 0.0
    %566 = vmatpush2.msra.mxu0 0.0
    %567 = vmatprep.subr.mxu0 0.0
    %568 = vmatpush2.msra.mxu0 0.0
    %569 = vmatprep.subr.mxu0 0.0
    %570 = vmatpush2.msra.mxu0 0.0
    %571 = vmatprep.subr.mxu0 0.0
    %572 = vmatpush2.msra.mxu0 0.0
    %573 = vmatprep.subr.mxu0 0.0
    %574 = vmatpush2.msra.mxu0 0.0
    %575 = vmatprep.subr.mxu0 0.0
    %576 = vmatpush2.msra.mxu0 0.0
    %577 = vmatprep.subr.mxu0 0.0
    %578 = vmatpush2.msra.mxu0 0.0
    %579 = vmatprep.subr.mxu0 0.0
    %580 = vmatpush2.msra.mxu0 0.0
    %581 = vmatprep.subr.mxu0 0.0
    %582 = vmatpush2.msra.mxu0 0.0
    %583 = vmatprep.subr.mxu0 0.0
    %584 = vmatpush2.msra.mxu0 0.0
    %585 = vmatprep.subr.mxu0 0.0
    %586 = vmatpush2.msra.mxu0 0.0
    %587 = vmatprep.subr.mxu0 0.0
    %588 = vmatpush2.msra.mxu0 0.0
    %589 = vmatprep.subr.mxu0 0.0
    %590 = vmatpush2.msra.mxu0 0.0
    %591 = vmatprep.subr.mxu0 0.0
    %592 = vmatpush2.msra.mxu0 0.0
    %593 = vmatprep.mubr.f32.mxu0 0.0
    %594 = vmatmul.mubr.f32.gmra.mxu0 %v527
    %v595 = vpop.f32.mrf.mxu0
    %v596 = vadd.f32 %v523, %v595
    %v597 = vpop.f32.mrf.mxu0
    %598 = vdwg.mxu0
    %v600 = vlaneseq
    %v601 = vshrl.u32 %v600, 7
    %v602 = vsub.s32 0, %v601
    %v603 = vrot.slane %v488, %v602
    %605 = vmatprep.subr.mxu0 0.0
    %606 = vmatpush1.msra.mxu0 0.0
    %607 = vmatprep.subr.mxu0 0.0
    %608 = vmatpush1.msra.mxu0 0.0
    %609 = vmatprep.subr.mxu0 0.0
    %610 = vmatpush1.msra.mxu0 0.0
    %611 = vmatprep.subr.mxu0 0.0
    %612 = vmatpush1.msra.mxu0 0.0
    %613 = vmatprep.subr.mxu0 0.0
    %614 = vmatpush1.msra.mxu0 0.0
    %615 = vmatprep.subr.mxu0 0.0
    %616 = vmatpush1.msra.mxu0 0.0
    %617 = vmatprep.subr.mxu0 0.0
    %618 = vmatpush1.msra.mxu0 0.0
    %619 = vmatprep.subr.mxu0 0.0
    %620 = vmatpush1.msra.mxu0 0.0
    %621 = vmatprep.subr.mxu0 0.0
    %622 = vmatpush1.msra.mxu0 0.0
    %623 = vmatprep.subr.mxu0 0.0
    %624 = vmatpush1.msra.mxu0 0.0
    %625 = vmatprep.subr.mxu0 0.0
    %626 = vmatpush1.msra.mxu0 0.0
    %627 = vmatprep.subr.mxu0 0.0
    %628 = vmatpush1.msra.mxu0 0.0
    %629 = vmatprep.subr.mxu0 0.0
    %630 = vmatpush1.msra.mxu0 %v470
    %631 = vmatprep.subr.mxu0 0.0
    %632 = vmatpush1.msra.mxu0 %v469
    %633 = vmatprep.subr.mxu0 0.0
    %634 = vmatpush1.msra.mxu0 %v468
    %635 = vmatprep.subr.mxu0 0.0
    %636 = vmatpush1.msra.mxu0 %v467
    %637 = vmatprep.subr.mxu0 0.0
    %638 = vmatpush2.msra.mxu0 0.0
    %639 = vmatprep.subr.mxu0 0.0
    %640 = vmatpush2.msra.mxu0 0.0
    %641 = vmatprep.subr.mxu0 0.0
    %642 = vmatpush2.msra.mxu0 0.0
    %643 = vmatprep.subr.mxu0 0.0
    %644 = vmatpush2.msra.mxu0 0.0
    %645 = vmatprep.subr.mxu0 0.0
    %646 = vmatpush2.msra.mxu0 0.0
    %647 = vmatprep.subr.mxu0 0.0
    %648 = vmatpush2.msra.mxu0 0.0
    %649 = vmatprep.subr.mxu0 0.0
    %650 = vmatpush2.msra.mxu0 0.0
    %651 = vmatprep.subr.mxu0 0.0
    %652 = vmatpush2.msra.mxu0 0.0
    %653 = vmatprep.subr.mxu0 0.0
    %654 = vmatpush2.msra.mxu0 0.0
    %655 = vmatprep.subr.mxu0 0.0
    %656 = vmatpush2.msra.mxu0 0.0
    %657 = vmatprep.subr.mxu0 0.0
    %658 = vmatpush2.msra.mxu0 0.0
    %659 = vmatprep.subr.mxu0 0.0
    %660 = vmatpush2.msra.mxu0 0.0
    %661 = vmatprep.subr.mxu0 0.0
    %662 = vmatpush2.msra.mxu0 0.0
    %663 = vmatprep.subr.mxu0 0.0
    %664 = vmatpush2.msra.mxu0 0.0
    %665 = vmatprep.subr.mxu0 0.0
    %666 = vmatpush2.msra.mxu0 0.0
    %667 = vmatprep.subr.mxu0 0.0
    %668 = vmatpush2.msra.mxu0 0.0
    %669 = vmatprep.mubr.f32.mxu0 0.0
    %670 = vmatmul.mubr.f32.gmra.mxu0 %v527
    %v671 = vpop.f32.mrf.mxu0
    %v672 = vadd.f32 %v603, %v671
    %v673 = vpop.f32.mrf.mxu0
    %674 = vdwg.mxu0
    %v676 = vlaneseq
    %v677 = vshrl.u32 %v676, 7
    %v678 = vsub.s32 0, %v677
    %v679 = vrot.slane %v489, %v678
    %681 = vmatprep.subr.mxu0 0.0
    %682 = vmatpush1.msra.mxu0 0.0
    %683 = vmatprep.subr.mxu0 0.0
    %684 = vmatpush1.msra.mxu0 0.0
    %685 = vmatprep.subr.mxu0 0.0
    %686 = vmatpush1.msra.mxu0 0.0
    %687 = vmatprep.subr.mxu0 0.0
    %688 = vmatpush1.msra.mxu0 0.0
    %689 = vmatprep.subr.mxu0 0.0
    %690 = vmatpush1.msra.mxu0 0.0
    %691 = vmatprep.subr.mxu0 0.0
    %692 = vmatpush1.msra.mxu0 0.0
    %693 = vmatprep.subr.mxu0 0.0
    %694 = vmatpush1.msra.mxu0 0.0
    %695 = vmatprep.subr.mxu0 0.0
    %696 = vmatpush1.msra.mxu0 0.0
    %697 = vmatprep.subr.mxu0 0.0
    %698 = vmatpush1.msra.mxu0 0.0
    %699 = vmatprep.subr.mxu0 0.0
    %700 = vmatpush1.msra.mxu0 0.0
    %701 = vmatprep.subr.mxu0 0.0
    %702 = vmatpush1.msra.mxu0 0.0
    %703 = vmatprep.subr.mxu0 0.0
    %704 = vmatpush1.msra.mxu0 0.0
    %705 = vmatprep.subr.mxu0 0.0
    %706 = vmatpush1.msra.mxu0 %v474
    %707 = vmatprep.subr.mxu0 0.0
    %708 = vmatpush1.msra.mxu0 %v473
    %709 = vmatprep.subr.mxu0 0.0
    %710 = vmatpush1.msra.mxu0 %v472
    %711 = vmatprep.subr.mxu0 0.0
    %712 = vmatpush1.msra.mxu0 %v471
    %713 = vmatprep.subr.mxu0 0.0
    %714 = vmatpush2.msra.mxu0 0.0
    %715 = vmatprep.subr.mxu0 0.0
    %716 = vmatpush2.msra.mxu0 0.0
    %717 = vmatprep.subr.mxu0 0.0
    %718 = vmatpush2.msra.mxu0 0.0
    %719 = vmatprep.subr.mxu0 0.0
    %720 = vmatpush2.msra.mxu0 0.0
    %721 = vmatprep.subr.mxu0 0.0
    %722 = vmatpush2.msra.mxu0 0.0
    %723 = vmatprep.subr.mxu0 0.0
    %724 = vmatpush2.msra.mxu0 0.0
    %725 = vmatprep.subr.mxu0 0.0
    %726 = vmatpush2.msra.mxu0 0.0
    %727 = vmatprep.subr.mxu0 0.0
    %728 = vmatpush2.msra.mxu0 0.0
    %729 = vmatprep.subr.mxu0 0.0
    %730 = vmatpush2.msra.mxu0 0.0
    %731 = vmatprep.subr.mxu0 0.0
    %732 = vmatpush2.msra.mxu0 0.0
    %733 = vmatprep.subr.mxu0 0.0
    %734 = vmatpush2.msra.mxu0 0.0
    %735 = vmatprep.subr.mxu0 0.0
    %736 = vmatpush2.msra.mxu0 0.0
    %737 = vmatprep.subr.mxu0 0.0
    %738 = vmatpush2.msra.mxu0 0.0
    %739 = vmatprep.subr.mxu0 0.0
    %740 = vmatpush2.msra.mxu0 0.0
    %741 = vmatprep.subr.mxu0 0.0
    %742 = vmatpush2.msra.mxu0 0.0
    %743 = vmatprep.subr.mxu0 0.0
    %744 = vmatpush2.msra.mxu0 0.0
    %745 = vmatprep.mubr.f32.mxu0 0.0
    %746 = vmatmul.mubr.f32.gmra.mxu0 %v527
    %v747 = vpop.f32.mrf.mxu0
    %v748 = vadd.f32 %v679, %v747
    %v749 = vpop.f32.mrf.mxu0
    %750 = vdwg.mxu0
    %v752 = vsel %vm525, 0.0, 0
    %754 = vmatprep.subr.mxu0 0.0
    %755 = vmatpush1.msra.mxu0 0.0
    %756 = vmatprep.subr.mxu0 0.0
    %757 = vmatpush1.msra.mxu0 0.0
    %758 = vmatprep.subr.mxu0 0.0
    %759 = vmatpush1.msra.mxu0 0.0
    %760 = vmatprep.subr.mxu0 0.0
    %761 = vmatpush1.msra.mxu0 0.0
    %762 = vmatprep.subr.mxu0 0.0
    %763 = vmatpush1.msra.mxu0 0.0
    %764 = vmatprep.subr.mxu0 0.0
    %765 = vmatpush1.msra.mxu0 0.0
    %766 = vmatprep.subr.mxu0 0.0
    %767 = vmatpush1.msra.mxu0 0.0
    %768 = vmatprep.subr.mxu0 0.0
    %769 = vmatpush1.msra.mxu0 0.0
    %770 = vmatprep.subr.mxu0 0.0
    %771 = vmatpush1.msra.mxu0 0.0
    %772 = vmatprep.subr.mxu0 0.0
    %773 = vmatpush1.msra.mxu0 0.0
    %774 = vmatprep.subr.mxu0 0.0
    %775 = vmatpush1.msra.mxu0 0.0
    %776 = vmatprep.subr.mxu0 0.0
    %777 = vmatpush1.msra.mxu0 0.0
    %778 = vmatprep.subr.mxu0 0.0
    %779 = vmatpush1.msra.mxu0 %v478
    %780 = vmatprep.subr.mxu0 0.0
    %781 = vmatpush1.msra.mxu0 %v477
    %782 = vmatprep.subr.mxu0 0.0
    %783 = vmatpush1.msra.mxu0 %v476
    %784 = vmatprep.subr.mxu0 0.0
    %785 = vmatpush1.msra.mxu0 %v475
    %786 = vmatprep.subr.mxu0 0.0
    %787 = vmatpush2.msra.mxu0 0.0
    %788 = vmatprep.subr.mxu0 0.0
    %789 = vmatpush2.msra.mxu0 0.0
    %790 = vmatprep.subr.mxu0 0.0
    %791 = vmatpush2.msra.mxu0 0.0
    %792 = vmatprep.subr.mxu0 0.0
    %793 = vmatpush2.msra.mxu0 0.0
    %794 = vmatprep.subr.mxu0 0.0
    %795 = vmatpush2.msra.mxu0 0.0
    %796 = vmatprep.subr.mxu0 0.0
    %797 = vmatpush2.msra.mxu0 0.0
    %798 = vmatprep.subr.mxu0 0.0
    %799 = vmatpush2.msra.mxu0 0.0
    %800 = vmatprep.subr.mxu0 0.0
    %801 = vmatpush2.msra.mxu0 0.0
    %802 = vmatprep.subr.mxu0 0.0
    %803 = vmatpush2.msra.mxu0 0.0
    %804 = vmatprep.subr.mxu0 0.0
    %805 = vmatpush2.msra.mxu0 0.0
    %806 = vmatprep.subr.mxu0 0.0
    %807 = vmatpush2.msra.mxu0 0.0
    %808 = vmatprep.subr.mxu0 0.0
    %809 = vmatpush2.msra.mxu0 0.0
    %810 = vmatprep.subr.mxu0 0.0
    %811 = vmatpush2.msra.mxu0 0.0
    %812 = vmatprep.subr.mxu0 0.0
    %813 = vmatpush2.msra.mxu0 0.0
    %814 = vmatprep.subr.mxu0 0.0
    %815 = vmatpush2.msra.mxu0 0.0
    %816 = vmatprep.subr.mxu0 0.0
    %817 = vmatpush2.msra.mxu0 0.0
    %818 = vmatprep.mubr.f32.mxu0 0.0
    %819 = vmatmul.mubr.f32.gmra.mxu0 %v752
    %v820 = vpop.f32.mrf.mxu0
    %v821 = vadd.f32 0.0, %v820
    %v822 = vpop.f32.mrf.mxu0
    %823 = vdwg.mxu0
    %824 = vmatprep.subr.mxu0 0.0
    %825 = vmatpush1.msra.mxu0 0.0
    %826 = vmatprep.subr.mxu0 0.0
    %827 = vmatpush1.msra.mxu0 0.0
    %828 = vmatprep.subr.mxu0 0.0
    %829 = vmatpush1.msra.mxu0 0.0
    %830 = vmatprep.subr.mxu0 0.0
    %831 = vmatpush1.msra.mxu0 0.0
    %832 = vmatprep.subr.mxu0 0.0
    %833 = vmatpush1.msra.mxu0 0.0
    %834 = vmatprep.subr.mxu0 0.0
    %835 = vmatpush1.msra.mxu0 0.0
    %836 = vmatprep.subr.mxu0 0.0
    %837 = vmatpush1.msra.mxu0 0.0
    %838 = vmatprep.subr.mxu0 0.0
    %839 = vmatpush1.msra.mxu0 0.0
    %840 = vmatprep.subr.mxu0 0.0
    %841 = vmatpush1.msra.mxu0 0.0
    %842 = vmatprep.subr.mxu0 0.0
    %843 = vmatpush1.msra.mxu0 0.0
    %844 = vmatprep.subr.mxu0 0.0
    %845 = vmatpush1.msra.mxu0 0.0
    %846 = vmatprep.subr.mxu0 0.0
    %847 = vmatpush1.msra.mxu0 0.0
    %848 = vmatprep.subr.mxu0 0.0
    %849 = vmatpush1.msra.mxu0 %v482
    %850 = vmatprep.subr.mxu0 0.0
    %851 = vmatpush1.msra.mxu0 %v481
    %852 = vmatprep.subr.mxu0 0.0
    %853 = vmatpush1.msra.mxu0 %v480
    %854 = vmatprep.subr.mxu0 0.0
    %855 = vmatpush1.msra.mxu0 %v479
    %856 = vmatprep.subr.mxu0 0.0
    %857 = vmatpush2.msra.mxu0 0.0
    %858 = vmatprep.subr.mxu0 0.0
    %859 = vmatpush2.msra.mxu0 0.0
    %860 = vmatprep.subr.mxu0 0.0
    %861 = vmatpush2.msra.mxu0 0.0
    %862 = vmatprep.subr.mxu0 0.0
    %863 = vmatpush2.msra.mxu0 0.0
    %864 = vmatprep.subr.mxu0 0.0
    %865 = vmatpush2.msra.mxu0 0.0
    %866 = vmatprep.subr.mxu0 0.0
    %867 = vmatpush2.msra.mxu0 0.0
    %868 = vmatprep.subr.mxu0 0.0
    %869 = vmatpush2.msra.mxu0 0.0
    %870 = vmatprep.subr.mxu0 0.0
    %871 = vmatpush2.msra.mxu0 0.0
    %872 = vmatprep.subr.mxu0 0.0
    %873 = vmatpush2.msra.mxu0 0.0
    %874 = vmatprep.subr.mxu0 0.0
    %875 = vmatpush2.msra.mxu0 0.0
    %876 = vmatprep.subr.mxu0 0.0
    %877 = vmatpush2.msra.mxu0 0.0
    %878 = vmatprep.subr.mxu0 0.0
    %879 = vmatpush2.msra.mxu0 0.0
    %880 = vmatprep.subr.mxu0 0.0
    %881 = vmatpush2.msra.mxu0 0.0
    %882 = vmatprep.subr.mxu0 0.0
    %883 = vmatpush2.msra.mxu0 0.0
    %884 = vmatprep.subr.mxu0 0.0
    %885 = vmatpush2.msra.mxu0 0.0
    %886 = vmatprep.subr.mxu0 0.0
    %887 = vmatpush2.msra.mxu0 0.0
    %888 = vmatprep.mubr.f32.mxu0 0.0
    %889 = vmatmul.mubr.f32.gmra.mxu0 %v752
    %v890 = vpop.f32.mrf.mxu0
    %v891 = vadd.f32 0.0, %v890
    %v892 = vpop.f32.mrf.mxu0
    %893 = vdwg.mxu0
    %v894 = vadd.f32 %v596, %v821
    %v895 = vxor.u32 %v894, 2147483648
    %v896 = vmul.f32 %v895, 1.442695
    %v897 = vpow.pop %v896
    %v898 = vadd.f32 %v897, 1.0
    %v899 = vrcp.pop %v898
    %v900 = vmul.f32 1.0, %v899
    %v901 = vadd.f32 %v672, %v891
    %v902 = vxor.u32 %v901, 2147483648
    %v903 = vmul.f32 %v902, 1.442695
    %v904 = vpow.pop %v903
    %v905 = vadd.f32 %v904, 1.0
    %v906 = vrcp.pop %v905
    %v907 = vmul.f32 1.0, %v906
    %908 = vmatprep.subr.mxu0 0.0
    %909 = vmatpush1.msra.mxu0 0.0
    %910 = vmatprep.subr.mxu0 0.0
    %911 = vmatpush1.msra.mxu0 0.0
    %912 = vmatprep.subr.mxu0 0.0
    %913 = vmatpush1.msra.mxu0 0.0
    %914 = vmatprep.subr.mxu0 0.0
    %915 = vmatpush1.msra.mxu0 0.0
    %916 = vmatprep.subr.mxu0 0.0
    %917 = vmatpush1.msra.mxu0 0.0
    %918 = vmatprep.subr.mxu0 0.0
    %919 = vmatpush1.msra.mxu0 0.0
    %920 = vmatprep.subr.mxu0 0.0
    %921 = vmatpush1.msra.mxu0 0.0
    %922 = vmatprep.subr.mxu0 0.0
    %923 = vmatpush1.msra.mxu0 0.0
    %924 = vmatprep.subr.mxu0 0.0
    %925 = vmatpush1.msra.mxu0 0.0
    %926 = vmatprep.subr.mxu0 0.0
    %927 = vmatpush1.msra.mxu0 0.0
    %928 = vmatprep.subr.mxu0 0.0
    %929 = vmatpush1.msra.mxu0 0.0
    %930 = vmatprep.subr.mxu0 0.0
    %931 = vmatpush1.msra.mxu0 0.0
    %932 = vmatprep.subr.mxu0 0.0
    %933 = vmatpush1.msra.mxu0 %v486
    %934 = vmatprep.subr.mxu0 0.0
    %935 = vmatpush1.msra.mxu0 %v485
    %936 = vmatprep.subr.mxu0 0.0
    %937 = vmatpush1.msra.mxu0 %v484
    %938 = vmatprep.subr.mxu0 0.0
    %939 = vmatpush1.msra.mxu0 %v483
    %940 = vmatprep.subr.mxu0 0.0
    %941 = vmatpush2.msra.mxu0 0.0
    %942 = vmatprep.subr.mxu0 0.0
    %943 = vmatpush2.msra.mxu0 0.0
    %944 = vmatprep.subr.mxu0 0.0
    %945 = vmatpush2.msra.mxu0 0.0
    %946 = vmatprep.subr.mxu0 0.0
    %947 = vmatpush2.msra.mxu0 0.0
    %948 = vmatprep.subr.mxu0 0.0
    %949 = vmatpush2.msra.mxu0 0.0
    %950 = vmatprep.subr.mxu0 0.0
    %951 = vmatpush2.msra.mxu0 0.0
    %952 = vmatprep.subr.mxu0 0.0
    %953 = vmatpush2.msra.mxu0 0.0
    %954 = vmatprep.subr.mxu0 0.0
    %955 = vmatpush2.msra.mxu0 0.0
    %956 = vmatprep.subr.mxu0 0.0
    %957 = vmatpush2.msra.mxu0 0.0
    %958 = vmatprep.subr.mxu0 0.0
    %959 = vmatpush2.msra.mxu0 0.0
    %960 = vmatprep.subr.mxu0 0.0
    %961 = vmatpush2.msra.mxu0 0.0
    %962 = vmatprep.subr.mxu0 0.0
    %963 = vmatpush2.msra.mxu0 0.0
    %964 = vmatprep.subr.mxu0 0.0
    %965 = vmatpush2.msra.mxu0 0.0
    %966 = vmatprep.subr.mxu0 0.0
    %967 = vmatpush2.msra.mxu0 0.0
    %968 = vmatprep.subr.mxu0 0.0
    %969 = vmatpush2.msra.mxu0 0.0
    %970 = vmatprep.subr.mxu0 0.0
    %971 = vmatpush2.msra.mxu0 0.0
    %972 = vmatprep.mubr.f32.mxu0 0.0
    %973 = vmatmul.mubr.f32.gmra.mxu0 %v752
    %v974 = vpop.f32.mrf.mxu0
    %v975 = vadd.f32 %v490, %v974
    %v976 = vpop.f32.mrf.mxu0
    %977 = vdwg.mxu0
    %v978 = vmul.f32 %v900, %v975
    %v979 = vadd.f32 %v748, %v978
    %v980 = vtanh.pop %v979
    %v981 = vsub.f32 1.0, %v907
    %v982 = vmul.f32 %v981, %v980
    %v983 = vmul.f32 %v907, 0.0
    %v984 = vadd.f32 %v982, %v983
    %v986 = vsel %vm525, %v984, 0
    %988 = vmatprep.subr.mxu0 0.0
    %989 = vmatpush1.msra.mxu0 0.0
    %990 = vmatprep.subr.mxu0 0.0
    %991 = vmatpush1.msra.mxu0 0.0
    %992 = vmatprep.subr.mxu0 0.0
    %993 = vmatpush1.msra.mxu0 0.0
    %994 = vmatprep.subr.mxu0 0.0
    %995 = vmatpush1.msra.mxu0 0.0
    %996 = vmatprep.subr.mxu0 0.0
    %997 = vmatpush1.msra.mxu0 0.0
    %998 = vmatprep.subr.mxu0 0.0
    %999 = vmatpush1.msra.mxu0 0.0
    %1000 = vmatprep.subr.mxu0 0.0
    %1001 = vmatpush1.msra.mxu0 0.0
    %1002 = vmatprep.subr.mxu0 0.0
    %1003 = vmatpush1.msra.mxu0 0.0
    %1004 = vmatprep.subr.mxu0 0.0
    %1005 = vmatpush1.msra.mxu0 0.0
    %1006 = vmatprep.subr.mxu0 0.0
    %1007 = vmatpush1.msra.mxu0 0.0
    %1008 = vmatprep.subr.mxu0 0.0
    %1009 = vmatpush1.msra.mxu0 0.0
    %1010 = vmatprep.subr.mxu0 0.0
    %1011 = vmatpush1.msra.mxu0 0.0
    %1012 = vmatprep.subr.mxu0 0.0
    %1013 = vmatpush1.msra.mxu0 %v494
    %1014 = vmatprep.subr.mxu0 0.0
    %1015 = vmatpush1.msra.mxu0 %v493
    %1016 = vmatprep.subr.mxu0 0.0
    %1017 = vmatpush1.msra.mxu0 %v492
    %1018 = vmatprep.subr.mxu0 0.0
    %1019 = vmatpush1.msra.mxu0 %v491
    %1020 = vmatprep.subr.mxu0 0.0
    %1021 = vmatpush2.msra.mxu0 0.0
    %1022 = vmatprep.subr.mxu0 0.0
    %1023 = vmatpush2.msra.mxu0 0.0
    %1024 = vmatprep.subr.mxu0 0.0
    %1025 = vmatpush2.msra.mxu0 0.0
    %1026 = vmatprep.subr.mxu0 0.0
    %1027 = vmatpush2.msra.mxu0 0.0
    %1028 = vmatprep.subr.mxu0 0.0
    %1029 = vmatpush2.msra.mxu0 0.0
    %1030 = vmatprep.subr.mxu0 0.0
    %1031 = vmatpush2.msra.mxu0 0.0
    %1032 = vmatprep.subr.mxu0 0.0
    %1033 = vmatpush2.msra.mxu0 0.0
    %1034 = vmatprep.subr.mxu0 0.0
    %1035 = vmatpush2.msra.mxu0 0.0
    %1036 = vmatprep.subr.mxu0 0.0
    %1037 = vmatpush2.msra.mxu0 0.0
    %1038 = vmatprep.subr.mxu0 0.0
    %1039 = vmatpush2.msra.mxu0 0.0
    %1040 = vmatprep.subr.mxu0 0.0
    %1041 = vmatpush2.msra.mxu0 0.0
    %1042 = vmatprep.subr.mxu0 0.0
    %1043 = vmatpush2.msra.mxu0 0.0
    %1044 = vmatprep.subr.mxu0 0.0
    %1045 = vmatpush2.msra.mxu0 0.0
    %1046 = vmatprep.subr.mxu0 0.0
    %1047 = vmatpush2.msra.mxu0 0.0
    %1048 = vmatprep.subr.mxu0 0.0
    %1049 = vmatpush2.msra.mxu0 0.0
    %1050 = vmatprep.subr.mxu0 0.0
    %1051 = vmatpush2.msra.mxu0 0.0
    %1052 = vmatprep.mubr.f32.mxu0 0.0
    %1053 = vmatmul.mubr.f32.gmra.mxu0 %v986
    %v1054 = vpop.f32.mrf.mxu0
    %v1055 = vadd.f32 %v515, %v1054
    %v1056 = vpop.f32.mrf.mxu0
    %1057 = vdwg.mxu0
    %1058 = vmatprep.subr.mxu0 0.0
    %1059 = vmatpush1.msra.mxu0 0.0
    %1060 = vmatprep.subr.mxu0 0.0
    %1061 = vmatpush1.msra.mxu0 0.0
    %1062 = vmatprep.subr.mxu0 0.0
    %1063 = vmatpush1.msra.mxu0 0.0
    %1064 = vmatprep.subr.mxu0 0.0
    %1065 = vmatpush1.msra.mxu0 0.0
    %1066 = vmatprep.subr.mxu0 0.0
    %1067 = vmatpush1.msra.mxu0 0.0
    %1068 = vmatprep.subr.mxu0 0.0
    %1069 = vmatpush1.msra.mxu0 0.0
    %1070 = vmatprep.subr.mxu0 0.0
    %1071 = vmatpush1.msra.mxu0 0.0
    %1072 = vmatprep.subr.mxu0 0.0
    %1073 = vmatpush1.msra.mxu0 0.0
    %1074 = vmatprep.subr.mxu0 0.0
    %1075 = vmatpush1.msra.mxu0 0.0
    %1076 = vmatprep.subr.mxu0 0.0
    %1077 = vmatpush1.msra.mxu0 0.0
    %1078 = vmatprep.subr.mxu0 0.0
    %1079 = vmatpush1.msra.mxu0 0.0
    %1080 = vmatprep.subr.mxu0 0.0
    %1081 = vmatpush1.msra.mxu0 0.0
    %1082 = vmatprep.subr.mxu0 0.0
    %1083 = vmatpush1.msra.mxu0 %v498
    %1084 = vmatprep.subr.mxu0 0.0
    %1085 = vmatpush1.msra.mxu0 %v497
    %1086 = vmatprep.subr.mxu0 0.0
    %1087 = vmatpush1.msra.mxu0 %v496
    %1088 = vmatprep.subr.mxu0 0.0
    %1089 = vmatpush1.msra.mxu0 %v495
    %1090 = vmatprep.subr.mxu0 0.0
    %1091 = vmatpush2.msra.mxu0 0.0
    %1092 = vmatprep.subr.mxu0 0.0
    %1093 = vmatpush2.msra.mxu0 0.0
    %1094 = vmatprep.subr.mxu0 0.0
    %1095 = vmatpush2.msra.mxu0 0.0
    %1096 = vmatprep.subr.mxu0 0.0
    %1097 = vmatpush2.msra.mxu0 0.0
    %1098 = vmatprep.subr.mxu0 0.0
    %1099 = vmatpush2.msra.mxu0 0.0
    %1100 = vmatprep.subr.mxu0 0.0
    %1101 = vmatpush2.msra.mxu0 0.0
    %1102 = vmatprep.subr.mxu0 0.0
    %1103 = vmatpush2.msra.mxu0 0.0
    %1104 = vmatprep.subr.mxu0 0.0
    %1105 = vmatpush2.msra.mxu0 0.0
    %1106 = vmatprep.subr.mxu0 0.0
    %1107 = vmatpush2.msra.mxu0 0.0
    %1108 = vmatprep.subr.mxu0 0.0
    %1109 = vmatpush2.msra.mxu0 0.0
    %1110 = vmatprep.subr.mxu0 0.0
    %1111 = vmatpush2.msra.mxu0 0.0
    %1112 = vmatprep.subr.mxu0 0.0
    %1113 = vmatpush2.msra.mxu0 0.0
    %1114 = vmatprep.subr.mxu0 0.0
    %1115 = vmatpush2.msra.mxu0 0.0
    %1116 = vmatprep.subr.mxu0 0.0
    %1117 = vmatpush2.msra.mxu0 0.0
    %1118 = vmatprep.subr.mxu0 0.0
    %1119 = vmatpush2.msra.mxu0 0.0
    %1120 = vmatprep.subr.mxu0 0.0
    %1121 = vmatpush2.msra.mxu0 0.0
    %1122 = vmatprep.mubr.f32.mxu0 0.0
    %1123 = vmatmul.mubr.f32.gmra.mxu0 %v986
    %v1124 = vpop.f32.mrf.mxu0
    %v1125 = vadd.f32 %v516, %v1124
    %v1126 = vpop.f32.mrf.mxu0
    %1127 = vdwg.mxu0
    %1128 = vmatprep.subr.mxu0 0.0
    %1129 = vmatpush1.msra.mxu0 0.0
    %1130 = vmatprep.subr.mxu0 0.0
    %1131 = vmatpush1.msra.mxu0 0.0
    %1132 = vmatprep.subr.mxu0 0.0
    %1133 = vmatpush1.msra.mxu0 0.0
    %1134 = vmatprep.subr.mxu0 0.0
    %1135 = vmatpush1.msra.mxu0 0.0
    %1136 = vmatprep.subr.mxu0 0.0
    %1137 = vmatpush1.msra.mxu0 0.0
    %1138 = vmatprep.subr.mxu0 0.0
    %1139 = vmatpush1.msra.mxu0 0.0
    %1140 = vmatprep.subr.mxu0 0.0
    %1141 = vmatpush1.msra.mxu0 0.0
    %1142 = vmatprep.subr.mxu0 0.0
    %1143 = vmatpush1.msra.mxu0 0.0
    %1144 = vmatprep.subr.mxu0 0.0
    %1145 = vmatpush1.msra.mxu0 0.0
    %1146 = vmatprep.subr.mxu0 0.0
    %1147 = vmatpush1.msra.mxu0 0.0
    %1148 = vmatprep.subr.mxu0 0.0
    %1149 = vmatpush1.msra.mxu0 0.0
    %1150 = vmatprep.subr.mxu0 0.0
    %1151 = vmatpush1.msra.mxu0 0.0
    %1152 = vmatprep.subr.mxu0 0.0
    %1153 = vmatpush1.msra.mxu0 %v502
    %1154 = vmatprep.subr.mxu0 0.0
    %1155 = vmatpush1.msra.mxu0 %v501
    %1156 = vmatprep.subr.mxu0 0.0
    %1157 = vmatpush1.msra.mxu0 %v500
    %1158 = vmatprep.subr.mxu0 0.0
    %1159 = vmatpush1.msra.mxu0 %v499
    %1160 = vmatprep.subr.mxu0 0.0
    %1161 = vmatpush2.msra.mxu0 0.0
    %1162 = vmatprep.subr.mxu0 0.0
    %1163 = vmatpush2.msra.mxu0 0.0
    %1164 = vmatprep.subr.mxu0 0.0
    %1165 = vmatpush2.msra.mxu0 0.0
    %1166 = vmatprep.subr.mxu0 0.0
    %1167 = vmatpush2.msra.mxu0 0.0
    %1168 = vmatprep.subr.mxu0 0.0
    %1169 = vmatpush2.msra.mxu0 0.0
    %1170 = vmatprep.subr.mxu0 0.0
    %1171 = vmatpush2.msra.mxu0 0.0
    %1172 = vmatprep.subr.mxu0 0.0
    %1173 = vmatpush2.msra.mxu0 0.0
    %1174 = vmatprep.subr.mxu0 0.0
    %1175 = vmatpush2.msra.mxu0 0.0
    %1176 = vmatprep.subr.mxu0 0.0
    %1177 = vmatpush2.msra.mxu0 0.0
    %1178 = vmatprep.subr.mxu0 0.0
    %1179 = vmatpush2.msra.mxu0 0.0
    %1180 = vmatprep.subr.mxu0 0.0
    %1181 = vmatpush2.msra.mxu0 0.0
    %1182 = vmatprep.subr.mxu0 0.0
    %1183 = vmatpush2.msra.mxu0 0.0
    %1184 = vmatprep.subr.mxu0 0.0
    %1185 = vmatpush2.msra.mxu0 0.0
    %1186 = vmatprep.subr.mxu0 0.0
    %1187 = vmatpush2.msra.mxu0 0.0
    %1188 = vmatprep.subr.mxu0 0.0
    %1189 = vmatpush2.msra.mxu0 0.0
    %1190 = vmatprep.subr.mxu0 0.0
    %1191 = vmatpush2.msra.mxu0 0.0
    %1192 = vmatprep.mubr.f32.mxu0 0.0
    %1193 = vmatmul.mubr.f32.gmra.mxu0 %v986
    %v1194 = vpop.f32.mrf.mxu0
    %v1195 = vadd.f32 %v517, %v1194
    %v1196 = vpop.f32.mrf.mxu0
    %1197 = vdwg.mxu0
    %1198 = vmatprep.subr.mxu0 0.0
    %1199 = vmatpush1.msra.mxu0 0.0
    %1200 = vmatprep.subr.mxu0 0.0
    %1201 = vmatpush1.msra.mxu0 0.0
    %1202 = vmatprep.subr.mxu0 0.0
    %1203 = vmatpush1.msra.mxu0 0.0
    %1204 = vmatprep.subr.mxu0 0.0
    %1205 = vmatpush1.msra.mxu0 0.0
    %1206 = vmatprep.subr.mxu0 0.0
    %1207 = vmatpush1.msra.mxu0 0.0
    %1208 = vmatprep.subr.mxu0 0.0
    %1209 = vmatpush1.msra.mxu0 0.0
    %1210 = vmatprep.subr.mxu0 0.0
    %1211 = vmatpush1.msra.mxu0 0.0
    %1212 = vmatprep.subr.mxu0 0.0
    %1213 = vmatpush1.msra.mxu0 0.0
    %1214 = vmatprep.subr.mxu0 0.0
    %1215 = vmatpush1.msra.mxu0 0.0
    %1216 = vmatprep.subr.mxu0 0.0
    %1217 = vmatpush1.msra.mxu0 0.0
    %1218 = vmatprep.subr.mxu0 0.0
    %1219 = vmatpush1.msra.mxu0 0.0
    %1220 = vmatprep.subr.mxu0 0.0
    %1221 = vmatpush1.msra.mxu0 0.0
    %1222 = vmatprep.subr.mxu0 0.0
    %1223 = vmatpush1.msra.mxu0 %v506
    %1224 = vmatprep.subr.mxu0 0.0
    %1225 = vmatpush1.msra.mxu0 %v505
    %1226 = vmatprep.subr.mxu0 0.0
    %1227 = vmatpush1.msra.mxu0 %v504
    %1228 = vmatprep.subr.mxu0 0.0
    %1229 = vmatpush1.msra.mxu0 %v503
    %1230 = vmatprep.subr.mxu0 0.0
    %1231 = vmatpush2.msra.mxu0 0.0
    %1232 = vmatprep.subr.mxu0 0.0
    %1233 = vmatpush2.msra.mxu0 0.0
    %1234 = vmatprep.subr.mxu0 0.0
    %1235 = vmatpush2.msra.mxu0 0.0
    %1236 = vmatprep.subr.mxu0 0.0
    %1237 = vmatpush2.msra.mxu0 0.0
    %1238 = vmatprep.subr.mxu0 0.0
    %1239 = vmatpush2.msra.mxu0 0.0
    %1240 = vmatprep.subr.mxu0 0.0
    %1241 = vmatpush2.msra.mxu0 0.0
    %1242 = vmatprep.subr.mxu0 0.0
    %1243 = vmatpush2.msra.mxu0 0.0
    %1244 = vmatprep.subr.mxu0 0.0
    %1245 = vmatpush2.msra.mxu0 0.0
    %1246 = vmatprep.subr.mxu0 0.0
    %1247 = vmatpush2.msra.mxu0 0.0
    %1248 = vmatprep.subr.mxu0 0.0
    %1249 = vmatpush2.msra.mxu0 0.0
    %1250 = vmatprep.subr.mxu0 0.0
    %1251 = vmatpush2.msra.mxu0 0.0
    %1252 = vmatprep.subr.mxu0 0.0
    %1253 = vmatpush2.msra.mxu0 0.0
    %1254 = vmatprep.subr.mxu0 0.0
    %1255 = vmatpush2.msra.mxu0 0.0
    %1256 = vmatprep.subr.mxu0 0.0
    %1257 = vmatpush2.msra.mxu0 0.0
    %1258 = vmatprep.subr.mxu0 0.0
    %1259 = vmatpush2.msra.mxu0 0.0
    %1260 = vmatprep.subr.mxu0 0.0
    %1261 = vmatpush2.msra.mxu0 0.0
    %1262 = vmatprep.mubr.f32.mxu0 0.0
    %1263 = vmatmul.mubr.f32.gmra.mxu0 %v752
    %v1264 = vpop.f32.mrf.mxu0
    %v1265 = vadd.f32 0.0, %v1264
    %v1266 = vpop.f32.mrf.mxu0
    %1267 = vdwg.mxu0
    %1268 = vmatprep.subr.mxu0 0.0
    %1269 = vmatpush1.msra.mxu0 0.0
    %1270 = vmatprep.subr.mxu0 0.0
    %1271 = vmatpush1.msra.mxu0 0.0
    %1272 = vmatprep.subr.mxu0 0.0
    %1273 = vmatpush1.msra.mxu0 0.0
    %1274 = vmatprep.subr.mxu0 0.0
    %1275 = vmatpush1.msra.mxu0 0.0
    %1276 = vmatprep.subr.mxu0 0.0
    %1277 = vmatpush1.msra.mxu0 0.0
    %1278 = vmatprep.subr.mxu0 0.0
    %1279 = vmatpush1.msra.mxu0 0.0
    %1280 = vmatprep.subr.mxu0 0.0
    %1281 = vmatpush1.msra.mxu0 0.0
    %1282 = vmatprep.subr.mxu0 0.0
    %1283 = vmatpush1.msra.mxu0 0.0
    %1284 = vmatprep.subr.mxu0 0.0
    %1285 = vmatpush1.msra.mxu0 0.0
    %1286 = vmatprep.subr.mxu0 0.0
    %1287 = vmatpush1.msra.mxu0 0.0
    %1288 = vmatprep.subr.mxu0 0.0
    %1289 = vmatpush1.msra.mxu0 0.0
    %1290 = vmatprep.subr.mxu0 0.0
    %1291 = vmatpush1.msra.mxu0 0.0
    %1292 = vmatprep.subr.mxu0 0.0
    %1293 = vmatpush1.msra.mxu0 %v510
    %1294 = vmatprep.subr.mxu0 0.0
    %1295 = vmatpush1.msra.mxu0 %v509
    %1296 = vmatprep.subr.mxu0 0.0
    %1297 = vmatpush1.msra.mxu0 %v508
    %1298 = vmatprep.subr.mxu0 0.0
    %1299 = vmatpush1.msra.mxu0 %v507
    %1300 = vmatprep.subr.mxu0 0.0
    %1301 = vmatpush2.msra.mxu0 0.0
    %1302 = vmatprep.subr.mxu0 0.0
    %1303 = vmatpush2.msra.mxu0 0.0
    %1304 = vmatprep.subr.mxu0 0.0
    %1305 = vmatpush2.msra.mxu0 0.0
    %1306 = vmatprep.subr.mxu0 0.0
    %1307 = vmatpush2.msra.mxu0 0.0
    %1308 = vmatprep.subr.mxu0 0.0
    %1309 = vmatpush2.msra.mxu0 0.0
    %1310 = vmatprep.subr.mxu0 0.0
    %1311 = vmatpush2.msra.mxu0 0.0
    %1312 = vmatprep.subr.mxu0 0.0
    %1313 = vmatpush2.msra.mxu0 0.0
    %1314 = vmatprep.subr.mxu0 0.0
    %1315 = vmatpush2.msra.mxu0 0.0
    %1316 = vmatprep.subr.mxu0 0.0
    %1317 = vmatpush2.msra.mxu0 0.0
    %1318 = vmatprep.subr.mxu0 0.0
    %1319 = vmatpush2.msra.mxu0 0.0
    %1320 = vmatprep.subr.mxu0 0.0
    %1321 = vmatpush2.msra.mxu0 0.0
    %1322 = vmatprep.subr.mxu0 0.0
    %1323 = vmatpush2.msra.mxu0 0.0
    %1324 = vmatprep.subr.mxu0 0.0
    %1325 = vmatpush2.msra.mxu0 0.0
    %1326 = vmatprep.subr.mxu0 0.0
    %1327 = vmatpush2.msra.mxu0 0.0
    %1328 = vmatprep.subr.mxu0 0.0
    %1329 = vmatpush2.msra.mxu0 0.0
    %1330 = vmatprep.subr.mxu0 0.0
    %1331 = vmatpush2.msra.mxu0 0.0
    %1332 = vmatprep.mubr.f32.mxu0 0.0
    %1333 = vmatmul.mubr.f32.gmra.mxu0 %v752
    %v1334 = vpop.f32.mrf.mxu0
    %v1335 = vadd.f32 0.0, %v1334
    %v1336 = vpop.f32.mrf.mxu0
    %1337 = vdwg.mxu0
    %v1338 = vadd.f32 %v1055, %v1265
    %v1339 = vxor.u32 %v1338, 2147483648
    %v1340 = vmul.f32 %v1339, 1.442695
    %v1341 = vpow.pop %v1340
    %v1342 = vadd.f32 %v1341, 1.0
    %v1343 = vrcp.pop %v1342
    %v1344 = vmul.f32 1.0, %v1343
    %v1345 = vadd.f32 %v1125, %v1335
    %v1346 = vxor.u32 %v1345, 2147483648
    %v1347 = vmul.f32 %v1346, 1.442695
    %v1348 = vpow.pop %v1347
    %v1349 = vadd.f32 %v1348, 1.0
    %v1350 = vrcp.pop %v1349
    %v1351 = vmul.f32 1.0, %v1350
    %1352 = vmatprep.subr.mxu0 0.0
    %1353 = vmatpush1.msra.mxu0 0.0
    %1354 = vmatprep.subr.mxu0 0.0
    %1355 = vmatpush1.msra.mxu0 0.0
    %1356 = vmatprep.subr.mxu0 0.0
    %1357 = vmatpush1.msra.mxu0 0.0
    %1358 = vmatprep.subr.mxu0 0.0
    %1359 = vmatpush1.msra.mxu0 0.0
    %1360 = vmatprep.subr.mxu0 0.0
    %1361 = vmatpush1.msra.mxu0 0.0
    %1362 = vmatprep.subr.mxu0 0.0
    %1363 = vmatpush1.msra.mxu0 0.0
    %1364 = vmatprep.subr.mxu0 0.0
    %1365 = vmatpush1.msra.mxu0 0.0
    %1366 = vmatprep.subr.mxu0 0.0
    %1367 = vmatpush1.msra.mxu0 0.0
    %1368 = vmatprep.subr.mxu0 0.0
    %1369 = vmatpush1.msra.mxu0 0.0
    %1370 = vmatprep.subr.mxu0 0.0
    %1371 = vmatpush1.msra.mxu0 0.0
    %1372 = vmatprep.subr.mxu0 0.0
    %1373 = vmatpush1.msra.mxu0 0.0
    %1374 = vmatprep.subr.mxu0 0.0
    %1375 = vmatpush1.msra.mxu0 0.0
    %1376 = vmatprep.subr.mxu0 0.0
    %1377 = vmatpush1.msra.mxu0 %v514
    %1378 = vmatprep.subr.mxu0 0.0
    %1379 = vmatpush1.msra.mxu0 %v513
    %1380 = vmatprep.subr.mxu0 0.0
    %1381 = vmatpush1.msra.mxu0 %v512
    %1382 = vmatprep.subr.mxu0 0.0
    %1383 = vmatpush1.msra.mxu0 %v511
    %1384 = vmatprep.subr.mxu0 0.0
    %1385 = vmatpush2.msra.mxu0 0.0
    %1386 = vmatprep.subr.mxu0 0.0
    %1387 = vmatpush2.msra.mxu0 0.0
    %1388 = vmatprep.subr.mxu0 0.0
    %1389 = vmatpush2.msra.mxu0 0.0
    %1390 = vmatprep.subr.mxu0 0.0
    %1391 = vmatpush2.msra.mxu0 0.0
    %1392 = vmatprep.subr.mxu0 0.0
    %1393 = vmatpush2.msra.mxu0 0.0
    %1394 = vmatprep.subr.mxu0 0.0
    %1395 = vmatpush2.msra.mxu0 0.0
    %1396 = vmatprep.subr.mxu0 0.0
    %1397 = vmatpush2.msra.mxu0 0.0
    %1398 = vmatprep.subr.mxu0 0.0
    %1399 = vmatpush2.msra.mxu0 0.0
    %1400 = vmatprep.subr.mxu0 0.0
    %1401 = vmatpush2.msra.mxu0 0.0
    %1402 = vmatprep.subr.mxu0 0.0
    %1403 = vmatpush2.msra.mxu0 0.0
    %1404 = vmatprep.subr.mxu0 0.0
    %1405 = vmatpush2.msra.mxu0 0.0
    %1406 = vmatprep.subr.mxu0 0.0
    %1407 = vmatpush2.msra.mxu0 0.0
    %1408 = vmatprep.subr.mxu0 0.0
    %1409 = vmatpush2.msra.mxu0 0.0
    %1410 = vmatprep.subr.mxu0 0.0
    %1411 = vmatpush2.msra.mxu0 0.0
    %1412 = vmatprep.subr.mxu0 0.0
    %1413 = vmatpush2.msra.mxu0 0.0
    %1414 = vmatprep.subr.mxu0 0.0
    %1415 = vmatpush2.msra.mxu0 0.0
    %1416 = vmatprep.mubr.f32.mxu0 0.0
    %1417 = vmatmul.mubr.f32.gmra.mxu0 %v752
    %v1418 = vpop.f32.mrf.mxu0
    %v1419 = vadd.f32 %v518, %v1418
    %v1420 = vpop.f32.mrf.mxu0
    %1421 = vdwg.mxu0
    %v1422 = vmul.f32 %v1344, %v1419
    %v1423 = vadd.f32 %v1195, %v1422
    %v1424 = vtanh.pop %v1423
    %v1425 = vsub.f32 1.0, %v1351
    %v1426 = vmul.f32 %v1425, %v1424
    %v1427 = vmul.f32 %v1351, 0.0
    %v1428 = vadd.f32 %v1426, %v1427
    %1429 = vmatprep.subr.mxu0 0.0
    %1430 = vmatpush1.msra.mxu0 0.0
    %1431 = vmatprep.subr.mxu0 0.0
    %1432 = vmatpush1.msra.mxu0 0.0
    %1433 = vmatprep.subr.mxu0 0.0
    %1434 = vmatpush1.msra.mxu0 0.0
    %1435 = vmatprep.subr.mxu0 0.0
    %1436 = vmatpush1.msra.mxu0 0.0
    %1437 = vmatprep.subr.mxu0 0.0
    %1438 = vmatpush1.msra.mxu0 0.0
    %1439 = vmatprep.subr.mxu0 0.0
    %1440 = vmatpush1.msra.mxu0 0.0
    %1441 = vmatprep.subr.mxu0 0.0
    %1442 = vmatpush1.msra.mxu0 0.0
    %1443 = vmatprep.subr.mxu0 0.0
    %1444 = vmatpush1.msra.mxu0 0.0
    %1445 = vmatprep.subr.mxu0 0.0
    %1446 = vmatpush1.msra.mxu0 0.0
    %1447 = vmatprep.subr.mxu0 0.0
    %1448 = vmatpush1.msra.mxu0 0.0
    %1449 = vmatprep.subr.mxu0 0.0
    %1450 = vmatpush1.msra.mxu0 0.0
    %1451 = vmatprep.subr.mxu0 0.0
    %1452 = vmatpush1.msra.mxu0 0.0
    %1453 = vmatprep.subr.mxu0 0.0
    %1454 = vmatpush1.msra.mxu0 %v478
    %1455 = vmatprep.subr.mxu0 0.0
    %1456 = vmatpush1.msra.mxu0 %v477
    %1457 = vmatprep.subr.mxu0 0.0
    %1458 = vmatpush1.msra.mxu0 %v476
    %1459 = vmatprep.subr.mxu0 0.0
    %1460 = vmatpush1.msra.mxu0 %v475
    %1461 = vmatprep.subr.mxu0 0.0
    %1462 = vmatpush2.msra.mxu0 0.0
    %1463 = vmatprep.subr.mxu0 0.0
    %1464 = vmatpush2.msra.mxu0 0.0
    %1465 = vmatprep.subr.mxu0 0.0
    %1466 = vmatpush2.msra.mxu0 0.0
    %1467 = vmatprep.subr.mxu0 0.0
    %1468 = vmatpush2.msra.mxu0 0.0
    %1469 = vmatprep.subr.mxu0 0.0
    %1470 = vmatpush2.msra.mxu0 0.0
    %1471 = vmatprep.subr.mxu0 0.0
    %1472 = vmatpush2.msra.mxu0 0.0
    %1473 = vmatprep.subr.mxu0 0.0
    %1474 = vmatpush2.msra.mxu0 0.0
    %1475 = vmatprep.subr.mxu0 0.0
    %1476 = vmatpush2.msra.mxu0 0.0
    %1477 = vmatprep.subr.mxu0 0.0
    %1478 = vmatpush2.msra.mxu0 0.0
    %1479 = vmatprep.subr.mxu0 0.0
    %1480 = vmatpush2.msra.mxu0 0.0
    %1481 = vmatprep.subr.mxu0 0.0
    %1482 = vmatpush2.msra.mxu0 0.0
    %1483 = vmatprep.subr.mxu0 0.0
    %1484 = vmatpush2.msra.mxu0 0.0
    %1485 = vmatprep.subr.mxu0 0.0
    %1486 = vmatpush2.msra.mxu0 0.0
    %1487 = vmatprep.subr.mxu0 0.0
    %1488 = vmatpush2.msra.mxu0 0.0
    %1489 = vmatprep.subr.mxu0 0.0
    %1490 = vmatpush2.msra.mxu0 0.0
    %1491 = vmatprep.subr.mxu0 0.0
    %1492 = vmatpush2.msra.mxu0 0.0
    %1493 = vmatprep.mubr.f32.mxu0 0.0
    %1494 = vmatmul.mubr.f32.gmra.mxu0 %v986
    %v1495 = vpop.f32.mrf.mxu0
    %v1496 = vadd.f32 0.0, %v1495
    %v1497 = vpop.f32.mrf.mxu0
    %1498 = vdwg.mxu0
    %1499 = vmatprep.subr.mxu0 0.0
    %1500 = vmatpush1.msra.mxu0 0.0
    %1501 = vmatprep.subr.mxu0 0.0
    %1502 = vmatpush1.msra.mxu0 0.0
    %1503 = vmatprep.subr.mxu0 0.0
    %1504 = vmatpush1.msra.mxu0 0.0
    %1505 = vmatprep.subr.mxu0 0.0
    %1506 = vmatpush1.msra.mxu0 0.0
    %1507 = vmatprep.subr.mxu0 0.0
    %1508 = vmatpush1.msra.mxu0 0.0
    %1509 = vmatprep.subr.mxu0 0.0
    %1510 = vmatpush1.msra.mxu0 0.0
    %1511 = vmatprep.subr.mxu0 0.0
    %1512 = vmatpush1.msra.mxu0 0.0
    %1513 = vmatprep.subr.mxu0 0.0
    %1514 = vmatpush1.msra.mxu0 0.0
    %1515 = vmatprep.subr.mxu0 0.0
    %1516 = vmatpush1.msra.mxu0 0.0
    %1517 = vmatprep.subr.mxu0 0.0
    %1518 = vmatpush1.msra.mxu0 0.0
    %1519 = vmatprep.subr.mxu0 0.0
    %1520 = vmatpush1.msra.mxu0 0.0
    %1521 = vmatprep.subr.mxu0 0.0
    %1522 = vmatpush1.msra.mxu0 0.0
    %1523 = vmatprep.subr.mxu0 0.0
    %1524 = vmatpush1.msra.mxu0 %v482
    %1525 = vmatprep.subr.mxu0 0.0
    %1526 = vmatpush1.msra.mxu0 %v481
    %1527 = vmatprep.subr.mxu0 0.0
    %1528 = vmatpush1.msra.mxu0 %v480
    %1529 = vmatprep.subr.mxu0 0.0
    %1530 = vmatpush1.msra.mxu0 %v479
    %1531 = vmatprep.subr.mxu0 0.0
    %1532 = vmatpush2.msra.mxu0 0.0
    %1533 = vmatprep.subr.mxu0 0.0
    %1534 = vmatpush2.msra.mxu0 0.0
    %1535 = vmatprep.subr.mxu0 0.0
    %1536 = vmatpush2.msra.mxu0 0.0
    %1537 = vmatprep.subr.mxu0 0.0
    %1538 = vmatpush2.msra.mxu0 0.0
    %1539 = vmatprep.subr.mxu0 0.0
    %1540 = vmatpush2.msra.mxu0 0.0
    %1541 = vmatprep.subr.mxu0 0.0
    %1542 = vmatpush2.msra.mxu0 0.0
    %1543 = vmatprep.subr.mxu0 0.0
    %1544 = vmatpush2.msra.mxu0 0.0
    %1545 = vmatprep.subr.mxu0 0.0
    %1546 = vmatpush2.msra.mxu0 0.0
    %1547 = vmatprep.subr.mxu0 0.0
    %1548 = vmatpush2.msra.mxu0 0.0
    %1549 = vmatprep.subr.mxu0 0.0
    %1550 = vmatpush2.msra.mxu0 0.0
    %1551 = vmatprep.subr.mxu0 0.0
    %1552 = vmatpush2.msra.mxu0 0.0
    %1553 = vmatprep.subr.mxu0 0.0
    %1554 = vmatpush2.msra.mxu0 0.0
    %1555 = vmatprep.subr.mxu0 0.0
    %1556 = vmatpush2.msra.mxu0 0.0
    %1557 = vmatprep.subr.mxu0 0.0
    %1558 = vmatpush2.msra.mxu0 0.0
    %1559 = vmatprep.subr.mxu0 0.0
    %1560 = vmatpush2.msra.mxu0 0.0
    %1561 = vmatprep.subr.mxu0 0.0
    %1562 = vmatpush2.msra.mxu0 0.0
    %1563 = vmatprep.mubr.f32.mxu0 0.0
    %1564 = vmatmul.mubr.f32.gmra.mxu0 %v986
    %v1565 = vpop.f32.mrf.mxu0
    %v1566 = vadd.f32 0.0, %v1565
    %v1567 = vpop.f32.mrf.mxu0
    %1568 = vdwg.mxu0
    %v1570 = vrot.slane %v1496, 7
    %v1572 = vadd.f32 %v596, %v1570
    %v1573 = vxor.u32 %v1572, 2147483648
    %v1574 = vmul.f32 %v1573, 1.442695
    %v1575 = vpow.pop %v1574
    %v1576 = vadd.f32 %v1575, 1.0
    %v1577 = vrcp.pop %v1576
    %v1578 = vmul.f32 1.0, %v1577
    %v1580 = vrot.slane %v1566, 7
    %v1582 = vadd.f32 %v672, %v1580
    %v1583 = vxor.u32 %v1582, 2147483648
    %v1584 = vmul.f32 %v1583, 1.442695
    %v1585 = vpow.pop %v1584
    %v1586 = vadd.f32 %v1585, 1.0
    %v1587 = vrcp.pop %v1586
    %v1588 = vmul.f32 1.0, %v1587
    %1589 = vmatprep.subr.mxu0 0.0
    %1590 = vmatpush1.msra.mxu0 0.0
    %1591 = vmatprep.subr.mxu0 0.0
    %1592 = vmatpush1.msra.mxu0 0.0
    %1593 = vmatprep.subr.mxu0 0.0
    %1594 = vmatpush1.msra.mxu0 0.0
    %1595 = vmatprep.subr.mxu0 0.0
    %1596 = vmatpush1.msra.mxu0 0.0
    %1597 = vmatprep.subr.mxu0 0.0
    %1598 = vmatpush1.msra.mxu0 0.0
    %1599 = vmatprep.subr.mxu0 0.0
    %1600 = vmatpush1.msra.mxu0 0.0
    %1601 = vmatprep.subr.mxu0 0.0
    %1602 = vmatpush1.msra.mxu0 0.0
    %1603 = vmatprep.subr.mxu0 0.0
    %1604 = vmatpush1.msra.mxu0 0.0
    %1605 = vmatprep.subr.mxu0 0.0
    %1606 = vmatpush1.msra.mxu0 0.0
    %1607 = vmatprep.subr.mxu0 0.0
    %1608 = vmatpush1.msra.mxu0 0.0
    %1609 = vmatprep.subr.mxu0 0.0
    %1610 = vmatpush1.msra.mxu0 0.0
    %1611 = vmatprep.subr.mxu0 0.0
    %1612 = vmatpush1.msra.mxu0 0.0
    %1613 = vmatprep.subr.mxu0 0.0
    %1614 = vmatpush1.msra.mxu0 %v486
    %1615 = vmatprep.subr.mxu0 0.0
    %1616 = vmatpush1.msra.mxu0 %v485
    %1617 = vmatprep.subr.mxu0 0.0
    %1618 = vmatpush1.msra.mxu0 %v484
    %1619 = vmatprep.subr.mxu0 0.0
    %1620 = vmatpush1.msra.mxu0 %v483
    %1621 = vmatprep.subr.mxu0 0.0
    %1622 = vmatpush2.msra.mxu0 0.0
    %1623 = vmatprep.subr.mxu0 0.0
    %1624 = vmatpush2.msra.mxu0 0.0
    %1625 = vmatprep.subr.mxu0 0.0
    %1626 = vmatpush2.msra.mxu0 0.0
    %1627 = vmatprep.subr.mxu0 0.0
    %1628 = vmatpush2.msra.mxu0 0.0
    %1629 = vmatprep.subr.mxu0 0.0
    %1630 = vmatpush2.msra.mxu0 0.0
    %1631 = vmatprep.subr.mxu0 0.0
    %1632 = vmatpush2.msra.mxu0 0.0
    %1633 = vmatprep.subr.mxu0 0.0
    %1634 = vmatpush2.msra.mxu0 0.0
    %1635 = vmatprep.subr.mxu0 0.0
    %1636 = vmatpush2.msra.mxu0 0.0
    %1637 = vmatprep.subr.mxu0 0.0
    %1638 = vmatpush2.msra.mxu0 0.0
    %1639 = vmatprep.subr.mxu0 0.0
    %1640 = vmatpush2.msra.mxu0 0.0
    %1641 = vmatprep.subr.mxu0 0.0
    %1642 = vmatpush2.msra.mxu0 0.0
    %1643 = vmatprep.subr.mxu0 0.0
    %1644 = vmatpush2.msra.mxu0 0.0
    %1645 = vmatprep.subr.mxu0 0.0
    %1646 = vmatpush2.msra.mxu0 0.0
    %1647 = vmatprep.subr.mxu0 0.0
    %1648 = vmatpush2.msra.mxu0 0.0
    %1649 = vmatprep.subr.mxu0 0.0
    %1650 = vmatpush2.msra.mxu0 0.0
    %1651 = vmatprep.subr.mxu0 0.0
    %1652 = vmatpush2.msra.mxu0 0.0
    %1653 = vmatprep.mubr.f32.mxu0 0.0
    %1654 = vmatmul.mubr.f32.gmra.mxu0 %v986
    %v1655 = vpop.f32.mrf.mxu0
    %v1656 = vadd.f32 %v490, %v1655
    %v1657 = vpop.f32.mrf.mxu0
    %1658 = vdwg.mxu0
    %v1660 = vrot.slane %v1656, 7
    %v1662 = vmul.f32 %v1578, %v1660
    %v1663 = vadd.f32 %v748, %v1662
    %v1664 = vtanh.pop %v1663
    %v1665 = vsub.f32 1.0, %v1588
    %v1666 = vmul.f32 %v1665, %v1664
    %v1667 = vrot.slane %v984, 7
    %v1669 = vmul.f32 %v1588, %v1667
    %v1670 = vadd.f32 %v1666, %v1669
    %v1672 = vrot.slane %v1670, 1
    %v1673 = vsel %vm525, %v1672, 0
    %1675 = vmatprep.subr.mxu0 0.0
    %1676 = vmatpush1.msra.mxu0 0.0
    %1677 = vmatprep.subr.mxu0 0.0
    %1678 = vmatpush1.msra.mxu0 0.0
    %1679 = vmatprep.subr.mxu0 0.0
    %1680 = vmatpush1.msra.mxu0 0.0
    %1681 = vmatprep.subr.mxu0 0.0
    %1682 = vmatpush1.msra.mxu0 0.0
    %1683 = vmatprep.subr.mxu0 0.0
    %1684 = vmatpush1.msra.mxu0 0.0
    %1685 = vmatprep.subr.mxu0 0.0
    %1686 = vmatpush1.msra.mxu0 0.0
    %1687 = vmatprep.subr.mxu0 0.0
    %1688 = vmatpush1.msra.mxu0 0.0
    %1689 = vmatprep.subr.mxu0 0.0
    %1690 = vmatpush1.msra.mxu0 0.0
    %1691 = vmatprep.subr.mxu0 0.0
    %1692 = vmatpush1.msra.mxu0 0.0
    %1693 = vmatprep.subr.mxu0 0.0
    %1694 = vmatpush1.msra.mxu0 0.0
    %1695 = vmatprep.subr.mxu0 0.0
    %1696 = vmatpush1.msra.mxu0 0.0
    %1697 = vmatprep.subr.mxu0 0.0
    %1698 = vmatpush1.msra.mxu0 0.0
    %1699 = vmatprep.subr.mxu0 0.0
    %1700 = vmatpush1.msra.mxu0 %v494
    %1701 = vmatprep.subr.mxu0 0.0
    %1702 = vmatpush1.msra.mxu0 %v493
    %1703 = vmatprep.subr.mxu0 0.0
    %1704 = vmatpush1.msra.mxu0 %v492
    %1705 = vmatprep.subr.mxu0 0.0
    %1706 = vmatpush1.msra.mxu0 %v491
    %1707 = vmatprep.subr.mxu0 0.0
    %1708 = vmatpush2.msra.mxu0 0.0
    %1709 = vmatprep.subr.mxu0 0.0
    %1710 = vmatpush2.msra.mxu0 0.0
    %1711 = vmatprep.subr.mxu0 0.0
    %1712 = vmatpush2.msra.mxu0 0.0
    %1713 = vmatprep.subr.mxu0 0.0
    %1714 = vmatpush2.msra.mxu0 0.0
    %1715 = vmatprep.subr.mxu0 0.0
    %1716 = vmatpush2.msra.mxu0 0.0
    %1717 = vmatprep.subr.mxu0 0.0
    %1718 = vmatpush2.msra.mxu0 0.0
    %1719 = vmatprep.subr.mxu0 0.0
    %1720 = vmatpush2.msra.mxu0 0.0
    %1721 = vmatprep.subr.mxu0 0.0
    %1722 = vmatpush2.msra.mxu0 0.0
    %1723 = vmatprep.subr.mxu0 0.0
    %1724 = vmatpush2.msra.mxu0 0.0
    %1725 = vmatprep.subr.mxu0 0.0
    %1726 = vmatpush2.msra.mxu0 0.0
    %1727 = vmatprep.subr.mxu0 0.0
    %1728 = vmatpush2.msra.mxu0 0.0
    %1729 = vmatprep.subr.mxu0 0.0
    %1730 = vmatpush2.msra.mxu0 0.0
    %1731 = vmatprep.subr.mxu0 0.0
    %1732 = vmatpush2.msra.mxu0 0.0
    %1733 = vmatprep.subr.mxu0 0.0
    %1734 = vmatpush2.msra.mxu0 0.0
    %1735 = vmatprep.subr.mxu0 0.0
    %1736 = vmatpush2.msra.mxu0 0.0
    %1737 = vmatprep.subr.mxu0 0.0
    %1738 = vmatpush2.msra.mxu0 0.0
    %1739 = vmatprep.mubr.f32.mxu0 0.0
    %1740 = vmatmul.mubr.f32.gmra.mxu0 %v1673
    %v1741 = vpop.f32.mrf.mxu0
    %v1742 = vadd.f32 %v515, %v1741
    %v1743 = vpop.f32.mrf.mxu0
    %1744 = vdwg.mxu0
    %1745 = vmatprep.subr.mxu0 0.0
    %1746 = vmatpush1.msra.mxu0 0.0
    %1747 = vmatprep.subr.mxu0 0.0
    %1748 = vmatpush1.msra.mxu0 0.0
    %1749 = vmatprep.subr.mxu0 0.0
    %1750 = vmatpush1.msra.mxu0 0.0
    %1751 = vmatprep.subr.mxu0 0.0
    %1752 = vmatpush1.msra.mxu0 0.0
    %1753 = vmatprep.subr.mxu0 0.0
    %1754 = vmatpush1.msra.mxu0 0.0
    %1755 = vmatprep.subr.mxu0 0.0
    %1756 = vmatpush1.msra.mxu0 0.0
    %1757 = vmatprep.subr.mxu0 0.0
    %1758 = vmatpush1.msra.mxu0 0.0
    %1759 = vmatprep.subr.mxu0 0.0
    %1760 = vmatpush1.msra.mxu0 0.0
    %1761 = vmatprep.subr.mxu0 0.0
    %1762 = vmatpush1.msra.mxu0 0.0
    %1763 = vmatprep.subr.mxu0 0.0
    %1764 = vmatpush1.msra.mxu0 0.0
    %1765 = vmatprep.subr.mxu0 0.0
    %1766 = vmatpush1.msra.mxu0 0.0
    %1767 = vmatprep.subr.mxu0 0.0
    %1768 = vmatpush1.msra.mxu0 0.0
    %1769 = vmatprep.subr.mxu0 0.0
    %1770 = vmatpush1.msra.mxu0 %v498
    %1771 = vmatprep.subr.mxu0 0.0
    %1772 = vmatpush1.msra.mxu0 %v497
    %1773 = vmatprep.subr.mxu0 0.0
    %1774 = vmatpush1.msra.mxu0 %v496
    %1775 = vmatprep.subr.mxu0 0.0
    %1776 = vmatpush1.msra.mxu0 %v495
    %1777 = vmatprep.subr.mxu0 0.0
    %1778 = vmatpush2.msra.mxu0 0.0
    %1779 = vmatprep.subr.mxu0 0.0
    %1780 = vmatpush2.msra.mxu0 0.0
    %1781 = vmatprep.subr.mxu0 0.0
    %1782 = vmatpush2.msra.mxu0 0.0
    %1783 = vmatprep.subr.mxu0 0.0
    %1784 = vmatpush2.msra.mxu0 0.0
    %1785 = vmatprep.subr.mxu0 0.0
    %1786 = vmatpush2.msra.mxu0 0.0
    %1787 = vmatprep.subr.mxu0 0.0
    %1788 = vmatpush2.msra.mxu0 0.0
    %1789 = vmatprep.subr.mxu0 0.0
    %1790 = vmatpush2.msra.mxu0 0.0
    %1791 = vmatprep.subr.mxu0 0.0
    %1792 = vmatpush2.msra.mxu0 0.0
    %1793 = vmatprep.subr.mxu0 0.0
    %1794 = vmatpush2.msra.mxu0 0.0
    %1795 = vmatprep.subr.mxu0 0.0
    %1796 = vmatpush2.msra.mxu0 0.0
    %1797 = vmatprep.subr.mxu0 0.0
    %1798 = vmatpush2.msra.mxu0 0.0
    %1799 = vmatprep.subr.mxu0 0.0
    %1800 = vmatpush2.msra.mxu0 0.0
    %1801 = vmatprep.subr.mxu0 0.0
    %1802 = vmatpush2.msra.mxu0 0.0
    %1803 = vmatprep.subr.mxu0 0.0
    %1804 = vmatpush2.msra.mxu0 0.0
    %1805 = vmatprep.subr.mxu0 0.0
    %1806 = vmatpush2.msra.mxu0 0.0
    %1807 = vmatprep.subr.mxu0 0.0
    %1808 = vmatpush2.msra.mxu0 0.0
    %1809 = vmatprep.mubr.f32.mxu0 0.0
    %1810 = vmatmul.mubr.f32.gmra.mxu0 %v1673
    %v1811 = vpop.f32.mrf.mxu0
    %v1812 = vadd.f32 %v516, %v1811
    %v1813 = vpop.f32.mrf.mxu0
    %1814 = vdwg.mxu0
    %1815 = vmatprep.subr.mxu0 0.0
    %1816 = vmatpush1.msra.mxu0 0.0
    %1817 = vmatprep.subr.mxu0 0.0
    %1818 = vmatpush1.msra.mxu0 0.0
    %1819 = vmatprep.subr.mxu0 0.0
    %1820 = vmatpush1.msra.mxu0 0.0
    %1821 = vmatprep.subr.mxu0 0.0
    %1822 = vmatpush1.msra.mxu0 0.0
    %1823 = vmatprep.subr.mxu0 0.0
    %1824 = vmatpush1.msra.mxu0 0.0
    %1825 = vmatprep.subr.mxu0 0.0
    %1826 = vmatpush1.msra.mxu0 0.0
    %1827 = vmatprep.subr.mxu0 0.0
    %1828 = vmatpush1.msra.mxu0 0.0
    %1829 = vmatprep.subr.mxu0 0.0
    %1830 = vmatpush1.msra.mxu0 0.0
    %1831 = vmatprep.subr.mxu0 0.0
    %1832 = vmatpush1.msra.mxu0 0.0
    %1833 = vmatprep.subr.mxu0 0.0
    %1834 = vmatpush1.msra.mxu0 0.0
    %1835 = vmatprep.subr.mxu0 0.0
    %1836 = vmatpush1.msra.mxu0 0.0
    %1837 = vmatprep.subr.mxu0 0.0
    %1838 = vmatpush1.msra.mxu0 0.0
    %1839 = vmatprep.subr.mxu0 0.0
    %1840 = vmatpush1.msra.mxu0 %v502
    %1841 = vmatprep.subr.mxu0 0.0
    %1842 = vmatpush1.msra.mxu0 %v501
    %1843 = vmatprep.subr.mxu0 0.0
    %1844 = vmatpush1.msra.mxu0 %v500
    %1845 = vmatprep.subr.mxu0 0.0
    %1846 = vmatpush1.msra.mxu0 %v499
    %1847 = vmatprep.subr.mxu0 0.0
    %1848 = vmatpush2.msra.mxu0 0.0
    %1849 = vmatprep.subr.mxu0 0.0
    %1850 = vmatpush2.msra.mxu0 0.0
    %1851 = vmatprep.subr.mxu0 0.0
    %1852 = vmatpush2.msra.mxu0 0.0
    %1853 = vmatprep.subr.mxu0 0.0
    %1854 = vmatpush2.msra.mxu0 0.0
    %1855 = vmatprep.subr.mxu0 0.0
    %1856 = vmatpush2.msra.mxu0 0.0
    %1857 = vmatprep.subr.mxu0 0.0
    %1858 = vmatpush2.msra.mxu0 0.0
    %1859 = vmatprep.subr.mxu0 0.0
    %1860 = vmatpush2.msra.mxu0 0.0
    %1861 = vmatprep.subr.mxu0 0.0
    %1862 = vmatpush2.msra.mxu0 0.0
    %1863 = vmatprep.subr.mxu0 0.0
    %1864 = vmatpush2.msra.mxu0 0.0
    %1865 = vmatprep.subr.mxu0 0.0
    %1866 = vmatpush2.msra.mxu0 0.0
    %1867 = vmatprep.subr.mxu0 0.0
    %1868 = vmatpush2.msra.mxu0 0.0
    %1869 = vmatprep.subr.mxu0 0.0
    %1870 = vmatpush2.msra.mxu0 0.0
    %1871 = vmatprep.subr.mxu0 0.0
    %1872 = vmatpush2.msra.mxu0 0.0
    %1873 = vmatprep.subr.mxu0 0.0
    %1874 = vmatpush2.msra.mxu0 0.0
    %1875 = vmatprep.subr.mxu0 0.0
    %1876 = vmatpush2.msra.mxu0 0.0
    %1877 = vmatprep.subr.mxu0 0.0
    %1878 = vmatpush2.msra.mxu0 0.0
    %1879 = vmatprep.mubr.f32.mxu0 0.0
    %1880 = vmatmul.mubr.f32.gmra.mxu0 %v1673
    %v1881 = vpop.f32.mrf.mxu0
    %v1882 = vadd.f32 %v517, %v1881
    %v1883 = vpop.f32.mrf.mxu0
    %1884 = vdwg.mxu0
    %v1886 = vsel %vm525, %v1428, 0
    %1888 = vmatprep.subr.mxu0 0.0
    %1889 = vmatpush1.msra.mxu0 0.0
    %1890 = vmatprep.subr.mxu0 0.0
    %1891 = vmatpush1.msra.mxu0 0.0
    %1892 = vmatprep.subr.mxu0 0.0
    %1893 = vmatpush1.msra.mxu0 0.0
    %1894 = vmatprep.subr.mxu0 0.0
    %1895 = vmatpush1.msra.mxu0 0.0
    %1896 = vmatprep.subr.mxu0 0.0
    %1897 = vmatpush1.msra.mxu0 0.0
    %1898 = vmatprep.subr.mxu0 0.0
    %1899 = vmatpush1.msra.mxu0 0.0
    %1900 = vmatprep.subr.mxu0 0.0
    %1901 = vmatpush1.msra.mxu0 0.0
    %1902 = vmatprep.subr.mxu0 0.0
    %1903 = vmatpush1.msra.mxu0 0.0
    %1904 = vmatprep.subr.mxu0 0.0
    %1905 = vmatpush1.msra.mxu0 0.0
    %1906 = vmatprep.subr.mxu0 0.0
    %1907 = vmatpush1.msra.mxu0 0.0
    %1908 = vmatprep.subr.mxu0 0.0
    %1909 = vmatpush1.msra.mxu0 0.0
    %1910 = vmatprep.subr.mxu0 0.0
    %1911 = vmatpush1.msra.mxu0 0.0
    %1912 = vmatprep.subr.mxu0 0.0
    %1913 = vmatpush1.msra.mxu0 %v506
    %1914 = vmatprep.subr.mxu0 0.0
    %1915 = vmatpush1.msra.mxu0 %v505
    %1916 = vmatprep.subr.mxu0 0.0
    %1917 = vmatpush1.msra.mxu0 %v504
    %1918 = vmatprep.subr.mxu0 0.0
    %1919 = vmatpush1.msra.mxu0 %v503
    %1920 = vmatprep.subr.mxu0 0.0
    %1921 = vmatpush2.msra.mxu0 0.0
    %1922 = vmatprep.subr.mxu0 0.0
    %1923 = vmatpush2.msra.mxu0 0.0
    %1924 = vmatprep.subr.mxu0 0.0
    %1925 = vmatpush2.msra.mxu0 0.0
    %1926 = vmatprep.subr.mxu0 0.0
    %1927 = vmatpush2.msra.mxu0 0.0
    %1928 = vmatprep.subr.mxu0 0.0
    %1929 = vmatpush2.msra.mxu0 0.0
    %1930 = vmatprep.subr.mxu0 0.0
    %1931 = vmatpush2.msra.mxu0 0.0
    %1932 = vmatprep.subr.mxu0 0.0
    %1933 = vmatpush2.msra.mxu0 0.0
    %1934 = vmatprep.subr.mxu0 0.0
    %1935 = vmatpush2.msra.mxu0 0.0
    %1936 = vmatprep.subr.mxu0 0.0
    %1937 = vmatpush2.msra.mxu0 0.0
    %1938 = vmatprep.subr.mxu0 0.0
    %1939 = vmatpush2.msra.mxu0 0.0
    %1940 = vmatprep.subr.mxu0 0.0
    %1941 = vmatpush2.msra.mxu0 0.0
    %1942 = vmatprep.subr.mxu0 0.0
    %1943 = vmatpush2.msra.mxu0 0.0
    %1944 = vmatprep.subr.mxu0 0.0
    %1945 = vmatpush2.msra.mxu0 0.0
    %1946 = vmatprep.subr.mxu0 0.0
    %1947 = vmatpush2.msra.mxu0 0.0
    %1948 = vmatprep.subr.mxu0 0.0
    %1949 = vmatpush2.msra.mxu0 0.0
    %1950 = vmatprep.subr.mxu0 0.0
    %1951 = vmatpush2.msra.mxu0 0.0
    %1952 = vmatprep.mubr.f32.mxu0 0.0
    %1953 = vmatmul.mubr.f32.gmra.mxu0 %v1886
    %v1954 = vpop.f32.mrf.mxu0
    %v1955 = vadd.f32 0.0, %v1954
    %v1956 = vpop.f32.mrf.mxu0
    %1957 = vdwg.mxu0
    %1958 = vmatprep.subr.mxu0 0.0
    %1959 = vmatpush1.msra.mxu0 0.0
    %1960 = vmatprep.subr.mxu0 0.0
    %1961 = vmatpush1.msra.mxu0 0.0
    %1962 = vmatprep.subr.mxu0 0.0
    %1963 = vmatpush1.msra.mxu0 0.0
    %1964 = vmatprep.subr.mxu0 0.0
    %1965 = vmatpush1.msra.mxu0 0.0
    %1966 = vmatprep.subr.mxu0 0.0
    %1967 = vmatpush1.msra.mxu0 0.0
    %1968 = vmatprep.subr.mxu0 0.0
    %1969 = vmatpush1.msra.mxu0 0.0
    %1970 = vmatprep.subr.mxu0 0.0
    %1971 = vmatpush1.msra.mxu0 0.0
    %1972 = vmatprep.subr.mxu0 0.0
    %1973 = vmatpush1.msra.mxu0 0.0
    %1974 = vmatprep.subr.mxu0 0.0
    %1975 = vmatpush1.msra.mxu0 0.0
    %1976 = vmatprep.subr.mxu0 0.0
    %1977 = vmatpush1.msra.mxu0 0.0
    %1978 = vmatprep.subr.mxu0 0.0
    %1979 = vmatpush1.msra.mxu0 0.0
    %1980 = vmatprep.subr.mxu0 0.0
    %1981 = vmatpush1.msra.mxu0 0.0
    %1982 = vmatprep.subr.mxu0 0.0
    %1983 = vmatpush1.msra.mxu0 %v510
    %1984 = vmatprep.subr.mxu0 0.0
    %1985 = vmatpush1.msra.mxu0 %v509
    %1986 = vmatprep.subr.mxu0 0.0
    %1987 = vmatpush1.msra.mxu0 %v508
    %1988 = vmatprep.subr.mxu0 0.0
    %1989 = vmatpush1.msra.mxu0 %v507
    %1990 = vmatprep.subr.mxu0 0.0
    %1991 = vmatpush2.msra.mxu0 0.0
    %1992 = vmatprep.subr.mxu0 0.0
    %1993 = vmatpush2.msra.mxu0 0.0
    %1994 = vmatprep.subr.mxu0 0.0
    %1995 = vmatpush2.msra.mxu0 0.0
    %1996 = vmatprep.subr.mxu0 0.0
    %1997 = vmatpush2.msra.mxu0 0.0
    %1998 = vmatprep.subr.mxu0 0.0
    %1999 = vmatpush2.msra.mxu0 0.0
    %2000 = vmatprep.subr.mxu0 0.0
    %2001 = vmatpush2.msra.mxu0 0.0
    %2002 = vmatprep.subr.mxu0 0.0
    %2003 = vmatpush2.msra.mxu0 0.0
    %2004 = vmatprep.subr.mxu0 0.0
    %2005 = vmatpush2.msra.mxu0 0.0
    %2006 = vmatprep.subr.mxu0 0.0
    %2007 = vmatpush2.msra.mxu0 0.0
    %2008 = vmatprep.subr.mxu0 0.0
    %2009 = vmatpush2.msra.mxu0 0.0
    %2010 = vmatprep.subr.mxu0 0.0
    %2011 = vmatpush2.msra.mxu0 0.0
    %2012 = vmatprep.subr.mxu0 0.0
    %2013 = vmatpush2.msra.mxu0 0.0
    %2014 = vmatprep.subr.mxu0 0.0
    %2015 = vmatpush2.msra.mxu0 0.0
    %2016 = vmatprep.subr.mxu0 0.0
    %2017 = vmatpush2.msra.mxu0 0.0
    %2018 = vmatprep.subr.mxu0 0.0
    %2019 = vmatpush2.msra.mxu0 0.0
    %2020 = vmatprep.subr.mxu0 0.0
    %2021 = vmatpush2.msra.mxu0 0.0
    %2022 = vmatprep.mubr.f32.mxu0 0.0
    %2023 = vmatmul.mubr.f32.gmra.mxu0 %v1886
    %v2024 = vpop.f32.mrf.mxu0
    %v2025 = vadd.f32 0.0, %v2024
    %v2026 = vpop.f32.mrf.mxu0
    %2027 = vdwg.mxu0
    %v2028 = vadd.f32 %v1742, %v1955
    %v2029 = vxor.u32 %v2028, 2147483648
    %v2030 = vmul.f32 %v2029, 1.442695
    %v2031 = vpow.pop %v2030
    %v2032 = vadd.f32 %v2031, 1.0
    %v2033 = vrcp.pop %v2032
    %v2034 = vmul.f32 1.0, %v2033
    %v2035 = vadd.f32 %v1812, %v2025
    %v2036 = vxor.u32 %v2035, 2147483648
    %v2037 = vmul.f32 %v2036, 1.442695
    %v2038 = vpow.pop %v2037
    %v2039 = vadd.f32 %v2038, 1.0
    %v2040 = vrcp.pop %v2039
    %v2041 = vmul.f32 1.0, %v2040
    %2042 = vmatprep.subr.mxu0 0.0
    %2043 = vmatpush1.msra.mxu0 0.0
    %2044 = vmatprep.subr.mxu0 0.0
    %2045 = vmatpush1.msra.mxu0 0.0
    %2046 = vmatprep.subr.mxu0 0.0
    %2047 = vmatpush1.msra.mxu0 0.0
    %2048 = vmatprep.subr.mxu0 0.0
    %2049 = vmatpush1.msra.mxu0 0.0
    %2050 = vmatprep.subr.mxu0 0.0
    %2051 = vmatpush1.msra.mxu0 0.0
    %2052 = vmatprep.subr.mxu0 0.0
    %2053 = vmatpush1.msra.mxu0 0.0
    %2054 = vmatprep.subr.mxu0 0.0
    %2055 = vmatpush1.msra.mxu0 0.0
    %2056 = vmatprep.subr.mxu0 0.0
    %2057 = vmatpush1.msra.mxu0 0.0
    %2058 = vmatprep.subr.mxu0 0.0
    %2059 = vmatpush1.msra.mxu0 0.0
    %2060 = vmatprep.subr.mxu0 0.0
    %2061 = vmatpush1.msra.mxu0 0.0
    %2062 = vmatprep.subr.mxu0 0.0
    %2063 = vmatpush1.msra.mxu0 0.0
    %2064 = vmatprep.subr.mxu0 0.0
    %2065 = vmatpush1.msra.mxu0 0.0
    %2066 = vmatprep.subr.mxu0 0.0
    %2067 = vmatpush1.msra.mxu0 %v514
    %2068 = vmatprep.subr.mxu0 0.0
    %2069 = vmatpush1.msra.mxu0 %v513
    %2070 = vmatprep.subr.mxu0 0.0
    %2071 = vmatpush1.msra.mxu0 %v512
    %2072 = vmatprep.subr.mxu0 0.0
    %2073 = vmatpush1.msra.mxu0 %v511
    %2074 = vmatprep.subr.mxu0 0.0
    %2075 = vmatpush2.msra.mxu0 0.0
    %2076 = vmatprep.subr.mxu0 0.0
    %2077 = vmatpush2.msra.mxu0 0.0
    %2078 = vmatprep.subr.mxu0 0.0
    %2079 = vmatpush2.msra.mxu0 0.0
    %2080 = vmatprep.subr.mxu0 0.0
    %2081 = vmatpush2.msra.mxu0 0.0
    %2082 = vmatprep.subr.mxu0 0.0
    %2083 = vmatpush2.msra.mxu0 0.0
    %2084 = vmatprep.subr.mxu0 0.0
    %2085 = vmatpush2.msra.mxu0 0.0
    %2086 = vmatprep.subr.mxu0 0.0
    %2087 = vmatpush2.msra.mxu0 0.0
    %2088 = vmatprep.subr.mxu0 0.0
    %2089 = vmatpush2.msra.mxu0 0.0
    %2090 = vmatprep.subr.mxu0 0.0
    %2091 = vmatpush2.msra.mxu0 0.0
    %2092 = vmatprep.subr.mxu0 0.0
    %2093 = vmatpush2.msra.mxu0 0.0
    %2094 = vmatprep.subr.mxu0 0.0
    %2095 = vmatpush2.msra.mxu0 0.0
    %2096 = vmatprep.subr.mxu0 0.0
    %2097 = vmatpush2.msra.mxu0 0.0
    %2098 = vmatprep.subr.mxu0 0.0
    %2099 = vmatpush2.msra.mxu0 0.0
    %2100 = vmatprep.subr.mxu0 0.0
    %2101 = vmatpush2.msra.mxu0 0.0
    %2102 = vmatprep.subr.mxu0 0.0
    %2103 = vmatpush2.msra.mxu0 0.0
    %2104 = vmatprep.subr.mxu0 0.0
    %2105 = vmatpush2.msra.mxu0 0.0
    %2106 = vmatprep.mubr.f32.mxu0 0.0
    %2107 = vmatmul.mubr.f32.gmra.mxu0 %v1886
    %v2108 = vpop.f32.mrf.mxu0
    %v2109 = vadd.f32 %v518, %v2108
    %v2110 = vpop.f32.mrf.mxu0
    %2111 = vdwg.mxu0
    %v2112 = vmul.f32 %v2034, %v2109
    %v2113 = vadd.f32 %v1882, %v2112
    %v2114 = vtanh.pop %v2113
    %v2115 = vsub.f32 1.0, %v2041
    %v2116 = vmul.f32 %v2115, %v2114
    %v2117 = vmul.f32 %v2041, %v1428
    %v2118 = vadd.f32 %v2116, %v2117
    %2119 = vmatprep.subr.mxu0 0.0
    %2120 = vmatpush1.msra.mxu0 0.0
    %2121 = vmatprep.subr.mxu0 0.0
    %2122 = vmatpush1.msra.mxu0 0.0
    %2123 = vmatprep.subr.mxu0 0.0
    %2124 = vmatpush1.msra.mxu0 0.0
    %2125 = vmatprep.subr.mxu0 0.0
    %2126 = vmatpush1.msra.mxu0 0.0
    %2127 = vmatprep.subr.mxu0 0.0
    %2128 = vmatpush1.msra.mxu0 0.0
    %2129 = vmatprep.subr.mxu0 0.0
    %2130 = vmatpush1.msra.mxu0 0.0
    %2131 = vmatprep.subr.mxu0 0.0
    %2132 = vmatpush1.msra.mxu0 0.0
    %2133 = vmatprep.subr.mxu0 0.0
    %2134 = vmatpush1.msra.mxu0 0.0
    %2135 = vmatprep.subr.mxu0 0.0
    %2136 = vmatpush1.msra.mxu0 0.0
    %2137 = vmatprep.subr.mxu0 0.0
    %2138 = vmatpush1.msra.mxu0 0.0
    %2139 = vmatprep.subr.mxu0 0.0
    %2140 = vmatpush1.msra.mxu0 0.0
    %2141 = vmatprep.subr.mxu0 0.0
    %2142 = vmatpush1.msra.mxu0 0.0
    %2143 = vmatprep.subr.mxu0 0.0
    %2144 = vmatpush1.msra.mxu0 %v478
    %2145 = vmatprep.subr.mxu0 0.0
    %2146 = vmatpush1.msra.mxu0 %v477
    %2147 = vmatprep.subr.mxu0 0.0
    %2148 = vmatpush1.msra.mxu0 %v476
    %2149 = vmatprep.subr.mxu0 0.0
    %2150 = vmatpush1.msra.mxu0 %v475
    %2151 = vmatprep.subr.mxu0 0.0
    %2152 = vmatpush2.msra.mxu0 0.0
    %2153 = vmatprep.subr.mxu0 0.0
    %2154 = vmatpush2.msra.mxu0 0.0
    %2155 = vmatprep.subr.mxu0 0.0
    %2156 = vmatpush2.msra.mxu0 0.0
    %2157 = vmatprep.subr.mxu0 0.0
    %2158 = vmatpush2.msra.mxu0 0.0
    %2159 = vmatprep.subr.mxu0 0.0
    %2160 = vmatpush2.msra.mxu0 0.0
    %2161 = vmatprep.subr.mxu0 0.0
    %2162 = vmatpush2.msra.mxu0 0.0
    %2163 = vmatprep.subr.mxu0 0.0
    %2164 = vmatpush2.msra.mxu0 0.0
    %2165 = vmatprep.subr.mxu0 0.0
    %2166 = vmatpush2.msra.mxu0 0.0
    %2167 = vmatprep.subr.mxu0 0.0
    %2168 = vmatpush2.msra.mxu0 0.0
    %2169 = vmatprep.subr.mxu0 0.0
    %2170 = vmatpush2.msra.mxu0 0.0
    %2171 = vmatprep.subr.mxu0 0.0
    %2172 = vmatpush2.msra.mxu0 0.0
    %2173 = vmatprep.subr.mxu0 0.0
    %2174 = vmatpush2.msra.mxu0 0.0
    %2175 = vmatprep.subr.mxu0 0.0
    %2176 = vmatpush2.msra.mxu0 0.0
    %2177 = vmatprep.subr.mxu0 0.0
    %2178 = vmatpush2.msra.mxu0 0.0
    %2179 = vmatprep.subr.mxu0 0.0
    %2180 = vmatpush2.msra.mxu0 0.0
    %2181 = vmatprep.subr.mxu0 0.0
    %2182 = vmatpush2.msra.mxu0 0.0
    %2183 = vmatprep.mubr.f32.mxu0 0.0
    %2184 = vmatmul.mubr.f32.gmra.mxu0 %v1673
    %v2185 = vpop.f32.mrf.mxu0
    %v2186 = vadd.f32 0.0, %v2185
    %v2187 = vpop.f32.mrf.mxu0
    %2188 = vdwg.mxu0
    %2189 = vmatprep.subr.mxu0 0.0
    %2190 = vmatpush1.msra.mxu0 0.0
    %2191 = vmatprep.subr.mxu0 0.0
    %2192 = vmatpush1.msra.mxu0 0.0
    %2193 = vmatprep.subr.mxu0 0.0
    %2194 = vmatpush1.msra.mxu0 0.0
    %2195 = vmatprep.subr.mxu0 0.0
    %2196 = vmatpush1.msra.mxu0 0.0
    %2197 = vmatprep.subr.mxu0 0.0
    %2198 = vmatpush1.msra.mxu0 0.0
    %2199 = vmatprep.subr.mxu0 0.0
    %2200 = vmatpush1.msra.mxu0 0.0
    %2201 = vmatprep.subr.mxu0 0.0
    %2202 = vmatpush1.msra.mxu0 0.0
    %2203 = vmatprep.subr.mxu0 0.0
    %2204 = vmatpush1.msra.mxu0 0.0
    %2205 = vmatprep.subr.mxu0 0.0
    %2206 = vmatpush1.msra.mxu0 0.0
    %2207 = vmatprep.subr.mxu0 0.0
    %2208 = vmatpush1.msra.mxu0 0.0
    %2209 = vmatprep.subr.mxu0 0.0
    %2210 = vmatpush1.msra.mxu0 0.0
    %2211 = vmatprep.subr.mxu0 0.0
    %2212 = vmatpush1.msra.mxu0 0.0
    %2213 = vmatprep.subr.mxu0 0.0
    %2214 = vmatpush1.msra.mxu0 %v482
    %2215 = vmatprep.subr.mxu0 0.0
    %2216 = vmatpush1.msra.mxu0 %v481
    %2217 = vmatprep.subr.mxu0 0.0
    %2218 = vmatpush1.msra.mxu0 %v480
    %2219 = vmatprep.subr.mxu0 0.0
    %2220 = vmatpush1.msra.mxu0 %v479
    %2221 = vmatprep.subr.mxu0 0.0
    %2222 = vmatpush2.msra.mxu0 0.0
    %2223 = vmatprep.subr.mxu0 0.0
    %2224 = vmatpush2.msra.mxu0 0.0
    %2225 = vmatprep.subr.mxu0 0.0
    %2226 = vmatpush2.msra.mxu0 0.0
    %2227 = vmatprep.subr.mxu0 0.0
    %2228 = vmatpush2.msra.mxu0 0.0
    %2229 = vmatprep.subr.mxu0 0.0
    %2230 = vmatpush2.msra.mxu0 0.0
    %2231 = vmatprep.subr.mxu0 0.0
    %2232 = vmatpush2.msra.mxu0 0.0
    %2233 = vmatprep.subr.mxu0 0.0
    %2234 = vmatpush2.msra.mxu0 0.0
    %2235 = vmatprep.subr.mxu0 0.0
    %2236 = vmatpush2.msra.mxu0 0.0
    %2237 = vmatprep.subr.mxu0 0.0
    %2238 = vmatpush2.msra.mxu0 0.0
    %2239 = vmatprep.subr.mxu0 0.0
    %2240 = vmatpush2.msra.mxu0 0.0
    %2241 = vmatprep.subr.mxu0 0.0
    %2242 = vmatpush2.msra.mxu0 0.0
    %2243 = vmatprep.subr.mxu0 0.0
    %2244 = vmatpush2.msra.mxu0 0.0
    %2245 = vmatprep.subr.mxu0 0.0
    %2246 = vmatpush2.msra.mxu0 0.0
    %2247 = vmatprep.subr.mxu0 0.0
    %2248 = vmatpush2.msra.mxu0 0.0
    %2249 = vmatprep.subr.mxu0 0.0
    %2250 = vmatpush2.msra.mxu0 0.0
    %2251 = vmatprep.subr.mxu0 0.0
    %2252 = vmatpush2.msra.mxu0 0.0
    %2253 = vmatprep.mubr.f32.mxu0 0.0
    %2254 = vmatmul.mubr.f32.gmra.mxu0 %v1673
    %v2255 = vpop.f32.mrf.mxu0
    %v2256 = vadd.f32 0.0, %v2255
    %v2257 = vpop.f32.mrf.mxu0
    %2258 = vdwg.mxu0
    %v2260 = vrot.slane %v2186, 6
    %v2262 = vadd.f32 %v596, %v2260
    %v2263 = vxor.u32 %v2262, 2147483648
    %v2264 = vmul.f32 %v2263, 1.442695
    %v2265 = vpow.pop %v2264
    %v2266 = vadd.f32 %v2265, 1.0
    %v2267 = vrcp.pop %v2266
    %v2268 = vmul.f32 1.0, %v2267
    %v2270 = vrot.slane %v2256, 6
    %v2272 = vadd.f32 %v672, %v2270
    %v2273 = vxor.u32 %v2272, 2147483648
    %v2274 = vmul.f32 %v2273, 1.442695
    %v2275 = vpow.pop %v2274
    %v2276 = vadd.f32 %v2275, 1.0
    %v2277 = vrcp.pop %v2276
    %v2278 = vmul.f32 1.0, %v2277
    %2279 = vmatprep.subr.mxu0 0.0
    %2280 = vmatpush1.msra.mxu0 0.0
    %2281 = vmatprep.subr.mxu0 0.0
    %2282 = vmatpush1.msra.mxu0 0.0
    %2283 = vmatprep.subr.mxu0 0.0
    %2284 = vmatpush1.msra.mxu0 0.0
    %2285 = vmatprep.subr.mxu0 0.0
    %2286 = vmatpush1.msra.mxu0 0.0
    %2287 = vmatprep.subr.mxu0 0.0
    %2288 = vmatpush1.msra.mxu0 0.0
    %2289 = vmatprep.subr.mxu0 0.0
    %2290 = vmatpush1.msra.mxu0 0.0
    %2291 = vmatprep.subr.mxu0 0.0
    %2292 = vmatpush1.msra.mxu0 0.0
    %2293 = vmatprep.subr.mxu0 0.0
    %2294 = vmatpush1.msra.mxu0 0.0
    %2295 = vmatprep.subr.mxu0 0.0
    %2296 = vmatpush1.msra.mxu0 0.0
    %2297 = vmatprep.subr.mxu0 0.0
    %2298 = vmatpush1.msra.mxu0 0.0
    %2299 = vmatprep.subr.mxu0 0.0
    %2300 = vmatpush1.msra.mxu0 0.0
    %2301 = vmatprep.subr.mxu0 0.0
    %2302 = vmatpush1.msra.mxu0 0.0
    %2303 = vmatprep.subr.mxu0 0.0
    %2304 = vmatpush1.msra.mxu0 %v486
    %2305 = vmatprep.subr.mxu0 0.0
    %2306 = vmatpush1.msra.mxu0 %v485
    %2307 = vmatprep.subr.mxu0 0.0
    %2308 = vmatpush1.msra.mxu0 %v484
    %2309 = vmatprep.subr.mxu0 0.0
    %2310 = vmatpush1.msra.mxu0 %v483
    %2311 = vmatprep.subr.mxu0 0.0
    %2312 = vmatpush2.msra.mxu0 0.0
    %2313 = vmatprep.subr.mxu0 0.0
    %2314 = vmatpush2.msra.mxu0 0.0
    %2315 = vmatprep.subr.mxu0 0.0
    %2316 = vmatpush2.msra.mxu0 0.0
    %2317 = vmatprep.subr.mxu0 0.0
    %2318 = vmatpush2.msra.mxu0 0.0
    %2319 = vmatprep.subr.mxu0 0.0
    %2320 = vmatpush2.msra.mxu0 0.0
    %2321 = vmatprep.subr.mxu0 0.0
    %2322 = vmatpush2.msra.mxu0 0.0
    %2323 = vmatprep.subr.mxu0 0.0
    %2324 = vmatpush2.msra.mxu0 0.0
    %2325 = vmatprep.subr.mxu0 0.0
    %2326 = vmatpush2.msra.mxu0 0.0
    %2327 = vmatprep.subr.mxu0 0.0
    %2328 = vmatpush2.msra.mxu0 0.0
    %2329 = vmatprep.subr.mxu0 0.0
    %2330 = vmatpush2.msra.mxu0 0.0
    %2331 = vmatprep.subr.mxu0 0.0
    %2332 = vmatpush2.msra.mxu0 0.0
    %2333 = vmatprep.subr.mxu0 0.0
    %2334 = vmatpush2.msra.mxu0 0.0
    %2335 = vmatprep.subr.mxu0 0.0
    %2336 = vmatpush2.msra.mxu0 0.0
    %2337 = vmatprep.subr.mxu0 0.0
    %2338 = vmatpush2.msra.mxu0 0.0
    %2339 = vmatprep.subr.mxu0 0.0
    %2340 = vmatpush2.msra.mxu0 0.0
    %2341 = vmatprep.subr.mxu0 0.0
    %2342 = vmatpush2.msra.mxu0 0.0
    %2343 = vmatprep.mubr.f32.mxu0 0.0
    %2344 = vmatmul.mubr.f32.gmra.mxu0 %v1673
    %v2345 = vpop.f32.mrf.mxu0
    %v2346 = vadd.f32 %v490, %v2345
    %v2347 = vpop.f32.mrf.mxu0
    %2348 = vdwg.mxu0
    %v2350 = vrot.slane %v2346, 6
    %v2352 = vmul.f32 %v2268, %v2350
    %v2353 = vadd.f32 %v748, %v2352
    %v2354 = vtanh.pop %v2353
    %v2355 = vsub.f32 1.0, %v2278
    %v2356 = vmul.f32 %v2355, %v2354
    %v2357 = vrot.slane %v1670, 7
    %v2359 = vmul.f32 %v2278, %v2357
    %v2360 = vadd.f32 %v2356, %v2359
    %v2362 = vrot.slane %v2360, 2
    %v2363 = vsel %vm525, %v2362, 0
    %2365 = vmatprep.subr.mxu0 0.0
    %2366 = vmatpush1.msra.mxu0 0.0
    %2367 = vmatprep.subr.mxu0 0.0
    %2368 = vmatpush1.msra.mxu0 0.0
    %2369 = vmatprep.subr.mxu0 0.0
    %2370 = vmatpush1.msra.mxu0 0.0
    %2371 = vmatprep.subr.mxu0 0.0
    %2372 = vmatpush1.msra.mxu0 0.0
    %2373 = vmatprep.subr.mxu0 0.0
    %2374 = vmatpush1.msra.mxu0 0.0
    %2375 = vmatprep.subr.mxu0 0.0
    %2376 = vmatpush1.msra.mxu0 0.0
    %2377 = vmatprep.subr.mxu0 0.0
    %2378 = vmatpush1.msra.mxu0 0.0
    %2379 = vmatprep.subr.mxu0 0.0
    %2380 = vmatpush1.msra.mxu0 0.0
    %2381 = vmatprep.subr.mxu0 0.0
    %2382 = vmatpush1.msra.mxu0 0.0
    %2383 = vmatprep.subr.mxu0 0.0
    %2384 = vmatpush1.msra.mxu0 0.0
    %2385 = vmatprep.subr.mxu0 0.0
    %2386 = vmatpush1.msra.mxu0 0.0
    %2387 = vmatprep.subr.mxu0 0.0
    %2388 = vmatpush1.msra.mxu0 0.0
    %2389 = vmatprep.subr.mxu0 0.0
    %2390 = vmatpush1.msra.mxu0 %v494
    %2391 = vmatprep.subr.mxu0 0.0
    %2392 = vmatpush1.msra.mxu0 %v493
    %2393 = vmatprep.subr.mxu0 0.0
    %2394 = vmatpush1.msra.mxu0 %v492
    %2395 = vmatprep.subr.mxu0 0.0
    %2396 = vmatpush1.msra.mxu0 %v491
    %2397 = vmatprep.subr.mxu0 0.0
    %2398 = vmatpush2.msra.mxu0 0.0
    %2399 = vmatprep.subr.mxu0 0.0
    %2400 = vmatpush2.msra.mxu0 0.0
    %2401 = vmatprep.subr.mxu0 0.0
    %2402 = vmatpush2.msra.mxu0 0.0
    %2403 = vmatprep.subr.mxu0 0.0
    %2404 = vmatpush2.msra.mxu0 0.0
    %2405 = vmatprep.subr.mxu0 0.0
    %2406 = vmatpush2.msra.mxu0 0.0
    %2407 = vmatprep.subr.mxu0 0.0
    %2408 = vmatpush2.msra.mxu0 0.0
    %2409 = vmatprep.subr.mxu0 0.0
    %2410 = vmatpush2.msra.mxu0 0.0
    %2411 = vmatprep.subr.mxu0 0.0
    %2412 = vmatpush2.msra.mxu0 0.0
    %2413 = vmatprep.subr.mxu0 0.0
    %2414 = vmatpush2.msra.mxu0 0.0
    %2415 = vmatprep.subr.mxu0 0.0
    %2416 = vmatpush2.msra.mxu0 0.0
    %2417 = vmatprep.subr.mxu0 0.0
    %2418 = vmatpush2.msra.mxu0 0.0
    %2419 = vmatprep.subr.mxu0 0.0
    %2420 = vmatpush2.msra.mxu0 0.0
    %2421 = vmatprep.subr.mxu0 0.0
    %2422 = vmatpush2.msra.mxu0 0.0
    %2423 = vmatprep.subr.mxu0 0.0
    %2424 = vmatpush2.msra.mxu0 0.0
    %2425 = vmatprep.subr.mxu0 0.0
    %2426 = vmatpush2.msra.mxu0 0.0
    %2427 = vmatprep.subr.mxu0 0.0
    %2428 = vmatpush2.msra.mxu0 0.0
    %2429 = vmatprep.mubr.f32.mxu0 0.0
    %2430 = vmatmul.mubr.f32.gmra.mxu0 %v2363
    %v2431 = vpop.f32.mrf.mxu0
    %v2432 = vadd.f32 %v515, %v2431
    %v2433 = vpop.f32.mrf.mxu0
    %2434 = vdwg.mxu0
    %2435 = vmatprep.subr.mxu0 0.0
    %2436 = vmatpush1.msra.mxu0 0.0
    %2437 = vmatprep.subr.mxu0 0.0
    %2438 = vmatpush1.msra.mxu0 0.0
    %2439 = vmatprep.subr.mxu0 0.0
    %2440 = vmatpush1.msra.mxu0 0.0
    %2441 = vmatprep.subr.mxu0 0.0
    %2442 = vmatpush1.msra.mxu0 0.0
    %2443 = vmatprep.subr.mxu0 0.0
    %2444 = vmatpush1.msra.mxu0 0.0
    %2445 = vmatprep.subr.mxu0 0.0
    %2446 = vmatpush1.msra.mxu0 0.0
    %2447 = vmatprep.subr.mxu0 0.0
    %2448 = vmatpush1.msra.mxu0 0.0
    %2449 = vmatprep.subr.mxu0 0.0
    %2450 = vmatpush1.msra.mxu0 0.0
    %2451 = vmatprep.subr.mxu0 0.0
    %2452 = vmatpush1.msra.mxu0 0.0
    %2453 = vmatprep.subr.mxu0 0.0
    %2454 = vmatpush1.msra.mxu0 0.0
    %2455 = vmatprep.subr.mxu0 0.0
    %2456 = vmatpush1.msra.mxu0 0.0
    %2457 = vmatprep.subr.mxu0 0.0
    %2458 = vmatpush1.msra.mxu0 0.0
    %2459 = vmatprep.subr.mxu0 0.0
    %2460 = vmatpush1.msra.mxu0 %v498
    %2461 = vmatprep.subr.mxu0 0.0
    %2462 = vmatpush1.msra.mxu0 %v497
    %2463 = vmatprep.subr.mxu0 0.0
    %2464 = vmatpush1.msra.mxu0 %v496
    %2465 = vmatprep.subr.mxu0 0.0
    %2466 = vmatpush1.msra.mxu0 %v495
    %2467 = vmatprep.subr.mxu0 0.0
    %2468 = vmatpush2.msra.mxu0 0.0
    %2469 = vmatprep.subr.mxu0 0.0
    %2470 = vmatpush2.msra.mxu0 0.0
    %2471 = vmatprep.subr.mxu0 0.0
    %2472 = vmatpush2.msra.mxu0 0.0
    %2473 = vmatprep.subr.mxu0 0.0
    %2474 = vmatpush2.msra.mxu0 0.0
    %2475 = vmatprep.subr.mxu0 0.0
    %2476 = vmatpush2.msra.mxu0 0.0
    %2477 = vmatprep.subr.mxu0 0.0
    %2478 = vmatpush2.msra.mxu0 0.0
    %2479 = vmatprep.subr.mxu0 0.0
    %2480 = vmatpush2.msra.mxu0 0.0
    %2481 = vmatprep.subr.mxu0 0.0
    %2482 = vmatpush2.msra.mxu0 0.0
    %2483 = vmatprep.subr.mxu0 0.0
    %2484 = vmatpush2.msra.mxu0 0.0
    %2485 = vmatprep.subr.mxu0 0.0
    %2486 = vmatpush2.msra.mxu0 0.0
    %2487 = vmatprep.subr.mxu0 0.0
    %2488 = vmatpush2.msra.mxu0 0.0
    %2489 = vmatprep.subr.mxu0 0.0
    %2490 = vmatpush2.msra.mxu0 0.0
    %2491 = vmatprep.subr.mxu0 0.0
    %2492 = vmatpush2.msra.mxu0 0.0
    %2493 = vmatprep.subr.mxu0 0.0
    %2494 = vmatpush2.msra.mxu0 0.0
    %2495 = vmatprep.subr.mxu0 0.0
    %2496 = vmatpush2.msra.mxu0 0.0
    %2497 = vmatprep.subr.mxu0 0.0
    %2498 = vmatpush2.msra.mxu0 0.0
    %2499 = vmatprep.mubr.f32.mxu0 0.0
    %2500 = vmatmul.mubr.f32.gmra.mxu0 %v2363
    %v2501 = vpop.f32.mrf.mxu0
    %v2502 = vadd.f32 %v516, %v2501
    %v2503 = vpop.f32.mrf.mxu0
    %2504 = vdwg.mxu0
    %2505 = vmatprep.subr.mxu0 0.0
    %2506 = vmatpush1.msra.mxu0 0.0
    %2507 = vmatprep.subr.mxu0 0.0
    %2508 = vmatpush1.msra.mxu0 0.0
    %2509 = vmatprep.subr.mxu0 0.0
    %2510 = vmatpush1.msra.mxu0 0.0
    %2511 = vmatprep.subr.mxu0 0.0
    %2512 = vmatpush1.msra.mxu0 0.0
    %2513 = vmatprep.subr.mxu0 0.0
    %2514 = vmatpush1.msra.mxu0 0.0
    %2515 = vmatprep.subr.mxu0 0.0
    %2516 = vmatpush1.msra.mxu0 0.0
    %2517 = vmatprep.subr.mxu0 0.0
    %2518 = vmatpush1.msra.mxu0 0.0
    %2519 = vmatprep.subr.mxu0 0.0
    %2520 = vmatpush1.msra.mxu0 0.0
    %2521 = vmatprep.subr.mxu0 0.0
    %2522 = vmatpush1.msra.mxu0 0.0
    %2523 = vmatprep.subr.mxu0 0.0
    %2524 = vmatpush1.msra.mxu0 0.0
    %2525 = vmatprep.subr.mxu0 0.0
    %2526 = vmatpush1.msra.mxu0 0.0
    %2527 = vmatprep.subr.mxu0 0.0
    %2528 = vmatpush1.msra.mxu0 0.0
    %2529 = vmatprep.subr.mxu0 0.0
    %2530 = vmatpush1.msra.mxu0 %v502
    %2531 = vmatprep.subr.mxu0 0.0
    %2532 = vmatpush1.msra.mxu0 %v501
    %2533 = vmatprep.subr.mxu0 0.0
    %2534 = vmatpush1.msra.mxu0 %v500
    %2535 = vmatprep.subr.mxu0 0.0
    %2536 = vmatpush1.msra.mxu0 %v499
    %2537 = vmatprep.subr.mxu0 0.0
    %2538 = vmatpush2.msra.mxu0 0.0
    %2539 = vmatprep.subr.mxu0 0.0
    %2540 = vmatpush2.msra.mxu0 0.0
    %2541 = vmatprep.subr.mxu0 0.0
    %2542 = vmatpush2.msra.mxu0 0.0
    %2543 = vmatprep.subr.mxu0 0.0
    %2544 = vmatpush2.msra.mxu0 0.0
    %2545 = vmatprep.subr.mxu0 0.0
    %2546 = vmatpush2.msra.mxu0 0.0
    %2547 = vmatprep.subr.mxu0 0.0
    %2548 = vmatpush2.msra.mxu0 0.0
    %2549 = vmatprep.subr.mxu0 0.0
    %2550 = vmatpush2.msra.mxu0 0.0
    %2551 = vmatprep.subr.mxu0 0.0
    %2552 = vmatpush2.msra.mxu0 0.0
    %2553 = vmatprep.subr.mxu0 0.0
    %2554 = vmatpush2.msra.mxu0 0.0
    %2555 = vmatprep.subr.mxu0 0.0
    %2556 = vmatpush2.msra.mxu0 0.0
    %2557 = vmatprep.subr.mxu0 0.0
    %2558 = vmatpush2.msra.mxu0 0.0
    %2559 = vmatprep.subr.mxu0 0.0
    %2560 = vmatpush2.msra.mxu0 0.0
    %2561 = vmatprep.subr.mxu0 0.0
    %2562 = vmatpush2.msra.mxu0 0.0
    %2563 = vmatprep.subr.mxu0 0.0
    %2564 = vmatpush2.msra.mxu0 0.0
    %2565 = vmatprep.subr.mxu0 0.0
    %2566 = vmatpush2.msra.mxu0 0.0
    %2567 = vmatprep.subr.mxu0 0.0
    %2568 = vmatpush2.msra.mxu0 0.0
    %2569 = vmatprep.mubr.f32.mxu0 0.0
    %2570 = vmatmul.mubr.f32.gmra.mxu0 %v2363
    %v2571 = vpop.f32.mrf.mxu0
    %v2572 = vadd.f32 %v517, %v2571
    %v2573 = vpop.f32.mrf.mxu0
    %2574 = vdwg.mxu0
    %v2576 = vsel %vm525, %v2118, 0
    %2578 = vmatprep.subr.mxu0 0.0
    %2579 = vmatpush1.msra.mxu0 0.0
    %2580 = vmatprep.subr.mxu0 0.0
    %2581 = vmatpush1.msra.mxu0 0.0
    %2582 = vmatprep.subr.mxu0 0.0
    %2583 = vmatpush1.msra.mxu0 0.0
    %2584 = vmatprep.subr.mxu0 0.0
    %2585 = vmatpush1.msra.mxu0 0.0
    %2586 = vmatprep.subr.mxu0 0.0
    %2587 = vmatpush1.msra.mxu0 0.0
    %2588 = vmatprep.subr.mxu0 0.0
    %2589 = vmatpush1.msra.mxu0 0.0
    %2590 = vmatprep.subr.mxu0 0.0
    %2591 = vmatpush1.msra.mxu0 0.0
    %2592 = vmatprep.subr.mxu0 0.0
    %2593 = vmatpush1.msra.mxu0 0.0
    %2594 = vmatprep.subr.mxu0 0.0
    %2595 = vmatpush1.msra.mxu0 0.0
    %2596 = vmatprep.subr.mxu0 0.0
    %2597 = vmatpush1.msra.mxu0 0.0
    %2598 = vmatprep.subr.mxu0 0.0
    %2599 = vmatpush1.msra.mxu0 0.0
    %2600 = vmatprep.subr.mxu0 0.0
    %2601 = vmatpush1.msra.mxu0 0.0
    %2602 = vmatprep.subr.mxu0 0.0
    %2603 = vmatpush1.msra.mxu0 %v506
    %2604 = vmatprep.subr.mxu0 0.0
    %2605 = vmatpush1.msra.mxu0 %v505
    %2606 = vmatprep.subr.mxu0 0.0
    %2607 = vmatpush1.msra.mxu0 %v504
    %2608 = vmatprep.subr.mxu0 0.0
    %2609 = vmatpush1.msra.mxu0 %v503
    %2610 = vmatprep.subr.mxu0 0.0
    %2611 = vmatpush2.msra.mxu0 0.0
    %2612 = vmatprep.subr.mxu0 0.0
    %2613 = vmatpush2.msra.mxu0 0.0
    %2614 = vmatprep.subr.mxu0 0.0
    %2615 = vmatpush2.msra.mxu0 0.0
    %2616 = vmatprep.subr.mxu0 0.0
    %2617 = vmatpush2.msra.mxu0 0.0
    %2618 = vmatprep.subr.mxu0 0.0
    %2619 = vmatpush2.msra.mxu0 0.0
    %2620 = vmatprep.subr.mxu0 0.0
    %2621 = vmatpush2.msra.mxu0 0.0
    %2622 = vmatprep.subr.mxu0 0.0
    %2623 = vmatpush2.msra.mxu0 0.0
    %2624 = vmatprep.subr.mxu0 0.0
    %2625 = vmatpush2.msra.mxu0 0.0
    %2626 = vmatprep.subr.mxu0 0.0
    %2627 = vmatpush2.msra.mxu0 0.0
    %2628 = vmatprep.subr.mxu0 0.0
    %2629 = vmatpush2.msra.mxu0 0.0
    %2630 = vmatprep.subr.mxu0 0.0
    %2631 = vmatpush2.msra.mxu0 0.0
    %2632 = vmatprep.subr.mxu0 0.0
    %2633 = vmatpush2.msra.mxu0 0.0
    %2634 = vmatprep.subr.mxu0 0.0
    %2635 = vmatpush2.msra.mxu0 0.0
    %2636 = vmatprep.subr.mxu0 0.0
    %2637 = vmatpush2.msra.mxu0 0.0
    %2638 = vmatprep.subr.mxu0 0.0
    %2639 = vmatpush2.msra.mxu0 0.0
    %2640 = vmatprep.subr.mxu0 0.0
    %2641 = vmatpush2.msra.mxu0 0.0
    %2642 = vmatprep.mubr.f32.mxu0 0.0
    %2643 = vmatmul.mubr.f32.gmra.mxu0 %v2576
    %v2644 = vpop.f32.mrf.mxu0
    %v2645 = vadd.f32 0.0, %v2644
    %v2646 = vpop.f32.mrf.mxu0
    %2647 = vdwg.mxu0
    %2648 = vmatprep.subr.mxu0 0.0
    %2649 = vmatpush1.msra.mxu0 0.0
    %2650 = vmatprep.subr.mxu0 0.0
    %2651 = vmatpush1.msra.mxu0 0.0
    %2652 = vmatprep.subr.mxu0 0.0
    %2653 = vmatpush1.msra.mxu0 0.0
    %2654 = vmatprep.subr.mxu0 0.0
    %2655 = vmatpush1.msra.mxu0 0.0
    %2656 = vmatprep.subr.mxu0 0.0
    %2657 = vmatpush1.msra.mxu0 0.0
    %2658 = vmatprep.subr.mxu0 0.0
    %2659 = vmatpush1.msra.mxu0 0.0
    %2660 = vmatprep.subr.mxu0 0.0
    %2661 = vmatpush1.msra.mxu0 0.0
    %2662 = vmatprep.subr.mxu0 0.0
    %2663 = vmatpush1.msra.mxu0 0.0
    %2664 = vmatprep.subr.mxu0 0.0
    %2665 = vmatpush1.msra.mxu0 0.0
    %2666 = vmatprep.subr.mxu0 0.0
    %2667 = vmatpush1.msra.mxu0 0.0
    %2668 = vmatprep.subr.mxu0 0.0
    %2669 = vmatpush1.msra.mxu0 0.0
    %2670 = vmatprep.subr.mxu0 0.0
    %2671 = vmatpush1.msra.mxu0 0.0
    %2672 = vmatprep.subr.mxu0 0.0
    %2673 = vmatpush1.msra.mxu0 %v510
    %2674 = vmatprep.subr.mxu0 0.0
    %2675 = vmatpush1.msra.mxu0 %v509
    %2676 = vmatprep.subr.mxu0 0.0
    %2677 = vmatpush1.msra.mxu0 %v508
    %2678 = vmatprep.subr.mxu0 0.0
    %2679 = vmatpush1.msra.mxu0 %v507
    %2680 = vmatprep.subr.mxu0 0.0
    %2681 = vmatpush2.msra.mxu0 0.0
    %2682 = vmatprep.subr.mxu0 0.0
    %2683 = vmatpush2.msra.mxu0 0.0
    %2684 = vmatprep.subr.mxu0 0.0
    %2685 = vmatpush2.msra.mxu0 0.0
    %2686 = vmatprep.subr.mxu0 0.0
    %2687 = vmatpush2.msra.mxu0 0.0
    %2688 = vmatprep.subr.mxu0 0.0
    %2689 = vmatpush2.msra.mxu0 0.0
    %2690 = vmatprep.subr.mxu0 0.0
    %2691 = vmatpush2.msra.mxu0 0.0
    %2692 = vmatprep.subr.mxu0 0.0
    %2693 = vmatpush2.msra.mxu0 0.0
    %2694 = vmatprep.subr.mxu0 0.0
    %2695 = vmatpush2.msra.mxu0 0.0
    %2696 = vmatprep.subr.mxu0 0.0
    %2697 = vmatpush2.msra.mxu0 0.0
    %2698 = vmatprep.subr.mxu0 0.0
    %2699 = vmatpush2.msra.mxu0 0.0
    %2700 = vmatprep.subr.mxu0 0.0
    %2701 = vmatpush2.msra.mxu0 0.0
    %2702 = vmatprep.subr.mxu0 0.0
    %2703 = vmatpush2.msra.mxu0 0.0
    %2704 = vmatprep.subr.mxu0 0.0
    %2705 = vmatpush2.msra.mxu0 0.0
    %2706 = vmatprep.subr.mxu0 0.0
    %2707 = vmatpush2.msra.mxu0 0.0
    %2708 = vmatprep.subr.mxu0 0.0
    %2709 = vmatpush2.msra.mxu0 0.0
    %2710 = vmatprep.subr.mxu0 0.0
    %2711 = vmatpush2.msra.mxu0 0.0
    %2712 = vmatprep.mubr.f32.mxu0 0.0
    %2713 = vmatmul.mubr.f32.gmra.mxu0 %v2576
    %v2714 = vpop.f32.mrf.mxu0
    %v2715 = vadd.f32 0.0, %v2714
    %v2716 = vpop.f32.mrf.mxu0
    %2717 = vdwg.mxu0
    %v2718 = vadd.f32 %v2432, %v2645
    %v2719 = vxor.u32 %v2718, 2147483648
    %v2720 = vmul.f32 %v2719, 1.442695
    %v2721 = vpow.pop %v2720
    %v2722 = vadd.f32 %v2721, 1.0
    %v2723 = vrcp.pop %v2722
    %v2724 = vmul.f32 1.0, %v2723
    %v2725 = vadd.f32 %v2502, %v2715
    %v2726 = vxor.u32 %v2725, 2147483648
    %v2727 = vmul.f32 %v2726, 1.442695
    %v2728 = vpow.pop %v2727
    %v2729 = vadd.f32 %v2728, 1.0
    %v2730 = vrcp.pop %v2729
    %v2731 = vmul.f32 1.0, %v2730
    %2732 = vmatprep.subr.mxu0 0.0
    %2733 = vmatpush1.msra.mxu0 0.0
    %2734 = vmatprep.subr.mxu0 0.0
    %2735 = vmatpush1.msra.mxu0 0.0
    %2736 = vmatprep.subr.mxu0 0.0
    %2737 = vmatpush1.msra.mxu0 0.0
    %2738 = vmatprep.subr.mxu0 0.0
    %2739 = vmatpush1.msra.mxu0 0.0
    %2740 = vmatprep.subr.mxu0 0.0
    %2741 = vmatpush1.msra.mxu0 0.0
    %2742 = vmatprep.subr.mxu0 0.0
    %2743 = vmatpush1.msra.mxu0 0.0
    %2744 = vmatprep.subr.mxu0 0.0
    %2745 = vmatpush1.msra.mxu0 0.0
    %2746 = vmatprep.subr.mxu0 0.0
    %2747 = vmatpush1.msra.mxu0 0.0
    %2748 = vmatprep.subr.mxu0 0.0
    %2749 = vmatpush1.msra.mxu0 0.0
    %2750 = vmatprep.subr.mxu0 0.0
    %2751 = vmatpush1.msra.mxu0 0.0
    %2752 = vmatprep.subr.mxu0 0.0
    %2753 = vmatpush1.msra.mxu0 0.0
    %2754 = vmatprep.subr.mxu0 0.0
    %2755 = vmatpush1.msra.mxu0 0.0
    %2756 = vmatprep.subr.mxu0 0.0
    %2757 = vmatpush1.msra.mxu0 %v514
    %2758 = vmatprep.subr.mxu0 0.0
    %2759 = vmatpush1.msra.mxu0 %v513
    %2760 = vmatprep.subr.mxu0 0.0
    %2761 = vmatpush1.msra.mxu0 %v512
    %2762 = vmatprep.subr.mxu0 0.0
    %2763 = vmatpush1.msra.mxu0 %v511
    %2764 = vmatprep.subr.mxu0 0.0
    %2765 = vmatpush2.msra.mxu0 0.0
    %2766 = vmatprep.subr.mxu0 0.0
    %2767 = vmatpush2.msra.mxu0 0.0
    %2768 = vmatprep.subr.mxu0 0.0
    %2769 = vmatpush2.msra.mxu0 0.0
    %2770 = vmatprep.subr.mxu0 0.0
    %2771 = vmatpush2.msra.mxu0 0.0
    %2772 = vmatprep.subr.mxu0 0.0
    %2773 = vmatpush2.msra.mxu0 0.0
    %2774 = vmatprep.subr.mxu0 0.0
    %2775 = vmatpush2.msra.mxu0 0.0
    %2776 = vmatprep.subr.mxu0 0.0
    %2777 = vmatpush2.msra.mxu0 0.0
    %2778 = vmatprep.subr.mxu0 0.0
    %2779 = vmatpush2.msra.mxu0 0.0
    %2780 = vmatprep.subr.mxu0 0.0
    %2781 = vmatpush2.msra.mxu0 0.0
    %2782 = vmatprep.subr.mxu0 0.0
    %2783 = vmatpush2.msra.mxu0 0.0
    %2784 = vmatprep.subr.mxu0 0.0
    %2785 = vmatpush2.msra.mxu0 0.0
    %2786 = vmatprep.subr.mxu0 0.0
    %2787 = vmatpush2.msra.mxu0 0.0
    %2788 = vmatprep.subr.mxu0 0.0
    %2789 = vmatpush2.msra.mxu0 0.0
    %2790 = vmatprep.subr.mxu0 0.0
    %2791 = vmatpush2.msra.mxu0 0.0
    %2792 = vmatprep.subr.mxu0 0.0
    %2793 = vmatpush2.msra.mxu0 0.0
    %2794 = vmatprep.subr.mxu0 0.0
    %2795 = vmatpush2.msra.mxu0 0.0
    %2796 = vmatprep.mubr.f32.mxu0 0.0
    %2797 = vmatmul.mubr.f32.gmra.mxu0 %v2576
    %v2798 = vpop.f32.mrf.mxu0
    %v2799 = vadd.f32 %v518, %v2798
    %v2800 = vpop.f32.mrf.mxu0
    %2801 = vdwg.mxu0
    %v2802 = vmul.f32 %v2724, %v2799
    %v2803 = vadd.f32 %v2572, %v2802
    %v2804 = vtanh.pop %v2803
    %v2805 = vsub.f32 1.0, %v2731
    %v2806 = vmul.f32 %v2805, %v2804
    %v2807 = vmul.f32 %v2731, %v2118
    %v2808 = vadd.f32 %v2806, %v2807
    %2809 = vmatprep.subr.mxu0 0.0
    %2810 = vmatpush1.msra.mxu0 0.0
    %2811 = vmatprep.subr.mxu0 0.0
    %2812 = vmatpush1.msra.mxu0 0.0
    %2813 = vmatprep.subr.mxu0 0.0
    %2814 = vmatpush1.msra.mxu0 0.0
    %2815 = vmatprep.subr.mxu0 0.0
    %2816 = vmatpush1.msra.mxu0 0.0
    %2817 = vmatprep.subr.mxu0 0.0
    %2818 = vmatpush1.msra.mxu0 0.0
    %2819 = vmatprep.subr.mxu0 0.0
    %2820 = vmatpush1.msra.mxu0 0.0
    %2821 = vmatprep.subr.mxu0 0.0
    %2822 = vmatpush1.msra.mxu0 0.0
    %2823 = vmatprep.subr.mxu0 0.0
    %2824 = vmatpush1.msra.mxu0 0.0
    %2825 = vmatprep.subr.mxu0 0.0
    %2826 = vmatpush1.msra.mxu0 0.0
    %2827 = vmatprep.subr.mxu0 0.0
    %2828 = vmatpush1.msra.mxu0 0.0
    %2829 = vmatprep.subr.mxu0 0.0
    %2830 = vmatpush1.msra.mxu0 0.0
    %2831 = vmatprep.subr.mxu0 0.0
    %2832 = vmatpush1.msra.mxu0 0.0
    %2833 = vmatprep.subr.mxu0 0.0
    %2834 = vmatpush1.msra.mxu0 %v478
    %2835 = vmatprep.subr.mxu0 0.0
    %2836 = vmatpush1.msra.mxu0 %v477
    %2837 = vmatprep.subr.mxu0 0.0
    %2838 = vmatpush1.msra.mxu0 %v476
    %2839 = vmatprep.subr.mxu0 0.0
    %2840 = vmatpush1.msra.mxu0 %v475
    %2841 = vmatprep.subr.mxu0 0.0
    %2842 = vmatpush2.msra.mxu0 0.0
    %2843 = vmatprep.subr.mxu0 0.0
    %2844 = vmatpush2.msra.mxu0 0.0
    %2845 = vmatprep.subr.mxu0 0.0
    %2846 = vmatpush2.msra.mxu0 0.0
    %2847 = vmatprep.subr.mxu0 0.0
    %2848 = vmatpush2.msra.mxu0 0.0
    %2849 = vmatprep.subr.mxu0 0.0
    %2850 = vmatpush2.msra.mxu0 0.0
    %2851 = vmatprep.subr.mxu0 0.0
    %2852 = vmatpush2.msra.mxu0 0.0
    %2853 = vmatprep.subr.mxu0 0.0
    %2854 = vmatpush2.msra.mxu0 0.0
    %2855 = vmatprep.subr.mxu0 0.0
    %2856 = vmatpush2.msra.mxu0 0.0
    %2857 = vmatprep.subr.mxu0 0.0
    %2858 = vmatpush2.msra.mxu0 0.0
    %2859 = vmatprep.subr.mxu0 0.0
    %2860 = vmatpush2.msra.mxu0 0.0
    %2861 = vmatprep.subr.mxu0 0.0
    %2862 = vmatpush2.msra.mxu0 0.0
    %2863 = vmatprep.subr.mxu0 0.0
    %2864 = vmatpush2.msra.mxu0 0.0
    %2865 = vmatprep.subr.mxu0 0.0
    %2866 = vmatpush2.msra.mxu0 0.0
    %2867 = vmatprep.subr.mxu0 0.0
    %2868 = vmatpush2.msra.mxu0 0.0
    %2869 = vmatprep.subr.mxu0 0.0
    %2870 = vmatpush2.msra.mxu0 0.0
    %2871 = vmatprep.subr.mxu0 0.0
    %2872 = vmatpush2.msra.mxu0 0.0
    %2873 = vmatprep.mubr.f32.mxu0 0.0
    %2874 = vmatmul.mubr.f32.gmra.mxu0 %v2363
    %v2875 = vpop.f32.mrf.mxu0
    %v2876 = vadd.f32 0.0, %v2875
    %v2877 = vpop.f32.mrf.mxu0
    %2878 = vdwg.mxu0
    %2879 = vmatprep.subr.mxu0 0.0
    %2880 = vmatpush1.msra.mxu0 0.0
    %2881 = vmatprep.subr.mxu0 0.0
    %2882 = vmatpush1.msra.mxu0 0.0
    %2883 = vmatprep.subr.mxu0 0.0
    %2884 = vmatpush1.msra.mxu0 0.0
    %2885 = vmatprep.subr.mxu0 0.0
    %2886 = vmatpush1.msra.mxu0 0.0
    %2887 = vmatprep.subr.mxu0 0.0
    %2888 = vmatpush1.msra.mxu0 0.0
    %2889 = vmatprep.subr.mxu0 0.0
    %2890 = vmatpush1.msra.mxu0 0.0
    %2891 = vmatprep.subr.mxu0 0.0
    %2892 = vmatpush1.msra.mxu0 0.0
    %2893 = vmatprep.subr.mxu0 0.0
    %2894 = vmatpush1.msra.mxu0 0.0
    %2895 = vmatprep.subr.mxu0 0.0
    %2896 = vmatpush1.msra.mxu0 0.0
    %2897 = vmatprep.subr.mxu0 0.0
    %2898 = vmatpush1.msra.mxu0 0.0
    %2899 = vmatprep.subr.mxu0 0.0
    %2900 = vmatpush1.msra.mxu0 0.0
    %2901 = vmatprep.subr.mxu0 0.0
    %2902 = vmatpush1.msra.mxu0 0.0
    %2903 = vmatprep.subr.mxu0 0.0
    %2904 = vmatpush1.msra.mxu0 %v482
    %2905 = vmatprep.subr.mxu0 0.0
    %2906 = vmatpush1.msra.mxu0 %v481
    %2907 = vmatprep.subr.mxu0 0.0
    %2908 = vmatpush1.msra.mxu0 %v480
    %2909 = vmatprep.subr.mxu0 0.0
    %2910 = vmatpush1.msra.mxu0 %v479
    %2911 = vmatprep.subr.mxu0 0.0
    %2912 = vmatpush2.msra.mxu0 0.0
    %2913 = vmatprep.subr.mxu0 0.0
    %2914 = vmatpush2.msra.mxu0 0.0
    %2915 = vmatprep.subr.mxu0 0.0
    %2916 = vmatpush2.msra.mxu0 0.0
    %2917 = vmatprep.subr.mxu0 0.0
    %2918 = vmatpush2.msra.mxu0 0.0
    %2919 = vmatprep.subr.mxu0 0.0
    %2920 = vmatpush2.msra.mxu0 0.0
    %2921 = vmatprep.subr.mxu0 0.0
    %2922 = vmatpush2.msra.mxu0 0.0
    %2923 = vmatprep.subr.mxu0 0.0
    %2924 = vmatpush2.msra.mxu0 0.0
    %2925 = vmatprep.subr.mxu0 0.0
    %2926 = vmatpush2.msra.mxu0 0.0
    %2927 = vmatprep.subr.mxu0 0.0
    %2928 = vmatpush2.msra.mxu0 0.0
    %2929 = vmatprep.subr.mxu0 0.0
    %2930 = vmatpush2.msra.mxu0 0.0
    %2931 = vmatprep.subr.mxu0 0.0
    %2932 = vmatpush2.msra.mxu0 0.0
    %2933 = vmatprep.subr.mxu0 0.0
    %2934 = vmatpush2.msra.mxu0 0.0
    %2935 = vmatprep.subr.mxu0 0.0
    %2936 = vmatpush2.msra.mxu0 0.0
    %2937 = vmatprep.subr.mxu0 0.0
    %2938 = vmatpush2.msra.mxu0 0.0
    %2939 = vmatprep.subr.mxu0 0.0
    %2940 = vmatpush2.msra.mxu0 0.0
    %2941 = vmatprep.subr.mxu0 0.0
    %2942 = vmatpush2.msra.mxu0 0.0
    %2943 = vmatprep.mubr.f32.mxu0 0.0
    %2944 = vmatmul.mubr.f32.gmra.mxu0 %v2363
    %v2945 = vpop.f32.mrf.mxu0
    %v2946 = vadd.f32 0.0, %v2945
    %v2947 = vpop.f32.mrf.mxu0
    %2948 = vdwg.mxu0
    %v2950 = vrot.slane %v2876, 5
    %v2952 = vadd.f32 %v596, %v2950
    %v2953 = vxor.u32 %v2952, 2147483648
    %v2954 = vmul.f32 %v2953, 1.442695
    %v2955 = vpow.pop %v2954
    %v2956 = vadd.f32 %v2955, 1.0
    %v2957 = vrcp.pop %v2956
    %v2958 = vmul.f32 1.0, %v2957
    %v2960 = vrot.slane %v2946, 5
    %v2962 = vadd.f32 %v672, %v2960
    %v2963 = vxor.u32 %v2962, 2147483648
    %v2964 = vmul.f32 %v2963, 1.442695
    %v2965 = vpow.pop %v2964
    %v2966 = vadd.f32 %v2965, 1.0
    %v2967 = vrcp.pop %v2966
    %v2968 = vmul.f32 1.0, %v2967
    %2969 = vmatprep.subr.mxu0 0.0
    %2970 = vmatpush1.msra.mxu0 0.0
    %2971 = vmatprep.subr.mxu0 0.0
    %2972 = vmatpush1.msra.mxu0 0.0
    %2973 = vmatprep.subr.mxu0 0.0
    %2974 = vmatpush1.msra.mxu0 0.0
    %2975 = vmatprep.subr.mxu0 0.0
    %2976 = vmatpush1.msra.mxu0 0.0
    %2977 = vmatprep.subr.mxu0 0.0
    %2978 = vmatpush1.msra.mxu0 0.0
    %2979 = vmatprep.subr.mxu0 0.0
    %2980 = vmatpush1.msra.mxu0 0.0
    %2981 = vmatprep.subr.mxu0 0.0
    %2982 = vmatpush1.msra.mxu0 0.0
    %2983 = vmatprep.subr.mxu0 0.0
    %2984 = vmatpush1.msra.mxu0 0.0
    %2985 = vmatprep.subr.mxu0 0.0
    %2986 = vmatpush1.msra.mxu0 0.0
    %2987 = vmatprep.subr.mxu0 0.0
    %2988 = vmatpush1.msra.mxu0 0.0
    %2989 = vmatprep.subr.mxu0 0.0
    %2990 = vmatpush1.msra.mxu0 0.0
    %2991 = vmatprep.subr.mxu0 0.0
    %2992 = vmatpush1.msra.mxu0 0.0
    %2993 = vmatprep.subr.mxu0 0.0
    %2994 = vmatpush1.msra.mxu0 %v486
    %2995 = vmatprep.subr.mxu0 0.0
    %2996 = vmatpush1.msra.mxu0 %v485
    %2997 = vmatprep.subr.mxu0 0.0
    %2998 = vmatpush1.msra.mxu0 %v484
    %2999 = vmatprep.subr.mxu0 0.0
    %3000 = vmatpush1.msra.mxu0 %v483
    %3001 = vmatprep.subr.mxu0 0.0
    %3002 = vmatpush2.msra.mxu0 0.0
    %3003 = vmatprep.subr.mxu0 0.0
    %3004 = vmatpush2.msra.mxu0 0.0
    %3005 = vmatprep.subr.mxu0 0.0
    %3006 = vmatpush2.msra.mxu0 0.0
    %3007 = vmatprep.subr.mxu0 0.0
    %3008 = vmatpush2.msra.mxu0 0.0
    %3009 = vmatprep.subr.mxu0 0.0
    %3010 = vmatpush2.msra.mxu0 0.0
    %3011 = vmatprep.subr.mxu0 0.0
    %3012 = vmatpush2.msra.mxu0 0.0
    %3013 = vmatprep.subr.mxu0 0.0
    %3014 = vmatpush2.msra.mxu0 0.0
    %3015 = vmatprep.subr.mxu0 0.0
    %3016 = vmatpush2.msra.mxu0 0.0
    %3017 = vmatprep.subr.mxu0 0.0
    %3018 = vmatpush2.msra.mxu0 0.0
    %3019 = vmatprep.subr.mxu0 0.0
    %3020 = vmatpush2.msra.mxu0 0.0
    %3021 = vmatprep.subr.mxu0 0.0
    %3022 = vmatpush2.msra.mxu0 0.0
    %3023 = vmatprep.subr.mxu0 0.0
    %3024 = vmatpush2.msra.mxu0 0.0
    %3025 = vmatprep.subr.mxu0 0.0
    %3026 = vmatpush2.msra.mxu0 0.0
    %3027 = vmatprep.subr.mxu0 0.0
    %3028 = vmatpush2.msra.mxu0 0.0
    %3029 = vmatprep.subr.mxu0 0.0
    %3030 = vmatpush2.msra.mxu0 0.0
    %3031 = vmatprep.subr.mxu0 0.0
    %3032 = vmatpush2.msra.mxu0 0.0
    %3033 = vmatprep.mubr.f32.mxu0 0.0
    %3034 = vmatmul.mubr.f32.gmra.mxu0 %v2363
    %v3035 = vpop.f32.mrf.mxu0
    %v3036 = vadd.f32 %v490, %v3035
    %v3037 = vpop.f32.mrf.mxu0
    %3038 = vdwg.mxu0
    %v3040 = vrot.slane %v3036, 5
    %v3042 = vmul.f32 %v2958, %v3040
    %v3043 = vadd.f32 %v748, %v3042
    %v3044 = vtanh.pop %v3043
    %v3045 = vsub.f32 1.0, %v2968
    %v3046 = vmul.f32 %v3045, %v3044
    %v3047 = vrot.slane %v2360, 7
    %v3049 = vmul.f32 %v2968, %v3047
    %v3050 = vadd.f32 %v3046, %v3049
    %v3052 = vrot.slane %v3050, 3
    %v3053 = vsel %vm525, %v3052, 0
    %3055 = vmatprep.subr.mxu0 0.0
    %3056 = vmatpush1.msra.mxu0 0.0
    %3057 = vmatprep.subr.mxu0 0.0
    %3058 = vmatpush1.msra.mxu0 0.0
    %3059 = vmatprep.subr.mxu0 0.0
    %3060 = vmatpush1.msra.mxu0 0.0
    %3061 = vmatprep.subr.mxu0 0.0
    %3062 = vmatpush1.msra.mxu0 0.0
    %3063 = vmatprep.subr.mxu0 0.0
    %3064 = vmatpush1.msra.mxu0 0.0
    %3065 = vmatprep.subr.mxu0 0.0
    %3066 = vmatpush1.msra.mxu0 0.0
    %3067 = vmatprep.subr.mxu0 0.0
    %3068 = vmatpush1.msra.mxu0 0.0
    %3069 = vmatprep.subr.mxu0 0.0
    %3070 = vmatpush1.msra.mxu0 0.0
    %3071 = vmatprep.subr.mxu0 0.0
    %3072 = vmatpush1.msra.mxu0 0.0
    %3073 = vmatprep.subr.mxu0 0.0
    %3074 = vmatpush1.msra.mxu0 0.0
    %3075 = vmatprep.subr.mxu0 0.0
    %3076 = vmatpush1.msra.mxu0 0.0
    %3077 = vmatprep.subr.mxu0 0.0
    %3078 = vmatpush1.msra.mxu0 0.0
    %3079 = vmatprep.subr.mxu0 0.0
    %3080 = vmatpush1.msra.mxu0 %v494
    %3081 = vmatprep.subr.mxu0 0.0
    %3082 = vmatpush1.msra.mxu0 %v493
    %3083 = vmatprep.subr.mxu0 0.0
    %3084 = vmatpush1.msra.mxu0 %v492
    %3085 = vmatprep.subr.mxu0 0.0
    %3086 = vmatpush1.msra.mxu0 %v491
    %3087 = vmatprep.subr.mxu0 0.0
    %3088 = vmatpush2.msra.mxu0 0.0
    %3089 = vmatprep.subr.mxu0 0.0
    %3090 = vmatpush2.msra.mxu0 0.0
    %3091 = vmatprep.subr.mxu0 0.0
    %3092 = vmatpush2.msra.mxu0 0.0
    %3093 = vmatprep.subr.mxu0 0.0
    %3094 = vmatpush2.msra.mxu0 0.0
    %3095 = vmatprep.subr.mxu0 0.0
    %3096 = vmatpush2.msra.mxu0 0.0
    %3097 = vmatprep.subr.mxu0 0.0
    %3098 = vmatpush2.msra.mxu0 0.0
    %3099 = vmatprep.subr.mxu0 0.0
    %3100 = vmatpush2.msra.mxu0 0.0
    %3101 = vmatprep.subr.mxu0 0.0
    %3102 = vmatpush2.msra.mxu0 0.0
    %3103 = vmatprep.subr.mxu0 0.0
    %3104 = vmatpush2.msra.mxu0 0.0
    %3105 = vmatprep.subr.mxu0 0.0
    %3106 = vmatpush2.msra.mxu0 0.0
    %3107 = vmatprep.subr.mxu0 0.0
    %3108 = vmatpush2.msra.mxu0 0.0
    %3109 = vmatprep.subr.mxu0 0.0
    %3110 = vmatpush2.msra.mxu0 0.0
    %3111 = vmatprep.subr.mxu0 0.0
    %3112 = vmatpush2.msra.mxu0 0.0
    %3113 = vmatprep.subr.mxu0 0.0
    %3114 = vmatpush2.msra.mxu0 0.0
    %3115 = vmatprep.subr.mxu0 0.0
    %3116 = vmatpush2.msra.mxu0 0.0
    %3117 = vmatprep.subr.mxu0 0.0
    %3118 = vmatpush2.msra.mxu0 0.0
    %3119 = vmatprep.mubr.f32.mxu0 0.0
    %3120 = vmatmul.mubr.f32.gmra.mxu0 %v3053
    %v3121 = vpop.f32.mrf.mxu0
    %v3122 = vadd.f32 %v515, %v3121
    %v3123 = vpop.f32.mrf.mxu0
    %3124 = vdwg.mxu0
    %3125 = vmatprep.subr.mxu0 0.0
    %3126 = vmatpush1.msra.mxu0 0.0
    %3127 = vmatprep.subr.mxu0 0.0
    %3128 = vmatpush1.msra.mxu0 0.0
    %3129 = vmatprep.subr.mxu0 0.0
    %3130 = vmatpush1.msra.mxu0 0.0
    %3131 = vmatprep.subr.mxu0 0.0
    %3132 = vmatpush1.msra.mxu0 0.0
    %3133 = vmatprep.subr.mxu0 0.0
    %3134 = vmatpush1.msra.mxu0 0.0
    %3135 = vmatprep.subr.mxu0 0.0
    %3136 = vmatpush1.msra.mxu0 0.0
    %3137 = vmatprep.subr.mxu0 0.0
    %3138 = vmatpush1.msra.mxu0 0.0
    %3139 = vmatprep.subr.mxu0 0.0
    %3140 = vmatpush1.msra.mxu0 0.0
    %3141 = vmatprep.subr.mxu0 0.0
    %3142 = vmatpush1.msra.mxu0 0.0
    %3143 = vmatprep.subr.mxu0 0.0
    %3144 = vmatpush1.msra.mxu0 0.0
    %3145 = vmatprep.subr.mxu0 0.0
    %3146 = vmatpush1.msra.mxu0 0.0
    %3147 = vmatprep.subr.mxu0 0.0
    %3148 = vmatpush1.msra.mxu0 0.0
    %3149 = vmatprep.subr.mxu0 0.0
    %3150 = vmatpush1.msra.mxu0 %v498
    %3151 = vmatprep.subr.mxu0 0.0
    %3152 = vmatpush1.msra.mxu0 %v497
    %3153 = vmatprep.subr.mxu0 0.0
    %3154 = vmatpush1.msra.mxu0 %v496
    %3155 = vmatprep.subr.mxu0 0.0
    %3156 = vmatpush1.msra.mxu0 %v495
    %3157 = vmatprep.subr.mxu0 0.0
    %3158 = vmatpush2.msra.mxu0 0.0
    %3159 = vmatprep.subr.mxu0 0.0
    %3160 = vmatpush2.msra.mxu0 0.0
    %3161 = vmatprep.subr.mxu0 0.0
    %3162 = vmatpush2.msra.mxu0 0.0
    %3163 = vmatprep.subr.mxu0 0.0
    %3164 = vmatpush2.msra.mxu0 0.0
    %3165 = vmatprep.subr.mxu0 0.0
    %3166 = vmatpush2.msra.mxu0 0.0
    %3167 = vmatprep.subr.mxu0 0.0
    %3168 = vmatpush2.msra.mxu0 0.0
    %3169 = vmatprep.subr.mxu0 0.0
    %3170 = vmatpush2.msra.mxu0 0.0
    %3171 = vmatprep.subr.mxu0 0.0
    %3172 = vmatpush2.msra.mxu0 0.0
    %3173 = vmatprep.subr.mxu0 0.0
    %3174 = vmatpush2.msra.mxu0 0.0
    %3175 = vmatprep.subr.mxu0 0.0
    %3176 = vmatpush2.msra.mxu0 0.0
    %3177 = vmatprep.subr.mxu0 0.0
    %3178 = vmatpush2.msra.mxu0 0.0
    %3179 = vmatprep.subr.mxu0 0.0
    %3180 = vmatpush2.msra.mxu0 0.0
    %3181 = vmatprep.subr.mxu0 0.0
    %3182 = vmatpush2.msra.mxu0 0.0
    %3183 = vmatprep.subr.mxu0 0.0
    %3184 = vmatpush2.msra.mxu0 0.0
    %3185 = vmatprep.subr.mxu0 0.0
    %3186 = vmatpush2.msra.mxu0 0.0
    %3187 = vmatprep.subr.mxu0 0.0
    %3188 = vmatpush2.msra.mxu0 0.0
    %3189 = vmatprep.mubr.f32.mxu0 0.0
    %3190 = vmatmul.mubr.f32.gmra.mxu0 %v3053
    %v3191 = vpop.f32.mrf.mxu0
    %v3192 = vadd.f32 %v516, %v3191
    %v3193 = vpop.f32.mrf.mxu0
    %3194 = vdwg.mxu0
    %3195 = vmatprep.subr.mxu0 0.0
    %3196 = vmatpush1.msra.mxu0 0.0
    %3197 = vmatprep.subr.mxu0 0.0
    %3198 = vmatpush1.msra.mxu0 0.0
    %3199 = vmatprep.subr.mxu0 0.0
    %3200 = vmatpush1.msra.mxu0 0.0
    %3201 = vmatprep.subr.mxu0 0.0
    %3202 = vmatpush1.msra.mxu0 0.0
    %3203 = vmatprep.subr.mxu0 0.0
    %3204 = vmatpush1.msra.mxu0 0.0
    %3205 = vmatprep.subr.mxu0 0.0
    %3206 = vmatpush1.msra.mxu0 0.0
    %3207 = vmatprep.subr.mxu0 0.0
    %3208 = vmatpush1.msra.mxu0 0.0
    %3209 = vmatprep.subr.mxu0 0.0
    %3210 = vmatpush1.msra.mxu0 0.0
    %3211 = vmatprep.subr.mxu0 0.0
    %3212 = vmatpush1.msra.mxu0 0.0
    %3213 = vmatprep.subr.mxu0 0.0
    %3214 = vmatpush1.msra.mxu0 0.0
    %3215 = vmatprep.subr.mxu0 0.0
    %3216 = vmatpush1.msra.mxu0 0.0
    %3217 = vmatprep.subr.mxu0 0.0
    %3218 = vmatpush1.msra.mxu0 0.0
    %3219 = vmatprep.subr.mxu0 0.0
    %3220 = vmatpush1.msra.mxu0 %v502
    %3221 = vmatprep.subr.mxu0 0.0
    %3222 = vmatpush1.msra.mxu0 %v501
    %3223 = vmatprep.subr.mxu0 0.0
    %3224 = vmatpush1.msra.mxu0 %v500
    %3225 = vmatprep.subr.mxu0 0.0
    %3226 = vmatpush1.msra.mxu0 %v499
    %3227 = vmatprep.subr.mxu0 0.0
    %3228 = vmatpush2.msra.mxu0 0.0
    %3229 = vmatprep.subr.mxu0 0.0
    %3230 = vmatpush2.msra.mxu0 0.0
    %3231 = vmatprep.subr.mxu0 0.0
    %3232 = vmatpush2.msra.mxu0 0.0
    %3233 = vmatprep.subr.mxu0 0.0
    %3234 = vmatpush2.msra.mxu0 0.0
    %3235 = vmatprep.subr.mxu0 0.0
    %3236 = vmatpush2.msra.mxu0 0.0
    %3237 = vmatprep.subr.mxu0 0.0
    %3238 = vmatpush2.msra.mxu0 0.0
    %3239 = vmatprep.subr.mxu0 0.0
    %3240 = vmatpush2.msra.mxu0 0.0
    %3241 = vmatprep.subr.mxu0 0.0
    %3242 = vmatpush2.msra.mxu0 0.0
    %3243 = vmatprep.subr.mxu0 0.0
    %3244 = vmatpush2.msra.mxu0 0.0
    %3245 = vmatprep.subr.mxu0 0.0
    %3246 = vmatpush2.msra.mxu0 0.0
    %3247 = vmatprep.subr.mxu0 0.0
    %3248 = vmatpush2.msra.mxu0 0.0
    %3249 = vmatprep.subr.mxu0 0.0
    %3250 = vmatpush2.msra.mxu0 0.0
    %3251 = vmatprep.subr.mxu0 0.0
    %3252 = vmatpush2.msra.mxu0 0.0
    %3253 = vmatprep.subr.mxu0 0.0
    %3254 = vmatpush2.msra.mxu0 0.0
    %3255 = vmatprep.subr.mxu0 0.0
    %3256 = vmatpush2.msra.mxu0 0.0
    %3257 = vmatprep.subr.mxu0 0.0
    %3258 = vmatpush2.msra.mxu0 0.0
    %3259 = vmatprep.mubr.f32.mxu0 0.0
    %3260 = vmatmul.mubr.f32.gmra.mxu0 %v3053
    %v3261 = vpop.f32.mrf.mxu0
    %v3262 = vadd.f32 %v517, %v3261
    %v3263 = vpop.f32.mrf.mxu0
    %3264 = vdwg.mxu0
    %v3266 = vsel %vm525, %v2808, 0
    %3268 = vmatprep.subr.mxu0 0.0
    %3269 = vmatpush1.msra.mxu0 0.0
    %3270 = vmatprep.subr.mxu0 0.0
    %3271 = vmatpush1.msra.mxu0 0.0
    %3272 = vmatprep.subr.mxu0 0.0
    %3273 = vmatpush1.msra.mxu0 0.0
    %3274 = vmatprep.subr.mxu0 0.0
    %3275 = vmatpush1.msra.mxu0 0.0
    %3276 = vmatprep.subr.mxu0 0.0
    %3277 = vmatpush1.msra.mxu0 0.0
    %3278 = vmatprep.subr.mxu0 0.0
    %3279 = vmatpush1.msra.mxu0 0.0
    %3280 = vmatprep.subr.mxu0 0.0
    %3281 = vmatpush1.msra.mxu0 0.0
    %3282 = vmatprep.subr.mxu0 0.0
    %3283 = vmatpush1.msra.mxu0 0.0
    %3284 = vmatprep.subr.mxu0 0.0
    %3285 = vmatpush1.msra.mxu0 0.0
    %3286 = vmatprep.subr.mxu0 0.0
    %3287 = vmatpush1.msra.mxu0 0.0
    %3288 = vmatprep.subr.mxu0 0.0
    %3289 = vmatpush1.msra.mxu0 0.0
    %3290 = vmatprep.subr.mxu0 0.0
    %3291 = vmatpush1.msra.mxu0 0.0
    %3292 = vmatprep.subr.mxu0 0.0
    %3293 = vmatpush1.msra.mxu0 %v506
    %3294 = vmatprep.subr.mxu0 0.0
    %3295 = vmatpush1.msra.mxu0 %v505
    %3296 = vmatprep.subr.mxu0 0.0
    %3297 = vmatpush1.msra.mxu0 %v504
    %3298 = vmatprep.subr.mxu0 0.0
    %3299 = vmatpush1.msra.mxu0 %v503
    %3300 = vmatprep.subr.mxu0 0.0
    %3301 = vmatpush2.msra.mxu0 0.0
    %3302 = vmatprep.subr.mxu0 0.0
    %3303 = vmatpush2.msra.mxu0 0.0
    %3304 = vmatprep.subr.mxu0 0.0
    %3305 = vmatpush2.msra.mxu0 0.0
    %3306 = vmatprep.subr.mxu0 0.0
    %3307 = vmatpush2.msra.mxu0 0.0
    %3308 = vmatprep.subr.mxu0 0.0
    %3309 = vmatpush2.msra.mxu0 0.0
    %3310 = vmatprep.subr.mxu0 0.0
    %3311 = vmatpush2.msra.mxu0 0.0
    %3312 = vmatprep.subr.mxu0 0.0
    %3313 = vmatpush2.msra.mxu0 0.0
    %3314 = vmatprep.subr.mxu0 0.0
    %3315 = vmatpush2.msra.mxu0 0.0
    %3316 = vmatprep.subr.mxu0 0.0
    %3317 = vmatpush2.msra.mxu0 0.0
    %3318 = vmatprep.subr.mxu0 0.0
    %3319 = vmatpush2.msra.mxu0 0.0
    %3320 = vmatprep.subr.mxu0 0.0
    %3321 = vmatpush2.msra.mxu0 0.0
    %3322 = vmatprep.subr.mxu0 0.0
    %3323 = vmatpush2.msra.mxu0 0.0
    %3324 = vmatprep.subr.mxu0 0.0
    %3325 = vmatpush2.msra.mxu0 0.0
    %3326 = vmatprep.subr.mxu0 0.0
    %3327 = vmatpush2.msra.mxu0 0.0
    %3328 = vmatprep.subr.mxu0 0.0
    %3329 = vmatpush2.msra.mxu0 0.0
    %3330 = vmatprep.subr.mxu0 0.0
    %3331 = vmatpush2.msra.mxu0 0.0
    %3332 = vmatprep.mubr.f32.mxu0 0.0
    %3333 = vmatmul.mubr.f32.gmra.mxu0 %v3266
    %v3334 = vpop.f32.mrf.mxu0
    %v3335 = vadd.f32 0.0, %v3334
    %v3336 = vpop.f32.mrf.mxu0
    %3337 = vdwg.mxu0
    %3338 = vmatprep.subr.mxu0 0.0
    %3339 = vmatpush1.msra.mxu0 0.0
    %3340 = vmatprep.subr.mxu0 0.0
    %3341 = vmatpush1.msra.mxu0 0.0
    %3342 = vmatprep.subr.mxu0 0.0
    %3343 = vmatpush1.msra.mxu0 0.0
    %3344 = vmatprep.subr.mxu0 0.0
    %3345 = vmatpush1.msra.mxu0 0.0
    %3346 = vmatprep.subr.mxu0 0.0
    %3347 = vmatpush1.msra.mxu0 0.0
    %3348 = vmatprep.subr.mxu0 0.0
    %3349 = vmatpush1.msra.mxu0 0.0
    %3350 = vmatprep.subr.mxu0 0.0
    %3351 = vmatpush1.msra.mxu0 0.0
    %3352 = vmatprep.subr.mxu0 0.0
    %3353 = vmatpush1.msra.mxu0 0.0
    %3354 = vmatprep.subr.mxu0 0.0
    %3355 = vmatpush1.msra.mxu0 0.0
    %3356 = vmatprep.subr.mxu0 0.0
    %3357 = vmatpush1.msra.mxu0 0.0
    %3358 = vmatprep.subr.mxu0 0.0
    %3359 = vmatpush1.msra.mxu0 0.0
    %3360 = vmatprep.subr.mxu0 0.0
    %3361 = vmatpush1.msra.mxu0 0.0
    %3362 = vmatprep.subr.mxu0 0.0
    %3363 = vmatpush1.msra.mxu0 %v510
    %3364 = vmatprep.subr.mxu0 0.0
    %3365 = vmatpush1.msra.mxu0 %v509
    %3366 = vmatprep.subr.mxu0 0.0
    %3367 = vmatpush1.msra.mxu0 %v508
    %3368 = vmatprep.subr.mxu0 0.0
    %3369 = vmatpush1.msra.mxu0 %v507
    %3370 = vmatprep.subr.mxu0 0.0
    %3371 = vmatpush2.msra.mxu0 0.0
    %3372 = vmatprep.subr.mxu0 0.0
    %3373 = vmatpush2.msra.mxu0 0.0
    %3374 = vmatprep.subr.mxu0 0.0
    %3375 = vmatpush2.msra.mxu0 0.0
    %3376 = vmatprep.subr.mxu0 0.0
    %3377 = vmatpush2.msra.mxu0 0.0
    %3378 = vmatprep.subr.mxu0 0.0
    %3379 = vmatpush2.msra.mxu0 0.0
    %3380 = vmatprep.subr.mxu0 0.0
    %3381 = vmatpush2.msra.mxu0 0.0
    %3382 = vmatprep.subr.mxu0 0.0
    %3383 = vmatpush2.msra.mxu0 0.0
    %3384 = vmatprep.subr.mxu0 0.0
    %3385 = vmatpush2.msra.mxu0 0.0
    %3386 = vmatprep.subr.mxu0 0.0
    %3387 = vmatpush2.msra.mxu0 0.0
    %3388 = vmatprep.subr.mxu0 0.0
    %3389 = vmatpush2.msra.mxu0 0.0
    %3390 = vmatprep.subr.mxu0 0.0
    %3391 = vmatpush2.msra.mxu0 0.0
    %3392 = vmatprep.subr.mxu0 0.0
    %3393 = vmatpush2.msra.mxu0 0.0
    %3394 = vmatprep.subr.mxu0 0.0
    %3395 = vmatpush2.msra.mxu0 0.0
    %3396 = vmatprep.subr.mxu0 0.0
    %3397 = vmatpush2.msra.mxu0 0.0
    %3398 = vmatprep.subr.mxu0 0.0
    %3399 = vmatpush2.msra.mxu0 0.0
    %3400 = vmatprep.subr.mxu0 0.0
    %3401 = vmatpush2.msra.mxu0 0.0
    %3402 = vmatprep.mubr.f32.mxu0 0.0
    %3403 = vmatmul.mubr.f32.gmra.mxu0 %v3266
    %v3404 = vpop.f32.mrf.mxu0
    %v3405 = vadd.f32 0.0, %v3404
    %v3406 = vpop.f32.mrf.mxu0
    %3407 = vdwg.mxu0
    %v3408 = vadd.f32 %v3122, %v3335
    %v3409 = vxor.u32 %v3408, 2147483648
    %v3410 = vmul.f32 %v3409, 1.442695
    %v3411 = vpow.pop %v3410
    %v3412 = vadd.f32 %v3411, 1.0
    %v3413 = vrcp.pop %v3412
    %v3414 = vmul.f32 1.0, %v3413
    %v3415 = vadd.f32 %v3192, %v3405
    %v3416 = vxor.u32 %v3415, 2147483648
    %v3417 = vmul.f32 %v3416, 1.442695
    %v3418 = vpow.pop %v3417
    %v3419 = vadd.f32 %v3418, 1.0
    %v3420 = vrcp.pop %v3419
    %v3421 = vmul.f32 1.0, %v3420
    %3422 = vmatprep.subr.mxu0 0.0
    %3423 = vmatpush1.msra.mxu0 0.0
    %3424 = vmatprep.subr.mxu0 0.0
    %3425 = vmatpush1.msra.mxu0 0.0
    %3426 = vmatprep.subr.mxu0 0.0
    %3427 = vmatpush1.msra.mxu0 0.0
    %3428 = vmatprep.subr.mxu0 0.0
    %3429 = vmatpush1.msra.mxu0 0.0
    %3430 = vmatprep.subr.mxu0 0.0
    %3431 = vmatpush1.msra.mxu0 0.0
    %3432 = vmatprep.subr.mxu0 0.0
    %3433 = vmatpush1.msra.mxu0 0.0
    %3434 = vmatprep.subr.mxu0 0.0
    %3435 = vmatpush1.msra.mxu0 0.0
    %3436 = vmatprep.subr.mxu0 0.0
    %3437 = vmatpush1.msra.mxu0 0.0
    %3438 = vmatprep.subr.mxu0 0.0
    %3439 = vmatpush1.msra.mxu0 0.0
    %3440 = vmatprep.subr.mxu0 0.0
    %3441 = vmatpush1.msra.mxu0 0.0
    %3442 = vmatprep.subr.mxu0 0.0
    %3443 = vmatpush1.msra.mxu0 0.0
    %3444 = vmatprep.subr.mxu0 0.0
    %3445 = vmatpush1.msra.mxu0 0.0
    %3446 = vmatprep.subr.mxu0 0.0
    %3447 = vmatpush1.msra.mxu0 %v514
    %3448 = vmatprep.subr.mxu0 0.0
    %3449 = vmatpush1.msra.mxu0 %v513
    %3450 = vmatprep.subr.mxu0 0.0
    %3451 = vmatpush1.msra.mxu0 %v512
    %3452 = vmatprep.subr.mxu0 0.0
    %3453 = vmatpush1.msra.mxu0 %v511
    %3454 = vmatprep.subr.mxu0 0.0
    %3455 = vmatpush2.msra.mxu0 0.0
    %3456 = vmatprep.subr.mxu0 0.0
    %3457 = vmatpush2.msra.mxu0 0.0
    %3458 = vmatprep.subr.mxu0 0.0
    %3459 = vmatpush2.msra.mxu0 0.0
    %3460 = vmatprep.subr.mxu0 0.0
    %3461 = vmatpush2.msra.mxu0 0.0
    %3462 = vmatprep.subr.mxu0 0.0
    %3463 = vmatpush2.msra.mxu0 0.0
    %3464 = vmatprep.subr.mxu0 0.0
    %3465 = vmatpush2.msra.mxu0 0.0
    %3466 = vmatprep.subr.mxu0 0.0
    %3467 = vmatpush2.msra.mxu0 0.0
    %3468 = vmatprep.subr.mxu0 0.0
    %3469 = vmatpush2.msra.mxu0 0.0
    %3470 = vmatprep.subr.mxu0 0.0
    %3471 = vmatpush2.msra.mxu0 0.0
    %3472 = vmatprep.subr.mxu0 0.0
    %3473 = vmatpush2.msra.mxu0 0.0
    %3474 = vmatprep.subr.mxu0 0.0
    %3475 = vmatpush2.msra.mxu0 0.0
    %3476 = vmatprep.subr.mxu0 0.0
    %3477 = vmatpush2.msra.mxu0 0.0
    %3478 = vmatprep.subr.mxu0 0.0
    %3479 = vmatpush2.msra.mxu0 0.0
    %3480 = vmatprep.subr.mxu0 0.0
    %3481 = vmatpush2.msra.mxu0 0.0
    %3482 = vmatprep.subr.mxu0 0.0
    %3483 = vmatpush2.msra.mxu0 0.0
    %3484 = vmatprep.subr.mxu0 0.0
    %3485 = vmatpush2.msra.mxu0 0.0
    %3486 = vmatprep.mubr.f32.mxu0 0.0
    %3487 = vmatmul.mubr.f32.gmra.mxu0 %v3266
    %v3488 = vpop.f32.mrf.mxu0
    %v3489 = vadd.f32 %v518, %v3488
    %v3490 = vpop.f32.mrf.mxu0
    %3491 = vdwg.mxu0
    %v3492 = vmul.f32 %v3414, %v3489
    %v3493 = vadd.f32 %v3262, %v3492
    %v3494 = vtanh.pop %v3493
    %v3495 = vsub.f32 1.0, %v3421
    %v3496 = vmul.f32 %v3495, %v3494
    %v3497 = vmul.f32 %v3421, %v2808
    %v3498 = vadd.f32 %v3496, %v3497
    %3499 = vmatprep.subr.mxu0 0.0
    %3500 = vmatpush1.msra.mxu0 0.0
    %3501 = vmatprep.subr.mxu0 0.0
    %3502 = vmatpush1.msra.mxu0 0.0
    %3503 = vmatprep.subr.mxu0 0.0
    %3504 = vmatpush1.msra.mxu0 0.0
    %3505 = vmatprep.subr.mxu0 0.0
    %3506 = vmatpush1.msra.mxu0 0.0
    %3507 = vmatprep.subr.mxu0 0.0
    %3508 = vmatpush1.msra.mxu0 0.0
    %3509 = vmatprep.subr.mxu0 0.0
    %3510 = vmatpush1.msra.mxu0 0.0
    %3511 = vmatprep.subr.mxu0 0.0
    %3512 = vmatpush1.msra.mxu0 0.0
    %3513 = vmatprep.subr.mxu0 0.0
    %3514 = vmatpush1.msra.mxu0 0.0
    %3515 = vmatprep.subr.mxu0 0.0
    %3516 = vmatpush1.msra.mxu0 0.0
    %3517 = vmatprep.subr.mxu0 0.0
    %3518 = vmatpush1.msra.mxu0 0.0
    %3519 = vmatprep.subr.mxu0 0.0
    %3520 = vmatpush1.msra.mxu0 0.0
    %3521 = vmatprep.subr.mxu0 0.0
    %3522 = vmatpush1.msra.mxu0 0.0
    %3523 = vmatprep.subr.mxu0 0.0
    %3524 = vmatpush1.msra.mxu0 %v478
    %3525 = vmatprep.subr.mxu0 0.0
    %3526 = vmatpush1.msra.mxu0 %v477
    %3527 = vmatprep.subr.mxu0 0.0
    %3528 = vmatpush1.msra.mxu0 %v476
    %3529 = vmatprep.subr.mxu0 0.0
    %3530 = vmatpush1.msra.mxu0 %v475
    %3531 = vmatprep.subr.mxu0 0.0
    %3532 = vmatpush2.msra.mxu0 0.0
    %3533 = vmatprep.subr.mxu0 0.0
    %3534 = vmatpush2.msra.mxu0 0.0
    %3535 = vmatprep.subr.mxu0 0.0
    %3536 = vmatpush2.msra.mxu0 0.0
    %3537 = vmatprep.subr.mxu0 0.0
    %3538 = vmatpush2.msra.mxu0 0.0
    %3539 = vmatprep.subr.mxu0 0.0
    %3540 = vmatpush2.msra.mxu0 0.0
    %3541 = vmatprep.subr.mxu0 0.0
    %3542 = vmatpush2.msra.mxu0 0.0
    %3543 = vmatprep.subr.mxu0 0.0
    %3544 = vmatpush2.msra.mxu0 0.0
    %3545 = vmatprep.subr.mxu0 0.0
    %3546 = vmatpush2.msra.mxu0 0.0
    %3547 = vmatprep.subr.mxu0 0.0
    %3548 = vmatpush2.msra.mxu0 0.0
    %3549 = vmatprep.subr.mxu0 0.0
    %3550 = vmatpush2.msra.mxu0 0.0
    %3551 = vmatprep.subr.mxu0 0.0
    %3552 = vmatpush2.msra.mxu0 0.0
    %3553 = vmatprep.subr.mxu0 0.0
    %3554 = vmatpush2.msra.mxu0 0.0
    %3555 = vmatprep.subr.mxu0 0.0
    %3556 = vmatpush2.msra.mxu0 0.0
    %3557 = vmatprep.subr.mxu0 0.0
    %3558 = vmatpush2.msra.mxu0 0.0
    %3559 = vmatprep.subr.mxu0 0.0
    %3560 = vmatpush2.msra.mxu0 0.0
    %3561 = vmatprep.subr.mxu0 0.0
    %3562 = vmatpush2.msra.mxu0 0.0
    %3563 = vmatprep.mubr.f32.mxu0 0.0
    %3564 = vmatmul.mubr.f32.gmra.mxu0 %v3053
    %v3565 = vpop.f32.mrf.mxu0
    %v3566 = vadd.f32 0.0, %v3565
    %v3567 = vpop.f32.mrf.mxu0
    %3568 = vdwg.mxu0
    %3569 = vmatprep.subr.mxu0 0.0
    %3570 = vmatpush1.msra.mxu0 0.0
    %3571 = vmatprep.subr.mxu0 0.0
    %3572 = vmatpush1.msra.mxu0 0.0
    %3573 = vmatprep.subr.mxu0 0.0
    %3574 = vmatpush1.msra.mxu0 0.0
    %3575 = vmatprep.subr.mxu0 0.0
    %3576 = vmatpush1.msra.mxu0 0.0
    %3577 = vmatprep.subr.mxu0 0.0
    %3578 = vmatpush1.msra.mxu0 0.0
    %3579 = vmatprep.subr.mxu0 0.0
    %3580 = vmatpush1.msra.mxu0 0.0
    %3581 = vmatprep.subr.mxu0 0.0
    %3582 = vmatpush1.msra.mxu0 0.0
    %3583 = vmatprep.subr.mxu0 0.0
    %3584 = vmatpush1.msra.mxu0 0.0
    %3585 = vmatprep.subr.mxu0 0.0
    %3586 = vmatpush1.msra.mxu0 0.0
    %3587 = vmatprep.subr.mxu0 0.0
    %3588 = vmatpush1.msra.mxu0 0.0
    %3589 = vmatprep.subr.mxu0 0.0
    %3590 = vmatpush1.msra.mxu0 0.0
    %3591 = vmatprep.subr.mxu0 0.0
    %3592 = vmatpush1.msra.mxu0 0.0
    %3593 = vmatprep.subr.mxu0 0.0
    %3594 = vmatpush1.msra.mxu0 %v482
    %3595 = vmatprep.subr.mxu0 0.0
    %3596 = vmatpush1.msra.mxu0 %v481
    %3597 = vmatprep.subr.mxu0 0.0
    %3598 = vmatpush1.msra.mxu0 %v480
    %3599 = vmatprep.subr.mxu0 0.0
    %3600 = vmatpush1.msra.mxu0 %v479
    %3601 = vmatprep.subr.mxu0 0.0
    %3602 = vmatpush2.msra.mxu0 0.0
    %3603 = vmatprep.subr.mxu0 0.0
    %3604 = vmatpush2.msra.mxu0 0.0
    %3605 = vmatprep.subr.mxu0 0.0
    %3606 = vmatpush2.msra.mxu0 0.0
    %3607 = vmatprep.subr.mxu0 0.0
    %3608 = vmatpush2.msra.mxu0 0.0
    %3609 = vmatprep.subr.mxu0 0.0
    %3610 = vmatpush2.msra.mxu0 0.0
    %3611 = vmatprep.subr.mxu0 0.0
    %3612 = vmatpush2.msra.mxu0 0.0
    %3613 = vmatprep.subr.mxu0 0.0
    %3614 = vmatpush2.msra.mxu0 0.0
    %3615 = vmatprep.subr.mxu0 0.0
    %3616 = vmatpush2.msra.mxu0 0.0
    %3617 = vmatprep.subr.mxu0 0.0
    %3618 = vmatpush2.msra.mxu0 0.0
    %3619 = vmatprep.subr.mxu0 0.0
    %3620 = vmatpush2.msra.mxu0 0.0
    %3621 = vmatprep.subr.mxu0 0.0
    %3622 = vmatpush2.msra.mxu0 0.0
    %3623 = vmatprep.subr.mxu0 0.0
    %3624 = vmatpush2.msra.mxu0 0.0
    %3625 = vmatprep.subr.mxu0 0.0
    %3626 = vmatpush2.msra.mxu0 0.0
    %3627 = vmatprep.subr.mxu0 0.0
    %3628 = vmatpush2.msra.mxu0 0.0
    %3629 = vmatprep.subr.mxu0 0.0
    %3630 = vmatpush2.msra.mxu0 0.0
    %3631 = vmatprep.subr.mxu0 0.0
    %3632 = vmatpush2.msra.mxu0 0.0
    %3633 = vmatprep.mubr.f32.mxu0 0.0
    %3634 = vmatmul.mubr.f32.gmra.mxu0 %v3053
    %v3635 = vpop.f32.mrf.mxu0
    %v3636 = vadd.f32 0.0, %v3635
    %v3637 = vpop.f32.mrf.mxu0
    %3638 = vdwg.mxu0
    %v3640 = vrot.slane %v3566, 4
    %v3642 = vadd.f32 %v596, %v3640
    %v3643 = vxor.u32 %v3642, 2147483648
    %v3644 = vmul.f32 %v3643, 1.442695
    %v3645 = vpow.pop %v3644
    %v3646 = vadd.f32 %v3645, 1.0
    %v3647 = vrcp.pop %v3646
    %v3648 = vmul.f32 1.0, %v3647
    %v3650 = vrot.slane %v3636, 4
    %v3652 = vadd.f32 %v672, %v3650
    %v3653 = vxor.u32 %v3652, 2147483648
    %v3654 = vmul.f32 %v3653, 1.442695
    %v3655 = vpow.pop %v3654
    %v3656 = vadd.f32 %v3655, 1.0
    %v3657 = vrcp.pop %v3656
    %v3658 = vmul.f32 1.0, %v3657
    %3659 = vmatprep.subr.mxu0 0.0
    %3660 = vmatpush1.msra.mxu0 0.0
    %3661 = vmatprep.subr.mxu0 0.0
    %3662 = vmatpush1.msra.mxu0 0.0
    %3663 = vmatprep.subr.mxu0 0.0
    %3664 = vmatpush1.msra.mxu0 0.0
    %3665 = vmatprep.subr.mxu0 0.0
    %3666 = vmatpush1.msra.mxu0 0.0
    %3667 = vmatprep.subr.mxu0 0.0
    %3668 = vmatpush1.msra.mxu0 0.0
    %3669 = vmatprep.subr.mxu0 0.0
    %3670 = vmatpush1.msra.mxu0 0.0
    %3671 = vmatprep.subr.mxu0 0.0
    %3672 = vmatpush1.msra.mxu0 0.0
    %3673 = vmatprep.subr.mxu0 0.0
    %3674 = vmatpush1.msra.mxu0 0.0
    %3675 = vmatprep.subr.mxu0 0.0
    %3676 = vmatpush1.msra.mxu0 0.0
    %3677 = vmatprep.subr.mxu0 0.0
    %3678 = vmatpush1.msra.mxu0 0.0
    %3679 = vmatprep.subr.mxu0 0.0
    %3680 = vmatpush1.msra.mxu0 0.0
    %3681 = vmatprep.subr.mxu0 0.0
    %3682 = vmatpush1.msra.mxu0 0.0
    %3683 = vmatprep.subr.mxu0 0.0
    %3684 = vmatpush1.msra.mxu0 %v486
    %3685 = vmatprep.subr.mxu0 0.0
    %3686 = vmatpush1.msra.mxu0 %v485
    %3687 = vmatprep.subr.mxu0 0.0
    %3688 = vmatpush1.msra.mxu0 %v484
    %3689 = vmatprep.subr.mxu0 0.0
    %3690 = vmatpush1.msra.mxu0 %v483
    %3691 = vmatprep.subr.mxu0 0.0
    %3692 = vmatpush2.msra.mxu0 0.0
    %3693 = vmatprep.subr.mxu0 0.0
    %3694 = vmatpush2.msra.mxu0 0.0
    %3695 = vmatprep.subr.mxu0 0.0
    %3696 = vmatpush2.msra.mxu0 0.0
    %3697 = vmatprep.subr.mxu0 0.0
    %3698 = vmatpush2.msra.mxu0 0.0
    %3699 = vmatprep.subr.mxu0 0.0
    %3700 = vmatpush2.msra.mxu0 0.0
    %3701 = vmatprep.subr.mxu0 0.0
    %3702 = vmatpush2.msra.mxu0 0.0
    %3703 = vmatprep.subr.mxu0 0.0
    %3704 = vmatpush2.msra.mxu0 0.0
    %3705 = vmatprep.subr.mxu0 0.0
    %3706 = vmatpush2.msra.mxu0 0.0
    %3707 = vmatprep.subr.mxu0 0.0
    %3708 = vmatpush2.msra.mxu0 0.0
    %3709 = vmatprep.subr.mxu0 0.0
    %3710 = vmatpush2.msra.mxu0 0.0
    %3711 = vmatprep.subr.mxu0 0.0
    %3712 = vmatpush2.msra.mxu0 0.0
    %3713 = vmatprep.subr.mxu0 0.0
    %3714 = vmatpush2.msra.mxu0 0.0
    %3715 = vmatprep.subr.mxu0 0.0
    %3716 = vmatpush2.msra.mxu0 0.0
    %3717 = vmatprep.subr.mxu0 0.0
    %3718 = vmatpush2.msra.mxu0 0.0
    %3719 = vmatprep.subr.mxu0 0.0
    %3720 = vmatpush2.msra.mxu0 0.0
    %3721 = vmatprep.subr.mxu0 0.0
    %3722 = vmatpush2.msra.mxu0 0.0
    %3723 = vmatprep.mubr.f32.mxu0 0.0
    %3724 = vmatmul.mubr.f32.gmra.mxu0 %v3053
    %v3725 = vpop.f32.mrf.mxu0
    %v3726 = vadd.f32 %v490, %v3725
    %v3727 = vpop.f32.mrf.mxu0
    %3728 = vdwg.mxu0
    %v3730 = vrot.slane %v3726, 4
    %v3732 = vmul.f32 %v3648, %v3730
    %v3733 = vadd.f32 %v748, %v3732
    %v3734 = vtanh.pop %v3733
    %v3735 = vsub.f32 1.0, %v3658
    %v3736 = vmul.f32 %v3735, %v3734
    %v3737 = vrot.slane %v3050, 7
    %v3739 = vmul.f32 %v3658, %v3737
    %v3740 = vadd.f32 %v3736, %v3739
    %v3742 = vrot.slane %v3740, 4
    %v3743 = vsel %vm525, %v3742, 0
    %3745 = vmatprep.subr.mxu0 0.0
    %3746 = vmatpush1.msra.mxu0 0.0
    %3747 = vmatprep.subr.mxu0 0.0
    %3748 = vmatpush1.msra.mxu0 0.0
    %3749 = vmatprep.subr.mxu0 0.0
    %3750 = vmatpush1.msra.mxu0 0.0
    %3751 = vmatprep.subr.mxu0 0.0
    %3752 = vmatpush1.msra.mxu0 0.0
    %3753 = vmatprep.subr.mxu0 0.0
    %3754 = vmatpush1.msra.mxu0 0.0
    %3755 = vmatprep.subr.mxu0 0.0
    %3756 = vmatpush1.msra.mxu0 0.0
    %3757 = vmatprep.subr.mxu0 0.0
    %3758 = vmatpush1.msra.mxu0 0.0
    %3759 = vmatprep.subr.mxu0 0.0
    %3760 = vmatpush1.msra.mxu0 0.0
    %3761 = vmatprep.subr.mxu0 0.0
    %3762 = vmatpush1.msra.mxu0 0.0
    %3763 = vmatprep.subr.mxu0 0.0
    %3764 = vmatpush1.msra.mxu0 0.0
    %3765 = vmatprep.subr.mxu0 0.0
    %3766 = vmatpush1.msra.mxu0 0.0
    %3767 = vmatprep.subr.mxu0 0.0
    %3768 = vmatpush1.msra.mxu0 0.0
    %3769 = vmatprep.subr.mxu0 0.0
    %3770 = vmatpush1.msra.mxu0 %v494
    %3771 = vmatprep.subr.mxu0 0.0
    %3772 = vmatpush1.msra.mxu0 %v493
    %3773 = vmatprep.subr.mxu0 0.0
    %3774 = vmatpush1.msra.mxu0 %v492
    %3775 = vmatprep.subr.mxu0 0.0
    %3776 = vmatpush1.msra.mxu0 %v491
    %3777 = vmatprep.subr.mxu0 0.0
    %3778 = vmatpush2.msra.mxu0 0.0
    %3779 = vmatprep.subr.mxu0 0.0
    %3780 = vmatpush2.msra.mxu0 0.0
    %3781 = vmatprep.subr.mxu0 0.0
    %3782 = vmatpush2.msra.mxu0 0.0
    %3783 = vmatprep.subr.mxu0 0.0
    %3784 = vmatpush2.msra.mxu0 0.0
    %3785 = vmatprep.subr.mxu0 0.0
    %3786 = vmatpush2.msra.mxu0 0.0
    %3787 = vmatprep.subr.mxu0 0.0
    %3788 = vmatpush2.msra.mxu0 0.0
    %3789 = vmatprep.subr.mxu0 0.0
    %3790 = vmatpush2.msra.mxu0 0.0
    %3791 = vmatprep.subr.mxu0 0.0
    %3792 = vmatpush2.msra.mxu0 0.0
    %3793 = vmatprep.subr.mxu0 0.0
    %3794 = vmatpush2.msra.mxu0 0.0
    %3795 = vmatprep.subr.mxu0 0.0
    %3796 = vmatpush2.msra.mxu0 0.0
    %3797 = vmatprep.subr.mxu0 0.0
    %3798 = vmatpush2.msra.mxu0 0.0
    %3799 = vmatprep.subr.mxu0 0.0
    %3800 = vmatpush2.msra.mxu0 0.0
    %3801 = vmatprep.subr.mxu0 0.0
    %3802 = vmatpush2.msra.mxu0 0.0
    %3803 = vmatprep.subr.mxu0 0.0
    %3804 = vmatpush2.msra.mxu0 0.0
    %3805 = vmatprep.subr.mxu0 0.0
    %3806 = vmatpush2.msra.mxu0 0.0
    %3807 = vmatprep.subr.mxu0 0.0
    %3808 = vmatpush2.msra.mxu0 0.0
    %3809 = vmatprep.mubr.f32.mxu0 0.0
    %3810 = vmatmul.mubr.f32.gmra.mxu0 %v3743
    %v3811 = vpop.f32.mrf.mxu0
    %v3812 = vadd.f32 %v515, %v3811
    %v3813 = vpop.f32.mrf.mxu0
    %3814 = vdwg.mxu0
    %3815 = vmatprep.subr.mxu0 0.0
    %3816 = vmatpush1.msra.mxu0 0.0
    %3817 = vmatprep.subr.mxu0 0.0
    %3818 = vmatpush1.msra.mxu0 0.0
    %3819 = vmatprep.subr.mxu0 0.0
    %3820 = vmatpush1.msra.mxu0 0.0
    %3821 = vmatprep.subr.mxu0 0.0
    %3822 = vmatpush1.msra.mxu0 0.0
    %3823 = vmatprep.subr.mxu0 0.0
    %3824 = vmatpush1.msra.mxu0 0.0
    %3825 = vmatprep.subr.mxu0 0.0
    %3826 = vmatpush1.msra.mxu0 0.0
    %3827 = vmatprep.subr.mxu0 0.0
    %3828 = vmatpush1.msra.mxu0 0.0
    %3829 = vmatprep.subr.mxu0 0.0
    %3830 = vmatpush1.msra.mxu0 0.0
    %3831 = vmatprep.subr.mxu0 0.0
    %3832 = vmatpush1.msra.mxu0 0.0
    %3833 = vmatprep.subr.mxu0 0.0
    %3834 = vmatpush1.msra.mxu0 0.0
    %3835 = vmatprep.subr.mxu0 0.0
    %3836 = vmatpush1.msra.mxu0 0.0
    %3837 = vmatprep.subr.mxu0 0.0
    %3838 = vmatpush1.msra.mxu0 0.0
    %3839 = vmatprep.subr.mxu0 0.0
    %3840 = vmatpush1.msra.mxu0 %v498
    %3841 = vmatprep.subr.mxu0 0.0
    %3842 = vmatpush1.msra.mxu0 %v497
    %3843 = vmatprep.subr.mxu0 0.0
    %3844 = vmatpush1.msra.mxu0 %v496
    %3845 = vmatprep.subr.mxu0 0.0
    %3846 = vmatpush1.msra.mxu0 %v495
    %3847 = vmatprep.subr.mxu0 0.0
    %3848 = vmatpush2.msra.mxu0 0.0
    %3849 = vmatprep.subr.mxu0 0.0
    %3850 = vmatpush2.msra.mxu0 0.0
    %3851 = vmatprep.subr.mxu0 0.0
    %3852 = vmatpush2.msra.mxu0 0.0
    %3853 = vmatprep.subr.mxu0 0.0
    %3854 = vmatpush2.msra.mxu0 0.0
    %3855 = vmatprep.subr.mxu0 0.0
    %3856 = vmatpush2.msra.mxu0 0.0
    %3857 = vmatprep.subr.mxu0 0.0
    %3858 = vmatpush2.msra.mxu0 0.0
    %3859 = vmatprep.subr.mxu0 0.0
    %3860 = vmatpush2.msra.mxu0 0.0
    %3861 = vmatprep.subr.mxu0 0.0
    %3862 = vmatpush2.msra.mxu0 0.0
    %3863 = vmatprep.subr.mxu0 0.0
    %3864 = vmatpush2.msra.mxu0 0.0
    %3865 = vmatprep.subr.mxu0 0.0
    %3866 = vmatpush2.msra.mxu0 0.0
    %3867 = vmatprep.subr.mxu0 0.0
    %3868 = vmatpush2.msra.mxu0 0.0
    %3869 = vmatprep.subr.mxu0 0.0
    %3870 = vmatpush2.msra.mxu0 0.0
    %3871 = vmatprep.subr.mxu0 0.0
    %3872 = vmatpush2.msra.mxu0 0.0
    %3873 = vmatprep.subr.mxu0 0.0
    %3874 = vmatpush2.msra.mxu0 0.0
    %3875 = vmatprep.subr.mxu0 0.0
    %3876 = vmatpush2.msra.mxu0 0.0
    %3877 = vmatprep.subr.mxu0 0.0
    %3878 = vmatpush2.msra.mxu0 0.0
    %3879 = vmatprep.mubr.f32.mxu0 0.0
    %3880 = vmatmul.mubr.f32.gmra.mxu0 %v3743
    %v3881 = vpop.f32.mrf.mxu0
    %v3882 = vadd.f32 %v516, %v3881
    %v3883 = vpop.f32.mrf.mxu0
    %3884 = vdwg.mxu0
    %3885 = vmatprep.subr.mxu0 0.0
    %3886 = vmatpush1.msra.mxu0 0.0
    %3887 = vmatprep.subr.mxu0 0.0
    %3888 = vmatpush1.msra.mxu0 0.0
    %3889 = vmatprep.subr.mxu0 0.0
    %3890 = vmatpush1.msra.mxu0 0.0
    %3891 = vmatprep.subr.mxu0 0.0
    %3892 = vmatpush1.msra.mxu0 0.0
    %3893 = vmatprep.subr.mxu0 0.0
    %3894 = vmatpush1.msra.mxu0 0.0
    %3895 = vmatprep.subr.mxu0 0.0
    %3896 = vmatpush1.msra.mxu0 0.0
    %3897 = vmatprep.subr.mxu0 0.0
    %3898 = vmatpush1.msra.mxu0 0.0
    %3899 = vmatprep.subr.mxu0 0.0
    %3900 = vmatpush1.msra.mxu0 0.0
    %3901 = vmatprep.subr.mxu0 0.0
    %3902 = vmatpush1.msra.mxu0 0.0
    %3903 = vmatprep.subr.mxu0 0.0
    %3904 = vmatpush1.msra.mxu0 0.0
    %3905 = vmatprep.subr.mxu0 0.0
    %3906 = vmatpush1.msra.mxu0 0.0
    %3907 = vmatprep.subr.mxu0 0.0
    %3908 = vmatpush1.msra.mxu0 0.0
    %3909 = vmatprep.subr.mxu0 0.0
    %3910 = vmatpush1.msra.mxu0 %v502
    %3911 = vmatprep.subr.mxu0 0.0
    %3912 = vmatpush1.msra.mxu0 %v501
    %3913 = vmatprep.subr.mxu0 0.0
    %3914 = vmatpush1.msra.mxu0 %v500
    %3915 = vmatprep.subr.mxu0 0.0
    %3916 = vmatpush1.msra.mxu0 %v499
    %3917 = vmatprep.subr.mxu0 0.0
    %3918 = vmatpush2.msra.mxu0 0.0
    %3919 = vmatprep.subr.mxu0 0.0
    %3920 = vmatpush2.msra.mxu0 0.0
    %3921 = vmatprep.subr.mxu0 0.0
    %3922 = vmatpush2.msra.mxu0 0.0
    %3923 = vmatprep.subr.mxu0 0.0
    %3924 = vmatpush2.msra.mxu0 0.0
    %3925 = vmatprep.subr.mxu0 0.0
    %3926 = vmatpush2.msra.mxu0 0.0
    %3927 = vmatprep.subr.mxu0 0.0
    %3928 = vmatpush2.msra.mxu0 0.0
    %3929 = vmatprep.subr.mxu0 0.0
    %3930 = vmatpush2.msra.mxu0 0.0
    %3931 = vmatprep.subr.mxu0 0.0
    %3932 = vmatpush2.msra.mxu0 0.0
    %3933 = vmatprep.subr.mxu0 0.0
    %3934 = vmatpush2.msra.mxu0 0.0
    %3935 = vmatprep.subr.mxu0 0.0
    %3936 = vmatpush2.msra.mxu0 0.0
    %3937 = vmatprep.subr.mxu0 0.0
    %3938 = vmatpush2.msra.mxu0 0.0
    %3939 = vmatprep.subr.mxu0 0.0
    %3940 = vmatpush2.msra.mxu0 0.0
    %3941 = vmatprep.subr.mxu0 0.0
    %3942 = vmatpush2.msra.mxu0 0.0
    %3943 = vmatprep.subr.mxu0 0.0
    %3944 = vmatpush2.msra.mxu0 0.0
    %3945 = vmatprep.subr.mxu0 0.0
    %3946 = vmatpush2.msra.mxu0 0.0
    %3947 = vmatprep.subr.mxu0 0.0
    %3948 = vmatpush2.msra.mxu0 0.0
    %3949 = vmatprep.mubr.f32.mxu0 0.0
    %3950 = vmatmul.mubr.f32.gmra.mxu0 %v3743
    %v3951 = vpop.f32.mrf.mxu0
    %v3952 = vadd.f32 %v517, %v3951
    %v3953 = vpop.f32.mrf.mxu0
    %3954 = vdwg.mxu0
    %v3956 = vsel %vm525, %v3498, 0
    %3958 = vmatprep.subr.mxu0 0.0
    %3959 = vmatpush1.msra.mxu0 0.0
    %3960 = vmatprep.subr.mxu0 0.0
    %3961 = vmatpush1.msra.mxu0 0.0
    %3962 = vmatprep.subr.mxu0 0.0
    %3963 = vmatpush1.msra.mxu0 0.0
    %3964 = vmatprep.subr.mxu0 0.0
    %3965 = vmatpush1.msra.mxu0 0.0
    %3966 = vmatprep.subr.mxu0 0.0
    %3967 = vmatpush1.msra.mxu0 0.0
    %3968 = vmatprep.subr.mxu0 0.0
    %3969 = vmatpush1.msra.mxu0 0.0
    %3970 = vmatprep.subr.mxu0 0.0
    %3971 = vmatpush1.msra.mxu0 0.0
    %3972 = vmatprep.subr.mxu0 0.0
    %3973 = vmatpush1.msra.mxu0 0.0
    %3974 = vmatprep.subr.mxu0 0.0
    %3975 = vmatpush1.msra.mxu0 0.0
    %3976 = vmatprep.subr.mxu0 0.0
    %3977 = vmatpush1.msra.mxu0 0.0
    %3978 = vmatprep.subr.mxu0 0.0
    %3979 = vmatpush1.msra.mxu0 0.0
    %3980 = vmatprep.subr.mxu0 0.0
    %3981 = vmatpush1.msra.mxu0 0.0
    %3982 = vmatprep.subr.mxu0 0.0
    %3983 = vmatpush1.msra.mxu0 %v506
    %3984 = vmatprep.subr.mxu0 0.0
    %3985 = vmatpush1.msra.mxu0 %v505
    %3986 = vmatprep.subr.mxu0 0.0
    %3987 = vmatpush1.msra.mxu0 %v504
    %3988 = vmatprep.subr.mxu0 0.0
    %3989 = vmatpush1.msra.mxu0 %v503
    %3990 = vmatprep.subr.mxu0 0.0
    %3991 = vmatpush2.msra.mxu0 0.0
    %3992 = vmatprep.subr.mxu0 0.0
    %3993 = vmatpush2.msra.mxu0 0.0
    %3994 = vmatprep.subr.mxu0 0.0
    %3995 = vmatpush2.msra.mxu0 0.0
    %3996 = vmatprep.subr.mxu0 0.0
    %3997 = vmatpush2.msra.mxu0 0.0
    %3998 = vmatprep.subr.mxu0 0.0
    %3999 = vmatpush2.msra.mxu0 0.0
    %4000 = vmatprep.subr.mxu0 0.0
    %4001 = vmatpush2.msra.mxu0 0.0
    %4002 = vmatprep.subr.mxu0 0.0
    %4003 = vmatpush2.msra.mxu0 0.0
    %4004 = vmatprep.subr.mxu0 0.0
    %4005 = vmatpush2.msra.mxu0 0.0
    %4006 = vmatprep.subr.mxu0 0.0
    %4007 = vmatpush2.msra.mxu0 0.0
    %4008 = vmatprep.subr.mxu0 0.0
    %4009 = vmatpush2.msra.mxu0 0.0
    %4010 = vmatprep.subr.mxu0 0.0
    %4011 = vmatpush2.msra.mxu0 0.0
    %4012 = vmatprep.subr.mxu0 0.0
    %4013 = vmatpush2.msra.mxu0 0.0
    %4014 = vmatprep.subr.mxu0 0.0
    %4015 = vmatpush2.msra.mxu0 0.0
    %4016 = vmatprep.subr.mxu0 0.0
    %4017 = vmatpush2.msra.mxu0 0.0
    %4018 = vmatprep.subr.mxu0 0.0
    %4019 = vmatpush2.msra.mxu0 0.0
    %4020 = vmatprep.subr.mxu0 0.0
    %4021 = vmatpush2.msra.mxu0 0.0
    %4022 = vmatprep.mubr.f32.mxu0 0.0
    %4023 = vmatmul.mubr.f32.gmra.mxu0 %v3956
    %v4024 = vpop.f32.mrf.mxu0
    %v4025 = vadd.f32 0.0, %v4024
    %v4026 = vpop.f32.mrf.mxu0
    %4027 = vdwg.mxu0
    %4028 = vmatprep.subr.mxu0 0.0
    %4029 = vmatpush1.msra.mxu0 0.0
    %4030 = vmatprep.subr.mxu0 0.0
    %4031 = vmatpush1.msra.mxu0 0.0
    %4032 = vmatprep.subr.mxu0 0.0
    %4033 = vmatpush1.msra.mxu0 0.0
    %4034 = vmatprep.subr.mxu0 0.0
    %4035 = vmatpush1.msra.mxu0 0.0
    %4036 = vmatprep.subr.mxu0 0.0
    %4037 = vmatpush1.msra.mxu0 0.0
    %4038 = vmatprep.subr.mxu0 0.0
    %4039 = vmatpush1.msra.mxu0 0.0
    %4040 = vmatprep.subr.mxu0 0.0
    %4041 = vmatpush1.msra.mxu0 0.0
    %4042 = vmatprep.subr.mxu0 0.0
    %4043 = vmatpush1.msra.mxu0 0.0
    %4044 = vmatprep.subr.mxu0 0.0
    %4045 = vmatpush1.msra.mxu0 0.0
    %4046 = vmatprep.subr.mxu0 0.0
    %4047 = vmatpush1.msra.mxu0 0.0
    %4048 = vmatprep.subr.mxu0 0.0
    %4049 = vmatpush1.msra.mxu0 0.0
    %4050 = vmatprep.subr.mxu0 0.0
    %4051 = vmatpush1.msra.mxu0 0.0
    %4052 = vmatprep.subr.mxu0 0.0
    %4053 = vmatpush1.msra.mxu0 %v510
    %4054 = vmatprep.subr.mxu0 0.0
    %4055 = vmatpush1.msra.mxu0 %v509
    %4056 = vmatprep.subr.mxu0 0.0
    %4057 = vmatpush1.msra.mxu0 %v508
    %4058 = vmatprep.subr.mxu0 0.0
    %4059 = vmatpush1.msra.mxu0 %v507
    %4060 = vmatprep.subr.mxu0 0.0
    %4061 = vmatpush2.msra.mxu0 0.0
    %4062 = vmatprep.subr.mxu0 0.0
    %4063 = vmatpush2.msra.mxu0 0.0
    %4064 = vmatprep.subr.mxu0 0.0
    %4065 = vmatpush2.msra.mxu0 0.0
    %4066 = vmatprep.subr.mxu0 0.0
    %4067 = vmatpush2.msra.mxu0 0.0
    %4068 = vmatprep.subr.mxu0 0.0
    %4069 = vmatpush2.msra.mxu0 0.0
    %4070 = vmatprep.subr.mxu0 0.0
    %4071 = vmatpush2.msra.mxu0 0.0
    %4072 = vmatprep.subr.mxu0 0.0
    %4073 = vmatpush2.msra.mxu0 0.0
    %4074 = vmatprep.subr.mxu0 0.0
    %4075 = vmatpush2.msra.mxu0 0.0
    %4076 = vmatprep.subr.mxu0 0.0
    %4077 = vmatpush2.msra.mxu0 0.0
    %4078 = vmatprep.subr.mxu0 0.0
    %4079 = vmatpush2.msra.mxu0 0.0
    %4080 = vmatprep.subr.mxu0 0.0
    %4081 = vmatpush2.msra.mxu0 0.0
    %4082 = vmatprep.subr.mxu0 0.0
    %4083 = vmatpush2.msra.mxu0 0.0
    %4084 = vmatprep.subr.mxu0 0.0
    %4085 = vmatpush2.msra.mxu0 0.0
    %4086 = vmatprep.subr.mxu0 0.0
    %4087 = vmatpush2.msra.mxu0 0.0
    %4088 = vmatprep.subr.mxu0 0.0
    %4089 = vmatpush2.msra.mxu0 0.0
    %4090 = vmatprep.subr.mxu0 0.0
    %4091 = vmatpush2.msra.mxu0 0.0
    %4092 = vmatprep.mubr.f32.mxu0 0.0
    %4093 = vmatmul.mubr.f32.gmra.mxu0 %v3956
    %v4094 = vpop.f32.mrf.mxu0
    %v4095 = vadd.f32 0.0, %v4094
    %v4096 = vpop.f32.mrf.mxu0
    %4097 = vdwg.mxu0
    %v4098 = vadd.f32 %v3812, %v4025
    %v4099 = vxor.u32 %v4098, 2147483648
    %v4100 = vmul.f32 %v4099, 1.442695
    %v4101 = vpow.pop %v4100
    %v4102 = vadd.f32 %v4101, 1.0
    %v4103 = vrcp.pop %v4102
    %v4104 = vmul.f32 1.0, %v4103
    %v4105 = vadd.f32 %v3882, %v4095
    %v4106 = vxor.u32 %v4105, 2147483648
    %v4107 = vmul.f32 %v4106, 1.442695
    %v4108 = vpow.pop %v4107
    %v4109 = vadd.f32 %v4108, 1.0
    %v4110 = vrcp.pop %v4109
    %v4111 = vmul.f32 1.0, %v4110
    %4112 = vmatprep.subr.mxu0 0.0
    %4113 = vmatpush1.msra.mxu0 0.0
    %4114 = vmatprep.subr.mxu0 0.0
    %4115 = vmatpush1.msra.mxu0 0.0
    %4116 = vmatprep.subr.mxu0 0.0
    %4117 = vmatpush1.msra.mxu0 0.0
    %4118 = vmatprep.subr.mxu0 0.0
    %4119 = vmatpush1.msra.mxu0 0.0
    %4120 = vmatprep.subr.mxu0 0.0
    %4121 = vmatpush1.msra.mxu0 0.0
    %4122 = vmatprep.subr.mxu0 0.0
    %4123 = vmatpush1.msra.mxu0 0.0
    %4124 = vmatprep.subr.mxu0 0.0
    %4125 = vmatpush1.msra.mxu0 0.0
    %4126 = vmatprep.subr.mxu0 0.0
    %4127 = vmatpush1.msra.mxu0 0.0
    %4128 = vmatprep.subr.mxu0 0.0
    %4129 = vmatpush1.msra.mxu0 0.0
    %4130 = vmatprep.subr.mxu0 0.0
    %4131 = vmatpush1.msra.mxu0 0.0
    %4132 = vmatprep.subr.mxu0 0.0
    %4133 = vmatpush1.msra.mxu0 0.0
    %4134 = vmatprep.subr.mxu0 0.0
    %4135 = vmatpush1.msra.mxu0 0.0
    %4136 = vmatprep.subr.mxu0 0.0
    %4137 = vmatpush1.msra.mxu0 %v514
    %4138 = vmatprep.subr.mxu0 0.0
    %4139 = vmatpush1.msra.mxu0 %v513
    %4140 = vmatprep.subr.mxu0 0.0
    %4141 = vmatpush1.msra.mxu0 %v512
    %4142 = vmatprep.subr.mxu0 0.0
    %4143 = vmatpush1.msra.mxu0 %v511
    %4144 = vmatprep.subr.mxu0 0.0
    %4145 = vmatpush2.msra.mxu0 0.0
    %4146 = vmatprep.subr.mxu0 0.0
    %4147 = vmatpush2.msra.mxu0 0.0
    %4148 = vmatprep.subr.mxu0 0.0
    %4149 = vmatpush2.msra.mxu0 0.0
    %4150 = vmatprep.subr.mxu0 0.0
    %4151 = vmatpush2.msra.mxu0 0.0
    %4152 = vmatprep.subr.mxu0 0.0
    %4153 = vmatpush2.msra.mxu0 0.0
    %4154 = vmatprep.subr.mxu0 0.0
    %4155 = vmatpush2.msra.mxu0 0.0
    %4156 = vmatprep.subr.mxu0 0.0
    %4157 = vmatpush2.msra.mxu0 0.0
    %4158 = vmatprep.subr.mxu0 0.0
    %4159 = vmatpush2.msra.mxu0 0.0
    %4160 = vmatprep.subr.mxu0 0.0
    %4161 = vmatpush2.msra.mxu0 0.0
    %4162 = vmatprep.subr.mxu0 0.0
    %4163 = vmatpush2.msra.mxu0 0.0
    %4164 = vmatprep.subr.mxu0 0.0
    %4165 = vmatpush2.msra.mxu0 0.0
    %4166 = vmatprep.subr.mxu0 0.0
    %4167 = vmatpush2.msra.mxu0 0.0
    %4168 = vmatprep.subr.mxu0 0.0
    %4169 = vmatpush2.msra.mxu0 0.0
    %4170 = vmatprep.subr.mxu0 0.0
    %4171 = vmatpush2.msra.mxu0 0.0
    %4172 = vmatprep.subr.mxu0 0.0
    %4173 = vmatpush2.msra.mxu0 0.0
    %4174 = vmatprep.subr.mxu0 0.0
    %4175 = vmatpush2.msra.mxu0 0.0
    %4176 = vmatprep.mubr.f32.mxu0 0.0
    %4177 = vmatmul.mubr.f32.gmra.mxu0 %v3956
    %v4178 = vpop.f32.mrf.mxu0
    %v4179 = vadd.f32 %v518, %v4178
    %v4180 = vpop.f32.mrf.mxu0
    %4181 = vdwg.mxu0
    %v4182 = vmul.f32 %v4104, %v4179
    %v4183 = vadd.f32 %v3952, %v4182
    %v4184 = vtanh.pop %v4183
    %v4185 = vsub.f32 1.0, %v4111
    %v4186 = vmul.f32 %v4185, %v4184
    %v4187 = vmul.f32 %v4111, %v3498
    %v4188 = vadd.f32 %v4186, %v4187
    %4189 = vmatprep.subr.mxu0 0.0
    %4190 = vmatpush1.msra.mxu0 0.0
    %4191 = vmatprep.subr.mxu0 0.0
    %4192 = vmatpush1.msra.mxu0 0.0
    %4193 = vmatprep.subr.mxu0 0.0
    %4194 = vmatpush1.msra.mxu0 0.0
    %4195 = vmatprep.subr.mxu0 0.0
    %4196 = vmatpush1.msra.mxu0 0.0
    %4197 = vmatprep.subr.mxu0 0.0
    %4198 = vmatpush1.msra.mxu0 0.0
    %4199 = vmatprep.subr.mxu0 0.0
    %4200 = vmatpush1.msra.mxu0 0.0
    %4201 = vmatprep.subr.mxu0 0.0
    %4202 = vmatpush1.msra.mxu0 0.0
    %4203 = vmatprep.subr.mxu0 0.0
    %4204 = vmatpush1.msra.mxu0 0.0
    %4205 = vmatprep.subr.mxu0 0.0
    %4206 = vmatpush1.msra.mxu0 0.0
    %4207 = vmatprep.subr.mxu0 0.0
    %4208 = vmatpush1.msra.mxu0 0.0
    %4209 = vmatprep.subr.mxu0 0.0
    %4210 = vmatpush1.msra.mxu0 0.0
    %4211 = vmatprep.subr.mxu0 0.0
    %4212 = vmatpush1.msra.mxu0 0.0
    %4213 = vmatprep.subr.mxu0 0.0
    %4214 = vmatpush1.msra.mxu0 %v478
    %4215 = vmatprep.subr.mxu0 0.0
    %4216 = vmatpush1.msra.mxu0 %v477
    %4217 = vmatprep.subr.mxu0 0.0
    %4218 = vmatpush1.msra.mxu0 %v476
    %4219 = vmatprep.subr.mxu0 0.0
    %4220 = vmatpush1.msra.mxu0 %v475
    %4221 = vmatprep.subr.mxu0 0.0
    %4222 = vmatpush2.msra.mxu0 0.0
    %4223 = vmatprep.subr.mxu0 0.0
    %4224 = vmatpush2.msra.mxu0 0.0
    %4225 = vmatprep.subr.mxu0 0.0
    %4226 = vmatpush2.msra.mxu0 0.0
    %4227 = vmatprep.subr.mxu0 0.0
    %4228 = vmatpush2.msra.mxu0 0.0
    %4229 = vmatprep.subr.mxu0 0.0
    %4230 = vmatpush2.msra.mxu0 0.0
    %4231 = vmatprep.subr.mxu0 0.0
    %4232 = vmatpush2.msra.mxu0 0.0
    %4233 = vmatprep.subr.mxu0 0.0
    %4234 = vmatpush2.msra.mxu0 0.0
    %4235 = vmatprep.subr.mxu0 0.0
    %4236 = vmatpush2.msra.mxu0 0.0
    %4237 = vmatprep.subr.mxu0 0.0
    %4238 = vmatpush2.msra.mxu0 0.0
    %4239 = vmatprep.subr.mxu0 0.0
    %4240 = vmatpush2.msra.mxu0 0.0
    %4241 = vmatprep.subr.mxu0 0.0
    %4242 = vmatpush2.msra.mxu0 0.0
    %4243 = vmatprep.subr.mxu0 0.0
    %4244 = vmatpush2.msra.mxu0 0.0
    %4245 = vmatprep.subr.mxu0 0.0
    %4246 = vmatpush2.msra.mxu0 0.0
    %4247 = vmatprep.subr.mxu0 0.0
    %4248 = vmatpush2.msra.mxu0 0.0
    %4249 = vmatprep.subr.mxu0 0.0
    %4250 = vmatpush2.msra.mxu0 0.0
    %4251 = vmatprep.subr.mxu0 0.0
    %4252 = vmatpush2.msra.mxu0 0.0
    %4253 = vmatprep.mubr.f32.mxu0 0.0
    %4254 = vmatmul.mubr.f32.gmra.mxu0 %v3743
    %v4255 = vpop.f32.mrf.mxu0
    %v4256 = vadd.f32 0.0, %v4255
    %v4257 = vpop.f32.mrf.mxu0
    %4258 = vdwg.mxu0
    %4259 = vmatprep.subr.mxu0 0.0
    %4260 = vmatpush1.msra.mxu0 0.0
    %4261 = vmatprep.subr.mxu0 0.0
    %4262 = vmatpush1.msra.mxu0 0.0
    %4263 = vmatprep.subr.mxu0 0.0
    %4264 = vmatpush1.msra.mxu0 0.0
    %4265 = vmatprep.subr.mxu0 0.0
    %4266 = vmatpush1.msra.mxu0 0.0
    %4267 = vmatprep.subr.mxu0 0.0
    %4268 = vmatpush1.msra.mxu0 0.0
    %4269 = vmatprep.subr.mxu0 0.0
    %4270 = vmatpush1.msra.mxu0 0.0
    %4271 = vmatprep.subr.mxu0 0.0
    %4272 = vmatpush1.msra.mxu0 0.0
    %4273 = vmatprep.subr.mxu0 0.0
    %4274 = vmatpush1.msra.mxu0 0.0
    %4275 = vmatprep.subr.mxu0 0.0
    %4276 = vmatpush1.msra.mxu0 0.0
    %4277 = vmatprep.subr.mxu0 0.0
    %4278 = vmatpush1.msra.mxu0 0.0
    %4279 = vmatprep.subr.mxu0 0.0
    %4280 = vmatpush1.msra.mxu0 0.0
    %4281 = vmatprep.subr.mxu0 0.0
    %4282 = vmatpush1.msra.mxu0 0.0
    %4283 = vmatprep.subr.mxu0 0.0
    %4284 = vmatpush1.msra.mxu0 %v482
    %4285 = vmatprep.subr.mxu0 0.0
    %4286 = vmatpush1.msra.mxu0 %v481
    %4287 = vmatprep.subr.mxu0 0.0
    %4288 = vmatpush1.msra.mxu0 %v480
    %4289 = vmatprep.subr.mxu0 0.0
    %4290 = vmatpush1.msra.mxu0 %v479
    %4291 = vmatprep.subr.mxu0 0.0
    %4292 = vmatpush2.msra.mxu0 0.0
    %4293 = vmatprep.subr.mxu0 0.0
    %4294 = vmatpush2.msra.mxu0 0.0
    %4295 = vmatprep.subr.mxu0 0.0
    %4296 = vmatpush2.msra.mxu0 0.0
    %4297 = vmatprep.subr.mxu0 0.0
    %4298 = vmatpush2.msra.mxu0 0.0
    %4299 = vmatprep.subr.mxu0 0.0
    %4300 = vmatpush2.msra.mxu0 0.0
    %4301 = vmatprep.subr.mxu0 0.0
    %4302 = vmatpush2.msra.mxu0 0.0
    %4303 = vmatprep.subr.mxu0 0.0
    %4304 = vmatpush2.msra.mxu0 0.0
    %4305 = vmatprep.subr.mxu0 0.0
    %4306 = vmatpush2.msra.mxu0 0.0
    %4307 = vmatprep.subr.mxu0 0.0
    %4308 = vmatpush2.msra.mxu0 0.0
    %4309 = vmatprep.subr.mxu0 0.0
    %4310 = vmatpush2.msra.mxu0 0.0
    %4311 = vmatprep.subr.mxu0 0.0
    %4312 = vmatpush2.msra.mxu0 0.0
    %4313 = vmatprep.subr.mxu0 0.0
    %4314 = vmatpush2.msra.mxu0 0.0
    %4315 = vmatprep.subr.mxu0 0.0
    %4316 = vmatpush2.msra.mxu0 0.0
    %4317 = vmatprep.subr.mxu0 0.0
    %4318 = vmatpush2.msra.mxu0 0.0
    %4319 = vmatprep.subr.mxu0 0.0
    %4320 = vmatpush2.msra.mxu0 0.0
    %4321 = vmatprep.subr.mxu0 0.0
    %4322 = vmatpush2.msra.mxu0 0.0
    %4323 = vmatprep.mubr.f32.mxu0 0.0
    %4324 = vmatmul.mubr.f32.gmra.mxu0 %v3743
    %v4325 = vpop.f32.mrf.mxu0
    %v4326 = vadd.f32 0.0, %v4325
    %v4327 = vpop.f32.mrf.mxu0
    %4328 = vdwg.mxu0
    %v4330 = vrot.slane %v4256, 3
    %v4332 = vadd.f32 %v596, %v4330
    %v4333 = vxor.u32 %v4332, 2147483648
    %v4334 = vmul.f32 %v4333, 1.442695
    %v4335 = vpow.pop %v4334
    %v4336 = vadd.f32 %v4335, 1.0
    %v4337 = vrcp.pop %v4336
    %v4338 = vmul.f32 1.0, %v4337
    %v4340 = vrot.slane %v4326, 3
    %v4342 = vadd.f32 %v672, %v4340
    %v4343 = vxor.u32 %v4342, 2147483648
    %v4344 = vmul.f32 %v4343, 1.442695
    %v4345 = vpow.pop %v4344
    %v4346 = vadd.f32 %v4345, 1.0
    %v4347 = vrcp.pop %v4346
    %v4348 = vmul.f32 1.0, %v4347
    %4349 = vmatprep.subr.mxu0 0.0
    %4350 = vmatpush1.msra.mxu0 0.0
    %4351 = vmatprep.subr.mxu0 0.0
    %4352 = vmatpush1.msra.mxu0 0.0
    %4353 = vmatprep.subr.mxu0 0.0
    %4354 = vmatpush1.msra.mxu0 0.0
    %4355 = vmatprep.subr.mxu0 0.0
    %4356 = vmatpush1.msra.mxu0 0.0
    %4357 = vmatprep.subr.mxu0 0.0
    %4358 = vmatpush1.msra.mxu0 0.0
    %4359 = vmatprep.subr.mxu0 0.0
    %4360 = vmatpush1.msra.mxu0 0.0
    %4361 = vmatprep.subr.mxu0 0.0
    %4362 = vmatpush1.msra.mxu0 0.0
    %4363 = vmatprep.subr.mxu0 0.0
    %4364 = vmatpush1.msra.mxu0 0.0
    %4365 = vmatprep.subr.mxu0 0.0
    %4366 = vmatpush1.msra.mxu0 0.0
    %4367 = vmatprep.subr.mxu0 0.0
    %4368 = vmatpush1.msra.mxu0 0.0
    %4369 = vmatprep.subr.mxu0 0.0
    %4370 = vmatpush1.msra.mxu0 0.0
    %4371 = vmatprep.subr.mxu0 0.0
    %4372 = vmatpush1.msra.mxu0 0.0
    %4373 = vmatprep.subr.mxu0 0.0
    %4374 = vmatpush1.msra.mxu0 %v486
    %4375 = vmatprep.subr.mxu0 0.0
    %4376 = vmatpush1.msra.mxu0 %v485
    %4377 = vmatprep.subr.mxu0 0.0
    %4378 = vmatpush1.msra.mxu0 %v484
    %4379 = vmatprep.subr.mxu0 0.0
    %4380 = vmatpush1.msra.mxu0 %v483
    %4381 = vmatprep.subr.mxu0 0.0
    %4382 = vmatpush2.msra.mxu0 0.0
    %4383 = vmatprep.subr.mxu0 0.0
    %4384 = vmatpush2.msra.mxu0 0.0
    %4385 = vmatprep.subr.mxu0 0.0
    %4386 = vmatpush2.msra.mxu0 0.0
    %4387 = vmatprep.subr.mxu0 0.0
    %4388 = vmatpush2.msra.mxu0 0.0
    %4389 = vmatprep.subr.mxu0 0.0
    %4390 = vmatpush2.msra.mxu0 0.0
    %4391 = vmatprep.subr.mxu0 0.0
    %4392 = vmatpush2.msra.mxu0 0.0
    %4393 = vmatprep.subr.mxu0 0.0
    %4394 = vmatpush2.msra.mxu0 0.0
    %4395 = vmatprep.subr.mxu0 0.0
    %4396 = vmatpush2.msra.mxu0 0.0
    %4397 = vmatprep.subr.mxu0 0.0
    %4398 = vmatpush2.msra.mxu0 0.0
    %4399 = vmatprep.subr.mxu0 0.0
    %4400 = vmatpush2.msra.mxu0 0.0
    %4401 = vmatprep.subr.mxu0 0.0
    %4402 = vmatpush2.msra.mxu0 0.0
    %4403 = vmatprep.subr.mxu0 0.0
    %4404 = vmatpush2.msra.mxu0 0.0
    %4405 = vmatprep.subr.mxu0 0.0
    %4406 = vmatpush2.msra.mxu0 0.0
    %4407 = vmatprep.subr.mxu0 0.0
    %4408 = vmatpush2.msra.mxu0 0.0
    %4409 = vmatprep.subr.mxu0 0.0
    %4410 = vmatpush2.msra.mxu0 0.0
    %4411 = vmatprep.subr.mxu0 0.0
    %4412 = vmatpush2.msra.mxu0 0.0
    %4413 = vmatprep.mubr.f32.mxu0 0.0
    %4414 = vmatmul.mubr.f32.gmra.mxu0 %v3743
    %v4415 = vpop.f32.mrf.mxu0
    %v4416 = vadd.f32 %v490, %v4415
    %v4417 = vpop.f32.mrf.mxu0
    %4418 = vdwg.mxu0
    %v4420 = vrot.slane %v4416, 3
    %v4422 = vmul.f32 %v4338, %v4420
    %v4423 = vadd.f32 %v748, %v4422
    %v4424 = vtanh.pop %v4423
    %v4425 = vsub.f32 1.0, %v4348
    %v4426 = vmul.f32 %v4425, %v4424
    %v4427 = vrot.slane %v3740, 7
    %v4429 = vmul.f32 %v4348, %v4427
    %v4430 = vadd.f32 %v4426, %v4429
    %v4432 = vrot.slane %v4430, 5
    %v4433 = vsel %vm525, %v4432, 0
    %4435 = vmatprep.subr.mxu0 0.0
    %4436 = vmatpush1.msra.mxu0 0.0
    %4437 = vmatprep.subr.mxu0 0.0
    %4438 = vmatpush1.msra.mxu0 0.0
    %4439 = vmatprep.subr.mxu0 0.0
    %4440 = vmatpush1.msra.mxu0 0.0
    %4441 = vmatprep.subr.mxu0 0.0
    %4442 = vmatpush1.msra.mxu0 0.0
    %4443 = vmatprep.subr.mxu0 0.0
    %4444 = vmatpush1.msra.mxu0 0.0
    %4445 = vmatprep.subr.mxu0 0.0
    %4446 = vmatpush1.msra.mxu0 0.0
    %4447 = vmatprep.subr.mxu0 0.0
    %4448 = vmatpush1.msra.mxu0 0.0
    %4449 = vmatprep.subr.mxu0 0.0
    %4450 = vmatpush1.msra.mxu0 0.0
    %4451 = vmatprep.subr.mxu0 0.0
    %4452 = vmatpush1.msra.mxu0 0.0
    %4453 = vmatprep.subr.mxu0 0.0
    %4454 = vmatpush1.msra.mxu0 0.0
    %4455 = vmatprep.subr.mxu0 0.0
    %4456 = vmatpush1.msra.mxu0 0.0
    %4457 = vmatprep.subr.mxu0 0.0
    %4458 = vmatpush1.msra.mxu0 0.0
    %4459 = vmatprep.subr.mxu0 0.0
    %4460 = vmatpush1.msra.mxu0 %v494
    %4461 = vmatprep.subr.mxu0 0.0
    %4462 = vmatpush1.msra.mxu0 %v493
    %4463 = vmatprep.subr.mxu0 0.0
    %4464 = vmatpush1.msra.mxu0 %v492
    %4465 = vmatprep.subr.mxu0 0.0
    %4466 = vmatpush1.msra.mxu0 %v491
    %4467 = vmatprep.subr.mxu0 0.0
    %4468 = vmatpush2.msra.mxu0 0.0
    %4469 = vmatprep.subr.mxu0 0.0
    %4470 = vmatpush2.msra.mxu0 0.0
    %4471 = vmatprep.subr.mxu0 0.0
    %4472 = vmatpush2.msra.mxu0 0.0
    %4473 = vmatprep.subr.mxu0 0.0
    %4474 = vmatpush2.msra.mxu0 0.0
    %4475 = vmatprep.subr.mxu0 0.0
    %4476 = vmatpush2.msra.mxu0 0.0
    %4477 = vmatprep.subr.mxu0 0.0
    %4478 = vmatpush2.msra.mxu0 0.0
    %4479 = vmatprep.subr.mxu0 0.0
    %4480 = vmatpush2.msra.mxu0 0.0
    %4481 = vmatprep.subr.mxu0 0.0
    %4482 = vmatpush2.msra.mxu0 0.0
    %4483 = vmatprep.subr.mxu0 0.0
    %4484 = vmatpush2.msra.mxu0 0.0
    %4485 = vmatprep.subr.mxu0 0.0
    %4486 = vmatpush2.msra.mxu0 0.0
    %4487 = vmatprep.subr.mxu0 0.0
    %4488 = vmatpush2.msra.mxu0 0.0
    %4489 = vmatprep.subr.mxu0 0.0
    %4490 = vmatpush2.msra.mxu0 0.0
    %4491 = vmatprep.subr.mxu0 0.0
    %4492 = vmatpush2.msra.mxu0 0.0
    %4493 = vmatprep.subr.mxu0 0.0
    %4494 = vmatpush2.msra.mxu0 0.0
    %4495 = vmatprep.subr.mxu0 0.0
    %4496 = vmatpush2.msra.mxu0 0.0
    %4497 = vmatprep.subr.mxu0 0.0
    %4498 = vmatpush2.msra.mxu0 0.0
    %4499 = vmatprep.mubr.f32.mxu0 0.0
    %4500 = vmatmul.mubr.f32.gmra.mxu0 %v4433
    %v4501 = vpop.f32.mrf.mxu0
    %v4502 = vadd.f32 %v515, %v4501
    %v4503 = vpop.f32.mrf.mxu0
    %4504 = vdwg.mxu0
    %4505 = vmatprep.subr.mxu0 0.0
    %4506 = vmatpush1.msra.mxu0 0.0
    %4507 = vmatprep.subr.mxu0 0.0
    %4508 = vmatpush1.msra.mxu0 0.0
    %4509 = vmatprep.subr.mxu0 0.0
    %4510 = vmatpush1.msra.mxu0 0.0
    %4511 = vmatprep.subr.mxu0 0.0
    %4512 = vmatpush1.msra.mxu0 0.0
    %4513 = vmatprep.subr.mxu0 0.0
    %4514 = vmatpush1.msra.mxu0 0.0
    %4515 = vmatprep.subr.mxu0 0.0
    %4516 = vmatpush1.msra.mxu0 0.0
    %4517 = vmatprep.subr.mxu0 0.0
    %4518 = vmatpush1.msra.mxu0 0.0
    %4519 = vmatprep.subr.mxu0 0.0
    %4520 = vmatpush1.msra.mxu0 0.0
    %4521 = vmatprep.subr.mxu0 0.0
    %4522 = vmatpush1.msra.mxu0 0.0
    %4523 = vmatprep.subr.mxu0 0.0
    %4524 = vmatpush1.msra.mxu0 0.0
    %4525 = vmatprep.subr.mxu0 0.0
    %4526 = vmatpush1.msra.mxu0 0.0
    %4527 = vmatprep.subr.mxu0 0.0
    %4528 = vmatpush1.msra.mxu0 0.0
    %4529 = vmatprep.subr.mxu0 0.0
    %4530 = vmatpush1.msra.mxu0 %v498
    %4531 = vmatprep.subr.mxu0 0.0
    %4532 = vmatpush1.msra.mxu0 %v497
    %4533 = vmatprep.subr.mxu0 0.0
    %4534 = vmatpush1.msra.mxu0 %v496
    %4535 = vmatprep.subr.mxu0 0.0
    %4536 = vmatpush1.msra.mxu0 %v495
    %4537 = vmatprep.subr.mxu0 0.0
    %4538 = vmatpush2.msra.mxu0 0.0
    %4539 = vmatprep.subr.mxu0 0.0
    %4540 = vmatpush2.msra.mxu0 0.0
    %4541 = vmatprep.subr.mxu0 0.0
    %4542 = vmatpush2.msra.mxu0 0.0
    %4543 = vmatprep.subr.mxu0 0.0
    %4544 = vmatpush2.msra.mxu0 0.0
    %4545 = vmatprep.subr.mxu0 0.0
    %4546 = vmatpush2.msra.mxu0 0.0
    %4547 = vmatprep.subr.mxu0 0.0
    %4548 = vmatpush2.msra.mxu0 0.0
    %4549 = vmatprep.subr.mxu0 0.0
    %4550 = vmatpush2.msra.mxu0 0.0
    %4551 = vmatprep.subr.mxu0 0.0
    %4552 = vmatpush2.msra.mxu0 0.0
    %4553 = vmatprep.subr.mxu0 0.0
    %4554 = vmatpush2.msra.mxu0 0.0
    %4555 = vmatprep.subr.mxu0 0.0
    %4556 = vmatpush2.msra.mxu0 0.0
    %4557 = vmatprep.subr.mxu0 0.0
    %4558 = vmatpush2.msra.mxu0 0.0
    %4559 = vmatprep.subr.mxu0 0.0
    %4560 = vmatpush2.msra.mxu0 0.0
    %4561 = vmatprep.subr.mxu0 0.0
    %4562 = vmatpush2.msra.mxu0 0.0
    %4563 = vmatprep.subr.mxu0 0.0
    %4564 = vmatpush2.msra.mxu0 0.0
    %4565 = vmatprep.subr.mxu0 0.0
    %4566 = vmatpush2.msra.mxu0 0.0
    %4567 = vmatprep.subr.mxu0 0.0
    %4568 = vmatpush2.msra.mxu0 0.0
    %4569 = vmatprep.mubr.f32.mxu0 0.0
    %4570 = vmatmul.mubr.f32.gmra.mxu0 %v4433
    %v4571 = vpop.f32.mrf.mxu0
    %v4572 = vadd.f32 %v516, %v4571
    %v4573 = vpop.f32.mrf.mxu0
    %4574 = vdwg.mxu0
    %4575 = vmatprep.subr.mxu0 0.0
    %4576 = vmatpush1.msra.mxu0 0.0
    %4577 = vmatprep.subr.mxu0 0.0
    %4578 = vmatpush1.msra.mxu0 0.0
    %4579 = vmatprep.subr.mxu0 0.0
    %4580 = vmatpush1.msra.mxu0 0.0
    %4581 = vmatprep.subr.mxu0 0.0
    %4582 = vmatpush1.msra.mxu0 0.0
    %4583 = vmatprep.subr.mxu0 0.0
    %4584 = vmatpush1.msra.mxu0 0.0
    %4585 = vmatprep.subr.mxu0 0.0
    %4586 = vmatpush1.msra.mxu0 0.0
    %4587 = vmatprep.subr.mxu0 0.0
    %4588 = vmatpush1.msra.mxu0 0.0
    %4589 = vmatprep.subr.mxu0 0.0
    %4590 = vmatpush1.msra.mxu0 0.0
    %4591 = vmatprep.subr.mxu0 0.0
    %4592 = vmatpush1.msra.mxu0 0.0
    %4593 = vmatprep.subr.mxu0 0.0
    %4594 = vmatpush1.msra.mxu0 0.0
    %4595 = vmatprep.subr.mxu0 0.0
    %4596 = vmatpush1.msra.mxu0 0.0
    %4597 = vmatprep.subr.mxu0 0.0
    %4598 = vmatpush1.msra.mxu0 0.0
    %4599 = vmatprep.subr.mxu0 0.0
    %4600 = vmatpush1.msra.mxu0 %v502
    %4601 = vmatprep.subr.mxu0 0.0
    %4602 = vmatpush1.msra.mxu0 %v501
    %4603 = vmatprep.subr.mxu0 0.0
    %4604 = vmatpush1.msra.mxu0 %v500
    %4605 = vmatprep.subr.mxu0 0.0
    %4606 = vmatpush1.msra.mxu0 %v499
    %4607 = vmatprep.subr.mxu0 0.0
    %4608 = vmatpush2.msra.mxu0 0.0
    %4609 = vmatprep.subr.mxu0 0.0
    %4610 = vmatpush2.msra.mxu0 0.0
    %4611 = vmatprep.subr.mxu0 0.0
    %4612 = vmatpush2.msra.mxu0 0.0
    %4613 = vmatprep.subr.mxu0 0.0
    %4614 = vmatpush2.msra.mxu0 0.0
    %4615 = vmatprep.subr.mxu0 0.0
    %4616 = vmatpush2.msra.mxu0 0.0
    %4617 = vmatprep.subr.mxu0 0.0
    %4618 = vmatpush2.msra.mxu0 0.0
    %4619 = vmatprep.subr.mxu0 0.0
    %4620 = vmatpush2.msra.mxu0 0.0
    %4621 = vmatprep.subr.mxu0 0.0
    %4622 = vmatpush2.msra.mxu0 0.0
    %4623 = vmatprep.subr.mxu0 0.0
    %4624 = vmatpush2.msra.mxu0 0.0
    %4625 = vmatprep.subr.mxu0 0.0
    %4626 = vmatpush2.msra.mxu0 0.0
    %4627 = vmatprep.subr.mxu0 0.0
    %4628 = vmatpush2.msra.mxu0 0.0
    %4629 = vmatprep.subr.mxu0 0.0
    %4630 = vmatpush2.msra.mxu0 0.0
    %4631 = vmatprep.subr.mxu0 0.0
    %4632 = vmatpush2.msra.mxu0 0.0
    %4633 = vmatprep.subr.mxu0 0.0
    %4634 = vmatpush2.msra.mxu0 0.0
    %4635 = vmatprep.subr.mxu0 0.0
    %4636 = vmatpush2.msra.mxu0 0.0
    %4637 = vmatprep.subr.mxu0 0.0
    %4638 = vmatpush2.msra.mxu0 0.0
    %4639 = vmatprep.mubr.f32.mxu0 0.0
    %4640 = vmatmul.mubr.f32.gmra.mxu0 %v4433
    %v4641 = vpop.f32.mrf.mxu0
    %v4642 = vadd.f32 %v517, %v4641
    %v4643 = vpop.f32.mrf.mxu0
    %4644 = vdwg.mxu0
    %v4646 = vsel %vm525, %v4188, 0
    %4648 = vmatprep.subr.mxu0 0.0
    %4649 = vmatpush1.msra.mxu0 0.0
    %4650 = vmatprep.subr.mxu0 0.0
    %4651 = vmatpush1.msra.mxu0 0.0
    %4652 = vmatprep.subr.mxu0 0.0
    %4653 = vmatpush1.msra.mxu0 0.0
    %4654 = vmatprep.subr.mxu0 0.0
    %4655 = vmatpush1.msra.mxu0 0.0
    %4656 = vmatprep.subr.mxu0 0.0
    %4657 = vmatpush1.msra.mxu0 0.0
    %4658 = vmatprep.subr.mxu0 0.0
    %4659 = vmatpush1.msra.mxu0 0.0
    %4660 = vmatprep.subr.mxu0 0.0
    %4661 = vmatpush1.msra.mxu0 0.0
    %4662 = vmatprep.subr.mxu0 0.0
    %4663 = vmatpush1.msra.mxu0 0.0
    %4664 = vmatprep.subr.mxu0 0.0
    %4665 = vmatpush1.msra.mxu0 0.0
    %4666 = vmatprep.subr.mxu0 0.0
    %4667 = vmatpush1.msra.mxu0 0.0
    %4668 = vmatprep.subr.mxu0 0.0
    %4669 = vmatpush1.msra.mxu0 0.0
    %4670 = vmatprep.subr.mxu0 0.0
    %4671 = vmatpush1.msra.mxu0 0.0
    %4672 = vmatprep.subr.mxu0 0.0
    %4673 = vmatpush1.msra.mxu0 %v506
    %4674 = vmatprep.subr.mxu0 0.0
    %4675 = vmatpush1.msra.mxu0 %v505
    %4676 = vmatprep.subr.mxu0 0.0
    %4677 = vmatpush1.msra.mxu0 %v504
    %4678 = vmatprep.subr.mxu0 0.0
    %4679 = vmatpush1.msra.mxu0 %v503
    %4680 = vmatprep.subr.mxu0 0.0
    %4681 = vmatpush2.msra.mxu0 0.0
    %4682 = vmatprep.subr.mxu0 0.0
    %4683 = vmatpush2.msra.mxu0 0.0
    %4684 = vmatprep.subr.mxu0 0.0
    %4685 = vmatpush2.msra.mxu0 0.0
    %4686 = vmatprep.subr.mxu0 0.0
    %4687 = vmatpush2.msra.mxu0 0.0
    %4688 = vmatprep.subr.mxu0 0.0
    %4689 = vmatpush2.msra.mxu0 0.0
    %4690 = vmatprep.subr.mxu0 0.0
    %4691 = vmatpush2.msra.mxu0 0.0
    %4692 = vmatprep.subr.mxu0 0.0
    %4693 = vmatpush2.msra.mxu0 0.0
    %4694 = vmatprep.subr.mxu0 0.0
    %4695 = vmatpush2.msra.mxu0 0.0
    %4696 = vmatprep.subr.mxu0 0.0
    %4697 = vmatpush2.msra.mxu0 0.0
    %4698 = vmatprep.subr.mxu0 0.0
    %4699 = vmatpush2.msra.mxu0 0.0
    %4700 = vmatprep.subr.mxu0 0.0
    %4701 = vmatpush2.msra.mxu0 0.0
    %4702 = vmatprep.subr.mxu0 0.0
    %4703 = vmatpush2.msra.mxu0 0.0
    %4704 = vmatprep.subr.mxu0 0.0
    %4705 = vmatpush2.msra.mxu0 0.0
    %4706 = vmatprep.subr.mxu0 0.0
    %4707 = vmatpush2.msra.mxu0 0.0
    %4708 = vmatprep.subr.mxu0 0.0
    %4709 = vmatpush2.msra.mxu0 0.0
    %4710 = vmatprep.subr.mxu0 0.0
    %4711 = vmatpush2.msra.mxu0 0.0
    %4712 = vmatprep.mubr.f32.mxu0 0.0
    %4713 = vmatmul.mubr.f32.gmra.mxu0 %v4646
    %v4714 = vpop.f32.mrf.mxu0
    %v4715 = vadd.f32 0.0, %v4714
    %v4716 = vpop.f32.mrf.mxu0
    %4717 = vdwg.mxu0
    %4718 = vmatprep.subr.mxu0 0.0
    %4719 = vmatpush1.msra.mxu0 0.0
    %4720 = vmatprep.subr.mxu0 0.0
    %4721 = vmatpush1.msra.mxu0 0.0
    %4722 = vmatprep.subr.mxu0 0.0
    %4723 = vmatpush1.msra.mxu0 0.0
    %4724 = vmatprep.subr.mxu0 0.0
    %4725 = vmatpush1.msra.mxu0 0.0
    %4726 = vmatprep.subr.mxu0 0.0
    %4727 = vmatpush1.msra.mxu0 0.0
    %4728 = vmatprep.subr.mxu0 0.0
    %4729 = vmatpush1.msra.mxu0 0.0
    %4730 = vmatprep.subr.mxu0 0.0
    %4731 = vmatpush1.msra.mxu0 0.0
    %4732 = vmatprep.subr.mxu0 0.0
    %4733 = vmatpush1.msra.mxu0 0.0
    %4734 = vmatprep.subr.mxu0 0.0
    %4735 = vmatpush1.msra.mxu0 0.0
    %4736 = vmatprep.subr.mxu0 0.0
    %4737 = vmatpush1.msra.mxu0 0.0
    %4738 = vmatprep.subr.mxu0 0.0
    %4739 = vmatpush1.msra.mxu0 0.0
    %4740 = vmatprep.subr.mxu0 0.0
    %4741 = vmatpush1.msra.mxu0 0.0
    %4742 = vmatprep.subr.mxu0 0.0
    %4743 = vmatpush1.msra.mxu0 %v510
    %4744 = vmatprep.subr.mxu0 0.0
    %4745 = vmatpush1.msra.mxu0 %v509
    %4746 = vmatprep.subr.mxu0 0.0
    %4747 = vmatpush1.msra.mxu0 %v508
    %4748 = vmatprep.subr.mxu0 0.0
    %4749 = vmatpush1.msra.mxu0 %v507
    %4750 = vmatprep.subr.mxu0 0.0
    %4751 = vmatpush2.msra.mxu0 0.0
    %4752 = vmatprep.subr.mxu0 0.0
    %4753 = vmatpush2.msra.mxu0 0.0
    %4754 = vmatprep.subr.mxu0 0.0
    %4755 = vmatpush2.msra.mxu0 0.0
    %4756 = vmatprep.subr.mxu0 0.0
    %4757 = vmatpush2.msra.mxu0 0.0
    %4758 = vmatprep.subr.mxu0 0.0
    %4759 = vmatpush2.msra.mxu0 0.0
    %4760 = vmatprep.subr.mxu0 0.0
    %4761 = vmatpush2.msra.mxu0 0.0
    %4762 = vmatprep.subr.mxu0 0.0
    %4763 = vmatpush2.msra.mxu0 0.0
    %4764 = vmatprep.subr.mxu0 0.0
    %4765 = vmatpush2.msra.mxu0 0.0
    %4766 = vmatprep.subr.mxu0 0.0
    %4767 = vmatpush2.msra.mxu0 0.0
    %4768 = vmatprep.subr.mxu0 0.0
    %4769 = vmatpush2.msra.mxu0 0.0
    %4770 = vmatprep.subr.mxu0 0.0
    %4771 = vmatpush2.msra.mxu0 0.0
    %4772 = vmatprep.subr.mxu0 0.0
    %4773 = vmatpush2.msra.mxu0 0.0
    %4774 = vmatprep.subr.mxu0 0.0
    %4775 = vmatpush2.msra.mxu0 0.0
    %4776 = vmatprep.subr.mxu0 0.0
    %4777 = vmatpush2.msra.mxu0 0.0
    %4778 = vmatprep.subr.mxu0 0.0
    %4779 = vmatpush2.msra.mxu0 0.0
    %4780 = vmatprep.subr.mxu0 0.0
    %4781 = vmatpush2.msra.mxu0 0.0
    %4782 = vmatprep.mubr.f32.mxu0 0.0
    %4783 = vmatmul.mubr.f32.gmra.mxu0 %v4646
    %v4784 = vpop.f32.mrf.mxu0
    %v4785 = vadd.f32 0.0, %v4784
    %v4786 = vpop.f32.mrf.mxu0
    %4787 = vdwg.mxu0
    %v4788 = vadd.f32 %v4502, %v4715
    %v4789 = vxor.u32 %v4788, 2147483648
    %v4790 = vmul.f32 %v4789, 1.442695
    %v4791 = vpow.pop %v4790
    %v4792 = vadd.f32 %v4791, 1.0
    %v4793 = vrcp.pop %v4792
    %v4794 = vmul.f32 1.0, %v4793
    %v4795 = vadd.f32 %v4572, %v4785
    %v4796 = vxor.u32 %v4795, 2147483648
    %v4797 = vmul.f32 %v4796, 1.442695
    %v4798 = vpow.pop %v4797
    %v4799 = vadd.f32 %v4798, 1.0
    %v4800 = vrcp.pop %v4799
    %v4801 = vmul.f32 1.0, %v4800
    %4802 = vmatprep.subr.mxu0 0.0
    %4803 = vmatpush1.msra.mxu0 0.0
    %4804 = vmatprep.subr.mxu0 0.0
    %4805 = vmatpush1.msra.mxu0 0.0
    %4806 = vmatprep.subr.mxu0 0.0
    %4807 = vmatpush1.msra.mxu0 0.0
    %4808 = vmatprep.subr.mxu0 0.0
    %4809 = vmatpush1.msra.mxu0 0.0
    %4810 = vmatprep.subr.mxu0 0.0
    %4811 = vmatpush1.msra.mxu0 0.0
    %4812 = vmatprep.subr.mxu0 0.0
    %4813 = vmatpush1.msra.mxu0 0.0
    %4814 = vmatprep.subr.mxu0 0.0
    %4815 = vmatpush1.msra.mxu0 0.0
    %4816 = vmatprep.subr.mxu0 0.0
    %4817 = vmatpush1.msra.mxu0 0.0
    %4818 = vmatprep.subr.mxu0 0.0
    %4819 = vmatpush1.msra.mxu0 0.0
    %4820 = vmatprep.subr.mxu0 0.0
    %4821 = vmatpush1.msra.mxu0 0.0
    %4822 = vmatprep.subr.mxu0 0.0
    %4823 = vmatpush1.msra.mxu0 0.0
    %4824 = vmatprep.subr.mxu0 0.0
    %4825 = vmatpush1.msra.mxu0 0.0
    %4826 = vmatprep.subr.mxu0 0.0
    %4827 = vmatpush1.msra.mxu0 %v514
    %4828 = vmatprep.subr.mxu0 0.0
    %4829 = vmatpush1.msra.mxu0 %v513
    %4830 = vmatprep.subr.mxu0 0.0
    %4831 = vmatpush1.msra.mxu0 %v512
    %4832 = vmatprep.subr.mxu0 0.0
    %4833 = vmatpush1.msra.mxu0 %v511
    %4834 = vmatprep.subr.mxu0 0.0
    %4835 = vmatpush2.msra.mxu0 0.0
    %4836 = vmatprep.subr.mxu0 0.0
    %4837 = vmatpush2.msra.mxu0 0.0
    %4838 = vmatprep.subr.mxu0 0.0
    %4839 = vmatpush2.msra.mxu0 0.0
    %4840 = vmatprep.subr.mxu0 0.0
    %4841 = vmatpush2.msra.mxu0 0.0
    %4842 = vmatprep.subr.mxu0 0.0
    %4843 = vmatpush2.msra.mxu0 0.0
    %4844 = vmatprep.subr.mxu0 0.0
    %4845 = vmatpush2.msra.mxu0 0.0
    %4846 = vmatprep.subr.mxu0 0.0
    %4847 = vmatpush2.msra.mxu0 0.0
    %4848 = vmatprep.subr.mxu0 0.0
    %4849 = vmatpush2.msra.mxu0 0.0
    %4850 = vmatprep.subr.mxu0 0.0
    %4851 = vmatpush2.msra.mxu0 0.0
    %4852 = vmatprep.subr.mxu0 0.0
    %4853 = vmatpush2.msra.mxu0 0.0
    %4854 = vmatprep.subr.mxu0 0.0
    %4855 = vmatpush2.msra.mxu0 0.0
    %4856 = vmatprep.subr.mxu0 0.0
    %4857 = vmatpush2.msra.mxu0 0.0
    %4858 = vmatprep.subr.mxu0 0.0
    %4859 = vmatpush2.msra.mxu0 0.0
    %4860 = vmatprep.subr.mxu0 0.0
    %4861 = vmatpush2.msra.mxu0 0.0
    %4862 = vmatprep.subr.mxu0 0.0
    %4863 = vmatpush2.msra.mxu0 0.0
    %4864 = vmatprep.subr.mxu0 0.0
    %4865 = vmatpush2.msra.mxu0 0.0
    %4866 = vmatprep.mubr.f32.mxu0 0.0
    %4867 = vmatmul.mubr.f32.gmra.mxu0 %v4646
    %v4868 = vpop.f32.mrf.mxu0
    %v4869 = vadd.f32 %v518, %v4868
    %v4870 = vpop.f32.mrf.mxu0
    %4871 = vdwg.mxu0
    %v4872 = vmul.f32 %v4794, %v4869
    %v4873 = vadd.f32 %v4642, %v4872
    %v4874 = vtanh.pop %v4873
    %v4875 = vsub.f32 1.0, %v4801
    %v4876 = vmul.f32 %v4875, %v4874
    %v4877 = vmul.f32 %v4801, %v4188
    %v4878 = vadd.f32 %v4876, %v4877
    %4879 = vmatprep.subr.mxu0 0.0
    %4880 = vmatpush1.msra.mxu0 0.0
    %4881 = vmatprep.subr.mxu0 0.0
    %4882 = vmatpush1.msra.mxu0 0.0
    %4883 = vmatprep.subr.mxu0 0.0
    %4884 = vmatpush1.msra.mxu0 0.0
    %4885 = vmatprep.subr.mxu0 0.0
    %4886 = vmatpush1.msra.mxu0 0.0
    %4887 = vmatprep.subr.mxu0 0.0
    %4888 = vmatpush1.msra.mxu0 0.0
    %4889 = vmatprep.subr.mxu0 0.0
    %4890 = vmatpush1.msra.mxu0 0.0
    %4891 = vmatprep.subr.mxu0 0.0
    %4892 = vmatpush1.msra.mxu0 0.0
    %4893 = vmatprep.subr.mxu0 0.0
    %4894 = vmatpush1.msra.mxu0 0.0
    %4895 = vmatprep.subr.mxu0 0.0
    %4896 = vmatpush1.msra.mxu0 0.0
    %4897 = vmatprep.subr.mxu0 0.0
    %4898 = vmatpush1.msra.mxu0 0.0
    %4899 = vmatprep.subr.mxu0 0.0
    %4900 = vmatpush1.msra.mxu0 0.0
    %4901 = vmatprep.subr.mxu0 0.0
    %4902 = vmatpush1.msra.mxu0 0.0
    %4903 = vmatprep.subr.mxu0 0.0
    %4904 = vmatpush1.msra.mxu0 %v478
    %4905 = vmatprep.subr.mxu0 0.0
    %4906 = vmatpush1.msra.mxu0 %v477
    %4907 = vmatprep.subr.mxu0 0.0
    %4908 = vmatpush1.msra.mxu0 %v476
    %4909 = vmatprep.subr.mxu0 0.0
    %4910 = vmatpush1.msra.mxu0 %v475
    %4911 = vmatprep.subr.mxu0 0.0
    %4912 = vmatpush2.msra.mxu0 0.0
    %4913 = vmatprep.subr.mxu0 0.0
    %4914 = vmatpush2.msra.mxu0 0.0
    %4915 = vmatprep.subr.mxu0 0.0
    %4916 = vmatpush2.msra.mxu0 0.0
    %4917 = vmatprep.subr.mxu0 0.0
    %4918 = vmatpush2.msra.mxu0 0.0
    %4919 = vmatprep.subr.mxu0 0.0
    %4920 = vmatpush2.msra.mxu0 0.0
    %4921 = vmatprep.subr.mxu0 0.0
    %4922 = vmatpush2.msra.mxu0 0.0
    %4923 = vmatprep.subr.mxu0 0.0
    %4924 = vmatpush2.msra.mxu0 0.0
    %4925 = vmatprep.subr.mxu0 0.0
    %4926 = vmatpush2.msra.mxu0 0.0
    %4927 = vmatprep.subr.mxu0 0.0
    %4928 = vmatpush2.msra.mxu0 0.0
    %4929 = vmatprep.subr.mxu0 0.0
    %4930 = vmatpush2.msra.mxu0 0.0
    %4931 = vmatprep.subr.mxu0 0.0
    %4932 = vmatpush2.msra.mxu0 0.0
    %4933 = vmatprep.subr.mxu0 0.0
    %4934 = vmatpush2.msra.mxu0 0.0
    %4935 = vmatprep.subr.mxu0 0.0
    %4936 = vmatpush2.msra.mxu0 0.0
    %4937 = vmatprep.subr.mxu0 0.0
    %4938 = vmatpush2.msra.mxu0 0.0
    %4939 = vmatprep.subr.mxu0 0.0
    %4940 = vmatpush2.msra.mxu0 0.0
    %4941 = vmatprep.subr.mxu0 0.0
    %4942 = vmatpush2.msra.mxu0 0.0
    %4943 = vmatprep.mubr.f32.mxu0 0.0
    %4944 = vmatmul.mubr.f32.gmra.mxu0 %v4433
    %v4945 = vpop.f32.mrf.mxu0
    %v4946 = vadd.f32 0.0, %v4945
    %v4947 = vpop.f32.mrf.mxu0
    %4948 = vdwg.mxu0
    %4949 = vmatprep.subr.mxu0 0.0
    %4950 = vmatpush1.msra.mxu0 0.0
    %4951 = vmatprep.subr.mxu0 0.0
    %4952 = vmatpush1.msra.mxu0 0.0
    %4953 = vmatprep.subr.mxu0 0.0
    %4954 = vmatpush1.msra.mxu0 0.0
    %4955 = vmatprep.subr.mxu0 0.0
    %4956 = vmatpush1.msra.mxu0 0.0
    %4957 = vmatprep.subr.mxu0 0.0
    %4958 = vmatpush1.msra.mxu0 0.0
    %4959 = vmatprep.subr.mxu0 0.0
    %4960 = vmatpush1.msra.mxu0 0.0
    %4961 = vmatprep.subr.mxu0 0.0
    %4962 = vmatpush1.msra.mxu0 0.0
    %4963 = vmatprep.subr.mxu0 0.0
    %4964 = vmatpush1.msra.mxu0 0.0
    %4965 = vmatprep.subr.mxu0 0.0
    %4966 = vmatpush1.msra.mxu0 0.0
    %4967 = vmatprep.subr.mxu0 0.0
    %4968 = vmatpush1.msra.mxu0 0.0
    %4969 = vmatprep.subr.mxu0 0.0
    %4970 = vmatpush1.msra.mxu0 0.0
    %4971 = vmatprep.subr.mxu0 0.0
    %4972 = vmatpush1.msra.mxu0 0.0
    %4973 = vmatprep.subr.mxu0 0.0
    %4974 = vmatpush1.msra.mxu0 %v482
    %4975 = vmatprep.subr.mxu0 0.0
    %4976 = vmatpush1.msra.mxu0 %v481
    %4977 = vmatprep.subr.mxu0 0.0
    %4978 = vmatpush1.msra.mxu0 %v480
    %4979 = vmatprep.subr.mxu0 0.0
    %4980 = vmatpush1.msra.mxu0 %v479
    %4981 = vmatprep.subr.mxu0 0.0
    %4982 = vmatpush2.msra.mxu0 0.0
    %4983 = vmatprep.subr.mxu0 0.0
    %4984 = vmatpush2.msra.mxu0 0.0
    %4985 = vmatprep.subr.mxu0 0.0
    %4986 = vmatpush2.msra.mxu0 0.0
    %4987 = vmatprep.subr.mxu0 0.0
    %4988 = vmatpush2.msra.mxu0 0.0
    %4989 = vmatprep.subr.mxu0 0.0
    %4990 = vmatpush2.msra.mxu0 0.0
    %4991 = vmatprep.subr.mxu0 0.0
    %4992 = vmatpush2.msra.mxu0 0.0
    %4993 = vmatprep.subr.mxu0 0.0
    %4994 = vmatpush2.msra.mxu0 0.0
    %4995 = vmatprep.subr.mxu0 0.0
    %4996 = vmatpush2.msra.mxu0 0.0
    %4997 = vmatprep.subr.mxu0 0.0
    %4998 = vmatpush2.msra.mxu0 0.0
    %4999 = vmatprep.subr.mxu0 0.0
    %5000 = vmatpush2.msra.mxu0 0.0
    %5001 = vmatprep.subr.mxu0 0.0
    %5002 = vmatpush2.msra.mxu0 0.0
    %5003 = vmatprep.subr.mxu0 0.0
    %5004 = vmatpush2.msra.mxu0 0.0
    %5005 = vmatprep.subr.mxu0 0.0
    %5006 = vmatpush2.msra.mxu0 0.0
    %5007 = vmatprep.subr.mxu0 0.0
    %5008 = vmatpush2.msra.mxu0 0.0
    %5009 = vmatprep.subr.mxu0 0.0
    %5010 = vmatpush2.msra.mxu0 0.0
    %5011 = vmatprep.subr.mxu0 0.0
    %5012 = vmatpush2.msra.mxu0 0.0
    %5013 = vmatprep.mubr.f32.mxu0 0.0
    %5014 = vmatmul.mubr.f32.gmra.mxu0 %v4433
    %v5015 = vpop.f32.mrf.mxu0
    %v5016 = vadd.f32 0.0, %v5015
    %v5017 = vpop.f32.mrf.mxu0
    %5018 = vdwg.mxu0
    %v5020 = vrot.slane %v4946, 2
    %v5022 = vadd.f32 %v596, %v5020
    %v5023 = vxor.u32 %v5022, 2147483648
    %v5024 = vmul.f32 %v5023, 1.442695
    %v5025 = vpow.pop %v5024
    %v5026 = vadd.f32 %v5025, 1.0
    %v5027 = vrcp.pop %v5026
    %v5028 = vmul.f32 1.0, %v5027
    %v5030 = vrot.slane %v5016, 2
    %v5032 = vadd.f32 %v672, %v5030
    %v5033 = vxor.u32 %v5032, 2147483648
    %v5034 = vmul.f32 %v5033, 1.442695
    %v5035 = vpow.pop %v5034
    %v5036 = vadd.f32 %v5035, 1.0
    %v5037 = vrcp.pop %v5036
    %v5038 = vmul.f32 1.0, %v5037
    %5039 = vmatprep.subr.mxu0 0.0
    %5040 = vmatpush1.msra.mxu0 0.0
    %5041 = vmatprep.subr.mxu0 0.0
    %5042 = vmatpush1.msra.mxu0 0.0
    %5043 = vmatprep.subr.mxu0 0.0
    %5044 = vmatpush1.msra.mxu0 0.0
    %5045 = vmatprep.subr.mxu0 0.0
    %5046 = vmatpush1.msra.mxu0 0.0
    %5047 = vmatprep.subr.mxu0 0.0
    %5048 = vmatpush1.msra.mxu0 0.0
    %5049 = vmatprep.subr.mxu0 0.0
    %5050 = vmatpush1.msra.mxu0 0.0
    %5051 = vmatprep.subr.mxu0 0.0
    %5052 = vmatpush1.msra.mxu0 0.0
    %5053 = vmatprep.subr.mxu0 0.0
    %5054 = vmatpush1.msra.mxu0 0.0
    %5055 = vmatprep.subr.mxu0 0.0
    %5056 = vmatpush1.msra.mxu0 0.0
    %5057 = vmatprep.subr.mxu0 0.0
    %5058 = vmatpush1.msra.mxu0 0.0
    %5059 = vmatprep.subr.mxu0 0.0
    %5060 = vmatpush1.msra.mxu0 0.0
    %5061 = vmatprep.subr.mxu0 0.0
    %5062 = vmatpush1.msra.mxu0 0.0
    %5063 = vmatprep.subr.mxu0 0.0
    %5064 = vmatpush1.msra.mxu0 %v486
    %5065 = vmatprep.subr.mxu0 0.0
    %5066 = vmatpush1.msra.mxu0 %v485
    %5067 = vmatprep.subr.mxu0 0.0
    %5068 = vmatpush1.msra.mxu0 %v484
    %5069 = vmatprep.subr.mxu0 0.0
    %5070 = vmatpush1.msra.mxu0 %v483
    %5071 = vmatprep.subr.mxu0 0.0
    %5072 = vmatpush2.msra.mxu0 0.0
    %5073 = vmatprep.subr.mxu0 0.0
    %5074 = vmatpush2.msra.mxu0 0.0
    %5075 = vmatprep.subr.mxu0 0.0
    %5076 = vmatpush2.msra.mxu0 0.0
    %5077 = vmatprep.subr.mxu0 0.0
    %5078 = vmatpush2.msra.mxu0 0.0
    %5079 = vmatprep.subr.mxu0 0.0
    %5080 = vmatpush2.msra.mxu0 0.0
    %5081 = vmatprep.subr.mxu0 0.0
    %5082 = vmatpush2.msra.mxu0 0.0
    %5083 = vmatprep.subr.mxu0 0.0
    %5084 = vmatpush2.msra.mxu0 0.0
    %5085 = vmatprep.subr.mxu0 0.0
    %5086 = vmatpush2.msra.mxu0 0.0
    %5087 = vmatprep.subr.mxu0 0.0
    %5088 = vmatpush2.msra.mxu0 0.0
    %5089 = vmatprep.subr.mxu0 0.0
    %5090 = vmatpush2.msra.mxu0 0.0
    %5091 = vmatprep.subr.mxu0 0.0
    %5092 = vmatpush2.msra.mxu0 0.0
    %5093 = vmatprep.subr.mxu0 0.0
    %5094 = vmatpush2.msra.mxu0 0.0
    %5095 = vmatprep.subr.mxu0 0.0
    %5096 = vmatpush2.msra.mxu0 0.0
    %5097 = vmatprep.subr.mxu0 0.0
    %5098 = vmatpush2.msra.mxu0 0.0
    %5099 = vmatprep.subr.mxu0 0.0
    %5100 = vmatpush2.msra.mxu0 0.0
    %5101 = vmatprep.subr.mxu0 0.0
    %5102 = vmatpush2.msra.mxu0 0.0
    %5103 = vmatprep.mubr.f32.mxu0 0.0
    %5104 = vmatmul.mubr.f32.gmra.mxu0 %v4433
    %v5105 = vpop.f32.mrf.mxu0
    %v5106 = vadd.f32 %v490, %v5105
    %v5107 = vpop.f32.mrf.mxu0
    %5108 = vdwg.mxu0
    %v5110 = vrot.slane %v5106, 2
    %v5112 = vmul.f32 %v5028, %v5110
    %v5113 = vadd.f32 %v748, %v5112
    %v5114 = vtanh.pop %v5113
    %v5115 = vsub.f32 1.0, %v5038
    %v5116 = vmul.f32 %v5115, %v5114
    %v5117 = vrot.slane %v4430, 7
    %v5119 = vmul.f32 %v5038, %v5117
    %v5120 = vadd.f32 %v5116, %v5119
    %v5122 = vrot.slane %v5120, 6
    %v5123 = vsel %vm525, %v5122, 0
    %5125 = vmatprep.subr.mxu0 0.0
    %5126 = vmatpush1.msra.mxu0 0.0
    %5127 = vmatprep.subr.mxu0 0.0
    %5128 = vmatpush1.msra.mxu0 0.0
    %5129 = vmatprep.subr.mxu0 0.0
    %5130 = vmatpush1.msra.mxu0 0.0
    %5131 = vmatprep.subr.mxu0 0.0
    %5132 = vmatpush1.msra.mxu0 0.0
    %5133 = vmatprep.subr.mxu0 0.0
    %5134 = vmatpush1.msra.mxu0 0.0
    %5135 = vmatprep.subr.mxu0 0.0
    %5136 = vmatpush1.msra.mxu0 0.0
    %5137 = vmatprep.subr.mxu0 0.0
    %5138 = vmatpush1.msra.mxu0 0.0
    %5139 = vmatprep.subr.mxu0 0.0
    %5140 = vmatpush1.msra.mxu0 0.0
    %5141 = vmatprep.subr.mxu0 0.0
    %5142 = vmatpush1.msra.mxu0 0.0
    %5143 = vmatprep.subr.mxu0 0.0
    %5144 = vmatpush1.msra.mxu0 0.0
    %5145 = vmatprep.subr.mxu0 0.0
    %5146 = vmatpush1.msra.mxu0 0.0
    %5147 = vmatprep.subr.mxu0 0.0
    %5148 = vmatpush1.msra.mxu0 0.0
    %5149 = vmatprep.subr.mxu0 0.0
    %5150 = vmatpush1.msra.mxu0 %v494
    %5151 = vmatprep.subr.mxu0 0.0
    %5152 = vmatpush1.msra.mxu0 %v493
    %5153 = vmatprep.subr.mxu0 0.0
    %5154 = vmatpush1.msra.mxu0 %v492
    %5155 = vmatprep.subr.mxu0 0.0
    %5156 = vmatpush1.msra.mxu0 %v491
    %5157 = vmatprep.subr.mxu0 0.0
    %5158 = vmatpush2.msra.mxu0 0.0
    %5159 = vmatprep.subr.mxu0 0.0
    %5160 = vmatpush2.msra.mxu0 0.0
    %5161 = vmatprep.subr.mxu0 0.0
    %5162 = vmatpush2.msra.mxu0 0.0
    %5163 = vmatprep.subr.mxu0 0.0
    %5164 = vmatpush2.msra.mxu0 0.0
    %5165 = vmatprep.subr.mxu0 0.0
    %5166 = vmatpush2.msra.mxu0 0.0
    %5167 = vmatprep.subr.mxu0 0.0
    %5168 = vmatpush2.msra.mxu0 0.0
    %5169 = vmatprep.subr.mxu0 0.0
    %5170 = vmatpush2.msra.mxu0 0.0
    %5171 = vmatprep.subr.mxu0 0.0
    %5172 = vmatpush2.msra.mxu0 0.0
    %5173 = vmatprep.subr.mxu0 0.0
    %5174 = vmatpush2.msra.mxu0 0.0
    %5175 = vmatprep.subr.mxu0 0.0
    %5176 = vmatpush2.msra.mxu0 0.0
    %5177 = vmatprep.subr.mxu0 0.0
    %5178 = vmatpush2.msra.mxu0 0.0
    %5179 = vmatprep.subr.mxu0 0.0
    %5180 = vmatpush2.msra.mxu0 0.0
    %5181 = vmatprep.subr.mxu0 0.0
    %5182 = vmatpush2.msra.mxu0 0.0
    %5183 = vmatprep.subr.mxu0 0.0
    %5184 = vmatpush2.msra.mxu0 0.0
    %5185 = vmatprep.subr.mxu0 0.0
    %5186 = vmatpush2.msra.mxu0 0.0
    %5187 = vmatprep.subr.mxu0 0.0
    %5188 = vmatpush2.msra.mxu0 0.0
    %5189 = vmatprep.mubr.f32.mxu0 0.0
    %5190 = vmatmul.mubr.f32.gmra.mxu0 %v5123
    %v5191 = vpop.f32.mrf.mxu0
    %v5192 = vadd.f32 %v515, %v5191
    %v5193 = vpop.f32.mrf.mxu0
    %5194 = vdwg.mxu0
    %5195 = vmatprep.subr.mxu0 0.0
    %5196 = vmatpush1.msra.mxu0 0.0
    %5197 = vmatprep.subr.mxu0 0.0
    %5198 = vmatpush1.msra.mxu0 0.0
    %5199 = vmatprep.subr.mxu0 0.0
    %5200 = vmatpush1.msra.mxu0 0.0
    %5201 = vmatprep.subr.mxu0 0.0
    %5202 = vmatpush1.msra.mxu0 0.0
    %5203 = vmatprep.subr.mxu0 0.0
    %5204 = vmatpush1.msra.mxu0 0.0
    %5205 = vmatprep.subr.mxu0 0.0
    %5206 = vmatpush1.msra.mxu0 0.0
    %5207 = vmatprep.subr.mxu0 0.0
    %5208 = vmatpush1.msra.mxu0 0.0
    %5209 = vmatprep.subr.mxu0 0.0
    %5210 = vmatpush1.msra.mxu0 0.0
    %5211 = vmatprep.subr.mxu0 0.0
    %5212 = vmatpush1.msra.mxu0 0.0
    %5213 = vmatprep.subr.mxu0 0.0
    %5214 = vmatpush1.msra.mxu0 0.0
    %5215 = vmatprep.subr.mxu0 0.0
    %5216 = vmatpush1.msra.mxu0 0.0
    %5217 = vmatprep.subr.mxu0 0.0
    %5218 = vmatpush1.msra.mxu0 0.0
    %5219 = vmatprep.subr.mxu0 0.0
    %5220 = vmatpush1.msra.mxu0 %v498
    %5221 = vmatprep.subr.mxu0 0.0
    %5222 = vmatpush1.msra.mxu0 %v497
    %5223 = vmatprep.subr.mxu0 0.0
    %5224 = vmatpush1.msra.mxu0 %v496
    %5225 = vmatprep.subr.mxu0 0.0
    %5226 = vmatpush1.msra.mxu0 %v495
    %5227 = vmatprep.subr.mxu0 0.0
    %5228 = vmatpush2.msra.mxu0 0.0
    %5229 = vmatprep.subr.mxu0 0.0
    %5230 = vmatpush2.msra.mxu0 0.0
    %5231 = vmatprep.subr.mxu0 0.0
    %5232 = vmatpush2.msra.mxu0 0.0
    %5233 = vmatprep.subr.mxu0 0.0
    %5234 = vmatpush2.msra.mxu0 0.0
    %5235 = vmatprep.subr.mxu0 0.0
    %5236 = vmatpush2.msra.mxu0 0.0
    %5237 = vmatprep.subr.mxu0 0.0
    %5238 = vmatpush2.msra.mxu0 0.0
    %5239 = vmatprep.subr.mxu0 0.0
    %5240 = vmatpush2.msra.mxu0 0.0
    %5241 = vmatprep.subr.mxu0 0.0
    %5242 = vmatpush2.msra.mxu0 0.0
    %5243 = vmatprep.subr.mxu0 0.0
    %5244 = vmatpush2.msra.mxu0 0.0
    %5245 = vmatprep.subr.mxu0 0.0
    %5246 = vmatpush2.msra.mxu0 0.0
    %5247 = vmatprep.subr.mxu0 0.0
    %5248 = vmatpush2.msra.mxu0 0.0
    %5249 = vmatprep.subr.mxu0 0.0
    %5250 = vmatpush2.msra.mxu0 0.0
    %5251 = vmatprep.subr.mxu0 0.0
    %5252 = vmatpush2.msra.mxu0 0.0
    %5253 = vmatprep.subr.mxu0 0.0
    %5254 = vmatpush2.msra.mxu0 0.0
    %5255 = vmatprep.subr.mxu0 0.0
    %5256 = vmatpush2.msra.mxu0 0.0
    %5257 = vmatprep.subr.mxu0 0.0
    %5258 = vmatpush2.msra.mxu0 0.0
    %5259 = vmatprep.mubr.f32.mxu0 0.0
    %5260 = vmatmul.mubr.f32.gmra.mxu0 %v5123
    %v5261 = vpop.f32.mrf.mxu0
    %v5262 = vadd.f32 %v516, %v5261
    %v5263 = vpop.f32.mrf.mxu0
    %5264 = vdwg.mxu0
    %5265 = vmatprep.subr.mxu0 0.0
    %5266 = vmatpush1.msra.mxu0 0.0
    %5267 = vmatprep.subr.mxu0 0.0
    %5268 = vmatpush1.msra.mxu0 0.0
    %5269 = vmatprep.subr.mxu0 0.0
    %5270 = vmatpush1.msra.mxu0 0.0
    %5271 = vmatprep.subr.mxu0 0.0
    %5272 = vmatpush1.msra.mxu0 0.0
    %5273 = vmatprep.subr.mxu0 0.0
    %5274 = vmatpush1.msra.mxu0 0.0
    %5275 = vmatprep.subr.mxu0 0.0
    %5276 = vmatpush1.msra.mxu0 0.0
    %5277 = vmatprep.subr.mxu0 0.0
    %5278 = vmatpush1.msra.mxu0 0.0
    %5279 = vmatprep.subr.mxu0 0.0
    %5280 = vmatpush1.msra.mxu0 0.0
    %5281 = vmatprep.subr.mxu0 0.0
    %5282 = vmatpush1.msra.mxu0 0.0
    %5283 = vmatprep.subr.mxu0 0.0
    %5284 = vmatpush1.msra.mxu0 0.0
    %5285 = vmatprep.subr.mxu0 0.0
    %5286 = vmatpush1.msra.mxu0 0.0
    %5287 = vmatprep.subr.mxu0 0.0
    %5288 = vmatpush1.msra.mxu0 0.0
    %5289 = vmatprep.subr.mxu0 0.0
    %5290 = vmatpush1.msra.mxu0 %v502
    %5291 = vmatprep.subr.mxu0 0.0
    %5292 = vmatpush1.msra.mxu0 %v501
    %5293 = vmatprep.subr.mxu0 0.0
    %5294 = vmatpush1.msra.mxu0 %v500
    %5295 = vmatprep.subr.mxu0 0.0
    %5296 = vmatpush1.msra.mxu0 %v499
    %5297 = vmatprep.subr.mxu0 0.0
    %5298 = vmatpush2.msra.mxu0 0.0
    %5299 = vmatprep.subr.mxu0 0.0
    %5300 = vmatpush2.msra.mxu0 0.0
    %5301 = vmatprep.subr.mxu0 0.0
    %5302 = vmatpush2.msra.mxu0 0.0
    %5303 = vmatprep.subr.mxu0 0.0
    %5304 = vmatpush2.msra.mxu0 0.0
    %5305 = vmatprep.subr.mxu0 0.0
    %5306 = vmatpush2.msra.mxu0 0.0
    %5307 = vmatprep.subr.mxu0 0.0
    %5308 = vmatpush2.msra.mxu0 0.0
    %5309 = vmatprep.subr.mxu0 0.0
    %5310 = vmatpush2.msra.mxu0 0.0
    %5311 = vmatprep.subr.mxu0 0.0
    %5312 = vmatpush2.msra.mxu0 0.0
    %5313 = vmatprep.subr.mxu0 0.0
    %5314 = vmatpush2.msra.mxu0 0.0
    %5315 = vmatprep.subr.mxu0 0.0
    %5316 = vmatpush2.msra.mxu0 0.0
    %5317 = vmatprep.subr.mxu0 0.0
    %5318 = vmatpush2.msra.mxu0 0.0
    %5319 = vmatprep.subr.mxu0 0.0
    %5320 = vmatpush2.msra.mxu0 0.0
    %5321 = vmatprep.subr.mxu0 0.0
    %5322 = vmatpush2.msra.mxu0 0.0
    %5323 = vmatprep.subr.mxu0 0.0
    %5324 = vmatpush2.msra.mxu0 0.0
    %5325 = vmatprep.subr.mxu0 0.0
    %5326 = vmatpush2.msra.mxu0 0.0
    %5327 = vmatprep.subr.mxu0 0.0
    %5328 = vmatpush2.msra.mxu0 0.0
    %5329 = vmatprep.mubr.f32.mxu0 0.0
    %5330 = vmatmul.mubr.f32.gmra.mxu0 %v5123
    %v5331 = vpop.f32.mrf.mxu0
    %v5332 = vadd.f32 %v517, %v5331
    %v5333 = vpop.f32.mrf.mxu0
    %5334 = vdwg.mxu0
    %v5336 = vsel %vm525, %v4878, 0
    %5338 = vmatprep.subr.mxu0 0.0
    %5339 = vmatpush1.msra.mxu0 0.0
    %5340 = vmatprep.subr.mxu0 0.0
    %5341 = vmatpush1.msra.mxu0 0.0
    %5342 = vmatprep.subr.mxu0 0.0
    %5343 = vmatpush1.msra.mxu0 0.0
    %5344 = vmatprep.subr.mxu0 0.0
    %5345 = vmatpush1.msra.mxu0 0.0
    %5346 = vmatprep.subr.mxu0 0.0
    %5347 = vmatpush1.msra.mxu0 0.0
    %5348 = vmatprep.subr.mxu0 0.0
    %5349 = vmatpush1.msra.mxu0 0.0
    %5350 = vmatprep.subr.mxu0 0.0
    %5351 = vmatpush1.msra.mxu0 0.0
    %5352 = vmatprep.subr.mxu0 0.0
    %5353 = vmatpush1.msra.mxu0 0.0
    %5354 = vmatprep.subr.mxu0 0.0
    %5355 = vmatpush1.msra.mxu0 0.0
    %5356 = vmatprep.subr.mxu0 0.0
    %5357 = vmatpush1.msra.mxu0 0.0
    %5358 = vmatprep.subr.mxu0 0.0
    %5359 = vmatpush1.msra.mxu0 0.0
    %5360 = vmatprep.subr.mxu0 0.0
    %5361 = vmatpush1.msra.mxu0 0.0
    %5362 = vmatprep.subr.mxu0 0.0
    %5363 = vmatpush1.msra.mxu0 %v506
    %5364 = vmatprep.subr.mxu0 0.0
    %5365 = vmatpush1.msra.mxu0 %v505
    %5366 = vmatprep.subr.mxu0 0.0
    %5367 = vmatpush1.msra.mxu0 %v504
    %5368 = vmatprep.subr.mxu0 0.0
    %5369 = vmatpush1.msra.mxu0 %v503
    %5370 = vmatprep.subr.mxu0 0.0
    %5371 = vmatpush2.msra.mxu0 0.0
    %5372 = vmatprep.subr.mxu0 0.0
    %5373 = vmatpush2.msra.mxu0 0.0
    %5374 = vmatprep.subr.mxu0 0.0
    %5375 = vmatpush2.msra.mxu0 0.0
    %5376 = vmatprep.subr.mxu0 0.0
    %5377 = vmatpush2.msra.mxu0 0.0
    %5378 = vmatprep.subr.mxu0 0.0
    %5379 = vmatpush2.msra.mxu0 0.0
    %5380 = vmatprep.subr.mxu0 0.0
    %5381 = vmatpush2.msra.mxu0 0.0
    %5382 = vmatprep.subr.mxu0 0.0
    %5383 = vmatpush2.msra.mxu0 0.0
    %5384 = vmatprep.subr.mxu0 0.0
    %5385 = vmatpush2.msra.mxu0 0.0
    %5386 = vmatprep.subr.mxu0 0.0
    %5387 = vmatpush2.msra.mxu0 0.0
    %5388 = vmatprep.subr.mxu0 0.0
    %5389 = vmatpush2.msra.mxu0 0.0
    %5390 = vmatprep.subr.mxu0 0.0
    %5391 = vmatpush2.msra.mxu0 0.0
    %5392 = vmatprep.subr.mxu0 0.0
    %5393 = vmatpush2.msra.mxu0 0.0
    %5394 = vmatprep.subr.mxu0 0.0
    %5395 = vmatpush2.msra.mxu0 0.0
    %5396 = vmatprep.subr.mxu0 0.0
    %5397 = vmatpush2.msra.mxu0 0.0
    %5398 = vmatprep.subr.mxu0 0.0
    %5399 = vmatpush2.msra.mxu0 0.0
    %5400 = vmatprep.subr.mxu0 0.0
    %5401 = vmatpush2.msra.mxu0 0.0
    %5402 = vmatprep.mubr.f32.mxu0 0.0
    %5403 = vmatmul.mubr.f32.gmra.mxu0 %v5336
    %v5404 = vpop.f32.mrf.mxu0
    %v5405 = vadd.f32 0.0, %v5404
    %v5406 = vpop.f32.mrf.mxu0
    %5407 = vdwg.mxu0
    %5408 = vmatprep.subr.mxu0 0.0
    %5409 = vmatpush1.msra.mxu0 0.0
    %5410 = vmatprep.subr.mxu0 0.0
    %5411 = vmatpush1.msra.mxu0 0.0
    %5412 = vmatprep.subr.mxu0 0.0
    %5413 = vmatpush1.msra.mxu0 0.0
    %5414 = vmatprep.subr.mxu0 0.0
    %5415 = vmatpush1.msra.mxu0 0.0
    %5416 = vmatprep.subr.mxu0 0.0
    %5417 = vmatpush1.msra.mxu0 0.0
    %5418 = vmatprep.subr.mxu0 0.0
    %5419 = vmatpush1.msra.mxu0 0.0
    %5420 = vmatprep.subr.mxu0 0.0
    %5421 = vmatpush1.msra.mxu0 0.0
    %5422 = vmatprep.subr.mxu0 0.0
    %5423 = vmatpush1.msra.mxu0 0.0
    %5424 = vmatprep.subr.mxu0 0.0
    %5425 = vmatpush1.msra.mxu0 0.0
    %5426 = vmatprep.subr.mxu0 0.0
    %5427 = vmatpush1.msra.mxu0 0.0
    %5428 = vmatprep.subr.mxu0 0.0
    %5429 = vmatpush1.msra.mxu0 0.0
    %5430 = vmatprep.subr.mxu0 0.0
    %5431 = vmatpush1.msra.mxu0 0.0
    %5432 = vmatprep.subr.mxu0 0.0
    %5433 = vmatpush1.msra.mxu0 %v510
    %5434 = vmatprep.subr.mxu0 0.0
    %5435 = vmatpush1.msra.mxu0 %v509
    %5436 = vmatprep.subr.mxu0 0.0
    %5437 = vmatpush1.msra.mxu0 %v508
    %5438 = vmatprep.subr.mxu0 0.0
    %5439 = vmatpush1.msra.mxu0 %v507
    %5440 = vmatprep.subr.mxu0 0.0
    %5441 = vmatpush2.msra.mxu0 0.0
    %5442 = vmatprep.subr.mxu0 0.0
    %5443 = vmatpush2.msra.mxu0 0.0
    %5444 = vmatprep.subr.mxu0 0.0
    %5445 = vmatpush2.msra.mxu0 0.0
    %5446 = vmatprep.subr.mxu0 0.0
    %5447 = vmatpush2.msra.mxu0 0.0
    %5448 = vmatprep.subr.mxu0 0.0
    %5449 = vmatpush2.msra.mxu0 0.0
    %5450 = vmatprep.subr.mxu0 0.0
    %5451 = vmatpush2.msra.mxu0 0.0
    %5452 = vmatprep.subr.mxu0 0.0
    %5453 = vmatpush2.msra.mxu0 0.0
    %5454 = vmatprep.subr.mxu0 0.0
    %5455 = vmatpush2.msra.mxu0 0.0
    %5456 = vmatprep.subr.mxu0 0.0
    %5457 = vmatpush2.msra.mxu0 0.0
    %5458 = vmatprep.subr.mxu0 0.0
    %5459 = vmatpush2.msra.mxu0 0.0
    %5460 = vmatprep.subr.mxu0 0.0
    %5461 = vmatpush2.msra.mxu0 0.0
    %5462 = vmatprep.subr.mxu0 0.0
    %5463 = vmatpush2.msra.mxu0 0.0
    %5464 = vmatprep.subr.mxu0 0.0
    %5465 = vmatpush2.msra.mxu0 0.0
    %5466 = vmatprep.subr.mxu0 0.0
    %5467 = vmatpush2.msra.mxu0 0.0
    %5468 = vmatprep.subr.mxu0 0.0
    %5469 = vmatpush2.msra.mxu0 0.0
    %5470 = vmatprep.subr.mxu0 0.0
    %5471 = vmatpush2.msra.mxu0 0.0
    %5472 = vmatprep.mubr.f32.mxu0 0.0
    %5473 = vmatmul.mubr.f32.gmra.mxu0 %v5336
    %v5474 = vpop.f32.mrf.mxu0
    %v5475 = vadd.f32 0.0, %v5474
    %v5476 = vpop.f32.mrf.mxu0
    %5477 = vdwg.mxu0
    %v5478 = vadd.f32 %v5192, %v5405
    %v5479 = vxor.u32 %v5478, 2147483648
    %v5480 = vmul.f32 %v5479, 1.442695
    %v5481 = vpow.pop %v5480
    %v5482 = vadd.f32 %v5481, 1.0
    %v5483 = vrcp.pop %v5482
    %v5484 = vmul.f32 1.0, %v5483
    %v5485 = vadd.f32 %v5262, %v5475
    %v5486 = vxor.u32 %v5485, 2147483648
    %v5487 = vmul.f32 %v5486, 1.442695
    %v5488 = vpow.pop %v5487
    %v5489 = vadd.f32 %v5488, 1.0
    %v5490 = vrcp.pop %v5489
    %v5491 = vmul.f32 1.0, %v5490
    %5492 = vmatprep.subr.mxu0 0.0
    %5493 = vmatpush1.msra.mxu0 0.0
    %5494 = vmatprep.subr.mxu0 0.0
    %5495 = vmatpush1.msra.mxu0 0.0
    %5496 = vmatprep.subr.mxu0 0.0
    %5497 = vmatpush1.msra.mxu0 0.0
    %5498 = vmatprep.subr.mxu0 0.0
    %5499 = vmatpush1.msra.mxu0 0.0
    %5500 = vmatprep.subr.mxu0 0.0
    %5501 = vmatpush1.msra.mxu0 0.0
    %5502 = vmatprep.subr.mxu0 0.0
    %5503 = vmatpush1.msra.mxu0 0.0
    %5504 = vmatprep.subr.mxu0 0.0
    %5505 = vmatpush1.msra.mxu0 0.0
    %5506 = vmatprep.subr.mxu0 0.0
    %5507 = vmatpush1.msra.mxu0 0.0
    %5508 = vmatprep.subr.mxu0 0.0
    %5509 = vmatpush1.msra.mxu0 0.0
    %5510 = vmatprep.subr.mxu0 0.0
    %5511 = vmatpush1.msra.mxu0 0.0
    %5512 = vmatprep.subr.mxu0 0.0
    %5513 = vmatpush1.msra.mxu0 0.0
    %5514 = vmatprep.subr.mxu0 0.0
    %5515 = vmatpush1.msra.mxu0 0.0
    %5516 = vmatprep.subr.mxu0 0.0
    %5517 = vmatpush1.msra.mxu0 %v514
    %5518 = vmatprep.subr.mxu0 0.0
    %5519 = vmatpush1.msra.mxu0 %v513
    %5520 = vmatprep.subr.mxu0 0.0
    %5521 = vmatpush1.msra.mxu0 %v512
    %5522 = vmatprep.subr.mxu0 0.0
    %5523 = vmatpush1.msra.mxu0 %v511
    %5524 = vmatprep.subr.mxu0 0.0
    %5525 = vmatpush2.msra.mxu0 0.0
    %5526 = vmatprep.subr.mxu0 0.0
    %5527 = vmatpush2.msra.mxu0 0.0
    %5528 = vmatprep.subr.mxu0 0.0
    %5529 = vmatpush2.msra.mxu0 0.0
    %5530 = vmatprep.subr.mxu0 0.0
    %5531 = vmatpush2.msra.mxu0 0.0
    %5532 = vmatprep.subr.mxu0 0.0
    %5533 = vmatpush2.msra.mxu0 0.0
    %5534 = vmatprep.subr.mxu0 0.0
    %5535 = vmatpush2.msra.mxu0 0.0
    %5536 = vmatprep.subr.mxu0 0.0
    %5537 = vmatpush2.msra.mxu0 0.0
    %5538 = vmatprep.subr.mxu0 0.0
    %5539 = vmatpush2.msra.mxu0 0.0
    %5540 = vmatprep.subr.mxu0 0.0
    %5541 = vmatpush2.msra.mxu0 0.0
    %5542 = vmatprep.subr.mxu0 0.0
    %5543 = vmatpush2.msra.mxu0 0.0
    %5544 = vmatprep.subr.mxu0 0.0
    %5545 = vmatpush2.msra.mxu0 0.0
    %5546 = vmatprep.subr.mxu0 0.0
    %5547 = vmatpush2.msra.mxu0 0.0
    %5548 = vmatprep.subr.mxu0 0.0
    %5549 = vmatpush2.msra.mxu0 0.0
    %5550 = vmatprep.subr.mxu0 0.0
    %5551 = vmatpush2.msra.mxu0 0.0
    %5552 = vmatprep.subr.mxu0 0.0
    %5553 = vmatpush2.msra.mxu0 0.0
    %5554 = vmatprep.subr.mxu0 0.0
    %5555 = vmatpush2.msra.mxu0 0.0
    %5556 = vmatprep.mubr.f32.mxu0 0.0
    %5557 = vmatmul.mubr.f32.gmra.mxu0 %v5336
    %v5558 = vpop.f32.mrf.mxu0
    %v5559 = vadd.f32 %v518, %v5558
    %v5560 = vpop.f32.mrf.mxu0
    %5561 = vdwg.mxu0
    %v5562 = vmul.f32 %v5484, %v5559
    %v5563 = vadd.f32 %v5332, %v5562
    %v5564 = vtanh.pop %v5563
    %v5565 = vsub.f32 1.0, %v5491
    %v5566 = vmul.f32 %v5565, %v5564
    %v5567 = vmul.f32 %v5491, %v4878
    %v5568 = vadd.f32 %v5566, %v5567
    %5569 = vmatprep.subr.mxu0 0.0
    %5570 = vmatpush1.msra.mxu0 0.0
    %5571 = vmatprep.subr.mxu0 0.0
    %5572 = vmatpush1.msra.mxu0 0.0
    %5573 = vmatprep.subr.mxu0 0.0
    %5574 = vmatpush1.msra.mxu0 0.0
    %5575 = vmatprep.subr.mxu0 0.0
    %5576 = vmatpush1.msra.mxu0 0.0
    %5577 = vmatprep.subr.mxu0 0.0
    %5578 = vmatpush1.msra.mxu0 0.0
    %5579 = vmatprep.subr.mxu0 0.0
    %5580 = vmatpush1.msra.mxu0 0.0
    %5581 = vmatprep.subr.mxu0 0.0
    %5582 = vmatpush1.msra.mxu0 0.0
    %5583 = vmatprep.subr.mxu0 0.0
    %5584 = vmatpush1.msra.mxu0 0.0
    %5585 = vmatprep.subr.mxu0 0.0
    %5586 = vmatpush1.msra.mxu0 0.0
    %5587 = vmatprep.subr.mxu0 0.0
    %5588 = vmatpush1.msra.mxu0 0.0
    %5589 = vmatprep.subr.mxu0 0.0
    %5590 = vmatpush1.msra.mxu0 0.0
    %5591 = vmatprep.subr.mxu0 0.0
    %5592 = vmatpush1.msra.mxu0 0.0
    %5593 = vmatprep.subr.mxu0 0.0
    %5594 = vmatpush1.msra.mxu0 %v478
    %5595 = vmatprep.subr.mxu0 0.0
    %5596 = vmatpush1.msra.mxu0 %v477
    %5597 = vmatprep.subr.mxu0 0.0
    %5598 = vmatpush1.msra.mxu0 %v476
    %5599 = vmatprep.subr.mxu0 0.0
    %5600 = vmatpush1.msra.mxu0 %v475
    %5601 = vmatprep.subr.mxu0 0.0
    %5602 = vmatpush2.msra.mxu0 0.0
    %5603 = vmatprep.subr.mxu0 0.0
    %5604 = vmatpush2.msra.mxu0 0.0
    %5605 = vmatprep.subr.mxu0 0.0
    %5606 = vmatpush2.msra.mxu0 0.0
    %5607 = vmatprep.subr.mxu0 0.0
    %5608 = vmatpush2.msra.mxu0 0.0
    %5609 = vmatprep.subr.mxu0 0.0
    %5610 = vmatpush2.msra.mxu0 0.0
    %5611 = vmatprep.subr.mxu0 0.0
    %5612 = vmatpush2.msra.mxu0 0.0
    %5613 = vmatprep.subr.mxu0 0.0
    %5614 = vmatpush2.msra.mxu0 0.0
    %5615 = vmatprep.subr.mxu0 0.0
    %5616 = vmatpush2.msra.mxu0 0.0
    %5617 = vmatprep.subr.mxu0 0.0
    %5618 = vmatpush2.msra.mxu0 0.0
    %5619 = vmatprep.subr.mxu0 0.0
    %5620 = vmatpush2.msra.mxu0 0.0
    %5621 = vmatprep.subr.mxu0 0.0
    %5622 = vmatpush2.msra.mxu0 0.0
    %5623 = vmatprep.subr.mxu0 0.0
    %5624 = vmatpush2.msra.mxu0 0.0
    %5625 = vmatprep.subr.mxu0 0.0
    %5626 = vmatpush2.msra.mxu0 0.0
    %5627 = vmatprep.subr.mxu0 0.0
    %5628 = vmatpush2.msra.mxu0 0.0
    %5629 = vmatprep.subr.mxu0 0.0
    %5630 = vmatpush2.msra.mxu0 0.0
    %5631 = vmatprep.subr.mxu0 0.0
    %5632 = vmatpush2.msra.mxu0 0.0
    %5633 = vmatprep.mubr.f32.mxu0 0.0
    %5634 = vmatmul.mubr.f32.gmra.mxu0 %v5123
    %v5635 = vpop.f32.mrf.mxu0
    %v5636 = vadd.f32 0.0, %v5635
    %v5637 = vpop.f32.mrf.mxu0
    %5638 = vdwg.mxu0
    %5639 = vmatprep.subr.mxu0 0.0
    %5640 = vmatpush1.msra.mxu0 0.0
    %5641 = vmatprep.subr.mxu0 0.0
    %5642 = vmatpush1.msra.mxu0 0.0
    %5643 = vmatprep.subr.mxu0 0.0
    %5644 = vmatpush1.msra.mxu0 0.0
    %5645 = vmatprep.subr.mxu0 0.0
    %5646 = vmatpush1.msra.mxu0 0.0
    %5647 = vmatprep.subr.mxu0 0.0
    %5648 = vmatpush1.msra.mxu0 0.0
    %5649 = vmatprep.subr.mxu0 0.0
    %5650 = vmatpush1.msra.mxu0 0.0
    %5651 = vmatprep.subr.mxu0 0.0
    %5652 = vmatpush1.msra.mxu0 0.0
    %5653 = vmatprep.subr.mxu0 0.0
    %5654 = vmatpush1.msra.mxu0 0.0
    %5655 = vmatprep.subr.mxu0 0.0
    %5656 = vmatpush1.msra.mxu0 0.0
    %5657 = vmatprep.subr.mxu0 0.0
    %5658 = vmatpush1.msra.mxu0 0.0
    %5659 = vmatprep.subr.mxu0 0.0
    %5660 = vmatpush1.msra.mxu0 0.0
    %5661 = vmatprep.subr.mxu0 0.0
    %5662 = vmatpush1.msra.mxu0 0.0
    %5663 = vmatprep.subr.mxu0 0.0
    %5664 = vmatpush1.msra.mxu0 %v482
    %5665 = vmatprep.subr.mxu0 0.0
    %5666 = vmatpush1.msra.mxu0 %v481
    %5667 = vmatprep.subr.mxu0 0.0
    %5668 = vmatpush1.msra.mxu0 %v480
    %5669 = vmatprep.subr.mxu0 0.0
    %5670 = vmatpush1.msra.mxu0 %v479
    %5671 = vmatprep.subr.mxu0 0.0
    %5672 = vmatpush2.msra.mxu0 0.0
    %5673 = vmatprep.subr.mxu0 0.0
    %5674 = vmatpush2.msra.mxu0 0.0
    %5675 = vmatprep.subr.mxu0 0.0
    %5676 = vmatpush2.msra.mxu0 0.0
    %5677 = vmatprep.subr.mxu0 0.0
    %5678 = vmatpush2.msra.mxu0 0.0
    %5679 = vmatprep.subr.mxu0 0.0
    %5680 = vmatpush2.msra.mxu0 0.0
    %5681 = vmatprep.subr.mxu0 0.0
    %5682 = vmatpush2.msra.mxu0 0.0
    %5683 = vmatprep.subr.mxu0 0.0
    %5684 = vmatpush2.msra.mxu0 0.0
    %5685 = vmatprep.subr.mxu0 0.0
    %5686 = vmatpush2.msra.mxu0 0.0
    %5687 = vmatprep.subr.mxu0 0.0
    %5688 = vmatpush2.msra.mxu0 0.0
    %5689 = vmatprep.subr.mxu0 0.0
    %5690 = vmatpush2.msra.mxu0 0.0
    %5691 = vmatprep.subr.mxu0 0.0
    %5692 = vmatpush2.msra.mxu0 0.0
    %5693 = vmatprep.subr.mxu0 0.0
    %5694 = vmatpush2.msra.mxu0 0.0
    %5695 = vmatprep.subr.mxu0 0.0
    %5696 = vmatpush2.msra.mxu0 0.0
    %5697 = vmatprep.subr.mxu0 0.0
    %5698 = vmatpush2.msra.mxu0 0.0
    %5699 = vmatprep.subr.mxu0 0.0
    %5700 = vmatpush2.msra.mxu0 0.0
    %5701 = vmatprep.subr.mxu0 0.0
    %5702 = vmatpush2.msra.mxu0 0.0
    %5703 = vmatprep.mubr.f32.mxu0 0.0
    %5704 = vmatmul.mubr.f32.gmra.mxu0 %v5123
    %v5705 = vpop.f32.mrf.mxu0
    %v5706 = vadd.f32 0.0, %v5705
    %v5707 = vpop.f32.mrf.mxu0
    %5708 = vdwg.mxu0
    %v5710 = vrot.slane %v5636, 1
    %v5712 = vadd.f32 %v596, %v5710
    %v5713 = vxor.u32 %v5712, 2147483648
    %v5714 = vmul.f32 %v5713, 1.442695
    %v5715 = vpow.pop %v5714
    %v5716 = vadd.f32 %v5715, 1.0
    %v5717 = vrcp.pop %v5716
    %v5718 = vmul.f32 1.0, %v5717
    %v5720 = vrot.slane %v5706, 1
    %v5722 = vadd.f32 %v672, %v5720
    %v5723 = vxor.u32 %v5722, 2147483648
    %v5724 = vmul.f32 %v5723, 1.442695
    %v5725 = vpow.pop %v5724
    %v5726 = vadd.f32 %v5725, 1.0
    %v5727 = vrcp.pop %v5726
    %v5728 = vmul.f32 1.0, %v5727
    %5729 = vmatprep.subr.mxu0 0.0
    %5730 = vmatpush1.msra.mxu0 0.0
    %5731 = vmatprep.subr.mxu0 0.0
    %5732 = vmatpush1.msra.mxu0 0.0
    %5733 = vmatprep.subr.mxu0 0.0
    %5734 = vmatpush1.msra.mxu0 0.0
    %5735 = vmatprep.subr.mxu0 0.0
    %5736 = vmatpush1.msra.mxu0 0.0
    %5737 = vmatprep.subr.mxu0 0.0
    %5738 = vmatpush1.msra.mxu0 0.0
    %5739 = vmatprep.subr.mxu0 0.0
    %5740 = vmatpush1.msra.mxu0 0.0
    %5741 = vmatprep.subr.mxu0 0.0
    %5742 = vmatpush1.msra.mxu0 0.0
    %5743 = vmatprep.subr.mxu0 0.0
    %5744 = vmatpush1.msra.mxu0 0.0
    %5745 = vmatprep.subr.mxu0 0.0
    %5746 = vmatpush1.msra.mxu0 0.0
    %5747 = vmatprep.subr.mxu0 0.0
    %5748 = vmatpush1.msra.mxu0 0.0
    %5749 = vmatprep.subr.mxu0 0.0
    %5750 = vmatpush1.msra.mxu0 0.0
    %5751 = vmatprep.subr.mxu0 0.0
    %5752 = vmatpush1.msra.mxu0 0.0
    %5753 = vmatprep.subr.mxu0 0.0
    %5754 = vmatpush1.msra.mxu0 %v486
    %5755 = vmatprep.subr.mxu0 0.0
    %5756 = vmatpush1.msra.mxu0 %v485
    %5757 = vmatprep.subr.mxu0 0.0
    %5758 = vmatpush1.msra.mxu0 %v484
    %5759 = vmatprep.subr.mxu0 0.0
    %5760 = vmatpush1.msra.mxu0 %v483
    %5761 = vmatprep.subr.mxu0 0.0
    %5762 = vmatpush2.msra.mxu0 0.0
    %5763 = vmatprep.subr.mxu0 0.0
    %5764 = vmatpush2.msra.mxu0 0.0
    %5765 = vmatprep.subr.mxu0 0.0
    %5766 = vmatpush2.msra.mxu0 0.0
    %5767 = vmatprep.subr.mxu0 0.0
    %5768 = vmatpush2.msra.mxu0 0.0
    %5769 = vmatprep.subr.mxu0 0.0
    %5770 = vmatpush2.msra.mxu0 0.0
    %5771 = vmatprep.subr.mxu0 0.0
    %5772 = vmatpush2.msra.mxu0 0.0
    %5773 = vmatprep.subr.mxu0 0.0
    %5774 = vmatpush2.msra.mxu0 0.0
    %5775 = vmatprep.subr.mxu0 0.0
    %5776 = vmatpush2.msra.mxu0 0.0
    %5777 = vmatprep.subr.mxu0 0.0
    %5778 = vmatpush2.msra.mxu0 0.0
    %5779 = vmatprep.subr.mxu0 0.0
    %5780 = vmatpush2.msra.mxu0 0.0
    %5781 = vmatprep.subr.mxu0 0.0
    %5782 = vmatpush2.msra.mxu0 0.0
    %5783 = vmatprep.subr.mxu0 0.0
    %5784 = vmatpush2.msra.mxu0 0.0
    %5785 = vmatprep.subr.mxu0 0.0
    %5786 = vmatpush2.msra.mxu0 0.0
    %5787 = vmatprep.subr.mxu0 0.0
    %5788 = vmatpush2.msra.mxu0 0.0
    %5789 = vmatprep.subr.mxu0 0.0
    %5790 = vmatpush2.msra.mxu0 0.0
    %5791 = vmatprep.subr.mxu0 0.0
    %5792 = vmatpush2.msra.mxu0 0.0
    %5793 = vmatprep.mubr.f32.mxu0 0.0
    %5794 = vmatmul.mubr.f32.gmra.mxu0 %v5123
    %v5795 = vpop.f32.mrf.mxu0
    %v5796 = vadd.f32 %v490, %v5795
    %v5797 = vpop.f32.mrf.mxu0
    %5798 = vdwg.mxu0
    %v5800 = vrot.slane %v5796, 1
    %v5802 = vmul.f32 %v5718, %v5800
    %v5803 = vadd.f32 %v748, %v5802
    %v5804 = vtanh.pop %v5803
    %v5805 = vsub.f32 1.0, %v5728
    %v5806 = vmul.f32 %v5805, %v5804
    %v5807 = vrot.slane %v5120, 7
    %v5809 = vmul.f32 %v5728, %v5807
    %v5810 = vadd.f32 %v5806, %v5809
    %v5812 = vrot.slane %v5810, 7
    %v5813 = vsel %vm525, %v5812, 0
    %5815 = vmatprep.subr.mxu0 0.0
    %5816 = vmatpush1.msra.mxu0 0.0
    %5817 = vmatprep.subr.mxu0 0.0
    %5818 = vmatpush1.msra.mxu0 0.0
    %5819 = vmatprep.subr.mxu0 0.0
    %5820 = vmatpush1.msra.mxu0 0.0
    %5821 = vmatprep.subr.mxu0 0.0
    %5822 = vmatpush1.msra.mxu0 0.0
    %5823 = vmatprep.subr.mxu0 0.0
    %5824 = vmatpush1.msra.mxu0 0.0
    %5825 = vmatprep.subr.mxu0 0.0
    %5826 = vmatpush1.msra.mxu0 0.0
    %5827 = vmatprep.subr.mxu0 0.0
    %5828 = vmatpush1.msra.mxu0 0.0
    %5829 = vmatprep.subr.mxu0 0.0
    %5830 = vmatpush1.msra.mxu0 0.0
    %5831 = vmatprep.subr.mxu0 0.0
    %5832 = vmatpush1.msra.mxu0 0.0
    %5833 = vmatprep.subr.mxu0 0.0
    %5834 = vmatpush1.msra.mxu0 0.0
    %5835 = vmatprep.subr.mxu0 0.0
    %5836 = vmatpush1.msra.mxu0 0.0
    %5837 = vmatprep.subr.mxu0 0.0
    %5838 = vmatpush1.msra.mxu0 0.0
    %5839 = vmatprep.subr.mxu0 0.0
    %5840 = vmatpush1.msra.mxu0 %v494
    %5841 = vmatprep.subr.mxu0 0.0
    %5842 = vmatpush1.msra.mxu0 %v493
    %5843 = vmatprep.subr.mxu0 0.0
    %5844 = vmatpush1.msra.mxu0 %v492
    %5845 = vmatprep.subr.mxu0 0.0
    %5846 = vmatpush1.msra.mxu0 %v491
    %5847 = vmatprep.subr.mxu0 0.0
    %5848 = vmatpush2.msra.mxu0 0.0
    %5849 = vmatprep.subr.mxu0 0.0
    %5850 = vmatpush2.msra.mxu0 0.0
    %5851 = vmatprep.subr.mxu0 0.0
    %5852 = vmatpush2.msra.mxu0 0.0
    %5853 = vmatprep.subr.mxu0 0.0
    %5854 = vmatpush2.msra.mxu0 0.0
    %5855 = vmatprep.subr.mxu0 0.0
    %5856 = vmatpush2.msra.mxu0 0.0
    %5857 = vmatprep.subr.mxu0 0.0
    %5858 = vmatpush2.msra.mxu0 0.0
    %5859 = vmatprep.subr.mxu0 0.0
    %5860 = vmatpush2.msra.mxu0 0.0
    %5861 = vmatprep.subr.mxu0 0.0
    %5862 = vmatpush2.msra.mxu0 0.0
    %5863 = vmatprep.subr.mxu0 0.0
    %5864 = vmatpush2.msra.mxu0 0.0
    %5865 = vmatprep.subr.mxu0 0.0
    %5866 = vmatpush2.msra.mxu0 0.0
    %5867 = vmatprep.subr.mxu0 0.0
    %5868 = vmatpush2.msra.mxu0 0.0
    %5869 = vmatprep.subr.mxu0 0.0
    %5870 = vmatpush2.msra.mxu0 0.0
    %5871 = vmatprep.subr.mxu0 0.0
    %5872 = vmatpush2.msra.mxu0 0.0
    %5873 = vmatprep.subr.mxu0 0.0
    %5874 = vmatpush2.msra.mxu0 0.0
    %5875 = vmatprep.subr.mxu0 0.0
    %5876 = vmatpush2.msra.mxu0 0.0
    %5877 = vmatprep.subr.mxu0 0.0
    %5878 = vmatpush2.msra.mxu0 0.0
    %5879 = vmatprep.mubr.f32.mxu0 0.0
    %5880 = vmatmul.mubr.f32.gmra.mxu0 %v5813
    %v5881 = vpop.f32.mrf.mxu0
    %v5882 = vadd.f32 %v515, %v5881
    %v5883 = vpop.f32.mrf.mxu0
    %5884 = vdwg.mxu0
    %5885 = vmatprep.subr.mxu0 0.0
    %5886 = vmatpush1.msra.mxu0 0.0
    %5887 = vmatprep.subr.mxu0 0.0
    %5888 = vmatpush1.msra.mxu0 0.0
    %5889 = vmatprep.subr.mxu0 0.0
    %5890 = vmatpush1.msra.mxu0 0.0
    %5891 = vmatprep.subr.mxu0 0.0
    %5892 = vmatpush1.msra.mxu0 0.0
    %5893 = vmatprep.subr.mxu0 0.0
    %5894 = vmatpush1.msra.mxu0 0.0
    %5895 = vmatprep.subr.mxu0 0.0
    %5896 = vmatpush1.msra.mxu0 0.0
    %5897 = vmatprep.subr.mxu0 0.0
    %5898 = vmatpush1.msra.mxu0 0.0
    %5899 = vmatprep.subr.mxu0 0.0
    %5900 = vmatpush1.msra.mxu0 0.0
    %5901 = vmatprep.subr.mxu0 0.0
    %5902 = vmatpush1.msra.mxu0 0.0
    %5903 = vmatprep.subr.mxu0 0.0
    %5904 = vmatpush1.msra.mxu0 0.0
    %5905 = vmatprep.subr.mxu0 0.0
    %5906 = vmatpush1.msra.mxu0 0.0
    %5907 = vmatprep.subr.mxu0 0.0
    %5908 = vmatpush1.msra.mxu0 0.0
    %5909 = vmatprep.subr.mxu0 0.0
    %5910 = vmatpush1.msra.mxu0 %v498
    %5911 = vmatprep.subr.mxu0 0.0
    %5912 = vmatpush1.msra.mxu0 %v497
    %5913 = vmatprep.subr.mxu0 0.0
    %5914 = vmatpush1.msra.mxu0 %v496
    %5915 = vmatprep.subr.mxu0 0.0
    %5916 = vmatpush1.msra.mxu0 %v495
    %5917 = vmatprep.subr.mxu0 0.0
    %5918 = vmatpush2.msra.mxu0 0.0
    %5919 = vmatprep.subr.mxu0 0.0
    %5920 = vmatpush2.msra.mxu0 0.0
    %5921 = vmatprep.subr.mxu0 0.0
    %5922 = vmatpush2.msra.mxu0 0.0
    %5923 = vmatprep.subr.mxu0 0.0
    %5924 = vmatpush2.msra.mxu0 0.0
    %5925 = vmatprep.subr.mxu0 0.0
    %5926 = vmatpush2.msra.mxu0 0.0
    %5927 = vmatprep.subr.mxu0 0.0
    %5928 = vmatpush2.msra.mxu0 0.0
    %5929 = vmatprep.subr.mxu0 0.0
    %5930 = vmatpush2.msra.mxu0 0.0
    %5931 = vmatprep.subr.mxu0 0.0
    %5932 = vmatpush2.msra.mxu0 0.0
    %5933 = vmatprep.subr.mxu0 0.0
    %5934 = vmatpush2.msra.mxu0 0.0
    %5935 = vmatprep.subr.mxu0 0.0
    %5936 = vmatpush2.msra.mxu0 0.0
    %5937 = vmatprep.subr.mxu0 0.0
    %5938 = vmatpush2.msra.mxu0 0.0
    %5939 = vmatprep.subr.mxu0 0.0
    %5940 = vmatpush2.msra.mxu0 0.0
    %5941 = vmatprep.subr.mxu0 0.0
    %5942 = vmatpush2.msra.mxu0 0.0
    %5943 = vmatprep.subr.mxu0 0.0
    %5944 = vmatpush2.msra.mxu0 0.0
    %5945 = vmatprep.subr.mxu0 0.0
    %5946 = vmatpush2.msra.mxu0 0.0
    %5947 = vmatprep.subr.mxu0 0.0
    %5948 = vmatpush2.msra.mxu0 0.0
    %5949 = vmatprep.mubr.f32.mxu0 0.0
    %5950 = vmatmul.mubr.f32.gmra.mxu0 %v5813
    %v5951 = vpop.f32.mrf.mxu0
    %v5952 = vadd.f32 %v516, %v5951
    %v5953 = vpop.f32.mrf.mxu0
    %5954 = vdwg.mxu0
    %5955 = vmatprep.subr.mxu0 0.0
    %5956 = vmatpush1.msra.mxu0 0.0
    %5957 = vmatprep.subr.mxu0 0.0
    %5958 = vmatpush1.msra.mxu0 0.0
    %5959 = vmatprep.subr.mxu0 0.0
    %5960 = vmatpush1.msra.mxu0 0.0
    %5961 = vmatprep.subr.mxu0 0.0
    %5962 = vmatpush1.msra.mxu0 0.0
    %5963 = vmatprep.subr.mxu0 0.0
    %5964 = vmatpush1.msra.mxu0 0.0
    %5965 = vmatprep.subr.mxu0 0.0
    %5966 = vmatpush1.msra.mxu0 0.0
    %5967 = vmatprep.subr.mxu0 0.0
    %5968 = vmatpush1.msra.mxu0 0.0
    %5969 = vmatprep.subr.mxu0 0.0
    %5970 = vmatpush1.msra.mxu0 0.0
    %5971 = vmatprep.subr.mxu0 0.0
    %5972 = vmatpush1.msra.mxu0 0.0
    %5973 = vmatprep.subr.mxu0 0.0
    %5974 = vmatpush1.msra.mxu0 0.0
    %5975 = vmatprep.subr.mxu0 0.0
    %5976 = vmatpush1.msra.mxu0 0.0
    %5977 = vmatprep.subr.mxu0 0.0
    %5978 = vmatpush1.msra.mxu0 0.0
    %5979 = vmatprep.subr.mxu0 0.0
    %5980 = vmatpush1.msra.mxu0 %v502
    %5981 = vmatprep.subr.mxu0 0.0
    %5982 = vmatpush1.msra.mxu0 %v501
    %5983 = vmatprep.subr.mxu0 0.0
    %5984 = vmatpush1.msra.mxu0 %v500
    %5985 = vmatprep.subr.mxu0 0.0
    %5986 = vmatpush1.msra.mxu0 %v499
    %5987 = vmatprep.subr.mxu0 0.0
    %5988 = vmatpush2.msra.mxu0 0.0
    %5989 = vmatprep.subr.mxu0 0.0
    %5990 = vmatpush2.msra.mxu0 0.0
    %5991 = vmatprep.subr.mxu0 0.0
    %5992 = vmatpush2.msra.mxu0 0.0
    %5993 = vmatprep.subr.mxu0 0.0
    %5994 = vmatpush2.msra.mxu0 0.0
    %5995 = vmatprep.subr.mxu0 0.0
    %5996 = vmatpush2.msra.mxu0 0.0
    %5997 = vmatprep.subr.mxu0 0.0
    %5998 = vmatpush2.msra.mxu0 0.0
    %5999 = vmatprep.subr.mxu0 0.0
    %6000 = vmatpush2.msra.mxu0 0.0
    %6001 = vmatprep.subr.mxu0 0.0
    %6002 = vmatpush2.msra.mxu0 0.0
    %6003 = vmatprep.subr.mxu0 0.0
    %6004 = vmatpush2.msra.mxu0 0.0
    %6005 = vmatprep.subr.mxu0 0.0
    %6006 = vmatpush2.msra.mxu0 0.0
    %6007 = vmatprep.subr.mxu0 0.0
    %6008 = vmatpush2.msra.mxu0 0.0
    %6009 = vmatprep.subr.mxu0 0.0
    %6010 = vmatpush2.msra.mxu0 0.0
    %6011 = vmatprep.subr.mxu0 0.0
    %6012 = vmatpush2.msra.mxu0 0.0
    %6013 = vmatprep.subr.mxu0 0.0
    %6014 = vmatpush2.msra.mxu0 0.0
    %6015 = vmatprep.subr.mxu0 0.0
    %6016 = vmatpush2.msra.mxu0 0.0
    %6017 = vmatprep.subr.mxu0 0.0
    %6018 = vmatpush2.msra.mxu0 0.0
    %6019 = vmatprep.mubr.f32.mxu0 0.0
    %6020 = vmatmul.mubr.f32.gmra.mxu0 %v5813
    %v6021 = vpop.f32.mrf.mxu0
    %v6022 = vadd.f32 %v517, %v6021
    %v6023 = vpop.f32.mrf.mxu0
    %6024 = vdwg.mxu0
    %v6026 = vsel %vm525, %v5568, 0
    %6028 = vmatprep.subr.mxu0 0.0
    %6029 = vmatpush1.msra.mxu0 0.0
    %6030 = vmatprep.subr.mxu0 0.0
    %6031 = vmatpush1.msra.mxu0 0.0
    %6032 = vmatprep.subr.mxu0 0.0
    %6033 = vmatpush1.msra.mxu0 0.0
    %6034 = vmatprep.subr.mxu0 0.0
    %6035 = vmatpush1.msra.mxu0 0.0
    %6036 = vmatprep.subr.mxu0 0.0
    %6037 = vmatpush1.msra.mxu0 0.0
    %6038 = vmatprep.subr.mxu0 0.0
    %6039 = vmatpush1.msra.mxu0 0.0
    %6040 = vmatprep.subr.mxu0 0.0
    %6041 = vmatpush1.msra.mxu0 0.0
    %6042 = vmatprep.subr.mxu0 0.0
    %6043 = vmatpush1.msra.mxu0 0.0
    %6044 = vmatprep.subr.mxu0 0.0
    %6045 = vmatpush1.msra.mxu0 0.0
    %6046 = vmatprep.subr.mxu0 0.0
    %6047 = vmatpush1.msra.mxu0 0.0
    %6048 = vmatprep.subr.mxu0 0.0
    %6049 = vmatpush1.msra.mxu0 0.0
    %6050 = vmatprep.subr.mxu0 0.0
    %6051 = vmatpush1.msra.mxu0 0.0
    %6052 = vmatprep.subr.mxu0 0.0
    %6053 = vmatpush1.msra.mxu0 %v506
    %6054 = vmatprep.subr.mxu0 0.0
    %6055 = vmatpush1.msra.mxu0 %v505
    %6056 = vmatprep.subr.mxu0 0.0
    %6057 = vmatpush1.msra.mxu0 %v504
    %6058 = vmatprep.subr.mxu0 0.0
    %6059 = vmatpush1.msra.mxu0 %v503
    %6060 = vmatprep.subr.mxu0 0.0
    %6061 = vmatpush2.msra.mxu0 0.0
    %6062 = vmatprep.subr.mxu0 0.0
    %6063 = vmatpush2.msra.mxu0 0.0
    %6064 = vmatprep.subr.mxu0 0.0
    %6065 = vmatpush2.msra.mxu0 0.0
    %6066 = vmatprep.subr.mxu0 0.0
    %6067 = vmatpush2.msra.mxu0 0.0
    %6068 = vmatprep.subr.mxu0 0.0
    %6069 = vmatpush2.msra.mxu0 0.0
    %6070 = vmatprep.subr.mxu0 0.0
    %6071 = vmatpush2.msra.mxu0 0.0
    %6072 = vmatprep.subr.mxu0 0.0
    %6073 = vmatpush2.msra.mxu0 0.0
    %6074 = vmatprep.subr.mxu0 0.0
    %6075 = vmatpush2.msra.mxu0 0.0
    %6076 = vmatprep.subr.mxu0 0.0
    %6077 = vmatpush2.msra.mxu0 0.0
    %6078 = vmatprep.subr.mxu0 0.0
    %6079 = vmatpush2.msra.mxu0 0.0
    %6080 = vmatprep.subr.mxu0 0.0
    %6081 = vmatpush2.msra.mxu0 0.0
    %6082 = vmatprep.subr.mxu0 0.0
    %6083 = vmatpush2.msra.mxu0 0.0
    %6084 = vmatprep.subr.mxu0 0.0
    %6085 = vmatpush2.msra.mxu0 0.0
    %6086 = vmatprep.subr.mxu0 0.0
    %6087 = vmatpush2.msra.mxu0 0.0
    %6088 = vmatprep.subr.mxu0 0.0
    %6089 = vmatpush2.msra.mxu0 0.0
    %6090 = vmatprep.subr.mxu0 0.0
    %6091 = vmatpush2.msra.mxu0 0.0
    %6092 = vmatprep.mubr.f32.mxu0 0.0
    %6093 = vmatmul.mubr.f32.gmra.mxu0 %v6026
    %v6094 = vpop.f32.mrf.mxu0
    %v6095 = vadd.f32 0.0, %v6094
    %v6096 = vpop.f32.mrf.mxu0
    %6097 = vdwg.mxu0
    %6098 = vmatprep.subr.mxu0 0.0
    %6099 = vmatpush1.msra.mxu0 0.0
    %6100 = vmatprep.subr.mxu0 0.0
    %6101 = vmatpush1.msra.mxu0 0.0
    %6102 = vmatprep.subr.mxu0 0.0
    %6103 = vmatpush1.msra.mxu0 0.0
    %6104 = vmatprep.subr.mxu0 0.0
    %6105 = vmatpush1.msra.mxu0 0.0
    %6106 = vmatprep.subr.mxu0 0.0
    %6107 = vmatpush1.msra.mxu0 0.0
    %6108 = vmatprep.subr.mxu0 0.0
    %6109 = vmatpush1.msra.mxu0 0.0
    %6110 = vmatprep.subr.mxu0 0.0
    %6111 = vmatpush1.msra.mxu0 0.0
    %6112 = vmatprep.subr.mxu0 0.0
    %6113 = vmatpush1.msra.mxu0 0.0
    %6114 = vmatprep.subr.mxu0 0.0
    %6115 = vmatpush1.msra.mxu0 0.0
    %6116 = vmatprep.subr.mxu0 0.0
    %6117 = vmatpush1.msra.mxu0 0.0
    %6118 = vmatprep.subr.mxu0 0.0
    %6119 = vmatpush1.msra.mxu0 0.0
    %6120 = vmatprep.subr.mxu0 0.0
    %6121 = vmatpush1.msra.mxu0 0.0
    %6122 = vmatprep.subr.mxu0 0.0
    %6123 = vmatpush1.msra.mxu0 %v510
    %6124 = vmatprep.subr.mxu0 0.0
    %6125 = vmatpush1.msra.mxu0 %v509
    %6126 = vmatprep.subr.mxu0 0.0
    %6127 = vmatpush1.msra.mxu0 %v508
    %6128 = vmatprep.subr.mxu0 0.0
    %6129 = vmatpush1.msra.mxu0 %v507
    %6130 = vmatprep.subr.mxu0 0.0
    %6131 = vmatpush2.msra.mxu0 0.0
    %6132 = vmatprep.subr.mxu0 0.0
    %6133 = vmatpush2.msra.mxu0 0.0
    %6134 = vmatprep.subr.mxu0 0.0
    %6135 = vmatpush2.msra.mxu0 0.0
    %6136 = vmatprep.subr.mxu0 0.0
    %6137 = vmatpush2.msra.mxu0 0.0
    %6138 = vmatprep.subr.mxu0 0.0
    %6139 = vmatpush2.msra.mxu0 0.0
    %6140 = vmatprep.subr.mxu0 0.0
    %6141 = vmatpush2.msra.mxu0 0.0
    %6142 = vmatprep.subr.mxu0 0.0
    %6143 = vmatpush2.msra.mxu0 0.0
    %6144 = vmatprep.subr.mxu0 0.0
    %6145 = vmatpush2.msra.mxu0 0.0
    %6146 = vmatprep.subr.mxu0 0.0
    %6147 = vmatpush2.msra.mxu0 0.0
    %6148 = vmatprep.subr.mxu0 0.0
    %6149 = vmatpush2.msra.mxu0 0.0
    %6150 = vmatprep.subr.mxu0 0.0
    %6151 = vmatpush2.msra.mxu0 0.0
    %6152 = vmatprep.subr.mxu0 0.0
    %6153 = vmatpush2.msra.mxu0 0.0
    %6154 = vmatprep.subr.mxu0 0.0
    %6155 = vmatpush2.msra.mxu0 0.0
    %6156 = vmatprep.subr.mxu0 0.0
    %6157 = vmatpush2.msra.mxu0 0.0
    %6158 = vmatprep.subr.mxu0 0.0
    %6159 = vmatpush2.msra.mxu0 0.0
    %6160 = vmatprep.subr.mxu0 0.0
    %6161 = vmatpush2.msra.mxu0 0.0
    %6162 = vmatprep.mubr.f32.mxu0 0.0
    %6163 = vmatmul.mubr.f32.gmra.mxu0 %v6026
    %v6164 = vpop.f32.mrf.mxu0
    %v6165 = vadd.f32 0.0, %v6164
    %v6166 = vpop.f32.mrf.mxu0
    %6167 = vdwg.mxu0
    %v6168 = vadd.f32 %v5882, %v6095
    %v6169 = vxor.u32 %v6168, 2147483648
    %v6170 = vmul.f32 %v6169, 1.442695
    %v6171 = vpow.pop %v6170
    %v6172 = vadd.f32 %v6171, 1.0
    %v6173 = vrcp.pop %v6172
    %v6174 = vmul.f32 1.0, %v6173
    %v6175 = vadd.f32 %v5952, %v6165
    %v6176 = vxor.u32 %v6175, 2147483648
    %v6177 = vmul.f32 %v6176, 1.442695
    %v6178 = vpow.pop %v6177
    %v6179 = vadd.f32 %v6178, 1.0
    %v6180 = vrcp.pop %v6179
    %v6181 = vmul.f32 1.0, %v6180
    %6182 = vmatprep.subr.mxu0 0.0
    %6183 = vmatpush1.msra.mxu0 0.0
    %6184 = vmatprep.subr.mxu0 0.0
    %6185 = vmatpush1.msra.mxu0 0.0
    %6186 = vmatprep.subr.mxu0 0.0
    %6187 = vmatpush1.msra.mxu0 0.0
    %6188 = vmatprep.subr.mxu0 0.0
    %6189 = vmatpush1.msra.mxu0 0.0
    %6190 = vmatprep.subr.mxu0 0.0
    %6191 = vmatpush1.msra.mxu0 0.0
    %6192 = vmatprep.subr.mxu0 0.0
    %6193 = vmatpush1.msra.mxu0 0.0
    %6194 = vmatprep.subr.mxu0 0.0
    %6195 = vmatpush1.msra.mxu0 0.0
    %6196 = vmatprep.subr.mxu0 0.0
    %6197 = vmatpush1.msra.mxu0 0.0
    %6198 = vmatprep.subr.mxu0 0.0
    %6199 = vmatpush1.msra.mxu0 0.0
    %6200 = vmatprep.subr.mxu0 0.0
    %6201 = vmatpush1.msra.mxu0 0.0
    %6202 = vmatprep.subr.mxu0 0.0
    %6203 = vmatpush1.msra.mxu0 0.0
    %6204 = vmatprep.subr.mxu0 0.0
    %6205 = vmatpush1.msra.mxu0 0.0
    %6206 = vmatprep.subr.mxu0 0.0
    %6207 = vmatpush1.msra.mxu0 %v514
    %6208 = vmatprep.subr.mxu0 0.0
    %6209 = vmatpush1.msra.mxu0 %v513
    %6210 = vmatprep.subr.mxu0 0.0
    %6211 = vmatpush1.msra.mxu0 %v512
    %6212 = vmatprep.subr.mxu0 0.0
    %6213 = vmatpush1.msra.mxu0 %v511
    %6214 = vmatprep.subr.mxu0 0.0
    %6215 = vmatpush2.msra.mxu0 0.0
    %6216 = vmatprep.subr.mxu0 0.0
    %6217 = vmatpush2.msra.mxu0 0.0
    %6218 = vmatprep.subr.mxu0 0.0
    %6219 = vmatpush2.msra.mxu0 0.0
    %6220 = vmatprep.subr.mxu0 0.0
    %6221 = vmatpush2.msra.mxu0 0.0
    %6222 = vmatprep.subr.mxu0 0.0
    %6223 = vmatpush2.msra.mxu0 0.0
    %6224 = vmatprep.subr.mxu0 0.0
    %6225 = vmatpush2.msra.mxu0 0.0
    %6226 = vmatprep.subr.mxu0 0.0
    %6227 = vmatpush2.msra.mxu0 0.0
    %6228 = vmatprep.subr.mxu0 0.0
    %6229 = vmatpush2.msra.mxu0 0.0
    %6230 = vmatprep.subr.mxu0 0.0
    %6231 = vmatpush2.msra.mxu0 0.0
    %6232 = vmatprep.subr.mxu0 0.0
    %6233 = vmatpush2.msra.mxu0 0.0
    %6234 = vmatprep.subr.mxu0 0.0
    %6235 = vmatpush2.msra.mxu0 0.0
    %6236 = vmatprep.subr.mxu0 0.0
    %6237 = vmatpush2.msra.mxu0 0.0
    %6238 = vmatprep.subr.mxu0 0.0
    %6239 = vmatpush2.msra.mxu0 0.0
    %6240 = vmatprep.subr.mxu0 0.0
    %6241 = vmatpush2.msra.mxu0 0.0
    %6242 = vmatprep.subr.mxu0 0.0
    %6243 = vmatpush2.msra.mxu0 0.0
    %6244 = vmatprep.subr.mxu0 0.0
    %6245 = vmatpush2.msra.mxu0 0.0
    %6246 = vmatprep.mubr.f32.mxu0 0.0
    %6247 = vmatmul.mubr.f32.gmra.mxu0 %v6026
    %v6248 = vpop.f32.mrf.mxu0
    %v6249 = vadd.f32 %v518, %v6248
    %v6250 = vpop.f32.mrf.mxu0
    %6251 = vdwg.mxu0
    %v6252 = vmul.f32 %v6174, %v6249
    %v6253 = vadd.f32 %v6022, %v6252
    %v6254 = vtanh.pop %v6253
    %v6255 = vsub.f32 1.0, %v6181
    %v6256 = vmul.f32 %v6255, %v6254
    %v6257 = vmul.f32 %v6181, %v5568
    %v6258 = vadd.f32 %v6256, %v6257
    %v6259 = vrot.slane %v2118, 7
    %v6261 = vrot.slane %v2808, 6
    %v6263 = vrot.slane %v3498, 5
    %v6265 = vrot.slane %v4188, 4
    %v6267 = vrot.slane %v4878, 3
    %v6269 = vrot.slane %v5568, 2
    %v6272 = vrot.slane %v6258, 1
    %vm6274 = vcmask 1040384
    %v6275 = vsel %vm6274, %v1428, %v6259
    %vm6276 = vcmask 1041408
    %v6277 = vsel %vm6276, %v6275, %v6261
    %vm6278 = vcmask 1042432
    %v6279 = vsel %vm6278, %v6277, %v6263
    %vm6280 = vcmask 1043456
    %v6281 = vsel %vm6280, %v6279, %v6265
    %vm6282 = vcmask 1044480
    %v6283 = vsel %vm6282, %v6281, %v6267
    %vm6284 = vcmask 1045504
    %v6285 = vsel %vm6284, %v6283, %v6269
    %vm6286 = vcmask 1046528
    %v6287 = vsel %vm6286, %v6285, %v6272
    %6288 = vst.msk [vmem:[#allocation31] sm:$0xff] %vm525, %v6287
    %v6289 = vld [vmem:[%s5] sm:$0xff]
    %v6290 = vld [vmem:[%s5 + $0x8] sm:$0xff]
    %v6291 = vld [vmem:[%s5 + $0x10] sm:$0xff]
    %v6292 = vld [vmem:[%s5 + $0x18] sm:$0xff]
    %v6293 = vld [vmem:[%s5 + $0x20] sm:$0xff]
    %v6294 = vld [vmem:[%s5 + $0x28] sm:$0xff]
    %6295 = vset.pattern.permute.xlu0 0
    %6296 = vperm.xlu0 %6295, %v6289
    %v6297 = vpop.permute.xlu0 %6296
    %6298 = vset.pattern.permute.xlu0 0
    %6299 = vperm.xlu0 %6298, %v6290
    %v6300 = vpop.permute.xlu0 %6299
    %6301 = vset.pattern.permute.xlu0 0
    %6302 = vperm.xlu0 %6301, %v6291
    %v6303 = vpop.permute.xlu0 %6302
    %6304 = vset.pattern.permute.xlu0 0
    %6305 = vperm.xlu0 %6304, %v6292
    %v6306 = vpop.permute.xlu0 %6305
    %6307 = vset.pattern.permute.xlu0 0
    %6308 = vperm.xlu0 %6307, %v6293
    %v6309 = vpop.permute.xlu0 %6308
    %6310 = vset.pattern.permute.xlu0 0
    %6311 = vperm.xlu0 %6310, %v6294
    %v6312 = vpop.permute.xlu0 %6311
    %vm6313 = vcmp.eq.s32.totalorder %v6297, %v383
    %vm6314 = vcmp.eq.s32.totalorder %v6300, %v383
    %vm6315 = vcmp.eq.s32.totalorder %v6303, %v383
    %vm6316 = vcmp.eq.s32.totalorder %v6306, %v383
    %vm6317 = vcmp.eq.s32.totalorder %v6309, %v383
    %vm6318 = vcmp.eq.s32.totalorder %v6312, %v383
    %v6319 = vsel %vm6313, 1.0, 0.0
    %v6320 = vsel %vm6314, 1.0, 0.0
    %v6321 = vsel %vm6315, 1.0, 0.0
    %v6322 = vsel %vm6316, 1.0, 0.0
    %v6323 = vsel %vm6317, 1.0, 0.0
    %v6324 = vsel %vm6318, 1.0, 0.0
    %v6326 = vsel %vm389, %v6319, 0
    %v6329 = vsel %vm389, %v6320, 0
    %v6332 = vsel %vm389, %v6321, 0
    %v6335 = vsel %vm389, %v6322, 0
    %v6338 = vsel %vm389, %v6323, 0
    %v6341 = vsel %vm389, %v6324, 0
    %6343 = vmatprep.subr.mxu0 0.0
    %6344 = vmatpush1.msra.mxu0 0.0
    %6345 = vmatprep.subr.mxu0 0.0
    %6346 = vmatpush1.msra.mxu0 0.0
    %6347 = vmatprep.subr.mxu0 0.0
    %6348 = vmatpush1.msra.mxu0 0.0
    %6349 = vmatprep.subr.mxu0 0.0
    %6350 = vmatpush1.msra.mxu0 0.0
    %6351 = vmatprep.subr.mxu0 0.0
    %6352 = vmatpush1.msra.mxu0 0.0
    %6353 = vmatprep.subr.mxu0 0.0
    %6354 = vmatpush1.msra.mxu0 0.0
    %6355 = vmatprep.subr.mxu0 0.0
    %6356 = vmatpush1.msra.mxu0 0.0
    %6357 = vmatprep.subr.mxu0 0.0
    %6358 = vmatpush1.msra.mxu0 0.0
    %6359 = vmatprep.subr.mxu0 0.0
    %6360 = vmatpush1.msra.mxu0 %v380
    %6361 = vmatprep.subr.mxu0 0.0
    %6362 = vmatpush1.msra.mxu0 %v379
    %6363 = vmatprep.subr.mxu0 0.0
    %6364 = vmatpush1.msra.mxu0 %v378
    %6365 = vmatprep.subr.mxu0 0.0
    %6366 = vmatpush1.msra.mxu0 %v377
    %6367 = vmatprep.subr.mxu0 0.0
    %6368 = vmatpush1.msra.mxu0 %v376
    %6369 = vmatprep.subr.mxu0 0.0
    %6370 = vmatpush1.msra.mxu0 %v375
    %6371 = vmatprep.subr.mxu0 0.0
    %6372 = vmatpush1.msra.mxu0 %v374
    %6373 = vmatprep.subr.mxu0 0.0
    %6374 = vmatpush1.msra.mxu0 %v373
    %6375 = vmatprep.subr.mxu0 0.0
    %6376 = vmatpush2.msra.mxu0 0.0
    %6377 = vmatprep.subr.mxu0 0.0
    %6378 = vmatpush2.msra.mxu0 0.0
    %6379 = vmatprep.subr.mxu0 0.0
    %6380 = vmatpush2.msra.mxu0 0.0
    %6381 = vmatprep.subr.mxu0 0.0
    %6382 = vmatpush2.msra.mxu0 0.0
    %6383 = vmatprep.subr.mxu0 0.0
    %6384 = vmatpush2.msra.mxu0 0.0
    %6385 = vmatprep.subr.mxu0 0.0
    %6386 = vmatpush2.msra.mxu0 0.0
    %6387 = vmatprep.subr.mxu0 0.0
    %6388 = vmatpush2.msra.mxu0 0.0
    %6389 = vmatprep.subr.mxu0 0.0
    %6390 = vmatpush2.msra.mxu0 0.0
    %6391 = vmatprep.subr.mxu0 0.0
    %6392 = vmatpush2.msra.mxu0 0.0
    %6393 = vmatprep.subr.mxu0 0.0
    %6394 = vmatpush2.msra.mxu0 0.0
    %6395 = vmatprep.subr.mxu0 0.0
    %6396 = vmatpush2.msra.mxu0 0.0
    %6397 = vmatprep.subr.mxu0 0.0
    %6398 = vmatpush2.msra.mxu0 0.0
    %6399 = vmatprep.subr.mxu0 0.0
    %6400 = vmatpush2.msra.mxu0 0.0
    %6401 = vmatprep.subr.mxu0 0.0
    %6402 = vmatpush2.msra.mxu0 0.0
    %6403 = vmatprep.subr.mxu0 0.0
    %6404 = vmatpush2.msra.mxu0 0.0
    %6405 = vmatprep.subr.mxu0 0.0
    %6406 = vmatpush2.msra.mxu0 0.0
    %6407 = vmatprep.mubr.f32.mxu0 0.0
    %6408 = vmatmul.mubr.f32.gmra.mxu0 %v6326
    %v6409 = vpop.f32.mrf.mxu0
    %v6410 = vadd.f32 0.0, %v6409
    %v6411 = vpop.f32.mrf.mxu0
    %6412 = vmatprep.mubr.f32.mxu0 0.0
    %6413 = vmatmul.mubr.f32.gmra.mxu0 %v6329
    %v6414 = vpop.f32.mrf.mxu0
    %v6415 = vadd.f32 0.0, %v6414
    %v6416 = vpop.f32.mrf.mxu0
    %6417 = vmatprep.mubr.f32.mxu0 0.0
    %6418 = vmatmul.mubr.f32.gmra.mxu0 %v6332
    %v6419 = vpop.f32.mrf.mxu0
    %v6420 = vadd.f32 0.0, %v6419
    %v6421 = vpop.f32.mrf.mxu0
    %6422 = vmatprep.mubr.f32.mxu0 0.0
    %6423 = vmatmul.mubr.f32.gmra.mxu0 %v6335
    %v6424 = vpop.f32.mrf.mxu0
    %v6425 = vadd.f32 0.0, %v6424
    %v6426 = vpop.f32.mrf.mxu0
    %6427 = vmatprep.mubr.f32.mxu0 0.0
    %6428 = vmatmul.mubr.f32.gmra.mxu0 %v6338
    %v6429 = vpop.f32.mrf.mxu0
    %v6430 = vadd.f32 0.0, %v6429
    %v6431 = vpop.f32.mrf.mxu0
    %6432 = vmatprep.mubr.f32.mxu0 0.0
    %6433 = vmatmul.mubr.f32.gmra.mxu0 %v6341
    %v6434 = vpop.f32.mrf.mxu0
    %v6435 = vadd.f32 0.0, %v6434
    %v6436 = vpop.f32.mrf.mxu0
    %6437 = vdwg.mxu0
    %v6438 = vld [vmem:[%s47] sm:$0xff]
    %v6439 = vld [vmem:[%s47 + $0x8] sm:$0xff]
    %v6440 = vld [vmem:[%s47 + $0x10] sm:$0xff]
    %v6441 = vld [vmem:[%s47 + $0x18] sm:$0xff]
    %v6442 = vld [vmem:[#allocation23] sm:$0xff]
    %v6443 = vld [vmem:[#allocation23 + $0x8] sm:$0xff]
    %v6444 = vld [vmem:[#allocation23 + $0x10] sm:$0xff]
    %v6445 = vld [vmem:[#allocation23 + $0x18] sm:$0xff]
    %v6446 = vld [vmem:[#allocation25] sm:$0xff]
    %v6447 = vld [vmem:[#allocation25 + $0x8] sm:$0xff]
    %v6448 = vld [vmem:[#allocation25 + $0x10] sm:$0xff]
    %v6449 = vld [vmem:[#allocation25 + $0x18] sm:$0xff]
    %v6450 = vld [vmem:[#allocation26] sm:$0xff]
    %v6451 = vld [vmem:[#allocation26 + $0x8] sm:$0xff]
    %v6452 = vld [vmem:[#allocation26 + $0x10] sm:$0xff]
    %v6453 = vld [vmem:[#allocation26 + $0x18] sm:$0xff]
    %v6454 = vld [vmem:[#allocation28] sm:$0xff]
    %v6455 = vld [vmem:[#allocation28 + $0x8] sm:$0xff]
    %v6456 = vld [vmem:[#allocation28 + $0x10] sm:$0xff]
    %v6457 = vld [vmem:[#allocation28 + $0x18] sm:$0xff]
    %v6458 = vld [vmem:[#allocation29] sm:$0xff]
    %v6459 = vld [vmem:[#allocation29 + $0x8] sm:$0xff]
    %v6460 = vld [vmem:[#allocation29 + $0x10] sm:$0xff]
    %v6461 = vld [vmem:[#allocation29 + $0x18] sm:$0xff]
    %v6462 = vld [vmem:[%s59] sm:$0x1]
    %v6463 = vld [vmem:[%s61] sm:$0x1]
    %v6464 = vld [vmem:[%s63] sm:$0x1]
    %v6465 = vld [vmem:[%s65] sm:$0x1]
    %v6467 = vlaneseq
    %v6468 = vshrl.u32 %v6467, 7
    %v6469 = vsub.s32 0, %v6468
    %v6470 = vrot.slane %v6462, %v6469
    %v6473 = vsel %vm525, %v6410, 0
    %v6476 = vsel %vm525, %v6415, 0
    %v6479 = vsel %vm525, %v6420, 0
    %v6482 = vsel %vm525, %v6425, 0
    %v6485 = vsel %vm525, %v6430, 0
    %v6488 = vsel %vm525, %v6435, 0
    %6490 = vmatprep.subr.mxu0 0.0
    %6491 = vmatpush1.msra.mxu0 0.0
    %6492 = vmatprep.subr.mxu0 0.0
    %6493 = vmatpush1.msra.mxu0 0.0
    %6494 = vmatprep.subr.mxu0 0.0
    %6495 = vmatpush1.msra.mxu0 0.0
    %6496 = vmatprep.subr.mxu0 0.0
    %6497 = vmatpush1.msra.mxu0 0.0
    %6498 = vmatprep.subr.mxu0 0.0
    %6499 = vmatpush1.msra.mxu0 0.0
    %6500 = vmatprep.subr.mxu0 0.0
    %6501 = vmatpush1.msra.mxu0 0.0
    %6502 = vmatprep.subr.mxu0 0.0
    %6503 = vmatpush1.msra.mxu0 0.0
    %6504 = vmatprep.subr.mxu0 0.0
    %6505 = vmatpush1.msra.mxu0 0.0
    %6506 = vmatprep.subr.mxu0 0.0
    %6507 = vmatpush1.msra.mxu0 0.0
    %6508 = vmatprep.subr.mxu0 0.0
    %6509 = vmatpush1.msra.mxu0 0.0
    %6510 = vmatprep.subr.mxu0 0.0
    %6511 = vmatpush1.msra.mxu0 0.0
    %6512 = vmatprep.subr.mxu0 0.0
    %6513 = vmatpush1.msra.mxu0 0.0
    %6514 = vmatprep.subr.mxu0 0.0
    %6515 = vmatpush1.msra.mxu0 %v6441
    %6516 = vmatprep.subr.mxu0 0.0
    %6517 = vmatpush1.msra.mxu0 %v6440
    %6518 = vmatprep.subr.mxu0 0.0
    %6519 = vmatpush1.msra.mxu0 %v6439
    %6520 = vmatprep.subr.mxu0 0.0
    %6521 = vmatpush1.msra.mxu0 %v6438
    %6522 = vmatprep.subr.mxu0 0.0
    %6523 = vmatpush2.msra.mxu0 0.0
    %6524 = vmatprep.subr.mxu0 0.0
    %6525 = vmatpush2.msra.mxu0 0.0
    %6526 = vmatprep.subr.mxu0 0.0
    %6527 = vmatpush2.msra.mxu0 0.0
    %6528 = vmatprep.subr.mxu0 0.0
    %6529 = vmatpush2.msra.mxu0 0.0
    %6530 = vmatprep.subr.mxu0 0.0
    %6531 = vmatpush2.msra.mxu0 0.0
    %6532 = vmatprep.subr.mxu0 0.0
    %6533 = vmatpush2.msra.mxu0 0.0
    %6534 = vmatprep.subr.mxu0 0.0
    %6535 = vmatpush2.msra.mxu0 0.0
    %6536 = vmatprep.subr.mxu0 0.0
    %6537 = vmatpush2.msra.mxu0 0.0
    %6538 = vmatprep.subr.mxu0 0.0
    %6539 = vmatpush2.msra.mxu0 0.0
    %6540 = vmatprep.subr.mxu0 0.0
    %6541 = vmatpush2.msra.mxu0 0.0
    %6542 = vmatprep.subr.mxu0 0.0
    %6543 = vmatpush2.msra.mxu0 0.0
    %6544 = vmatprep.subr.mxu0 0.0
    %6545 = vmatpush2.msra.mxu0 0.0
    %6546 = vmatprep.subr.mxu0 0.0
    %6547 = vmatpush2.msra.mxu0 0.0
    %6548 = vmatprep.subr.mxu0 0.0
    %6549 = vmatpush2.msra.mxu0 0.0
    %6550 = vmatprep.subr.mxu0 0.0
    %6551 = vmatpush2.msra.mxu0 0.0
    %6552 = vmatprep.subr.mxu0 0.0
    %6553 = vmatpush2.msra.mxu0 0.0
    %6554 = vmatprep.mubr.f32.mxu0 0.0
    %6555 = vmatmul.mubr.f32.gmra.mxu0 %v6473
    %v6556 = vpop.f32.mrf.mxu0
    %v6557 = vadd.f32 %v6470, %v6556
    %v6558 = vpop.f32.mrf.mxu0
    %6559 = vmatprep.mubr.f32.mxu0 0.0
    %6560 = vmatmul.mubr.f32.gmra.mxu0 %v6476
    %v6561 = vpop.f32.mrf.mxu0
    %v6562 = vadd.f32 %v6470, %v6561
    %v6563 = vpop.f32.mrf.mxu0
    %6564 = vmatprep.mubr.f32.mxu0 0.0
    %6565 = vmatmul.mubr.f32.gmra.mxu0 %v6479
    %v6566 = vpop.f32.mrf.mxu0
    %v6567 = vadd.f32 %v6470, %v6566
    %v6568 = vpop.f32.mrf.mxu0
    %6569 = vmatprep.mubr.f32.mxu0 0.0
    %6570 = vmatmul.mubr.f32.gmra.mxu0 %v6482
    %v6571 = vpop.f32.mrf.mxu0
    %v6572 = vadd.f32 %v6470, %v6571
    %v6573 = vpop.f32.mrf.mxu0
    %6574 = vmatprep.mubr.f32.mxu0 0.0
    %6575 = vmatmul.mubr.f32.gmra.mxu0 %v6485
    %v6576 = vpop.f32.mrf.mxu0
    %v6577 = vadd.f32 %v6470, %v6576
    %v6578 = vpop.f32.mrf.mxu0
    %6579 = vmatprep.mubr.f32.mxu0 0.0
    %6580 = vmatmul.mubr.f32.gmra.mxu0 %v6488
    %v6581 = vpop.f32.mrf.mxu0
    %v6582 = vadd.f32 %v6470, %v6581
    %v6583 = vpop.f32.mrf.mxu0
    %6584 = vdwg.mxu0
    %v6586 = vlaneseq
    %v6587 = vshrl.u32 %v6586, 7
    %v6588 = vsub.s32 0, %v6587
    %v6589 = vrot.slane %v6463, %v6588
    %6591 = vmatprep.subr.mxu0 0.0
    %6592 = vmatpush1.msra.mxu0 0.0
    %6593 = vmatprep.subr.mxu0 0.0
    %6594 = vmatpush1.msra.mxu0 0.0
    %6595 = vmatprep.subr.mxu0 0.0
    %6596 = vmatpush1.msra.mxu0 0.0
    %6597 = vmatprep.subr.mxu0 0.0
    %6598 = vmatpush1.msra.mxu0 0.0
    %6599 = vmatprep.subr.mxu0 0.0
    %6600 = vmatpush1.msra.mxu0 0.0
    %6601 = vmatprep.subr.mxu0 0.0
    %6602 = vmatpush1.msra.mxu0 0.0
    %6603 = vmatprep.subr.mxu0 0.0
    %6604 = vmatpush1.msra.mxu0 0.0
    %6605 = vmatprep.subr.mxu0 0.0
    %6606 = vmatpush1.msra.mxu0 0.0
    %6607 = vmatprep.subr.mxu0 0.0
    %6608 = vmatpush1.msra.mxu0 0.0
    %6609 = vmatprep.subr.mxu0 0.0
    %6610 = vmatpush1.msra.mxu0 0.0
    %6611 = vmatprep.subr.mxu0 0.0
    %6612 = vmatpush1.msra.mxu0 0.0
    %6613 = vmatprep.subr.mxu0 0.0
    %6614 = vmatpush1.msra.mxu0 0.0
    %6615 = vmatprep.subr.mxu0 0.0
    %6616 = vmatpush1.msra.mxu0 %v6445
    %6617 = vmatprep.subr.mxu0 0.0
    %6618 = vmatpush1.msra.mxu0 %v6444
    %6619 = vmatprep.subr.mxu0 0.0
    %6620 = vmatpush1.msra.mxu0 %v6443
    %6621 = vmatprep.subr.mxu0 0.0
    %6622 = vmatpush1.msra.mxu0 %v6442
    %6623 = vmatprep.subr.mxu0 0.0
    %6624 = vmatpush2.msra.mxu0 0.0
    %6625 = vmatprep.subr.mxu0 0.0
    %6626 = vmatpush2.msra.mxu0 0.0
    %6627 = vmatprep.subr.mxu0 0.0
    %6628 = vmatpush2.msra.mxu0 0.0
    %6629 = vmatprep.subr.mxu0 0.0
    %6630 = vmatpush2.msra.mxu0 0.0
    %6631 = vmatprep.subr.mxu0 0.0
    %6632 = vmatpush2.msra.mxu0 0.0
    %6633 = vmatprep.subr.mxu0 0.0
    %6634 = vmatpush2.msra.mxu0 0.0
    %6635 = vmatprep.subr.mxu0 0.0
    %6636 = vmatpush2.msra.mxu0 0.0
    %6637 = vmatprep.subr.mxu0 0.0
    %6638 = vmatpush2.msra.mxu0 0.0
    %6639 = vmatprep.subr.mxu0 0.0
    %6640 = vmatpush2.msra.mxu0 0.0
    %6641 = vmatprep.subr.mxu0 0.0
    %6642 = vmatpush2.msra.mxu0 0.0
    %6643 = vmatprep.subr.mxu0 0.0
    %6644 = vmatpush2.msra.mxu0 0.0
    %6645 = vmatprep.subr.mxu0 0.0
    %6646 = vmatpush2.msra.mxu0 0.0
    %6647 = vmatprep.subr.mxu0 0.0
    %6648 = vmatpush2.msra.mxu0 0.0
    %6649 = vmatprep.subr.mxu0 0.0
    %6650 = vmatpush2.msra.mxu0 0.0
    %6651 = vmatprep.subr.mxu0 0.0
    %6652 = vmatpush2.msra.mxu0 0.0
    %6653 = vmatprep.subr.mxu0 0.0
    %6654 = vmatpush2.msra.mxu0 0.0
    %6655 = vmatprep.mubr.f32.mxu0 0.0
    %6656 = vmatmul.mubr.f32.gmra.mxu0 %v6473
    %v6657 = vpop.f32.mrf.mxu0
    %v6658 = vadd.f32 %v6589, %v6657
    %v6659 = vpop.f32.mrf.mxu0
    %6660 = vmatprep.mubr.f32.mxu0 0.0
    %6661 = vmatmul.mubr.f32.gmra.mxu0 %v6476
    %v6662 = vpop.f32.mrf.mxu0
    %v6663 = vadd.f32 %v6589, %v6662
    %v6664 = vpop.f32.mrf.mxu0
    %6665 = vmatprep.mubr.f32.mxu0 0.0
    %6666 = vmatmul.mubr.f32.gmra.mxu0 %v6479
    %v6667 = vpop.f32.mrf.mxu0
    %v6668 = vadd.f32 %v6589, %v6667
    %v6669 = vpop.f32.mrf.mxu0
    %6670 = vmatprep.mubr.f32.mxu0 0.0
    %6671 = vmatmul.mubr.f32.gmra.mxu0 %v6482
    %v6672 = vpop.f32.mrf.mxu0
    %v6673 = vadd.f32 %v6589, %v6672
    %v6674 = vpop.f32.mrf.mxu0
    %6675 = vmatprep.mubr.f32.mxu0 0.0
    %6676 = vmatmul.mubr.f32.gmra.mxu0 %v6485
    %v6677 = vpop.f32.mrf.mxu0
    %v6678 = vadd.f32 %v6589, %v6677
    %v6679 = vpop.f32.mrf.mxu0
    %6680 = vmatprep.mubr.f32.mxu0 0.0
    %6681 = vmatmul.mubr.f32.gmra.mxu0 %v6488
    %v6682 = vpop.f32.mrf.mxu0
    %v6683 = vadd.f32 %v6589, %v6682
    %v6684 = vpop.f32.mrf.mxu0
    %6685 = vdwg.mxu0
    %v6687 = vlaneseq
    %v6688 = vshrl.u32 %v6687, 7
    %v6689 = vsub.s32 0, %v6688
    %v6690 = vrot.slane %v6464, %v6689
    %6692 = vmatprep.subr.mxu0 0.0
    %6693 = vmatpush1.msra.mxu0 0.0
    %6694 = vmatprep.subr.mxu0 0.0
    %6695 = vmatpush1.msra.mxu0 0.0
    %6696 = vmatprep.subr.mxu0 0.0
    %6697 = vmatpush1.msra.mxu0 0.0
    %6698 = vmatprep.subr.mxu0 0.0
    %6699 = vmatpush1.msra.mxu0 0.0
    %6700 = vmatprep.subr.mxu0 0.0
    %6701 = vmatpush1.msra.mxu0 0.0
    %6702 = vmatprep.subr.mxu0 0.0
    %6703 = vmatpush1.msra.mxu0 0.0
    %6704 = vmatprep.subr.mxu0 0.0
    %6705 = vmatpush1.msra.mxu0 0.0
    %6706 = vmatprep.subr.mxu0 0.0
    %6707 = vmatpush1.msra.mxu0 0.0
    %6708 = vmatprep.subr.mxu0 0.0
    %6709 = vmatpush1.msra.mxu0 0.0
    %6710 = vmatprep.subr.mxu0 0.0
    %6711 = vmatpush1.msra.mxu0 0.0
    %6712 = vmatprep.subr.mxu0 0.0
    %6713 = vmatpush1.msra.mxu0 0.0
    %6714 = vmatprep.subr.mxu0 0.0
    %6715 = vmatpush1.msra.mxu0 0.0
    %6716 = vmatprep.subr.mxu0 0.0
    %6717 = vmatpush1.msra.mxu0 %v6449
    %6718 = vmatprep.subr.mxu0 0.0
    %6719 = vmatpush1.msra.mxu0 %v6448
    %6720 = vmatprep.subr.mxu0 0.0
    %6721 = vmatpush1.msra.mxu0 %v6447
    %6722 = vmatprep.subr.mxu0 0.0
    %6723 = vmatpush1.msra.mxu0 %v6446
    %6724 = vmatprep.subr.mxu0 0.0
    %6725 = vmatpush2.msra.mxu0 0.0
    %6726 = vmatprep.subr.mxu0 0.0
    %6727 = vmatpush2.msra.mxu0 0.0
    %6728 = vmatprep.subr.mxu0 0.0
    %6729 = vmatpush2.msra.mxu0 0.0
    %6730 = vmatprep.subr.mxu0 0.0
    %6731 = vmatpush2.msra.mxu0 0.0
    %6732 = vmatprep.subr.mxu0 0.0
    %6733 = vmatpush2.msra.mxu0 0.0
    %6734 = vmatprep.subr.mxu0 0.0
    %6735 = vmatpush2.msra.mxu0 0.0
    %6736 = vmatprep.subr.mxu0 0.0
    %6737 = vmatpush2.msra.mxu0 0.0
    %6738 = vmatprep.subr.mxu0 0.0
    %6739 = vmatpush2.msra.mxu0 0.0
    %6740 = vmatprep.subr.mxu0 0.0
    %6741 = vmatpush2.msra.mxu0 0.0
    %6742 = vmatprep.subr.mxu0 0.0
    %6743 = vmatpush2.msra.mxu0 0.0
    %6744 = vmatprep.subr.mxu0 0.0
    %6745 = vmatpush2.msra.mxu0 0.0
    %6746 = vmatprep.subr.mxu0 0.0
    %6747 = vmatpush2.msra.mxu0 0.0
    %6748 = vmatprep.subr.mxu0 0.0
    %6749 = vmatpush2.msra.mxu0 0.0
    %6750 = vmatprep.subr.mxu0 0.0
    %6751 = vmatpush2.msra.mxu0 0.0
    %6752 = vmatprep.subr.mxu0 0.0
    %6753 = vmatpush2.msra.mxu0 0.0
    %6754 = vmatprep.subr.mxu0 0.0
    %6755 = vmatpush2.msra.mxu0 0.0
    %6756 = vmatprep.mubr.f32.mxu0 0.0
    %6757 = vmatmul.mubr.f32.gmra.mxu0 %v6473
    %v6758 = vpop.f32.mrf.mxu0
    %v6759 = vadd.f32 %v6690, %v6758
    %v6760 = vpop.f32.mrf.mxu0
    %6761 = vmatprep.mubr.f32.mxu0 0.0
    %6762 = vmatmul.mubr.f32.gmra.mxu0 %v6476
    %v6763 = vpop.f32.mrf.mxu0
    %v6764 = vadd.f32 %v6690, %v6763
    %v6765 = vpop.f32.mrf.mxu0
    %6766 = vmatprep.mubr.f32.mxu0 0.0
    %6767 = vmatmul.mubr.f32.gmra.mxu0 %v6479
    %v6768 = vpop.f32.mrf.mxu0
    %v6769 = vadd.f32 %v6690, %v6768
    %v6770 = vpop.f32.mrf.mxu0
    %6771 = vmatprep.mubr.f32.mxu0 0.0
    %6772 = vmatmul.mubr.f32.gmra.mxu0 %v6482
    %v6773 = vpop.f32.mrf.mxu0
    %v6774 = vadd.f32 %v6690, %v6773
    %v6775 = vpop.f32.mrf.mxu0
    %6776 = vmatprep.mubr.f32.mxu0 0.0
    %6777 = vmatmul.mubr.f32.gmra.mxu0 %v6485
    %v6778 = vpop.f32.mrf.mxu0
    %v6779 = vadd.f32 %v6690, %v6778
    %v6780 = vpop.f32.mrf.mxu0
    %6781 = vmatprep.mubr.f32.mxu0 0.0
    %6782 = vmatmul.mubr.f32.gmra.mxu0 %v6488
    %v6783 = vpop.f32.mrf.mxu0
    %v6784 = vadd.f32 %v6690, %v6783
    %v6785 = vpop.f32.mrf.mxu0
    %6786 = vdwg.mxu0
    %v6788 = vlaneseq
    %v6789 = vshrl.u32 %v6788, 7
    %v6790 = vsub.s32 0, %v6789
    %v6791 = vrot.slane %v6465, %v6790
    %6793 = vmatprep.subr.mxu0 0.0
    %6794 = vmatpush1.msra.mxu0 0.0
    %6795 = vmatprep.subr.mxu0 0.0
    %6796 = vmatpush1.msra.mxu0 0.0
    %6797 = vmatprep.subr.mxu0 0.0
    %6798 = vmatpush1.msra.mxu0 0.0
    %6799 = vmatprep.subr.mxu0 0.0
    %6800 = vmatpush1.msra.mxu0 0.0
    %6801 = vmatprep.subr.mxu0 0.0
    %6802 = vmatpush1.msra.mxu0 0.0
    %6803 = vmatprep.subr.mxu0 0.0
    %6804 = vmatpush1.msra.mxu0 0.0
    %6805 = vmatprep.subr.mxu0 0.0
    %6806 = vmatpush1.msra.mxu0 0.0
    %6807 = vmatprep.subr.mxu0 0.0
    %6808 = vmatpush1.msra.mxu0 0.0
    %6809 = vmatprep.subr.mxu0 0.0
    %6810 = vmatpush1.msra.mxu0 0.0
    %6811 = vmatprep.subr.mxu0 0.0
    %6812 = vmatpush1.msra.mxu0 0.0
    %6813 = vmatprep.subr.mxu0 0.0
    %6814 = vmatpush1.msra.mxu0 0.0
    %6815 = vmatprep.subr.mxu0 0.0
    %6816 = vmatpush1.msra.mxu0 0.0
    %6817 = vmatprep.subr.mxu0 0.0
    %6818 = vmatpush1.msra.mxu0 %v6453
    %6819 = vmatprep.subr.mxu0 0.0
    %6820 = vmatpush1.msra.mxu0 %v6452
    %6821 = vmatprep.subr.mxu0 0.0
    %6822 = vmatpush1.msra.mxu0 %v6451
    %6823 = vmatprep.subr.mxu0 0.0
    %6824 = vmatpush1.msra.mxu0 %v6450
    %6825 = vmatprep.subr.mxu0 0.0
    %6826 = vmatpush2.msra.mxu0 0.0
    %6827 = vmatprep.subr.mxu0 0.0
    %6828 = vmatpush2.msra.mxu0 0.0
    %6829 = vmatprep.subr.mxu0 0.0
    %6830 = vmatpush2.msra.mxu0 0.0
    %6831 = vmatprep.subr.mxu0 0.0
    %6832 = vmatpush2.msra.mxu0 0.0
    %6833 = vmatprep.subr.mxu0 0.0
    %6834 = vmatpush2.msra.mxu0 0.0
    %6835 = vmatprep.subr.mxu0 0.0
    %6836 = vmatpush2.msra.mxu0 0.0
    %6837 = vmatprep.subr.mxu0 0.0
    %6838 = vmatpush2.msra.mxu0 0.0
    %6839 = vmatprep.subr.mxu0 0.0
    %6840 = vmatpush2.msra.mxu0 0.0
    %6841 = vmatprep.subr.mxu0 0.0
    %6842 = vmatpush2.msra.mxu0 0.0
    %6843 = vmatprep.subr.mxu0 0.0
    %6844 = vmatpush2.msra.mxu0 0.0
    %6845 = vmatprep.subr.mxu0 0.0
    %6846 = vmatpush2.msra.mxu0 0.0
    %6847 = vmatprep.subr.mxu0 0.0
    %6848 = vmatpush2.msra.mxu0 0.0
    %6849 = vmatprep.subr.mxu0 0.0
    %6850 = vmatpush2.msra.mxu0 0.0
    %6851 = vmatprep.subr.mxu0 0.0
    %6852 = vmatpush2.msra.mxu0 0.0
    %6853 = vmatprep.subr.mxu0 0.0
    %6854 = vmatpush2.msra.mxu0 0.0
    %6855 = vmatprep.subr.mxu0 0.0
    %6856 = vmatpush2.msra.mxu0 0.0
    %6857 = vmatprep.mubr.f32.mxu0 0.0
    %6858 = vmatmul.mubr.f32.gmra.mxu0 %v752
    %v6859 = vpop.f32.mrf.mxu0
    %v6860 = vadd.f32 0.0, %v6859
    %v6861 = vpop.f32.mrf.mxu0
    %6862 = vdwg.mxu0
    %6863 = vmatprep.subr.mxu0 0.0
    %6864 = vmatpush1.msra.mxu0 0.0
    %6865 = vmatprep.subr.mxu0 0.0
    %6866 = vmatpush1.msra.mxu0 0.0
    %6867 = vmatprep.subr.mxu0 0.0
    %6868 = vmatpush1.msra.mxu0 0.0
    %6869 = vmatprep.subr.mxu0 0.0
    %6870 = vmatpush1.msra.mxu0 0.0
    %6871 = vmatprep.subr.mxu0 0.0
    %6872 = vmatpush1.msra.mxu0 0.0
    %6873 = vmatprep.subr.mxu0 0.0
    %6874 = vmatpush1.msra.mxu0 0.0
    %6875 = vmatprep.subr.mxu0 0.0
    %6876 = vmatpush1.msra.mxu0 0.0
    %6877 = vmatprep.subr.mxu0 0.0
    %6878 = vmatpush1.msra.mxu0 0.0
    %6879 = vmatprep.subr.mxu0 0.0
    %6880 = vmatpush1.msra.mxu0 0.0
    %6881 = vmatprep.subr.mxu0 0.0
    %6882 = vmatpush1.msra.mxu0 0.0
    %6883 = vmatprep.subr.mxu0 0.0
    %6884 = vmatpush1.msra.mxu0 0.0
    %6885 = vmatprep.subr.mxu0 0.0
    %6886 = vmatpush1.msra.mxu0 0.0
    %6887 = vmatprep.subr.mxu0 0.0
    %6888 = vmatpush1.msra.mxu0 %v6457
    %6889 = vmatprep.subr.mxu0 0.0
    %6890 = vmatpush1.msra.mxu0 %v6456
    %6891 = vmatprep.subr.mxu0 0.0
    %6892 = vmatpush1.msra.mxu0 %v6455
    %6893 = vmatprep.subr.mxu0 0.0
    %6894 = vmatpush1.msra.mxu0 %v6454
    %6895 = vmatprep.subr.mxu0 0.0
    %6896 = vmatpush2.msra.mxu0 0.0
    %6897 = vmatprep.subr.mxu0 0.0
    %6898 = vmatpush2.msra.mxu0 0.0
    %6899 = vmatprep.subr.mxu0 0.0
    %6900 = vmatpush2.msra.mxu0 0.0
    %6901 = vmatprep.subr.mxu0 0.0
    %6902 = vmatpush2.msra.mxu0 0.0
    %6903 = vmatprep.subr.mxu0 0.0
    %6904 = vmatpush2.msra.mxu0 0.0
    %6905 = vmatprep.subr.mxu0 0.0
    %6906 = vmatpush2.msra.mxu0 0.0
    %6907 = vmatprep.subr.mxu0 0.0
    %6908 = vmatpush2.msra.mxu0 0.0
    %6909 = vmatprep.subr.mxu0 0.0
    %6910 = vmatpush2.msra.mxu0 0.0
    %6911 = vmatprep.subr.mxu0 0.0
    %6912 = vmatpush2.msra.mxu0 0.0
    %6913 = vmatprep.subr.mxu0 0.0
    %6914 = vmatpush2.msra.mxu0 0.0
    %6915 = vmatprep.subr.mxu0 0.0
    %6916 = vmatpush2.msra.mxu0 0.0
    %6917 = vmatprep.subr.mxu0 0.0
    %6918 = vmatpush2.msra.mxu0 0.0
    %6919 = vmatprep.subr.mxu0 0.0
    %6920 = vmatpush2.msra.mxu0 0.0
    %6921 = vmatprep.subr.mxu0 0.0
    %6922 = vmatpush2.msra.mxu0 0.0
    %6923 = vmatprep.subr.mxu0 0.0
    %6924 = vmatpush2.msra.mxu0 0.0
    %6925 = vmatprep.subr.mxu0 0.0
    %6926 = vmatpush2.msra.mxu0 0.0
    %6927 = vmatprep.mubr.f32.mxu0 0.0
    %6928 = vmatmul.mubr.f32.gmra.mxu0 %v752
    %v6929 = vpop.f32.mrf.mxu0
    %v6930 = vadd.f32 0.0, %v6929
    %v6931 = vpop.f32.mrf.mxu0
    %6932 = vdwg.mxu0
    %v6933 = vadd.f32 %v6557, %v6860
    %v6934 = vxor.u32 %v6933, 2147483648
    %v6935 = vmul.f32 %v6934, 1.442695
    %v6936 = vpow.pop %v6935
    %v6937 = vadd.f32 %v6936, 1.0
    %v6938 = vrcp.pop %v6937
    %v6939 = vmul.f32 1.0, %v6938
    %v6940 = vadd.f32 %v6658, %v6930
    %v6941 = vxor.u32 %v6940, 2147483648
    %v6942 = vmul.f32 %v6941, 1.442695
    %v6943 = vpow.pop %v6942
    %v6944 = vadd.f32 %v6943, 1.0
    %v6945 = vrcp.pop %v6944
    %v6946 = vmul.f32 1.0, %v6945
    %6947 = vmatprep.subr.mxu0 0.0
    %6948 = vmatpush1.msra.mxu0 0.0
    %6949 = vmatprep.subr.mxu0 0.0
    %6950 = vmatpush1.msra.mxu0 0.0
    %6951 = vmatprep.subr.mxu0 0.0
    %6952 = vmatpush1.msra.mxu0 0.0
    %6953 = vmatprep.subr.mxu0 0.0
    %6954 = vmatpush1.msra.mxu0 0.0
    %6955 = vmatprep.subr.mxu0 0.0
    %6956 = vmatpush1.msra.mxu0 0.0
    %6957 = vmatprep.subr.mxu0 0.0
    %6958 = vmatpush1.msra.mxu0 0.0
    %6959 = vmatprep.subr.mxu0 0.0
    %6960 = vmatpush1.msra.mxu0 0.0
    %6961 = vmatprep.subr.mxu0 0.0
    %6962 = vmatpush1.msra.mxu0 0.0
    %6963 = vmatprep.subr.mxu0 0.0
    %6964 = vmatpush1.msra.mxu0 0.0
    %6965 = vmatprep.subr.mxu0 0.0
    %6966 = vmatpush1.msra.mxu0 0.0
    %6967 = vmatprep.subr.mxu0 0.0
    %6968 = vmatpush1.msra.mxu0 0.0
    %6969 = vmatprep.subr.mxu0 0.0
    %6970 = vmatpush1.msra.mxu0 0.0
    %6971 = vmatprep.subr.mxu0 0.0
    %6972 = vmatpush1.msra.mxu0 %v6461
    %6973 = vmatprep.subr.mxu0 0.0
    %6974 = vmatpush1.msra.mxu0 %v6460
    %6975 = vmatprep.subr.mxu0 0.0
    %6976 = vmatpush1.msra.mxu0 %v6459
    %6977 = vmatprep.subr.mxu0 0.0
    %6978 = vmatpush1.msra.mxu0 %v6458
    %6979 = vmatprep.subr.mxu0 0.0
    %6980 = vmatpush2.msra.mxu0 0.0
    %6981 = vmatprep.subr.mxu0 0.0
    %6982 = vmatpush2.msra.mxu0 0.0
    %6983 = vmatprep.subr.mxu0 0.0
    %6984 = vmatpush2.msra.mxu0 0.0
    %6985 = vmatprep.subr.mxu0 0.0
    %6986 = vmatpush2.msra.mxu0 0.0
    %6987 = vmatprep.subr.mxu0 0.0
    %6988 = vmatpush2.msra.mxu0 0.0
    %6989 = vmatprep.subr.mxu0 0.0
    %6990 = vmatpush2.msra.mxu0 0.0
    %6991 = vmatprep.subr.mxu0 0.0
    %6992 = vmatpush2.msra.mxu0 0.0
    %6993 = vmatprep.subr.mxu0 0.0
    %6994 = vmatpush2.msra.mxu0 0.0
    %6995 = vmatprep.subr.mxu0 0.0
    %6996 = vmatpush2.msra.mxu0 0.0
    %6997 = vmatprep.subr.mxu0 0.0
    %6998 = vmatpush2.msra.mxu0 0.0
    %6999 = vmatprep.subr.mxu0 0.0
    %7000 = vmatpush2.msra.mxu0 0.0
    %7001 = vmatprep.subr.mxu0 0.0
    %7002 = vmatpush2.msra.mxu0 0.0
    %7003 = vmatprep.subr.mxu0 0.0
    %7004 = vmatpush2.msra.mxu0 0.0
    %7005 = vmatprep.subr.mxu0 0.0
    %7006 = vmatpush2.msra.mxu0 0.0
    %7007 = vmatprep.subr.mxu0 0.0
    %7008 = vmatpush2.msra.mxu0 0.0
    %7009 = vmatprep.subr.mxu0 0.0
    %7010 = vmatpush2.msra.mxu0 0.0
    %7011 = vmatprep.mubr.f32.mxu0 0.0
    %7012 = vmatmul.mubr.f32.gmra.mxu0 %v752
    %v7013 = vpop.f32.mrf.mxu0
    %v7014 = vadd.f32 %v6791, %v7013
    %v7015 = vpop.f32.mrf.mxu0
    %7016 = vdwg.mxu0
    %v7017 = vmul.f32 %v6939, %v7014
    %v7018 = vadd.f32 %v6759, %v7017
    %v7019 = vtanh.pop %v7018
    %v7020 = vsub.f32 1.0, %v6946
    %v7021 = vmul.f32 %v7020, %v7019
    %v7022 = vmul.f32 %v6946, 0.0
    %v7023 = vadd.f32 %v7021, %v7022
    %v7025 = vsel %vm525, %v7023, 0
    %7027 = vmatprep.subr.mxu0 0.0
    %7028 = vmatpush1.msra.mxu0 0.0
    %7029 = vmatprep.subr.mxu0 0.0
    %7030 = vmatpush1.msra.mxu0 0.0
    %7031 = vmatprep.subr.mxu0 0.0
    %7032 = vmatpush1.msra.mxu0 0.0
    %7033 = vmatprep.subr.mxu0 0.0
    %7034 = vmatpush1.msra.mxu0 0.0
    %7035 = vmatprep.subr.mxu0 0.0
    %7036 = vmatpush1.msra.mxu0 0.0
    %7037 = vmatprep.subr.mxu0 0.0
    %7038 = vmatpush1.msra.mxu0 0.0
    %7039 = vmatprep.subr.mxu0 0.0
    %7040 = vmatpush1.msra.mxu0 0.0
    %7041 = vmatprep.subr.mxu0 0.0
    %7042 = vmatpush1.msra.mxu0 0.0
    %7043 = vmatprep.subr.mxu0 0.0
    %7044 = vmatpush1.msra.mxu0 0.0
    %7045 = vmatprep.subr.mxu0 0.0
    %7046 = vmatpush1.msra.mxu0 0.0
    %7047 = vmatprep.subr.mxu0 0.0
    %7048 = vmatpush1.msra.mxu0 0.0
    %7049 = vmatprep.subr.mxu0 0.0
    %7050 = vmatpush1.msra.mxu0 0.0
    %7051 = vmatprep.subr.mxu0 0.0
    %7052 = vmatpush1.msra.mxu0 %v6453
    %7053 = vmatprep.subr.mxu0 0.0
    %7054 = vmatpush1.msra.mxu0 %v6452
    %7055 = vmatprep.subr.mxu0 0.0
    %7056 = vmatpush1.msra.mxu0 %v6451
    %7057 = vmatprep.subr.mxu0 0.0
    %7058 = vmatpush1.msra.mxu0 %v6450
    %7059 = vmatprep.subr.mxu0 0.0
    %7060 = vmatpush2.msra.mxu0 0.0
    %7061 = vmatprep.subr.mxu0 0.0
    %7062 = vmatpush2.msra.mxu0 0.0
    %7063 = vmatprep.subr.mxu0 0.0
    %7064 = vmatpush2.msra.mxu0 0.0
    %7065 = vmatprep.subr.mxu0 0.0
    %7066 = vmatpush2.msra.mxu0 0.0
    %7067 = vmatprep.subr.mxu0 0.0
    %7068 = vmatpush2.msra.mxu0 0.0
    %7069 = vmatprep.subr.mxu0 0.0
    %7070 = vmatpush2.msra.mxu0 0.0
    %7071 = vmatprep.subr.mxu0 0.0
    %7072 = vmatpush2.msra.mxu0 0.0
    %7073 = vmatprep.subr.mxu0 0.0
    %7074 = vmatpush2.msra.mxu0 0.0
    %7075 = vmatprep.subr.mxu0 0.0
    %7076 = vmatpush2.msra.mxu0 0.0
    %7077 = vmatprep.subr.mxu0 0.0
    %7078 = vmatpush2.msra.mxu0 0.0
    %7079 = vmatprep.subr.mxu0 0.0
    %7080 = vmatpush2.msra.mxu0 0.0
    %7081 = vmatprep.subr.mxu0 0.0
    %7082 = vmatpush2.msra.mxu0 0.0
    %7083 = vmatprep.subr.mxu0 0.0
    %7084 = vmatpush2.msra.mxu0 0.0
    %7085 = vmatprep.subr.mxu0 0.0
    %7086 = vmatpush2.msra.mxu0 0.0
    %7087 = vmatprep.subr.mxu0 0.0
    %7088 = vmatpush2.msra.mxu0 0.0
    %7089 = vmatprep.subr.mxu0 0.0
    %7090 = vmatpush2.msra.mxu0 0.0
    %7091 = vmatprep.mubr.f32.mxu0 0.0
    %7092 = vmatmul.mubr.f32.gmra.mxu0 %v7025
    %v7093 = vpop.f32.mrf.mxu0
    %v7094 = vadd.f32 0.0, %v7093
    %v7095 = vpop.f32.mrf.mxu0
    %7096 = vdwg.mxu0
    %7097 = vmatprep.subr.mxu0 0.0
    %7098 = vmatpush1.msra.mxu0 0.0
    %7099 = vmatprep.subr.mxu0 0.0
    %7100 = vmatpush1.msra.mxu0 0.0
    %7101 = vmatprep.subr.mxu0 0.0
    %7102 = vmatpush1.msra.mxu0 0.0
    %7103 = vmatprep.subr.mxu0 0.0
    %7104 = vmatpush1.msra.mxu0 0.0
    %7105 = vmatprep.subr.mxu0 0.0
    %7106 = vmatpush1.msra.mxu0 0.0
    %7107 = vmatprep.subr.mxu0 0.0
    %7108 = vmatpush1.msra.mxu0 0.0
    %7109 = vmatprep.subr.mxu0 0.0
    %7110 = vmatpush1.msra.mxu0 0.0
    %7111 = vmatprep.subr.mxu0 0.0
    %7112 = vmatpush1.msra.mxu0 0.0
    %7113 = vmatprep.subr.mxu0 0.0
    %7114 = vmatpush1.msra.mxu0 0.0
    %7115 = vmatprep.subr.mxu0 0.0
    %7116 = vmatpush1.msra.mxu0 0.0
    %7117 = vmatprep.subr.mxu0 0.0
    %7118 = vmatpush1.msra.mxu0 0.0
    %7119 = vmatprep.subr.mxu0 0.0
    %7120 = vmatpush1.msra.mxu0 0.0
    %7121 = vmatprep.subr.mxu0 0.0
    %7122 = vmatpush1.msra.mxu0 %v6457
    %7123 = vmatprep.subr.mxu0 0.0
    %7124 = vmatpush1.msra.mxu0 %v6456
    %7125 = vmatprep.subr.mxu0 0.0
    %7126 = vmatpush1.msra.mxu0 %v6455
    %7127 = vmatprep.subr.mxu0 0.0
    %7128 = vmatpush1.msra.mxu0 %v6454
    %7129 = vmatprep.subr.mxu0 0.0
    %7130 = vmatpush2.msra.mxu0 0.0
    %7131 = vmatprep.subr.mxu0 0.0
    %7132 = vmatpush2.msra.mxu0 0.0
    %7133 = vmatprep.subr.mxu0 0.0
    %7134 = vmatpush2.msra.mxu0 0.0
    %7135 = vmatprep.subr.mxu0 0.0
    %7136 = vmatpush2.msra.mxu0 0.0
    %7137 = vmatprep.subr.mxu0 0.0
    %7138 = vmatpush2.msra.mxu0 0.0
    %7139 = vmatprep.subr.mxu0 0.0
    %7140 = vmatpush2.msra.mxu0 0.0
    %7141 = vmatprep.subr.mxu0 0.0
    %7142 = vmatpush2.msra.mxu0 0.0
    %7143 = vmatprep.subr.mxu0 0.0
    %7144 = vmatpush2.msra.mxu0 0.0
    %7145 = vmatprep.subr.mxu0 0.0
    %7146 = vmatpush2.msra.mxu0 0.0
    %7147 = vmatprep.subr.mxu0 0.0
    %7148 = vmatpush2.msra.mxu0 0.0
    %7149 = vmatprep.subr.mxu0 0.0
    %7150 = vmatpush2.msra.mxu0 0.0
    %7151 = vmatprep.subr.mxu0 0.0
    %7152 = vmatpush2.msra.mxu0 0.0
    %7153 = vmatprep.subr.mxu0 0.0
    %7154 = vmatpush2.msra.mxu0 0.0
    %7155 = vmatprep.subr.mxu0 0.0
    %7156 = vmatpush2.msra.mxu0 0.0
    %7157 = vmatprep.subr.mxu0 0.0
    %7158 = vmatpush2.msra.mxu0 0.0
    %7159 = vmatprep.subr.mxu0 0.0
    %7160 = vmatpush2.msra.mxu0 0.0
    %7161 = vmatprep.mubr.f32.mxu0 0.0
    %7162 = vmatmul.mubr.f32.gmra.mxu0 %v7025
    %v7163 = vpop.f32.mrf.mxu0
    %v7164 = vadd.f32 0.0, %v7163
    %v7165 = vpop.f32.mrf.mxu0
    %7166 = vdwg.mxu0
    %v7167 = vadd.f32 %v6562, %v7094
    %v7168 = vxor.u32 %v7167, 2147483648
    %v7169 = vmul.f32 %v7168, 1.442695
    %v7170 = vpow.pop %v7169
    %v7171 = vadd.f32 %v7170, 1.0
    %v7172 = vrcp.pop %v7171
    %v7173 = vmul.f32 1.0, %v7172
    %v7174 = vadd.f32 %v6663, %v7164
    %v7175 = vxor.u32 %v7174, 2147483648
    %v7176 = vmul.f32 %v7175, 1.442695
    %v7177 = vpow.pop %v7176
    %v7178 = vadd.f32 %v7177, 1.0
    %v7179 = vrcp.pop %v7178
    %v7180 = vmul.f32 1.0, %v7179
    %7181 = vmatprep.subr.mxu0 0.0
    %7182 = vmatpush1.msra.mxu0 0.0
    %7183 = vmatprep.subr.mxu0 0.0
    %7184 = vmatpush1.msra.mxu0 0.0
    %7185 = vmatprep.subr.mxu0 0.0
    %7186 = vmatpush1.msra.mxu0 0.0
    %7187 = vmatprep.subr.mxu0 0.0
    %7188 = vmatpush1.msra.mxu0 0.0
    %7189 = vmatprep.subr.mxu0 0.0
    %7190 = vmatpush1.msra.mxu0 0.0
    %7191 = vmatprep.subr.mxu0 0.0
    %7192 = vmatpush1.msra.mxu0 0.0
    %7193 = vmatprep.subr.mxu0 0.0
    %7194 = vmatpush1.msra.mxu0 0.0
    %7195 = vmatprep.subr.mxu0 0.0
    %7196 = vmatpush1.msra.mxu0 0.0
    %7197 = vmatprep.subr.mxu0 0.0
    %7198 = vmatpush1.msra.mxu0 0.0
    %7199 = vmatprep.subr.mxu0 0.0
    %7200 = vmatpush1.msra.mxu0 0.0
    %7201 = vmatprep.subr.mxu0 0.0
    %7202 = vmatpush1.msra.mxu0 0.0
    %7203 = vmatprep.subr.mxu0 0.0
    %7204 = vmatpush1.msra.mxu0 0.0
    %7205 = vmatprep.subr.mxu0 0.0
    %7206 = vmatpush1.msra.mxu0 %v6461
    %7207 = vmatprep.subr.mxu0 0.0
    %7208 = vmatpush1.msra.mxu0 %v6460
    %7209 = vmatprep.subr.mxu0 0.0
    %7210 = vmatpush1.msra.mxu0 %v6459
    %7211 = vmatprep.subr.mxu0 0.0
    %7212 = vmatpush1.msra.mxu0 %v6458
    %7213 = vmatprep.subr.mxu0 0.0
    %7214 = vmatpush2.msra.mxu0 0.0
    %7215 = vmatprep.subr.mxu0 0.0
    %7216 = vmatpush2.msra.mxu0 0.0
    %7217 = vmatprep.subr.mxu0 0.0
    %7218 = vmatpush2.msra.mxu0 0.0
    %7219 = vmatprep.subr.mxu0 0.0
    %7220 = vmatpush2.msra.mxu0 0.0
    %7221 = vmatprep.subr.mxu0 0.0
    %7222 = vmatpush2.msra.mxu0 0.0
    %7223 = vmatprep.subr.mxu0 0.0
    %7224 = vmatpush2.msra.mxu0 0.0
    %7225 = vmatprep.subr.mxu0 0.0
    %7226 = vmatpush2.msra.mxu0 0.0
    %7227 = vmatprep.subr.mxu0 0.0
    %7228 = vmatpush2.msra.mxu0 0.0
    %7229 = vmatprep.subr.mxu0 0.0
    %7230 = vmatpush2.msra.mxu0 0.0
    %7231 = vmatprep.subr.mxu0 0.0
    %7232 = vmatpush2.msra.mxu0 0.0
    %7233 = vmatprep.subr.mxu0 0.0
    %7234 = vmatpush2.msra.mxu0 0.0
    %7235 = vmatprep.subr.mxu0 0.0
    %7236 = vmatpush2.msra.mxu0 0.0
    %7237 = vmatprep.subr.mxu0 0.0
    %7238 = vmatpush2.msra.mxu0 0.0
    %7239 = vmatprep.subr.mxu0 0.0
    %7240 = vmatpush2.msra.mxu0 0.0
    %7241 = vmatprep.subr.mxu0 0.0
    %7242 = vmatpush2.msra.mxu0 0.0
    %7243 = vmatprep.subr.mxu0 0.0
    %7244 = vmatpush2.msra.mxu0 0.0
    %7245 = vmatprep.mubr.f32.mxu0 0.0
    %7246 = vmatmul.mubr.f32.gmra.mxu0 %v7025
    %v7247 = vpop.f32.mrf.mxu0
    %v7248 = vadd.f32 %v6791, %v7247
    %v7249 = vpop.f32.mrf.mxu0
    %7250 = vdwg.mxu0
    %v7251 = vmul.f32 %v7173, %v7248
    %v7252 = vadd.f32 %v6764, %v7251
    %v7253 = vtanh.pop %v7252
    %v7254 = vsub.f32 1.0, %v7180
    %v7255 = vmul.f32 %v7254, %v7253
    %v7256 = vmul.f32 %v7180, %v7023
    %v7257 = vadd.f32 %v7255, %v7256
    %v7259 = vsel %vm525, %v7257, 0
    %7261 = vmatprep.subr.mxu0 0.0
    %7262 = vmatpush1.msra.mxu0 0.0
    %7263 = vmatprep.subr.mxu0 0.0
    %7264 = vmatpush1.msra.mxu0 0.0
    %7265 = vmatprep.subr.mxu0 0.0
    %7266 = vmatpush1.msra.mxu0 0.0
    %7267 = vmatprep.subr.mxu0 0.0
    %7268 = vmatpush1.msra.mxu0 0.0
    %7269 = vmatprep.subr.mxu0 0.0
    %7270 = vmatpush1.msra.mxu0 0.0
    %7271 = vmatprep.subr.mxu0 0.0
    %7272 = vmatpush1.msra.mxu0 0.0
    %7273 = vmatprep.subr.mxu0 0.0
    %7274 = vmatpush1.msra.mxu0 0.0
    %7275 = vmatprep.subr.mxu0 0.0
    %7276 = vmatpush1.msra.mxu0 0.0
    %7277 = vmatprep.subr.mxu0 0.0
    %7278 = vmatpush1.msra.mxu0 0.0
    %7279 = vmatprep.subr.mxu0 0.0
    %7280 = vmatpush1.msra.mxu0 0.0
    %7281 = vmatprep.subr.mxu0 0.0
    %7282 = vmatpush1.msra.mxu0 0.0
    %7283 = vmatprep.subr.mxu0 0.0
    %7284 = vmatpush1.msra.mxu0 0.0
    %7285 = vmatprep.subr.mxu0 0.0
    %7286 = vmatpush1.msra.mxu0 %v6453
    %7287 = vmatprep.subr.mxu0 0.0
    %7288 = vmatpush1.msra.mxu0 %v6452
    %7289 = vmatprep.subr.mxu0 0.0
    %7290 = vmatpush1.msra.mxu0 %v6451
    %7291 = vmatprep.subr.mxu0 0.0
    %7292 = vmatpush1.msra.mxu0 %v6450
    %7293 = vmatprep.subr.mxu0 0.0
    %7294 = vmatpush2.msra.mxu0 0.0
    %7295 = vmatprep.subr.mxu0 0.0
    %7296 = vmatpush2.msra.mxu0 0.0
    %7297 = vmatprep.subr.mxu0 0.0
    %7298 = vmatpush2.msra.mxu0 0.0
    %7299 = vmatprep.subr.mxu0 0.0
    %7300 = vmatpush2.msra.mxu0 0.0
    %7301 = vmatprep.subr.mxu0 0.0
    %7302 = vmatpush2.msra.mxu0 0.0
    %7303 = vmatprep.subr.mxu0 0.0
    %7304 = vmatpush2.msra.mxu0 0.0
    %7305 = vmatprep.subr.mxu0 0.0
    %7306 = vmatpush2.msra.mxu0 0.0
    %7307 = vmatprep.subr.mxu0 0.0
    %7308 = vmatpush2.msra.mxu0 0.0
    %7309 = vmatprep.subr.mxu0 0.0
    %7310 = vmatpush2.msra.mxu0 0.0
    %7311 = vmatprep.subr.mxu0 0.0
    %7312 = vmatpush2.msra.mxu0 0.0
    %7313 = vmatprep.subr.mxu0 0.0
    %7314 = vmatpush2.msra.mxu0 0.0
    %7315 = vmatprep.subr.mxu0 0.0
    %7316 = vmatpush2.msra.mxu0 0.0
    %7317 = vmatprep.subr.mxu0 0.0
    %7318 = vmatpush2.msra.mxu0 0.0
    %7319 = vmatprep.subr.mxu0 0.0
    %7320 = vmatpush2.msra.mxu0 0.0
    %7321 = vmatprep.subr.mxu0 0.0
    %7322 = vmatpush2.msra.mxu0 0.0
    %7323 = vmatprep.subr.mxu0 0.0
    %7324 = vmatpush2.msra.mxu0 0.0
    %7325 = vmatprep.mubr.f32.mxu0 0.0
    %7326 = vmatmul.mubr.f32.gmra.mxu0 %v7259
    %v7327 = vpop.f32.mrf.mxu0
    %v7328 = vadd.f32 0.0, %v7327
    %v7329 = vpop.f32.mrf.mxu0
    %7330 = vdwg.mxu0
    %7331 = vmatprep.subr.mxu0 0.0
    %7332 = vmatpush1.msra.mxu0 0.0
    %7333 = vmatprep.subr.mxu0 0.0
    %7334 = vmatpush1.msra.mxu0 0.0
    %7335 = vmatprep.subr.mxu0 0.0
    %7336 = vmatpush1.msra.mxu0 0.0
    %7337 = vmatprep.subr.mxu0 0.0
    %7338 = vmatpush1.msra.mxu0 0.0
    %7339 = vmatprep.subr.mxu0 0.0
    %7340 = vmatpush1.msra.mxu0 0.0
    %7341 = vmatprep.subr.mxu0 0.0
    %7342 = vmatpush1.msra.mxu0 0.0
    %7343 = vmatprep.subr.mxu0 0.0
    %7344 = vmatpush1.msra.mxu0 0.0
    %7345 = vmatprep.subr.mxu0 0.0
    %7346 = vmatpush1.msra.mxu0 0.0
    %7347 = vmatprep.subr.mxu0 0.0
    %7348 = vmatpush1.msra.mxu0 0.0
    %7349 = vmatprep.subr.mxu0 0.0
    %7350 = vmatpush1.msra.mxu0 0.0
    %7351 = vmatprep.subr.mxu0 0.0
    %7352 = vmatpush1.msra.mxu0 0.0
    %7353 = vmatprep.subr.mxu0 0.0
    %7354 = vmatpush1.msra.mxu0 0.0
    %7355 = vmatprep.subr.mxu0 0.0
    %7356 = vmatpush1.msra.mxu0 %v6457
    %7357 = vmatprep.subr.mxu0 0.0
    %7358 = vmatpush1.msra.mxu0 %v6456
    %7359 = vmatprep.subr.mxu0 0.0
    %7360 = vmatpush1.msra.mxu0 %v6455
    %7361 = vmatprep.subr.mxu0 0.0
    %7362 = vmatpush1.msra.mxu0 %v6454
    %7363 = vmatprep.subr.mxu0 0.0
    %7364 = vmatpush2.msra.mxu0 0.0
    %7365 = vmatprep.subr.mxu0 0.0
    %7366 = vmatpush2.msra.mxu0 0.0
    %7367 = vmatprep.subr.mxu0 0.0
    %7368 = vmatpush2.msra.mxu0 0.0
    %7369 = vmatprep.subr.mxu0 0.0
    %7370 = vmatpush2.msra.mxu0 0.0
    %7371 = vmatprep.subr.mxu0 0.0
    %7372 = vmatpush2.msra.mxu0 0.0
    %7373 = vmatprep.subr.mxu0 0.0
    %7374 = vmatpush2.msra.mxu0 0.0
    %7375 = vmatprep.subr.mxu0 0.0
    %7376 = vmatpush2.msra.mxu0 0.0
    %7377 = vmatprep.subr.mxu0 0.0
    %7378 = vmatpush2.msra.mxu0 0.0
    %7379 = vmatprep.subr.mxu0 0.0
    %7380 = vmatpush2.msra.mxu0 0.0
    %7381 = vmatprep.subr.mxu0 0.0
    %7382 = vmatpush2.msra.mxu0 0.0
    %7383 = vmatprep.subr.mxu0 0.0
    %7384 = vmatpush2.msra.mxu0 0.0
    %7385 = vmatprep.subr.mxu0 0.0
    %7386 = vmatpush2.msra.mxu0 0.0
    %7387 = vmatprep.subr.mxu0 0.0
    %7388 = vmatpush2.msra.mxu0 0.0
    %7389 = vmatprep.subr.mxu0 0.0
    %7390 = vmatpush2.msra.mxu0 0.0
    %7391 = vmatprep.subr.mxu0 0.0
    %7392 = vmatpush2.msra.mxu0 0.0
    %7393 = vmatprep.subr.mxu0 0.0
    %7394 = vmatpush2.msra.mxu0 0.0
    %7395 = vmatprep.mubr.f32.mxu0 0.0
    %7396 = vmatmul.mubr.f32.gmra.mxu0 %v7259
    %v7397 = vpop.f32.mrf.mxu0
    %v7398 = vadd.f32 0.0, %v7397
    %v7399 = vpop.f32.mrf.mxu0
    %7400 = vdwg.mxu0
    %v7401 = vadd.f32 %v6567, %v7328
    %v7402 = vxor.u32 %v7401, 2147483648
    %v7403 = vmul.f32 %v7402, 1.442695
    %v7404 = vpow.pop %v7403
    %v7405 = vadd.f32 %v7404, 1.0
    %v7406 = vrcp.pop %v7405
    %v7407 = vmul.f32 1.0, %v7406
    %v7408 = vadd.f32 %v6668, %v7398
    %v7409 = vxor.u32 %v7408, 2147483648
    %v7410 = vmul.f32 %v7409, 1.442695
    %v7411 = vpow.pop %v7410
    %v7412 = vadd.f32 %v7411, 1.0
    %v7413 = vrcp.pop %v7412
    %v7414 = vmul.f32 1.0, %v7413
    %7415 = vmatprep.subr.mxu0 0.0
    %7416 = vmatpush1.msra.mxu0 0.0
    %7417 = vmatprep.subr.mxu0 0.0
    %7418 = vmatpush1.msra.mxu0 0.0
    %7419 = vmatprep.subr.mxu0 0.0
    %7420 = vmatpush1.msra.mxu0 0.0
    %7421 = vmatprep.subr.mxu0 0.0
    %7422 = vmatpush1.msra.mxu0 0.0
    %7423 = vmatprep.subr.mxu0 0.0
    %7424 = vmatpush1.msra.mxu0 0.0
    %7425 = vmatprep.subr.mxu0 0.0
    %7426 = vmatpush1.msra.mxu0 0.0
    %7427 = vmatprep.subr.mxu0 0.0
    %7428 = vmatpush1.msra.mxu0 0.0
    %7429 = vmatprep.subr.mxu0 0.0
    %7430 = vmatpush1.msra.mxu0 0.0
    %7431 = vmatprep.subr.mxu0 0.0
    %7432 = vmatpush1.msra.mxu0 0.0
    %7433 = vmatprep.subr.mxu0 0.0
    %7434 = vmatpush1.msra.mxu0 0.0
    %7435 = vmatprep.subr.mxu0 0.0
    %7436 = vmatpush1.msra.mxu0 0.0
    %7437 = vmatprep.subr.mxu0 0.0
    %7438 = vmatpush1.msra.mxu0 0.0
    %7439 = vmatprep.subr.mxu0 0.0
    %7440 = vmatpush1.msra.mxu0 %v6461
    %7441 = vmatprep.subr.mxu0 0.0
    %7442 = vmatpush1.msra.mxu0 %v6460
    %7443 = vmatprep.subr.mxu0 0.0
    %7444 = vmatpush1.msra.mxu0 %v6459
    %7445 = vmatprep.subr.mxu0 0.0
    %7446 = vmatpush1.msra.mxu0 %v6458
    %7447 = vmatprep.subr.mxu0 0.0
    %7448 = vmatpush2.msra.mxu0 0.0
    %7449 = vmatprep.subr.mxu0 0.0
    %7450 = vmatpush2.msra.mxu0 0.0
    %7451 = vmatprep.subr.mxu0 0.0
    %7452 = vmatpush2.msra.mxu0 0.0
    %7453 = vmatprep.subr.mxu0 0.0
    %7454 = vmatpush2.msra.mxu0 0.0
    %7455 = vmatprep.subr.mxu0 0.0
    %7456 = vmatpush2.msra.mxu0 0.0
    %7457 = vmatprep.subr.mxu0 0.0
    %7458 = vmatpush2.msra.mxu0 0.0
    %7459 = vmatprep.subr.mxu0 0.0
    %7460 = vmatpush2.msra.mxu0 0.0
    %7461 = vmatprep.subr.mxu0 0.0
    %7462 = vmatpush2.msra.mxu0 0.0
    %7463 = vmatprep.subr.mxu0 0.0
    %7464 = vmatpush2.msra.mxu0 0.0
    %7465 = vmatprep.subr.mxu0 0.0
    %7466 = vmatpush2.msra.mxu0 0.0
    %7467 = vmatprep.subr.mxu0 0.0
    %7468 = vmatpush2.msra.mxu0 0.0
    %7469 = vmatprep.subr.mxu0 0.0
    %7470 = vmatpush2.msra.mxu0 0.0
    %7471 = vmatprep.subr.mxu0 0.0
    %7472 = vmatpush2.msra.mxu0 0.0
    %7473 = vmatprep.subr.mxu0 0.0
    %7474 = vmatpush2.msra.mxu0 0.0
    %7475 = vmatprep.subr.mxu0 0.0
    %7476 = vmatpush2.msra.mxu0 0.0
    %7477 = vmatprep.subr.mxu0 0.0
    %7478 = vmatpush2.msra.mxu0 0.0
    %7479 = vmatprep.mubr.f32.mxu0 0.0
    %7480 = vmatmul.mubr.f32.gmra.mxu0 %v7259
    %v7481 = vpop.f32.mrf.mxu0
    %v7482 = vadd.f32 %v6791, %v7481
    %v7483 = vpop.f32.mrf.mxu0
    %7484 = vdwg.mxu0
    %v7485 = vmul.f32 %v7407, %v7482
    %v7486 = vadd.f32 %v6769, %v7485
    %v7487 = vtanh.pop %v7486
    %v7488 = vsub.f32 1.0, %v7414
    %v7489 = vmul.f32 %v7488, %v7487
    %v7490 = vmul.f32 %v7414, %v7257
    %v7491 = vadd.f32 %v7489, %v7490
    %v7493 = vsel %vm525, %v7491, 0
    %7495 = vmatprep.subr.mxu0 0.0
    %7496 = vmatpush1.msra.mxu0 0.0
    %7497 = vmatprep.subr.mxu0 0.0
    %7498 = vmatpush1.msra.mxu0 0.0
    %7499 = vmatprep.subr.mxu0 0.0
    %7500 = vmatpush1.msra.mxu0 0.0
    %7501 = vmatprep.subr.mxu0 0.0
    %7502 = vmatpush1.msra.mxu0 0.0
    %7503 = vmatprep.subr.mxu0 0.0
    %7504 = vmatpush1.msra.mxu0 0.0
    %7505 = vmatprep.subr.mxu0 0.0
    %7506 = vmatpush1.msra.mxu0 0.0
    %7507 = vmatprep.subr.mxu0 0.0
    %7508 = vmatpush1.msra.mxu0 0.0
    %7509 = vmatprep.subr.mxu0 0.0
    %7510 = vmatpush1.msra.mxu0 0.0
    %7511 = vmatprep.subr.mxu0 0.0
    %7512 = vmatpush1.msra.mxu0 0.0
    %7513 = vmatprep.subr.mxu0 0.0
    %7514 = vmatpush1.msra.mxu0 0.0
    %7515 = vmatprep.subr.mxu0 0.0
    %7516 = vmatpush1.msra.mxu0 0.0
    %7517 = vmatprep.subr.mxu0 0.0
    %7518 = vmatpush1.msra.mxu0 0.0
    %7519 = vmatprep.subr.mxu0 0.0
    %7520 = vmatpush1.msra.mxu0 %v6453
    %7521 = vmatprep.subr.mxu0 0.0
    %7522 = vmatpush1.msra.mxu0 %v6452
    %7523 = vmatprep.subr.mxu0 0.0
    %7524 = vmatpush1.msra.mxu0 %v6451
    %7525 = vmatprep.subr.mxu0 0.0
    %7526 = vmatpush1.msra.mxu0 %v6450
    %7527 = vmatprep.subr.mxu0 0.0
    %7528 = vmatpush2.msra.mxu0 0.0
    %7529 = vmatprep.subr.mxu0 0.0
    %7530 = vmatpush2.msra.mxu0 0.0
    %7531 = vmatprep.subr.mxu0 0.0
    %7532 = vmatpush2.msra.mxu0 0.0
    %7533 = vmatprep.subr.mxu0 0.0
    %7534 = vmatpush2.msra.mxu0 0.0
    %7535 = vmatprep.subr.mxu0 0.0
    %7536 = vmatpush2.msra.mxu0 0.0
    %7537 = vmatprep.subr.mxu0 0.0
    %7538 = vmatpush2.msra.mxu0 0.0
    %7539 = vmatprep.subr.mxu0 0.0
    %7540 = vmatpush2.msra.mxu0 0.0
    %7541 = vmatprep.subr.mxu0 0.0
    %7542 = vmatpush2.msra.mxu0 0.0
    %7543 = vmatprep.subr.mxu0 0.0
    %7544 = vmatpush2.msra.mxu0 0.0
    %7545 = vmatprep.subr.mxu0 0.0
    %7546 = vmatpush2.msra.mxu0 0.0
    %7547 = vmatprep.subr.mxu0 0.0
    %7548 = vmatpush2.msra.mxu0 0.0
    %7549 = vmatprep.subr.mxu0 0.0
    %7550 = vmatpush2.msra.mxu0 0.0
    %7551 = vmatprep.subr.mxu0 0.0
    %7552 = vmatpush2.msra.mxu0 0.0
    %7553 = vmatprep.subr.mxu0 0.0
    %7554 = vmatpush2.msra.mxu0 0.0
    %7555 = vmatprep.subr.mxu0 0.0
    %7556 = vmatpush2.msra.mxu0 0.0
    %7557 = vmatprep.subr.mxu0 0.0
    %7558 = vmatpush2.msra.mxu0 0.0
    %7559 = vmatprep.mubr.f32.mxu0 0.0
    %7560 = vmatmul.mubr.f32.gmra.mxu0 %v7493
    %v7561 = vpop.f32.mrf.mxu0
    %v7562 = vadd.f32 0.0, %v7561
    %v7563 = vpop.f32.mrf.mxu0
    %7564 = vdwg.mxu0
    %7565 = vmatprep.subr.mxu0 0.0
    %7566 = vmatpush1.msra.mxu0 0.0
    %7567 = vmatprep.subr.mxu0 0.0
    %7568 = vmatpush1.msra.mxu0 0.0
    %7569 = vmatprep.subr.mxu0 0.0
    %7570 = vmatpush1.msra.mxu0 0.0
    %7571 = vmatprep.subr.mxu0 0.0
    %7572 = vmatpush1.msra.mxu0 0.0
    %7573 = vmatprep.subr.mxu0 0.0
    %7574 = vmatpush1.msra.mxu0 0.0
    %7575 = vmatprep.subr.mxu0 0.0
    %7576 = vmatpush1.msra.mxu0 0.0
    %7577 = vmatprep.subr.mxu0 0.0
    %7578 = vmatpush1.msra.mxu0 0.0
    %7579 = vmatprep.subr.mxu0 0.0
    %7580 = vmatpush1.msra.mxu0 0.0
    %7581 = vmatprep.subr.mxu0 0.0
    %7582 = vmatpush1.msra.mxu0 0.0
    %7583 = vmatprep.subr.mxu0 0.0
    %7584 = vmatpush1.msra.mxu0 0.0
    %7585 = vmatprep.subr.mxu0 0.0
    %7586 = vmatpush1.msra.mxu0 0.0
    %7587 = vmatprep.subr.mxu0 0.0
    %7588 = vmatpush1.msra.mxu0 0.0
    %7589 = vmatprep.subr.mxu0 0.0
    %7590 = vmatpush1.msra.mxu0 %v6457
    %7591 = vmatprep.subr.mxu0 0.0
    %7592 = vmatpush1.msra.mxu0 %v6456
    %7593 = vmatprep.subr.mxu0 0.0
    %7594 = vmatpush1.msra.mxu0 %v6455
    %7595 = vmatprep.subr.mxu0 0.0
    %7596 = vmatpush1.msra.mxu0 %v6454
    %7597 = vmatprep.subr.mxu0 0.0
    %7598 = vmatpush2.msra.mxu0 0.0
    %7599 = vmatprep.subr.mxu0 0.0
    %7600 = vmatpush2.msra.mxu0 0.0
    %7601 = vmatprep.subr.mxu0 0.0
    %7602 = vmatpush2.msra.mxu0 0.0
    %7603 = vmatprep.subr.mxu0 0.0
    %7604 = vmatpush2.msra.mxu0 0.0
    %7605 = vmatprep.subr.mxu0 0.0
    %7606 = vmatpush2.msra.mxu0 0.0
    %7607 = vmatprep.subr.mxu0 0.0
    %7608 = vmatpush2.msra.mxu0 0.0
    %7609 = vmatprep.subr.mxu0 0.0
    %7610 = vmatpush2.msra.mxu0 0.0
    %7611 = vmatprep.subr.mxu0 0.0
    %7612 = vmatpush2.msra.mxu0 0.0
    %7613 = vmatprep.subr.mxu0 0.0
    %7614 = vmatpush2.msra.mxu0 0.0
    %7615 = vmatprep.subr.mxu0 0.0
    %7616 = vmatpush2.msra.mxu0 0.0
    %7617 = vmatprep.subr.mxu0 0.0
    %7618 = vmatpush2.msra.mxu0 0.0
    %7619 = vmatprep.subr.mxu0 0.0
    %7620 = vmatpush2.msra.mxu0 0.0
    %7621 = vmatprep.subr.mxu0 0.0
    %7622 = vmatpush2.msra.mxu0 0.0
    %7623 = vmatprep.subr.mxu0 0.0
    %7624 = vmatpush2.msra.mxu0 0.0
    %7625 = vmatprep.subr.mxu0 0.0
    %7626 = vmatpush2.msra.mxu0 0.0
    %7627 = vmatprep.subr.mxu0 0.0
    %7628 = vmatpush2.msra.mxu0 0.0
    %7629 = vmatprep.mubr.f32.mxu0 0.0
    %7630 = vmatmul.mubr.f32.gmra.mxu0 %v7493
    %v7631 = vpop.f32.mrf.mxu0
    %v7632 = vadd.f32 0.0, %v7631
    %v7633 = vpop.f32.mrf.mxu0
    %7634 = vdwg.mxu0
    %v7635 = vadd.f32 %v6572, %v7562
    %v7636 = vxor.u32 %v7635, 2147483648
    %v7637 = vmul.f32 %v7636, 1.442695
    %v7638 = vpow.pop %v7637
    %v7639 = vadd.f32 %v7638, 1.0
    %v7640 = vrcp.pop %v7639
    %v7641 = vmul.f32 1.0, %v7640
    %v7642 = vadd.f32 %v6673, %v7632
    %v7643 = vxor.u32 %v7642, 2147483648
    %v7644 = vmul.f32 %v7643, 1.442695
    %v7645 = vpow.pop %v7644
    %v7646 = vadd.f32 %v7645, 1.0
    %v7647 = vrcp.pop %v7646
    %v7648 = vmul.f32 1.0, %v7647
    %7649 = vmatprep.subr.mxu0 0.0
    %7650 = vmatpush1.msra.mxu0 0.0
    %7651 = vmatprep.subr.mxu0 0.0
    %7652 = vmatpush1.msra.mxu0 0.0
    %7653 = vmatprep.subr.mxu0 0.0
    %7654 = vmatpush1.msra.mxu0 0.0
    %7655 = vmatprep.subr.mxu0 0.0
    %7656 = vmatpush1.msra.mxu0 0.0
    %7657 = vmatprep.subr.mxu0 0.0
    %7658 = vmatpush1.msra.mxu0 0.0
    %7659 = vmatprep.subr.mxu0 0.0
    %7660 = vmatpush1.msra.mxu0 0.0
    %7661 = vmatprep.subr.mxu0 0.0
    %7662 = vmatpush1.msra.mxu0 0.0
    %7663 = vmatprep.subr.mxu0 0.0
    %7664 = vmatpush1.msra.mxu0 0.0
    %7665 = vmatprep.subr.mxu0 0.0
    %7666 = vmatpush1.msra.mxu0 0.0
    %7667 = vmatprep.subr.mxu0 0.0
    %7668 = vmatpush1.msra.mxu0 0.0
    %7669 = vmatprep.subr.mxu0 0.0
    %7670 = vmatpush1.msra.mxu0 0.0
    %7671 = vmatprep.subr.mxu0 0.0
    %7672 = vmatpush1.msra.mxu0 0.0
    %7673 = vmatprep.subr.mxu0 0.0
    %7674 = vmatpush1.msra.mxu0 %v6461
    %7675 = vmatprep.subr.mxu0 0.0
    %7676 = vmatpush1.msra.mxu0 %v6460
    %7677 = vmatprep.subr.mxu0 0.0
    %7678 = vmatpush1.msra.mxu0 %v6459
    %7679 = vmatprep.subr.mxu0 0.0
    %7680 = vmatpush1.msra.mxu0 %v6458
    %7681 = vmatprep.subr.mxu0 0.0
    %7682 = vmatpush2.msra.mxu0 0.0
    %7683 = vmatprep.subr.mxu0 0.0
    %7684 = vmatpush2.msra.mxu0 0.0
    %7685 = vmatprep.subr.mxu0 0.0
    %7686 = vmatpush2.msra.mxu0 0.0
    %7687 = vmatprep.subr.mxu0 0.0
    %7688 = vmatpush2.msra.mxu0 0.0
    %7689 = vmatprep.subr.mxu0 0.0
    %7690 = vmatpush2.msra.mxu0 0.0
    %7691 = vmatprep.subr.mxu0 0.0
    %7692 = vmatpush2.msra.mxu0 0.0
    %7693 = vmatprep.subr.mxu0 0.0
    %7694 = vmatpush2.msra.mxu0 0.0
    %7695 = vmatprep.subr.mxu0 0.0
    %7696 = vmatpush2.msra.mxu0 0.0
    %7697 = vmatprep.subr.mxu0 0.0
    %7698 = vmatpush2.msra.mxu0 0.0
    %7699 = vmatprep.subr.mxu0 0.0
    %7700 = vmatpush2.msra.mxu0 0.0
    %7701 = vmatprep.subr.mxu0 0.0
    %7702 = vmatpush2.msra.mxu0 0.0
    %7703 = vmatprep.subr.mxu0 0.0
    %7704 = vmatpush2.msra.mxu0 0.0
    %7705 = vmatprep.subr.mxu0 0.0
    %7706 = vmatpush2.msra.mxu0 0.0
    %7707 = vmatprep.subr.mxu0 0.0
    %7708 = vmatpush2.msra.mxu0 0.0
    %7709 = vmatprep.subr.mxu0 0.0
    %7710 = vmatpush2.msra.mxu0 0.0
    %7711 = vmatprep.subr.mxu0 0.0
    %7712 = vmatpush2.msra.mxu0 0.0
    %7713 = vmatprep.mubr.f32.mxu0 0.0
    %7714 = vmatmul.mubr.f32.gmra.mxu0 %v7493
    %v7715 = vpop.f32.mrf.mxu0
    %v7716 = vadd.f32 %v6791, %v7715
    %v7717 = vpop.f32.mrf.mxu0
    %7718 = vdwg.mxu0
    %v7719 = vmul.f32 %v7641, %v7716
    %v7720 = vadd.f32 %v6774, %v7719
    %v7721 = vtanh.pop %v7720
    %v7722 = vsub.f32 1.0, %v7648
    %v7723 = vmul.f32 %v7722, %v7721
    %v7724 = vmul.f32 %v7648, %v7491
    %v7725 = vadd.f32 %v7723, %v7724
    %v7727 = vsel %vm525, %v7725, 0
    %7729 = vmatprep.subr.mxu0 0.0
    %7730 = vmatpush1.msra.mxu0 0.0
    %7731 = vmatprep.subr.mxu0 0.0
    %7732 = vmatpush1.msra.mxu0 0.0
    %7733 = vmatprep.subr.mxu0 0.0
    %7734 = vmatpush1.msra.mxu0 0.0
    %7735 = vmatprep.subr.mxu0 0.0
    %7736 = vmatpush1.msra.mxu0 0.0
    %7737 = vmatprep.subr.mxu0 0.0
    %7738 = vmatpush1.msra.mxu0 0.0
    %7739 = vmatprep.subr.mxu0 0.0
    %7740 = vmatpush1.msra.mxu0 0.0
    %7741 = vmatprep.subr.mxu0 0.0
    %7742 = vmatpush1.msra.mxu0 0.0
    %7743 = vmatprep.subr.mxu0 0.0
    %7744 = vmatpush1.msra.mxu0 0.0
    %7745 = vmatprep.subr.mxu0 0.0
    %7746 = vmatpush1.msra.mxu0 0.0
    %7747 = vmatprep.subr.mxu0 0.0
    %7748 = vmatpush1.msra.mxu0 0.0
    %7749 = vmatprep.subr.mxu0 0.0
    %7750 = vmatpush1.msra.mxu0 0.0
    %7751 = vmatprep.subr.mxu0 0.0
    %7752 = vmatpush1.msra.mxu0 0.0
    %7753 = vmatprep.subr.mxu0 0.0
    %7754 = vmatpush1.msra.mxu0 %v6453
    %7755 = vmatprep.subr.mxu0 0.0
    %7756 = vmatpush1.msra.mxu0 %v6452
    %7757 = vmatprep.subr.mxu0 0.0
    %7758 = vmatpush1.msra.mxu0 %v6451
    %7759 = vmatprep.subr.mxu0 0.0
    %7760 = vmatpush1.msra.mxu0 %v6450
    %7761 = vmatprep.subr.mxu0 0.0
    %7762 = vmatpush2.msra.mxu0 0.0
    %7763 = vmatprep.subr.mxu0 0.0
    %7764 = vmatpush2.msra.mxu0 0.0
    %7765 = vmatprep.subr.mxu0 0.0
    %7766 = vmatpush2.msra.mxu0 0.0
    %7767 = vmatprep.subr.mxu0 0.0
    %7768 = vmatpush2.msra.mxu0 0.0
    %7769 = vmatprep.subr.mxu0 0.0
    %7770 = vmatpush2.msra.mxu0 0.0
    %7771 = vmatprep.subr.mxu0 0.0
    %7772 = vmatpush2.msra.mxu0 0.0
    %7773 = vmatprep.subr.mxu0 0.0
    %7774 = vmatpush2.msra.mxu0 0.0
    %7775 = vmatprep.subr.mxu0 0.0
    %7776 = vmatpush2.msra.mxu0 0.0
    %7777 = vmatprep.subr.mxu0 0.0
    %7778 = vmatpush2.msra.mxu0 0.0
    %7779 = vmatprep.subr.mxu0 0.0
    %7780 = vmatpush2.msra.mxu0 0.0
    %7781 = vmatprep.subr.mxu0 0.0
    %7782 = vmatpush2.msra.mxu0 0.0
    %7783 = vmatprep.subr.mxu0 0.0
    %7784 = vmatpush2.msra.mxu0 0.0
    %7785 = vmatprep.subr.mxu0 0.0
    %7786 = vmatpush2.msra.mxu0 0.0
    %7787 = vmatprep.subr.mxu0 0.0
    %7788 = vmatpush2.msra.mxu0 0.0
    %7789 = vmatprep.subr.mxu0 0.0
    %7790 = vmatpush2.msra.mxu0 0.0
    %7791 = vmatprep.subr.mxu0 0.0
    %7792 = vmatpush2.msra.mxu0 0.0
    %7793 = vmatprep.mubr.f32.mxu0 0.0
    %7794 = vmatmul.mubr.f32.gmra.mxu0 %v7727
    %v7795 = vpop.f32.mrf.mxu0
    %v7796 = vadd.f32 0.0, %v7795
    %v7797 = vpop.f32.mrf.mxu0
    %7798 = vdwg.mxu0
    %7799 = vmatprep.subr.mxu0 0.0
    %7800 = vmatpush1.msra.mxu0 0.0
    %7801 = vmatprep.subr.mxu0 0.0
    %7802 = vmatpush1.msra.mxu0 0.0
    %7803 = vmatprep.subr.mxu0 0.0
    %7804 = vmatpush1.msra.mxu0 0.0
    %7805 = vmatprep.subr.mxu0 0.0
    %7806 = vmatpush1.msra.mxu0 0.0
    %7807 = vmatprep.subr.mxu0 0.0
    %7808 = vmatpush1.msra.mxu0 0.0
    %7809 = vmatprep.subr.mxu0 0.0
    %7810 = vmatpush1.msra.mxu0 0.0
    %7811 = vmatprep.subr.mxu0 0.0
    %7812 = vmatpush1.msra.mxu0 0.0
    %7813 = vmatprep.subr.mxu0 0.0
    %7814 = vmatpush1.msra.mxu0 0.0
    %7815 = vmatprep.subr.mxu0 0.0
    %7816 = vmatpush1.msra.mxu0 0.0
    %7817 = vmatprep.subr.mxu0 0.0
    %7818 = vmatpush1.msra.mxu0 0.0
    %7819 = vmatprep.subr.mxu0 0.0
    %7820 = vmatpush1.msra.mxu0 0.0
    %7821 = vmatprep.subr.mxu0 0.0
    %7822 = vmatpush1.msra.mxu0 0.0
    %7823 = vmatprep.subr.mxu0 0.0
    %7824 = vmatpush1.msra.mxu0 %v6457
    %7825 = vmatprep.subr.mxu0 0.0
    %7826 = vmatpush1.msra.mxu0 %v6456
    %7827 = vmatprep.subr.mxu0 0.0
    %7828 = vmatpush1.msra.mxu0 %v6455
    %7829 = vmatprep.subr.mxu0 0.0
    %7830 = vmatpush1.msra.mxu0 %v6454
    %7831 = vmatprep.subr.mxu0 0.0
    %7832 = vmatpush2.msra.mxu0 0.0
    %7833 = vmatprep.subr.mxu0 0.0
    %7834 = vmatpush2.msra.mxu0 0.0
    %7835 = vmatprep.subr.mxu0 0.0
    %7836 = vmatpush2.msra.mxu0 0.0
    %7837 = vmatprep.subr.mxu0 0.0
    %7838 = vmatpush2.msra.mxu0 0.0
    %7839 = vmatprep.subr.mxu0 0.0
    %7840 = vmatpush2.msra.mxu0 0.0
    %7841 = vmatprep.subr.mxu0 0.0
    %7842 = vmatpush2.msra.mxu0 0.0
    %7843 = vmatprep.subr.mxu0 0.0
    %7844 = vmatpush2.msra.mxu0 0.0
    %7845 = vmatprep.subr.mxu0 0.0
    %7846 = vmatpush2.msra.mxu0 0.0
    %7847 = vmatprep.subr.mxu0 0.0
    %7848 = vmatpush2.msra.mxu0 0.0
    %7849 = vmatprep.subr.mxu0 0.0
    %7850 = vmatpush2.msra.mxu0 0.0
    %7851 = vmatprep.subr.mxu0 0.0
    %7852 = vmatpush2.msra.mxu0 0.0
    %7853 = vmatprep.subr.mxu0 0.0
    %7854 = vmatpush2.msra.mxu0 0.0
    %7855 = vmatprep.subr.mxu0 0.0
    %7856 = vmatpush2.msra.mxu0 0.0
    %7857 = vmatprep.subr.mxu0 0.0
    %7858 = vmatpush2.msra.mxu0 0.0
    %7859 = vmatprep.subr.mxu0 0.0
    %7860 = vmatpush2.msra.mxu0 0.0
    %7861 = vmatprep.subr.mxu0 0.0
    %7862 = vmatpush2.msra.mxu0 0.0
    %7863 = vmatprep.mubr.f32.mxu0 0.0
    %7864 = vmatmul.mubr.f32.gmra.mxu0 %v7727
    %v7865 = vpop.f32.mrf.mxu0
    %v7866 = vadd.f32 0.0, %v7865
    %v7867 = vpop.f32.mrf.mxu0
    %7868 = vdwg.mxu0
    %v7869 = vadd.f32 %v6577, %v7796
    %v7870 = vxor.u32 %v7869, 2147483648
    %v7871 = vmul.f32 %v7870, 1.442695
    %v7872 = vpow.pop %v7871
    %v7873 = vadd.f32 %v7872, 1.0
    %v7874 = vrcp.pop %v7873
    %v7875 = vmul.f32 1.0, %v7874
    %v7876 = vadd.f32 %v6678, %v7866
    %v7877 = vxor.u32 %v7876, 2147483648
    %v7878 = vmul.f32 %v7877, 1.442695
    %v7879 = vpow.pop %v7878
    %v7880 = vadd.f32 %v7879, 1.0
    %v7881 = vrcp.pop %v7880
    %v7882 = vmul.f32 1.0, %v7881
    %7883 = vmatprep.subr.mxu0 0.0
    %7884 = vmatpush1.msra.mxu0 0.0
    %7885 = vmatprep.subr.mxu0 0.0
    %7886 = vmatpush1.msra.mxu0 0.0
    %7887 = vmatprep.subr.mxu0 0.0
    %7888 = vmatpush1.msra.mxu0 0.0
    %7889 = vmatprep.subr.mxu0 0.0
    %7890 = vmatpush1.msra.mxu0 0.0
    %7891 = vmatprep.subr.mxu0 0.0
    %7892 = vmatpush1.msra.mxu0 0.0
    %7893 = vmatprep.subr.mxu0 0.0
    %7894 = vmatpush1.msra.mxu0 0.0
    %7895 = vmatprep.subr.mxu0 0.0
    %7896 = vmatpush1.msra.mxu0 0.0
    %7897 = vmatprep.subr.mxu0 0.0
    %7898 = vmatpush1.msra.mxu0 0.0
    %7899 = vmatprep.subr.mxu0 0.0
    %7900 = vmatpush1.msra.mxu0 0.0
    %7901 = vmatprep.subr.mxu0 0.0
    %7902 = vmatpush1.msra.mxu0 0.0
    %7903 = vmatprep.subr.mxu0 0.0
    %7904 = vmatpush1.msra.mxu0 0.0
    %7905 = vmatprep.subr.mxu0 0.0
    %7906 = vmatpush1.msra.mxu0 0.0
    %7907 = vmatprep.subr.mxu0 0.0
    %7908 = vmatpush1.msra.mxu0 %v6461
    %7909 = vmatprep.subr.mxu0 0.0
    %7910 = vmatpush1.msra.mxu0 %v6460
    %7911 = vmatprep.subr.mxu0 0.0
    %7912 = vmatpush1.msra.mxu0 %v6459
    %7913 = vmatprep.subr.mxu0 0.0
    %7914 = vmatpush1.msra.mxu0 %v6458
    %7915 = vmatprep.subr.mxu0 0.0
    %7916 = vmatpush2.msra.mxu0 0.0
    %7917 = vmatprep.subr.mxu0 0.0
    %7918 = vmatpush2.msra.mxu0 0.0
    %7919 = vmatprep.subr.mxu0 0.0
    %7920 = vmatpush2.msra.mxu0 0.0
    %7921 = vmatprep.subr.mxu0 0.0
    %7922 = vmatpush2.msra.mxu0 0.0
    %7923 = vmatprep.subr.mxu0 0.0
    %7924 = vmatpush2.msra.mxu0 0.0
    %7925 = vmatprep.subr.mxu0 0.0
    %7926 = vmatpush2.msra.mxu0 0.0
    %7927 = vmatprep.subr.mxu0 0.0
    %7928 = vmatpush2.msra.mxu0 0.0
    %7929 = vmatprep.subr.mxu0 0.0
    %7930 = vmatpush2.msra.mxu0 0.0
    %7931 = vmatprep.subr.mxu0 0.0
    %7932 = vmatpush2.msra.mxu0 0.0
    %7933 = vmatprep.subr.mxu0 0.0
    %7934 = vmatpush2.msra.mxu0 0.0
    %7935 = vmatprep.subr.mxu0 0.0
    %7936 = vmatpush2.msra.mxu0 0.0
    %7937 = vmatprep.subr.mxu0 0.0
    %7938 = vmatpush2.msra.mxu0 0.0
    %7939 = vmatprep.subr.mxu0 0.0
    %7940 = vmatpush2.msra.mxu0 0.0
    %7941 = vmatprep.subr.mxu0 0.0
    %7942 = vmatpush2.msra.mxu0 0.0
    %7943 = vmatprep.subr.mxu0 0.0
    %7944 = vmatpush2.msra.mxu0 0.0
    %7945 = vmatprep.subr.mxu0 0.0
    %7946 = vmatpush2.msra.mxu0 0.0
    %7947 = vmatprep.mubr.f32.mxu0 0.0
    %7948 = vmatmul.mubr.f32.gmra.mxu0 %v7727
    %v7949 = vpop.f32.mrf.mxu0
    %v7950 = vadd.f32 %v6791, %v7949
    %v7951 = vpop.f32.mrf.mxu0
    %7952 = vdwg.mxu0
    %v7953 = vmul.f32 %v7875, %v7950
    %v7954 = vadd.f32 %v6779, %v7953
    %v7955 = vtanh.pop %v7954
    %v7956 = vsub.f32 1.0, %v7882
    %v7957 = vmul.f32 %v7956, %v7955
    %v7958 = vmul.f32 %v7882, %v7725
    %v7959 = vadd.f32 %v7957, %v7958
    %v7961 = vsel %vm525, %v7959, 0
    %7963 = vmatprep.subr.mxu0 0.0
    %7964 = vmatpush1.msra.mxu0 0.0
    %7965 = vmatprep.subr.mxu0 0.0
    %7966 = vmatpush1.msra.mxu0 0.0
    %7967 = vmatprep.subr.mxu0 0.0
    %7968 = vmatpush1.msra.mxu0 0.0
    %7969 = vmatprep.subr.mxu0 0.0
    %7970 = vmatpush1.msra.mxu0 0.0
    %7971 = vmatprep.subr.mxu0 0.0
    %7972 = vmatpush1.msra.mxu0 0.0
    %7973 = vmatprep.subr.mxu0 0.0
    %7974 = vmatpush1.msra.mxu0 0.0
    %7975 = vmatprep.subr.mxu0 0.0
    %7976 = vmatpush1.msra.mxu0 0.0
    %7977 = vmatprep.subr.mxu0 0.0
    %7978 = vmatpush1.msra.mxu0 0.0
    %7979 = vmatprep.subr.mxu0 0.0
    %7980 = vmatpush1.msra.mxu0 0.0
    %7981 = vmatprep.subr.mxu0 0.0
    %7982 = vmatpush1.msra.mxu0 0.0
    %7983 = vmatprep.subr.mxu0 0.0
    %7984 = vmatpush1.msra.mxu0 0.0
    %7985 = vmatprep.subr.mxu0 0.0
    %7986 = vmatpush1.msra.mxu0 0.0
    %7987 = vmatprep.subr.mxu0 0.0
    %7988 = vmatpush1.msra.mxu0 %v6453
    %7989 = vmatprep.subr.mxu0 0.0
    %7990 = vmatpush1.msra.mxu0 %v6452
    %7991 = vmatprep.subr.mxu0 0.0
    %7992 = vmatpush1.msra.mxu0 %v6451
    %7993 = vmatprep.subr.mxu0 0.0
    %7994 = vmatpush1.msra.mxu0 %v6450
    %7995 = vmatprep.subr.mxu0 0.0
    %7996 = vmatpush2.msra.mxu0 0.0
    %7997 = vmatprep.subr.mxu0 0.0
    %7998 = vmatpush2.msra.mxu0 0.0
    %7999 = vmatprep.subr.mxu0 0.0
    %8000 = vmatpush2.msra.mxu0 0.0
    %8001 = vmatprep.subr.mxu0 0.0
    %8002 = vmatpush2.msra.mxu0 0.0
    %8003 = vmatprep.subr.mxu0 0.0
    %8004 = vmatpush2.msra.mxu0 0.0
    %8005 = vmatprep.subr.mxu0 0.0
    %8006 = vmatpush2.msra.mxu0 0.0
    %8007 = vmatprep.subr.mxu0 0.0
    %8008 = vmatpush2.msra.mxu0 0.0
    %8009 = vmatprep.subr.mxu0 0.0
    %8010 = vmatpush2.msra.mxu0 0.0
    %8011 = vmatprep.subr.mxu0 0.0
    %8012 = vmatpush2.msra.mxu0 0.0
    %8013 = vmatprep.subr.mxu0 0.0
    %8014 = vmatpush2.msra.mxu0 0.0
    %8015 = vmatprep.subr.mxu0 0.0
    %8016 = vmatpush2.msra.mxu0 0.0
    %8017 = vmatprep.subr.mxu0 0.0
    %8018 = vmatpush2.msra.mxu0 0.0
    %8019 = vmatprep.subr.mxu0 0.0
    %8020 = vmatpush2.msra.mxu0 0.0
    %8021 = vmatprep.subr.mxu0 0.0
    %8022 = vmatpush2.msra.mxu0 0.0
    %8023 = vmatprep.subr.mxu0 0.0
    %8024 = vmatpush2.msra.mxu0 0.0
    %8025 = vmatprep.subr.mxu0 0.0
    %8026 = vmatpush2.msra.mxu0 0.0
    %8027 = vmatprep.mubr.f32.mxu0 0.0
    %8028 = vmatmul.mubr.f32.gmra.mxu0 %v7961
    %v8029 = vpop.f32.mrf.mxu0
    %v8030 = vadd.f32 0.0, %v8029
    %v8031 = vpop.f32.mrf.mxu0
    %8032 = vdwg.mxu0
    %8033 = vmatprep.subr.mxu0 0.0
    %8034 = vmatpush1.msra.mxu0 0.0
    %8035 = vmatprep.subr.mxu0 0.0
    %8036 = vmatpush1.msra.mxu0 0.0
    %8037 = vmatprep.subr.mxu0 0.0
    %8038 = vmatpush1.msra.mxu0 0.0
    %8039 = vmatprep.subr.mxu0 0.0
    %8040 = vmatpush1.msra.mxu0 0.0
    %8041 = vmatprep.subr.mxu0 0.0
    %8042 = vmatpush1.msra.mxu0 0.0
    %8043 = vmatprep.subr.mxu0 0.0
    %8044 = vmatpush1.msra.mxu0 0.0
    %8045 = vmatprep.subr.mxu0 0.0
    %8046 = vmatpush1.msra.mxu0 0.0
    %8047 = vmatprep.subr.mxu0 0.0
    %8048 = vmatpush1.msra.mxu0 0.0
    %8049 = vmatprep.subr.mxu0 0.0
    %8050 = vmatpush1.msra.mxu0 0.0
    %8051 = vmatprep.subr.mxu0 0.0
    %8052 = vmatpush1.msra.mxu0 0.0
    %8053 = vmatprep.subr.mxu0 0.0
    %8054 = vmatpush1.msra.mxu0 0.0
    %8055 = vmatprep.subr.mxu0 0.0
    %8056 = vmatpush1.msra.mxu0 0.0
    %8057 = vmatprep.subr.mxu0 0.0
    %8058 = vmatpush1.msra.mxu0 %v6457
    %8059 = vmatprep.subr.mxu0 0.0
    %8060 = vmatpush1.msra.mxu0 %v6456
    %8061 = vmatprep.subr.mxu0 0.0
    %8062 = vmatpush1.msra.mxu0 %v6455
    %8063 = vmatprep.subr.mxu0 0.0
    %8064 = vmatpush1.msra.mxu0 %v6454
    %8065 = vmatprep.subr.mxu0 0.0
    %8066 = vmatpush2.msra.mxu0 0.0
    %8067 = vmatprep.subr.mxu0 0.0
    %8068 = vmatpush2.msra.mxu0 0.0
    %8069 = vmatprep.subr.mxu0 0.0
    %8070 = vmatpush2.msra.mxu0 0.0
    %8071 = vmatprep.subr.mxu0 0.0
    %8072 = vmatpush2.msra.mxu0 0.0
    %8073 = vmatprep.subr.mxu0 0.0
    %8074 = vmatpush2.msra.mxu0 0.0
    %8075 = vmatprep.subr.mxu0 0.0
    %8076 = vmatpush2.msra.mxu0 0.0
    %8077 = vmatprep.subr.mxu0 0.0
    %8078 = vmatpush2.msra.mxu0 0.0
    %8079 = vmatprep.subr.mxu0 0.0
    %8080 = vmatpush2.msra.mxu0 0.0
    %8081 = vmatprep.subr.mxu0 0.0
    %8082 = vmatpush2.msra.mxu0 0.0
    %8083 = vmatprep.subr.mxu0 0.0
    %8084 = vmatpush2.msra.mxu0 0.0
    %8085 = vmatprep.subr.mxu0 0.0
    %8086 = vmatpush2.msra.mxu0 0.0
    %8087 = vmatprep.subr.mxu0 0.0
    %8088 = vmatpush2.msra.mxu0 0.0
    %8089 = vmatprep.subr.mxu0 0.0
    %8090 = vmatpush2.msra.mxu0 0.0
    %8091 = vmatprep.subr.mxu0 0.0
    %8092 = vmatpush2.msra.mxu0 0.0
    %8093 = vmatprep.subr.mxu0 0.0
    %8094 = vmatpush2.msra.mxu0 0.0
    %8095 = vmatprep.subr.mxu0 0.0
    %8096 = vmatpush2.msra.mxu0 0.0
    %8097 = vmatprep.mubr.f32.mxu0 0.0
    %8098 = vmatmul.mubr.f32.gmra.mxu0 %v7961
    %v8099 = vpop.f32.mrf.mxu0
    %v8100 = vadd.f32 0.0, %v8099
    %v8101 = vpop.f32.mrf.mxu0
    %8102 = vdwg.mxu0
    %v8103 = vadd.f32 %v6582, %v8030
    %v8104 = vxor.u32 %v8103, 2147483648
    %v8105 = vmul.f32 %v8104, 1.442695
    %v8106 = vpow.pop %v8105
    %v8107 = vadd.f32 %v8106, 1.0
    %v8108 = vrcp.pop %v8107
    %v8109 = vmul.f32 1.0, %v8108
    %v8110 = vadd.f32 %v6683, %v8100
    %v8111 = vxor.u32 %v8110, 2147483648
    %v8112 = vmul.f32 %v8111, 1.442695
    %v8113 = vpow.pop %v8112
    %v8114 = vadd.f32 %v8113, 1.0
    %v8115 = vrcp.pop %v8114
    %v8116 = vmul.f32 1.0, %v8115
    %8117 = vmatprep.subr.mxu0 0.0
    %8118 = vmatpush1.msra.mxu0 0.0
    %8119 = vmatprep.subr.mxu0 0.0
    %8120 = vmatpush1.msra.mxu0 0.0
    %8121 = vmatprep.subr.mxu0 0.0
    %8122 = vmatpush1.msra.mxu0 0.0
    %8123 = vmatprep.subr.mxu0 0.0
    %8124 = vmatpush1.msra.mxu0 0.0
    %8125 = vmatprep.subr.mxu0 0.0
    %8126 = vmatpush1.msra.mxu0 0.0
    %8127 = vmatprep.subr.mxu0 0.0
    %8128 = vmatpush1.msra.mxu0 0.0
    %8129 = vmatprep.subr.mxu0 0.0
    %8130 = vmatpush1.msra.mxu0 0.0
    %8131 = vmatprep.subr.mxu0 0.0
    %8132 = vmatpush1.msra.mxu0 0.0
    %8133 = vmatprep.subr.mxu0 0.0
    %8134 = vmatpush1.msra.mxu0 0.0
    %8135 = vmatprep.subr.mxu0 0.0
    %8136 = vmatpush1.msra.mxu0 0.0
    %8137 = vmatprep.subr.mxu0 0.0
    %8138 = vmatpush1.msra.mxu0 0.0
    %8139 = vmatprep.subr.mxu0 0.0
    %8140 = vmatpush1.msra.mxu0 0.0
    %8141 = vmatprep.subr.mxu0 0.0
    %8142 = vmatpush1.msra.mxu0 %v6461
    %8143 = vmatprep.subr.mxu0 0.0
    %8144 = vmatpush1.msra.mxu0 %v6460
    %8145 = vmatprep.subr.mxu0 0.0
    %8146 = vmatpush1.msra.mxu0 %v6459
    %8147 = vmatprep.subr.mxu0 0.0
    %8148 = vmatpush1.msra.mxu0 %v6458
    %8149 = vmatprep.subr.mxu0 0.0
    %8150 = vmatpush2.msra.mxu0 0.0
    %8151 = vmatprep.subr.mxu0 0.0
    %8152 = vmatpush2.msra.mxu0 0.0
    %8153 = vmatprep.subr.mxu0 0.0
    %8154 = vmatpush2.msra.mxu0 0.0
    %8155 = vmatprep.subr.mxu0 0.0
    %8156 = vmatpush2.msra.mxu0 0.0
    %8157 = vmatprep.subr.mxu0 0.0
    %8158 = vmatpush2.msra.mxu0 0.0
    %8159 = vmatprep.subr.mxu0 0.0
    %8160 = vmatpush2.msra.mxu0 0.0
    %8161 = vmatprep.subr.mxu0 0.0
    %8162 = vmatpush2.msra.mxu0 0.0
    %8163 = vmatprep.subr.mxu0 0.0
    %8164 = vmatpush2.msra.mxu0 0.0
    %8165 = vmatprep.subr.mxu0 0.0
    %8166 = vmatpush2.msra.mxu0 0.0
    %8167 = vmatprep.subr.mxu0 0.0
    %8168 = vmatpush2.msra.mxu0 0.0
    %8169 = vmatprep.subr.mxu0 0.0
    %8170 = vmatpush2.msra.mxu0 0.0
    %8171 = vmatprep.subr.mxu0 0.0
    %8172 = vmatpush2.msra.mxu0 0.0
    %8173 = vmatprep.subr.mxu0 0.0
    %8174 = vmatpush2.msra.mxu0 0.0
    %8175 = vmatprep.subr.mxu0 0.0
    %8176 = vmatpush2.msra.mxu0 0.0
    %8177 = vmatprep.subr.mxu0 0.0
    %8178 = vmatpush2.msra.mxu0 0.0
    %8179 = vmatprep.subr.mxu0 0.0
    %8180 = vmatpush2.msra.mxu0 0.0
    %8181 = vmatprep.mubr.f32.mxu0 0.0
    %8182 = vmatmul.mubr.f32.gmra.mxu0 %v7961
    %v8183 = vpop.f32.mrf.mxu0
    %v8184 = vadd.f32 %v6791, %v8183
    %v8185 = vpop.f32.mrf.mxu0
    %8186 = vdwg.mxu0
    %v8187 = vmul.f32 %v8109, %v8184
    %v8188 = vadd.f32 %v6784, %v8187
    %v8189 = vtanh.pop %v8188
    %v8190 = vsub.f32 1.0, %v8116
    %v8191 = vmul.f32 %v8190, %v8189
    %v8192 = vmul.f32 %v8116, %v7959
    %v8193 = vadd.f32 %v8191, %v8192
    %vm8194 = vcmask 257024
    %8195 = vst.msk [vmem:[#allocation32] sm:$0xf] %vm8194, %v8193
    // Predicated region
    $region206: #{discriminator_forward.1} parent=1 // pred_check
      _
    $region207: #{discriminator_forward.1} parent=1 // pred_check_branch
      %8197 = sbr.rel (0) target = $region209
    $region208: #{discriminator_forward.1} parent=1 // pred_region
      %s8199 = ssub.s32 128, 128
      %8200 = vsyncadd [#allocation4], %s8199
      %s8202 = sshll.u32 [#allocation31], 4
      %s8203 = int_to_ptr.vmem [resolvable:$true] %s8202
      %8205 = dma.vmem_to_hbm [thread:$0]  %s8203, 128, %s67, [#allocation4]
    $region209: #{discriminator_forward.1} parent=1 // pred_fallthru
      _
    // Predicated region
    $region210: #{discriminator_forward.1} parent=1 // pred_check
      _
    $region211: #{discriminator_forward.1} parent=1 // pred_check_branch
      %8207 = sbr.rel (0) target = $region213
    $region212: #{discriminator_forward.1} parent=1 // pred_region
      %s8209 = ssub.s32 64, 64
      %8210 = vsyncadd [#allocation33], %s8209
      %s8212 = sshll.u32 [#allocation32], 4
      %s8213 = int_to_ptr.vmem [resolvable:$true] %s8212
      %8215 = dma.vmem_to_hbm [thread:$0]  %s8213, 64, %s69, [#allocation33]
    $region213: #{discriminator_forward.1} parent=1 // pred_fallthru
      _
    // Predicated region
    $region214: #{discriminator_forward.1} parent=1 // pred_check
      _
    $region215: #{discriminator_forward.1} parent=1 // pred_check_branch
      %8217 = sbr.rel (0) target = $region217
    $region216: #{discriminator_forward.1} parent=1 // pred_region
      %8218 = dma.done [#allocation4], 128
    $region217: #{discriminator_forward.1} parent=1 // pred_fallthru
      _
    // Predicated region
    $region218: #{discriminator_forward.1} parent=1 // pred_check
      _
    $region219: #{discriminator_forward.1} parent=1 // pred_check_branch
      %8220 = sbr.rel (0) target = $region221
    $region220: #{discriminator_forward.1} parent=1 // pred_region
      %8221 = dma.done [#allocation33], 64
    $region221: #{discriminator_forward.1} parent=1 // pred_fallthru
      _
    %8222 = vsyncpa [#allocation3], 1
    %8223 = vsyncpa [#allocation6], 1
    %8224 = vsyncpa [#allocation9], 1
    %8225 = vsyncpa [#allocation12], 1
    %8226 = vsyncpa [#allocation15], 1
    %8227 = vsyncpa [#allocation18], 1
    %8228 = vsyncpa [#allocation21], 1
    %8229 = vsyncpa [#allocation24], 1
    %8230 = vsyncpa [#allocation27], 1
    %8231 = vsyncpa [#allocation30], 1
    %8232 = vsyncpa [#allocation4], 1
    %8233 = vsyncpa [#allocation33], 1

</llo_original>
